<compile_context>
chip_gen: v7x
topology: tpu7x:2x2x1
jax: 0.10.0
libtpu: 0.0.40
codegen_flags: <defaults>
</compile_context>

<pallas_src>
import jax
import jax.numpy as jnp
from jax.experimental import pallas as pl
from jax.experimental.pallas import tpu as pltpu


VMEM = pl.BlockSpec(memory_space=pltpu.MemorySpace.VMEM)


# ---------------------------------------------------------------------------
# Kernel 1: fused bidirectional LSTM over all stacked sequences
# ---------------------------------------------------------------------------
def bilstm_kernel(x_ref, wih_ref, whh_ref, b_ref, h0_ref, c0_ref, out_ref, xp_ref):
    # x_ref:   (L*Btot, 2E) row t*Btot+s: [x[s,t,:] | x[s,L-1-t,:]]
    # wih_ref: (2E, 8H), whh_ref: (2H, 8H), b_ref: (1, 8H)
    #          fused gate layout along 8H: [i_f,i_b,f_f,f_b,o_f,o_b,g_f,g_b]
    # h0/c0:   (Btot, 2H) = [fwd | bwd]
    # out_ref: (L*Btot, 2H) row t*Btot+s: [h_fwd(t) | h_bwd(t)]
    Btot, D2 = h0_ref.shape
    H = D2 // 2
    L = x_ref.shape[0] // Btot

    # Hoisted input projection for BOTH directions in one matmul; the bwd half is
    # already time-reversed, so every step reads ONE contiguous (Btot, 8H) row slice.
    xp_ref[...] = jnp.dot(x_ref[...], wih_ref[...],
                          preferred_element_type=jnp.float32) + b_ref[...]

    def step(t, carry):
        h, c = carry                                          # (Btot, 2H) each, in vregs
        r = pl.multiple_of(t * Btot, Btot)
        gates = xp_ref[pl.ds(r, Btot), :] + jnp.dot(
            h, whh_ref[...], preferred_element_type=jnp.float32)          # (Btot, 8H)
        # sigmoid only over the contiguous i|f|o columns, tanh over the g columns.
        sig = jax.nn.sigmoid(gates[:, 0:6 * H])
        g_g = jnp.tanh(gates[:, 6 * H:8 * H])
        i_g = sig[:, 0:2 * H]
        f_g = sig[:, 2 * H:4 * H]
        o_g = sig[:, 4 * H:6 * H]
        c_new = f_g * c + i_g * g_g
        h_new = o_g * jnp.tanh(c_new)
        # fwd hidden at time t, bwd hidden at (reversed) time L-1-t.
        out_ref[pl.ds(r, Btot), pl.ds(0, H)] = h_new[:, 0:H]
        rb = pl.multiple_of((L - 1 - t) * Btot, Btot)
        out_ref[pl.ds(rb, Btot), pl.ds(H, H)] = h_new[:, H:2 * H]
        return (h_new, c_new)

    # L is static and small: fully unroll so the LLO scheduler can overlap steps.
    jax.lax.fori_loop(0, L, step, (h0_ref[...], c0_ref[...]), unroll=True)


def run_bilstm(x_cat, prepped, h0_cat, c0_cat):
    LB = x_cat.shape[0]
    H = prepped['whh_cat'].shape[0] // 2
    return pl.pallas_call(
        bilstm_kernel,
        out_shape=jax.ShapeDtypeStruct((LB, 2 * H), jnp.float32),
        in_specs=[VMEM] * 6,
        out_specs=VMEM,
        scratch_shapes=[pltpu.VMEM((LB, 8 * H), jnp.float32)],     # hoisted projections
    )(x_cat, prepped['wih_cat'], prepped['whh_cat'], prepped['b_cat'], h0_cat, c0_cat)


# ---------------------------------------------------------------------------
# Kernel 2: fused NTN (query prep + all-doc bilinear + max-pool + fc1/fc2 head)
# ---------------------------------------------------------------------------
def make_ntn_kernel(Btot, L, q_row, doc_rows, n_query):
    def ntn_kernel(hist_ref, wb_ref, wf_ref, bias_ref,
                   w1_ref, b1_ref, w2_ref, b2_ref, out_ref):
        # hist_ref: (L*Btot, D2) biLSTM hidden history, row = t*Btot + seq
        # wb_ref:   (K, D2, D2) with wb_ref[k, d, e] = Wb[k][e, d]
        # wf_ref:   (K, D2); bias_ref: (K, 1) = bf + bb
        # w1_ref:   (F2, K); b1_ref: (F2, 1); w2_ref: (1, F2); b2_ref: (1, 1)
        # out_ref:  (1, Ndocs * I) scores, doc-major then query-row
        K, D2 = wf_ref.shape
        I = n_query
        J = L
        nd = len(doc_rows)

        # Strided sublane reads: batch-1 states straight out of the time-major history.
        U = hist_ref[pl.ds(q_row, I, stride=Btot), :]                        # (I, D2)
        V = jnp.concatenate(
            [hist_ref[pl.ds(s, J, stride=Btot), :] for s in doc_rows],
            axis=0)                                                          # (nd*J, D2)

        # Query-side bilinear / ntn_fc terms (computed once, shared by all docs).
        U_b = jnp.broadcast_to(U[None], (K, I, D2))
        t1 = jnp.einsum('kie,kde->kid', U_b, wb_ref[...],
                        preferred_element_type=jnp.float32)                  # (K, I, D2)
        qfc = jnp.einsum('kd,id->ki', wf_ref[...], U,
                         preferred_element_type=jnp.float32) + bias_ref[...]  # (K, I)

        # Doc-side terms for the positive AND all negative docs in one shot.
        V_b = jnp.broadcast_to(V[None], (K, nd * J, D2))
        bil = jnp.einsum('kid,kjd->kij', t1, V_b,
                         preferred_element_type=jnp.float32)                 # (K, I, nd*J)
        dfc = jnp.einsum('kd,jd->kj', wf_ref[...], V,
                         preferred_element_type=jnp.float32) + bias_ref[...]  # (K, nd*J)

        # TODO(synk): the reference assigns a (1,2,K) tensor into a (K,)-shaped slot
        # (shape-invalid in PyTorch); we reduce that cat((u,v)) dim with max, which is
        # consistent with the k=1 max pooling that follows.  relu is monotone, so
        # max(relu(bil+qfc), relu(bil+dfc)) == relu(bil + max(qfc, dfc)).
        ntn = jnp.maximum(bil + jnp.maximum(qfc[:, :, None], dfc[:, None, :]), 0.0)

        # k_max_pooling(dim=1, k=1) applied twice == max over doc positions j, per doc.
        pooled = jnp.concatenate(
            [jnp.max(ntn[:, :, n * J:(n + 1) * J], axis=2) for n in range(nd)],
            axis=1)                                                          # (K, nd*I)

        # fc1 -> fc2 (no activation in between, as in the reference).
        h1 = jnp.dot(w1_ref[...], pooled,
                     preferred_element_type=jnp.float32) + b1_ref[...]       # (F2, nd*I)
        out_ref[...] = jnp.dot(w2_ref[...], h1,
                               preferred_element_type=jnp.float32) + b2_ref[...]

    return ntn_kernel


# ---------------------------------------------------------------------------
# Full MV_LSTM.forward
# ---------------------------------------------------------------------------
def mv_lstm_forward(query, pos_doc, neg_docs, hidden, prepped):
    h0, c0 = hidden                                        # (2, B, H) each
    B, L, E = query.shape
    NNEG = neg_docs.shape[0]
    H = prepped['whh_cat'].shape[0] // 2
    D2 = 2 * H
    num_seq = 2 + NNEG
    Btot = num_seq * B

    # The reference indexes bilstm_query[1][i] for i in range(2H).
    assert L >= D2, "query length must be >= 2 * lstm_hidden_dim"
    assert pos_doc.shape[1] == L and neg_docs.shape[2] == L, \
        "all sequences share one length so the biLSTM runs as a single batched kernel"

    # --- one biLSTM launch for query + pos doc + all neg docs -------------------
    seqs = jnp.concatenate(
        [query, pos_doc, neg_docs.reshape(NNEG * B, L, E)], axis=0)   # (Btot, L, E)
    # fwd input (time t) and bwd input (time L-1-t) side by side on the lane axis,
    # so the recurrence reads ONE contiguous row slice of projected gates per step.
    x_cat = jnp.concatenate([seqs, seqs[:, ::-1, :]], axis=2)         # (Btot, L, 2E)
    x_cat = jnp.transpose(x_cat, (1, 0, 2)).reshape(L * Btot, 2 * E)  # row = t*Btot + s

    # Same initial hidden for every sequence (reference passes `hidden` to each call).
    h0_cat = jnp.tile(jnp.concatenate([h0[0], h0[1]], axis=1), (num_seq, 1))
    c0_cat = jnp.tile(jnp.concatenate([c0[0], c0[1]], axis=1), (num_seq, 1))

    hist = run_bilstm(x_cat, prepped, h0_cat, c0_cat)                 # (L*Btot, 2H)

    # --- fused NTN scoring for the positive + all negative docs -----------------
    q_row = 1                                         # query, batch index 1 (ref `[1]`)
    doc_rows = (B + 1,) + tuple((2 + n) * B + 1 for n in range(NNEG))
    Ndocs = 1 + NNEG
    kernel = make_ntn_kernel(Btot=Btot, L=L, q_row=q_row,
                             doc_rows=doc_rows, n_query=D2)
    scores = pl.pallas_call(
        kernel,
        out_shape=jax.ShapeDtypeStruct((1, Ndocs * D2), jnp.float32),
        in_specs=[VMEM] * 8,
        out_specs=VMEM,
    )(hist, prepped['wb_t'], prepped['wf'], prepped['bias_col'],
      prepped['w1'], prepped['b1_col'], prepped['w2'], prepped['b2'])

    # [pos, neg_0, ...] stacked, each (2H, 1, 1) -- matches the reference output stack.
    return scores.reshape(Ndocs, D2, 1, 1)


# ---------------------------------------------------------------------------
# Parameter init (source layouts) and one-time kernel-layout preprocessing
# ---------------------------------------------------------------------------
def init_params(key, E, H, K, F2):
    D2 = 2 * H
    ks = jax.random.split(key, 16)

    def nrm(k, shape):
        return 0.1 * jax.random.normal(k, shape, jnp.float32)

    lstm = {}
    for idx, name in enumerate(['fwd', 'bwd']):
        base = idx * 3
        lstm[name] = dict(
            wih=nrm(ks[base], (E, 4 * H)),      # per-direction gates, order i|f|g|o
            whh=nrm(ks[base + 1], (H, 4 * H)),
            b=nrm(ks[base + 2], (1, 4 * H)),    # b_ih + b_hh combined
        )
    return dict(
        lstm=lstm,
        wb=nrm(ks[6], (K, D2, D2)), bb=nrm(ks[7], (K,)),    # nn.Bilinear
        wf=nrm(ks[8], (K, D2)),     bf=nrm(ks[9], (K,)),    # ntn_fc
        w1=nrm(ks[10], (F2, K)),    b1=nrm(ks[11], (F2,)),  # fc1
        w2=nrm(ks[12], (1, F2)),    b2=nrm(ks[13], (1,)),   # fc2
    )


def preprocess_params(params):
    # One-time weight-layout prep, hoisted out of the forward (review item 9).
    lstm = params['lstm']
    E = lstm['fwd']['wih'].shape[0]
    H = lstm['fwd']['whh'].shape[0]
    # Target fused gate layout along the 8H axis: [i_f,i_b,f_f,f_b,o_f,o_b,g_f,g_b].
    # Source per-direction layout: i|f|g|o.
    src_of_tgt = [0, 0, 1, 1, 3, 3, 2, 2]
    dir_of_tgt = [0, 1, 0, 1, 0, 1, 0, 1]
    names = ['fwd', 'bwd']

    wih_cat = jnp.zeros((2 * E, 8 * H), jnp.float32)
    whh_cat = jnp.zeros((2 * H, 8 * H), jnp.float32)
    b_cat = jnp.zeros((1, 8 * H), jnp.float32)
    for tgt in range(8):
        d = dir_of_tgt[tgt]
        s = src_of_tgt[tgt]
        p = lstm[names[d]]
        col = slice(tgt * H, (tgt + 1) * H)
        src = slice(s * H, (s + 1) * H)
        wih_cat = wih_cat.at[d * E:(d + 1) * E, col].set(p['wih'][:, src])
        whh_cat = whh_cat.at[d * H:(d + 1) * H, col].set(p['whh'][:, src])
        b_cat = b_cat.at[:, col].set(p['b'][:, src])

    K = params['wf'].shape[0]
    F2 = params['w1'].shape[0]
    return dict(
        wih_cat=wih_cat, whh_cat=whh_cat, b_cat=b_cat,
        wb_t=jnp.transpose(params['wb'], (0, 2, 1)),   # wb_t[k, d, e] = Wb[k][e, d]
        wf=params['wf'],
        bias_col=(params['bf'] + params['bb']).reshape(K, 1),
        w1=params['w1'], b1_col=params['b1'].reshape(F2, 1),
        w2=params['w2'], b2=params['b2'].reshape(1, 1),
    )


if __name__ == "__main__":
    B, E, H = 2, 16, 8
    D2 = 2 * H           # bidirectional feature dim
    K = 16               # ntn_output_dim == fc1_dim
    F2 = 8               # fc2_dim
    L = D2               # one length for every sequence (>= 2H for the query indexing)
    NNEG = 2

    key = jax.random.PRNGKey(0)
    keys = jax.random.split(key, 8)
    query = jax.random.normal(keys[0], (B, L, E), jnp.float32)
    pos_doc = jax.random.normal(keys[1], (B, L, E), jnp.float32)
    neg_docs = jax.random.normal(keys[2], (NNEG, B, L, E), jnp.float32)
    h0 = jnp.zeros((2, B, H), jnp.float32)
    c0 = jnp.zeros((2, B, H), jnp.float32)

    params = init_params(keys[3], E, H, K, F2)
    prepped = preprocess_params(params)        # one-time layout prep, outside forward

    fwd = jax.jit(mv_lstm_forward)
    s = fwd(query, pos_doc, neg_docs, (h0, c0), prepped)
    s = jax.block_until_ready(s)
    assert s.shape == (1 + NNEG, D2, 1, 1), s.shape
    assert bool(jnp.all(jnp.isfinite(s)))
    print("KERNEL_OK")
</pallas_src>

<mosaic_0001>
module attributes {stable_mosaic.version = 11 : i64} {
  func.func @ntn_kernel(%arg0: memref<128x16xf32, #tpu.memory_space<vmem>>, %arg1: memref<16x16x16xf32, #tpu.memory_space<vmem>>, %arg2: memref<16x16xf32, #tpu.memory_space<vmem>>, %arg3: memref<16x1xf32, #tpu.memory_space<vmem>>, %arg4: memref<8x16xf32, #tpu.memory_space<vmem>>, %arg5: memref<8x1xf32, #tpu.memory_space<vmem>>, %arg6: memref<1x8xf32, #tpu.memory_space<vmem>>, %arg7: memref<1x1xf32, #tpu.memory_space<vmem>>, %arg8: memref<1x48xf32, #tpu.memory_space<vmem>>) attributes {dimension_semantics = [], scalar_prefetch = 0 : i64, scratch_operands = 0 : i64, tpu.core_type = #tpu.core_type<tc>} {
    %c1 = arith.constant 1 : index
    %c0 = arith.constant 0 : index
    %0 = tpu.strided_load %arg0[%c1, %c0] {strides = array<i32: 8, 1>} : memref<128x16xf32, #tpu.memory_space<vmem>>, vector<16x16xf32>
    %c3 = arith.constant 3 : index
    %c0_0 = arith.constant 0 : index
    %1 = tpu.strided_load %arg0[%c3, %c0_0] {strides = array<i32: 8, 1>} : memref<128x16xf32, #tpu.memory_space<vmem>>, vector<16x16xf32>
    %c5 = arith.constant 5 : index
    %c0_1 = arith.constant 0 : index
    %2 = tpu.strided_load %arg0[%c5, %c0_1] {strides = array<i32: 8, 1>} : memref<128x16xf32, #tpu.memory_space<vmem>>, vector<16x16xf32>
    %c7 = arith.constant 7 : index
    %c0_2 = arith.constant 0 : index
    %3 = tpu.strided_load %arg0[%c7, %c0_2] {strides = array<i32: 8, 1>} : memref<128x16xf32, #tpu.memory_space<vmem>>, vector<16x16xf32>
    %4 = tpu.concatenate %1, %2, %3 in 0 : vector<16x16xf32>, vector<16x16xf32>, vector<16x16xf32> -> vector<48x16xf32>
    %5 = vector.shape_cast %0 : vector<16x16xf32> to vector<1x16x16xf32>
    %6 = vector.shape_cast %5 : vector<1x16x16xf32> to vector<1x16x16xf32>
    %7 = vector.broadcast %6 : vector<1x16x16xf32> to vector<16x16x16xf32>
    %c0_3 = arith.constant 0 : index
    %c0_4 = arith.constant 0 : index
    %c0_5 = arith.constant 0 : index
    %8 = vector.load %arg1[%c0_3, %c0_4, %c0_5] : memref<16x16x16xf32, #tpu.memory_space<vmem>>, vector<16x16x16xf32>
    "tpu.trace_start"() <{level = 10 : i32, message = "kie,kde->kid"}> : () -> ()
    %cst = arith.constant dense<0.000000e+00> : vector<16x16x16xf32>
    %9 = tpu.matmul %7, %8, %cst {dimension_numbers = #tpu.dot_dimension_numbers<[2], [2], [1], [1], [0, 0, 0, 1, 1, 1], [0], [0]>} : vector<16x16x16xf32>, vector<16x16x16xf32>, vector<16x16x16xf32> -> vector<16x16x16xf32>
    "tpu.trace_stop"() : () -> ()
    %c0_6 = arith.constant 0 : index
    %c0_7 = arith.constant 0 : index
    %10 = vector.load %arg2[%c0_6, %c0_7] : memref<16x16xf32, #tpu.memory_space<vmem>>, vector<16x16xf32>
    "tpu.trace_start"() <{level = 10 : i32, message = "kd,id->ki"}> : () -> ()
    %cst_8 = arith.constant dense<0.000000e+00> : vector<16x16xf32>
    %11 = tpu.matmul %10, %0, %cst_8 {dimension_numbers = #tpu.dot_dimension_numbers<[1], [1], [0], [0], [0, 0, 1, 0], [], []>} : vector<16x16xf32>, vector<16x16xf32>, vector<16x16xf32> -> vector<16x16xf32>
    "tpu.trace_stop"() : () -> ()
    %c0_9 = arith.constant 0 : index
    %c0_10 = arith.constant 0 : index
    %12 = vector.load %arg3[%c0_9, %c0_10] : memref<16x1xf32, #tpu.memory_space<vmem>>, vector<16x1xf32>
    %13 = vector.broadcast %12 : vector<16x1xf32> to vector<16x16xf32>
    %14 = arith.addf %11, %13 : vector<16x16xf32>
    %15 = vector.shape_cast %4 : vector<48x16xf32> to vector<1x48x16xf32>
    %16 = vector.shape_cast %15 : vector<1x48x16xf32> to vector<1x48x16xf32>
    %17 = vector.broadcast %16 : vector<1x48x16xf32> to vector<16x48x16xf32>
    "tpu.trace_start"() <{level = 10 : i32, message = "kid,kjd->kij"}> : () -> ()
    %cst_11 = arith.constant dense<0.000000e+00> : vector<16x16x48xf32>
    %18 = tpu.matmul %9, %17, %cst_11 {dimension_numbers = #tpu.dot_dimension_numbers<[2], [2], [1], [1], [0, 0, 0, 1, 1, 1], [0], [0]>} : vector<16x16x16xf32>, vector<16x48x16xf32>, vector<16x16x48xf32> -> vector<16x16x48xf32>
    "tpu.trace_stop"() : () -> ()
    %c0_12 = arith.constant 0 : index
    %c0_13 = arith.constant 0 : index
    %19 = vector.load %arg2[%c0_12, %c0_13] : memref<16x16xf32, #tpu.memory_space<vmem>>, vector<16x16xf32>
    "tpu.trace_start"() <{level = 10 : i32, message = "kd,jd->kj"}> : () -> ()
    %cst_14 = arith.constant dense<0.000000e+00> : vector<16x48xf32>
    %20 = tpu.matmul %19, %4, %cst_14 {dimension_numbers = #tpu.dot_dimension_numbers<[1], [1], [0], [0], [0, 0, 1, 0], [], []>} : vector<16x16xf32>, vector<48x16xf32>, vector<16x48xf32> -> vector<16x48xf32>
    "tpu.trace_stop"() : () -> ()
    %c0_15 = arith.constant 0 : index
    %c0_16 = arith.constant 0 : index
    %21 = vector.load %arg3[%c0_15, %c0_16] : memref<16x1xf32, #tpu.memory_space<vmem>>, vector<16x1xf32>
    %22 = vector.broadcast %21 : vector<16x1xf32> to vector<16x48xf32>
    %23 = arith.addf %20, %22 : vector<16x48xf32>
    %24 = vector.shape_cast %14 : vector<16x16xf32> to vector<16x16x1xf32>
    %25 = vector.shape_cast %23 : vector<16x48xf32> to vector<16x1x48xf32>
    %26 = vector.broadcast %24 : vector<16x16x1xf32> to vector<16x16x48xf32>
    %27 = vector.broadcast %25 : vector<16x1x48xf32> to vector<16x16x48xf32>
    %28 = arith.maximumf %26, %27 : vector<16x16x48xf32>
    %29 = arith.addf %18, %28 : vector<16x16x48xf32>
    %cst_17 = arith.constant 0.000000e+00 : f32
    %30 = vector.broadcast %cst_17 : f32 to vector<16x16x48xf32>
    %31 = arith.maximumf %29, %30 : vector<16x16x48xf32>
    %32 = vector.extract_strided_slice %31 {offsets = [0, 0, 0], sizes = [16, 16, 16], strides = [1, 1, 1]} : vector<16x16x48xf32> to vector<16x16x16xf32>
    %cst_18 = arith.constant dense<0xFF800000> : vector<16x16xf32>
    %33 = vector.multi_reduction <maximumf>, %32, %cst_18 [2] : vector<16x16x16xf32> to vector<16x16xf32>
    %34 = vector.extract_strided_slice %31 {offsets = [0, 0, 16], sizes = [16, 16, 16], strides = [1, 1, 1]} : vector<16x16x48xf32> to vector<16x16x16xf32>
    %cst_19 = arith.constant dense<0xFF800000> : vector<16x16xf32>
    %35 = vector.multi_reduction <maximumf>, %34, %cst_19 [2] : vector<16x16x16xf32> to vector<16x16xf32>
    %36 = vector.extract_strided_slice %31 {offsets = [0, 0, 32], sizes = [16, 16, 16], strides = [1, 1, 1]} : vector<16x16x48xf32> to vector<16x16x16xf32>
    %cst_20 = arith.constant dense<0xFF800000> : vector<16x16xf32>
    %37 = vector.multi_reduction <maximumf>, %36, %cst_20 [2] : vector<16x16x16xf32> to vector<16x16xf32>
    %38 = tpu.concatenate %33, %35, %37 in 1 : vector<16x16xf32>, vector<16x16xf32>, vector<16x16xf32> -> vector<16x48xf32>
    %c0_21 = arith.constant 0 : index
    %c0_22 = arith.constant 0 : index
    %39 = vector.load %arg4[%c0_21, %c0_22] : memref<8x16xf32, #tpu.memory_space<vmem>>, vector<8x16xf32>
    %cst_23 = arith.constant dense<0.000000e+00> : vector<8x48xf32>
    %40 = tpu.matmul %39, %38, %cst_23 {dimension_numbers = #tpu.dot_dimension_numbers<[1], [0], [0], [1], [0, 0, 1, 1], [], []>} : vector<8x16xf32>, vector<16x48xf32>, vector<8x48xf32> -> vector<8x48xf32>
    %c0_24 = arith.constant 0 : index
    %c0_25 = arith.constant 0 : index
    %41 = vector.load %arg5[%c0_24, %c0_25] : memref<8x1xf32, #tpu.memory_space<vmem>>, vector<8x1xf32>
    %42 = vector.broadcast %41 : vector<8x1xf32> to vector<8x48xf32>
    %43 = arith.addf %40, %42 : vector<8x48xf32>
    %c0_26 = arith.constant 0 : index
    %c0_27 = arith.constant 0 : index
    %44 = vector.load %arg6[%c0_26, %c0_27] : memref<1x8xf32, #tpu.memory_space<vmem>>, vector<1x8xf32>
    %cst_28 = arith.constant dense<0.000000e+00> : vector<1x48xf32>
    %45 = tpu.matmul %44, %43, %cst_28 {dimension_numbers = #tpu.dot_dimension_numbers<[1], [0], [0], [1], [0, 0, 1, 1], [], []>} : vector<1x8xf32>, vector<8x48xf32>, vector<1x48xf32> -> vector<1x48xf32>
    %c0_29 = arith.constant 0 : index
    %c0_30 = arith.constant 0 : index
    %46 = vector.load %arg7[%c0_29, %c0_30] : memref<1x1xf32, #tpu.memory_space<vmem>>, vector<1x1xf32>
    %47 = vector.broadcast %46 : vector<1x1xf32> to vector<1x48xf32>
    %48 = arith.addf %45, %47 : vector<1x48xf32>
    %c0_31 = arith.constant 0 : index
    %c0_32 = arith.constant 0 : index
    %49 = vector.load %arg8[%c0_31, %c0_32] : memref<1x48xf32, #tpu.memory_space<vmem>>, vector<1x48xf32>
    tpu.vector_store %arg8[%c0_31, %c0_32], %48 {strides = array<i32>} : memref<1x48xf32, #tpu.memory_space<vmem>>, vector<1x48xf32>,
    return
  }
}

module attributes {stable_mosaic.version = 11 : i64} {
  func.func @bilstm_kernel(%arg0: memref<128x32xf32, #tpu.memory_space<vmem>>, %arg1: memref<32x64xf32, #tpu.memory_space<vmem>>, %arg2: memref<16x64xf32, #tpu.memory_space<vmem>>, %arg3: memref<1x64xf32, #tpu.memory_space<vmem>>, %arg4: memref<8x16xf32, #tpu.memory_space<vmem>>, %arg5: memref<8x16xf32, #tpu.memory_space<vmem>>, %arg6: memref<128x16xf32, #tpu.memory_space<vmem>>, %arg7: memref<128x64xf32, #tpu.memory_space<vmem>>) attributes {dimension_semantics = [], scalar_prefetch = 0 : i64, scratch_operands = 1 : i64, tpu.core_type = #tpu.core_type<tc>} {
    %c0 = arith.constant 0 : index
    %c0_0 = arith.constant 0 : index
    %0 = vector.load %arg0[%c0, %c0_0] : memref<128x32xf32, #tpu.memory_space<vmem>>, vector<128x32xf32>
    %c0_1 = arith.constant 0 : index
    %c0_2 = arith.constant 0 : index
    %1 = vector.load %arg1[%c0_1, %c0_2] : memref<32x64xf32, #tpu.memory_space<vmem>>, vector<32x64xf32>
    %cst = arith.constant dense<0.000000e+00> : vector<128x64xf32>
    %2 = tpu.matmul %0, %1, %cst {dimension_numbers = #tpu.dot_dimension_numbers<[1], [0], [0], [1], [0, 0, 1, 1], [], []>} : vector<128x32xf32>, vector<32x64xf32>, vector<128x64xf32> -> vector<128x64xf32>
    %c0_3 = arith.constant 0 : index
    %c0_4 = arith.constant 0 : index
    %3 = vector.load %arg3[%c0_3, %c0_4] : memref<1x64xf32, #tpu.memory_space<vmem>>, vector<1x64xf32>
    %4 = vector.broadcast %3 : vector<1x64xf32> to vector<128x64xf32>
    %5 = arith.addf %2, %4 : vector<128x64xf32>
    %c0_5 = arith.constant 0 : index
    %c0_6 = arith.constant 0 : index
    %6 = vector.load %arg7[%c0_5, %c0_6] : memref<128x64xf32, #tpu.memory_space<vmem>>, vector<128x64xf32>
    tpu.vector_store %arg7[%c0_5, %c0_6], %5 {strides = array<i32>} : memref<128x64xf32, #tpu.memory_space<vmem>>, vector<128x64xf32>,
    %c0_7 = arith.constant 0 : index
    %c0_8 = arith.constant 0 : index
    %7 = vector.load %arg4[%c0_7, %c0_8] : memref<8x16xf32, #tpu.memory_space<vmem>>, vector<8x16xf32>
    %c0_9 = arith.constant 0 : index
    %c0_10 = arith.constant 0 : index
    %8 = vector.load %arg5[%c0_9, %c0_10] : memref<8x16xf32, #tpu.memory_space<vmem>>, vector<8x16xf32>
    %c0_i32 = arith.constant 0 : i32
    %c8_i32 = arith.constant 8 : i32
    %9 = arith.muli %c0_i32, %c8_i32 : i32
    %10 = tpu.assume_multiple %9, 8 : i32
    %11 = arith.index_cast %10 : i32 to index
    %c0_11 = arith.constant 0 : index
    %12 = vector.load %arg7[%11, %c0_11] : memref<128x64xf32, #tpu.memory_space<vmem>>, vector<8x64xf32>
    %c0_12 = arith.constant 0 : index
    %c0_13 = arith.constant 0 : index
    %13 = vector.load %arg2[%c0_12, %c0_13] : memref<16x64xf32, #tpu.memory_space<vmem>>, vector<16x64xf32>
    %cst_14 = arith.constant dense<0.000000e+00> : vector<8x64xf32>
    %14 = tpu.matmul %7, %13, %cst_14 {dimension_numbers = #tpu.dot_dimension_numbers<[1], [0], [0], [1], [0, 0, 1, 1], [], []>} : vector<8x16xf32>, vector<16x64xf32>, vector<8x64xf32> -> vector<8x64xf32>
    %15 = arith.addf %12, %14 : vector<8x64xf32>
    %16 = vector.extract_strided_slice %15 {offsets = [0, 0], sizes = [8, 48], strides = [1, 1]} : vector<8x64xf32> to vector<8x48xf32>
    %17 = arith.negf %16 : vector<8x48xf32>
    %18 = math.exp %17 : vector<8x48xf32>
    %cst_15 = arith.constant 1.000000e+00 : f32
    %19 = vector.broadcast %cst_15 : f32 to vector<8x48xf32>
    %20 = arith.addf %19, %18 : vector<8x48xf32>
    %21 = arith.divf %19, %20 : vector<8x48xf32>
    %22 = vector.extract_strided_slice %15 {offsets = [0, 48], sizes = [8, 16], strides = [1, 1]} : vector<8x64xf32> to vector<8x16xf32>
    %23 = math.tanh %22 : vector<8x16xf32>
    %24 = vector.extract_strided_slice %21 {offsets = [0, 0], sizes = [8, 16], strides = [1, 1]} : vector<8x48xf32> to vector<8x16xf32>
    %25 = vector.extract_strided_slice %21 {offsets = [0, 16], sizes = [8, 16], strides = [1, 1]} : vector<8x48xf32> to vector<8x16xf32>
    %26 = vector.extract_strided_slice %21 {offsets = [0, 32], sizes = [8, 16], strides = [1, 1]} : vector<8x48xf32> to vector<8x16xf32>
    %27 = arith.mulf %25, %8 : vector<8x16xf32>
    %28 = arith.mulf %24, %23 : vector<8x16xf32>
    %29 = arith.addf %27, %28 : vector<8x16xf32>
    %30 = math.tanh %29 : vector<8x16xf32>
    %31 = arith.mulf %26, %30 : vector<8x16xf32>
    %32 = vector.extract_strided_slice %31 {offsets = [0, 0], sizes = [8, 8], strides = [1, 1]} : vector<8x16xf32> to vector<8x8xf32>
    %33 = arith.index_cast %10 : i32 to index
    %c0_16 = arith.constant 0 : index
    %34 = vector.load %arg6[%33, %c0_16] : memref<128x16xf32, #tpu.memory_space<vmem>>, vector<8x8xf32>
    tpu.vector_store %arg6[%33, %c0_16], %32 {strides = array<i32>} : memref<128x16xf32, #tpu.memory_space<vmem>>, vector<8x8xf32>,
    %c15_i32 = arith.constant 15 : i32
    %35 = arith.subi %c15_i32, %c0_i32 : i32
    %c8_i32_17 = arith.constant 8 : i32
    %36 = arith.muli %35, %c8_i32_17 : i32
    %37 = tpu.assume_multiple %36, 8 : i32
    %38 = vector.extract_strided_slice %31 {offsets = [0, 8], sizes = [8, 8], strides = [1, 1]} : vector<8x16xf32> to vector<8x8xf32>
    %39 = arith.index_cast %37 : i32 to index
    %c8 = arith.constant 8 : index
    %40 = vector.load %arg6[%39, %c8] : memref<128x16xf32, #tpu.memory_space<vmem>>, vector<8x8xf32>
    tpu.vector_store %arg6[%39, %c8], %38 {strides = array<i32>} : memref<128x16xf32, #tpu.memory_space<vmem>>, vector<8x8xf32>,
    %c1_i32 = arith.constant 1 : i32
    %c8_i32_18 = arith.constant 8 : i32
    %41 = arith.muli %c1_i32, %c8_i32_18 : i32
    %42 = tpu.assume_multiple %41, 8 : i32
    %43 = arith.index_cast %42 : i32 to index
    %c0_19 = arith.constant 0 : index
    %44 = vector.load %arg7[%43, %c0_19] : memref<128x64xf32, #tpu.memory_space<vmem>>, vector<8x64xf32>
    %c0_20 = arith.constant 0 : index
    %c0_21 = arith.constant 0 : index
    %45 = vector.load %arg2[%c0_20, %c0_21] : memref<16x64xf32, #tpu.memory_space<vmem>>, vector<16x64xf32>
    %cst_22 = arith.constant dense<0.000000e+00> : vector<8x64xf32>
    %46 = tpu.matmul %31, %45, %cst_22 {dimension_numbers = #tpu.dot_dimension_numbers<[1], [0], [0], [1], [0, 0, 1, 1], [], []>} : vector<8x16xf32>, vector<16x64xf32>, vector<8x64xf32> -> vector<8x64xf32>
    %47 = arith.addf %44, %46 : vector<8x64xf32>
    %48 = vector.extract_strided_slice %47 {offsets = [0, 0], sizes = [8, 48], strides = [1, 1]} : vector<8x64xf32> to vector<8x48xf32>
    %49 = arith.negf %48 : vector<8x48xf32>
    %50 = math.exp %49 : vector<8x48xf32>
    %cst_23 = arith.constant 1.000000e+00 : f32
    %51 = vector.broadcast %cst_23 : f32 to vector<8x48xf32>
    %52 = arith.addf %51, %50 : vector<8x48xf32>
    %53 = arith.divf %51, %52 : vector<8x48xf32>
    %54 = vector.extract_strided_slice %47 {offsets = [0, 48], sizes = [8, 16], strides = [1, 1]} : vector<8x64xf32> to vector<8x16xf32>
    %55 = math.tanh %54 : vector<8x16xf32>
    %56 = vector.extract_strided_slice %53 {offsets = [0, 0], sizes = [8, 16], strides = [1, 1]} : vector<8x48xf32> to vector<8x16xf32>
    %57 = vector.extract_strided_slice %53 {offsets = [0, 16], sizes = [8, 16], strides = [1, 1]} : vector<8x48xf32> to vector<8x16xf32>
    %58 = vector.extract_strided_slice %53 {offsets = [0, 32], sizes = [8, 16], strides = [1, 1]} : vector<8x48xf32> to vector<8x16xf32>
    %59 = arith.mulf %57, %29 : vector<8x16xf32>
    %60 = arith.mulf %56, %55 : vector<8x16xf32>
    %61 = arith.addf %59, %60 : vector<8x16xf32>
    %62 = math.tanh %61 : vector<8x16xf32>
    %63 = arith.mulf %58, %62 : vector<8x16xf32>
    %64 = vector.extract_strided_slice %63 {offsets = [0, 0], sizes = [8, 8], strides = [1, 1]} : vector<8x16xf32> to vector<8x8xf32>
    %65 = arith.index_cast %42 : i32 to index
    %c0_24 = arith.constant 0 : index
    %66 = vector.load %arg6[%65, %c0_24] : memref<128x16xf32, #tpu.memory_space<vmem>>, vector<8x8xf32>
    tpu.vector_store %arg6[%65, %c0_24], %64 {strides = array<i32>} : memref<128x16xf32, #tpu.memory_space<vmem>>, vector<8x8xf32>,
    %c15_i32_25 = arith.constant 15 : i32
    %67 = arith.subi %c15_i32_25, %c1_i32 : i32
    %c8_i32_26 = arith.constant 8 : i32
    %68 = arith.muli %67, %c8_i32_26 : i32
    %69 = tpu.assume_multiple %68, 8 : i32
    %70 = vector.extract_strided_slice %63 {offsets = [0, 8], sizes = [8, 8], strides = [1, 1]} : vector<8x16xf32> to vector<8x8xf32>
    %71 = arith.index_cast %69 : i32 to index
    %c8_27 = arith.constant 8 : index
    %72 = vector.load %arg6[%71, %c8_27] : memref<128x16xf32, #tpu.memory_space<vmem>>, vector<8x8xf32>
    tpu.vector_store %arg6[%71, %c8_27], %70 {strides = array<i32>} : memref<128x16xf32, #tpu.memory_space<vmem>>, vector<8x8xf32>,
    %c2_i32 = arith.constant 2 : i32
    %c8_i32_28 = arith.constant 8 : i32
    %73 = arith.muli %c2_i32, %c8_i32_28 : i32
    %74 = tpu.assume_multiple %73, 8 : i32
    %75 = arith.index_cast %74 : i32 to index
    %c0_29 = arith.constant 0 : index
    %76 = vector.load %arg7[%75, %c0_29] : memref<128x64xf32, #tpu.memory_space<vmem>>, vector<8x64xf32>
    %c0_30 = arith.constant 0 : index
    %c0_31 = arith.constant 0 : index
    %77 = vector.load %arg2[%c0_30, %c0_31] : memref<16x64xf32, #tpu.memory_space<vmem>>, vector<16x64xf32>
    %cst_32 = arith.constant dense<0.000000e+00> : vector<8x64xf32>
    %78 = tpu.matmul %63, %77, %cst_32 {dimension_numbers = #tpu.dot_dimension_numbers<[1], [0], [0], [1], [0, 0, 1, 1], [], []>} : vector<8x16xf32>, vector<16x64xf32>, vector<8x64xf32> -> vector<8x64xf32>
    %79 = arith.addf %76, %78 : vector<8x64xf32>
    %80 = vector.extract_strided_slice %79 {offsets = [0, 0], sizes = [8, 48], strides = [1, 1]} : vector<8x64xf32> to vector<8x48xf32>
    %81 = arith.negf %80 : vector<8x48xf32>
    %82 = math.exp %81 : vector<8x48xf32>
    %cst_33 = arith.constant 1.000000e+00 : f32
    %83 = vector.broadcast %cst_33 : f32 to vector<8x48xf32>
    %84 = arith.addf %83, %82 : vector<8x48xf32>
    %85 = arith.divf %83, %84 : vector<8x48xf32>
    %86 = vector.extract_strided_slice %79 {offsets = [0, 48], sizes = [8, 16], strides = [1, 1]} : vector<8x64xf32> to vector<8x16xf32>
    %87 = math.tanh %86 : vector<8x16xf32>
    %88 = vector.extract_strided_slice %85 {offsets = [0, 0], sizes = [8, 16], strides = [1, 1]} : vector<8x48xf32> to vector<8x16xf32>
    %89 = vector.extract_strided_slice %85 {offsets = [0, 16], sizes = [8, 16], strides = [1, 1]} : vector<8x48xf32> to vector<8x16xf32>
    %90 = vector.extract_strided_slice %85 {offsets = [0, 32], sizes = [8, 16], strides = [1, 1]} : vector<8x48xf32> to vector<8x16xf32>
    %91 = arith.mulf %89, %61 : vector<8x16xf32>
    %92 = arith.mulf %88, %87 : vector<8x16xf32>
    %93 = arith.addf %91, %92 : vector<8x16xf32>
    %94 = math.tanh %93 : vector<8x16xf32>
    %95 = arith.mulf %90, %94 : vector<8x16xf32>
    %96 = vector.extract_strided_slice %95 {offsets = [0, 0], sizes = [8, 8], strides = [1, 1]} : vector<8x16xf32> to vector<8x8xf32>
    %97 = arith.index_cast %74 : i32 to index
    %c0_34 = arith.constant 0 : index
    %98 = vector.load %arg6[%97, %c0_34] : memref<128x16xf32, #tpu.memory_space<vmem>>, vector<8x8xf32>
    tpu.vector_store %arg6[%97, %c0_34], %96 {strides = array<i32>} : memref<128x16xf32, #tpu.memory_space<vmem>>, vector<8x8xf32>,
    %c15_i32_35 = arith.constant 15 : i32
    %99 = arith.subi %c15_i32_35, %c2_i32 : i32
    %c8_i32_36 = arith.constant 8 : i32
    %100 = arith.muli %99, %c8_i32_36 : i32
    %101 = tpu.assume_multiple %100, 8 : i32
    %102 = vector.extract_strided_slice %95 {offsets = [0, 8], sizes = [8, 8], strides = [1, 1]} : vector<8x16xf32> to vector<8x8xf32>
    %103 = arith.index_cast %101 : i32 to index
    %c8_37 = arith.constant 8 : index
    %104 = vector.load %arg6[%103, %c8_37] : memref<128x16xf32, #tpu.memory_space<vmem>>, vector<8x8xf32>
    tpu.vector_store %arg6[%103, %c8_37], %102 {strides = array<i32>} : memref<128x16xf32, #tpu.memory_space<vmem>>, vector<8x8xf32>,
    %c3_i32 = arith.constant 3 : i32
    %c8_i32_38 = arith.constant 8 : i32
    %105 = arith.muli %c3_i32, %c8_i32_38 : i32
    %106 = tpu.assume_multiple %105, 8 : i32
    %107 = arith.index_cast %106 : i32 to index
    %c0_39 = arith.constant 0 : index
    %108 = vector.load %arg7[%107, %c0_39] : memref<128x64xf32, #tpu.memory_space<vmem>>, vector<8x64xf32>
    %c0_40 = arith.constant 0 : index
    %c0_41 = arith.constant 0 : index
    %109 = vector.load %arg2[%c0_40, %c0_41] : memref<16x64xf32, #tpu.memory_space<vmem>>, vector<16x64xf32>
    %cst_42 = arith.constant dense<0.000000e+00> : vector<8x64xf32>
    %110 = tpu.matmul %95, %109, %cst_42 {dimension_numbers = #tpu.dot_dimension_numbers<[1], [0], [0], [1], [0, 0, 1, 1], [], []>} : vector<8x16xf32>, vector<16x64xf32>, vector<8x64xf32> -> vector<8x64xf32>
    %111 = arith.addf %108, %110 : vector<8x64xf32>
    %112 = vector.extract_strided_slice %111 {offsets = [0, 0], sizes = [8, 48], strides = [1, 1]} : vector<8x64xf32> to vector<8x48xf32>
    %113 = arith.negf %112 : vector<8x48xf32>
    %114 = math.exp %113 : vector<8x48xf32>
    %cst_43 = arith.constant 1.000000e+00 : f32
    %115 = vector.broadcast %cst_43 : f32 to vector<8x48xf32>
    %116 = arith.addf %115, %114 : vector<8x48xf32>
    %117 = arith.divf %115, %116 : vector<8x48xf32>
    %118 = vector.extract_strided_slice %111 {offsets = [0, 48], sizes = [8, 16], strides = [1, 1]} : vector<8x64xf32> to vector<8x16xf32>
    %119 = math.tanh %118 : vector<8x16xf32>
    %120 = vector.extract_strided_slice %117 {offsets = [0, 0], sizes = [8, 16], strides = [1, 1]} : vector<8x48xf32> to vector<8x16xf32>
    %121 = vector.extract_strided_slice %117 {offsets = [0, 16], sizes = [8, 16], strides = [1, 1]} : vector<8x48xf32> to vector<8x16xf32>
    %122 = vector.extract_strided_slice %117 {offsets = [0, 32], sizes = [8, 16], strides = [1, 1]} : vector<8x48xf32> to vector<8x16xf32>
    %123 = arith.mulf %121, %93 : vector<8x16xf32>
    %124 = arith.mulf %120, %119 : vector<8x16xf32>
    %125 = arith.addf %123, %124 : vector<8x16xf32>
    %126 = math.tanh %125 : vector<8x16xf32>
    %127 = arith.mulf %122, %126 : vector<8x16xf32>
    %128 = vector.extract_strided_slice %127 {offsets = [0, 0], sizes = [8, 8], strides = [1, 1]} : vector<8x16xf32> to vector<8x8xf32>
    %129 = arith.index_cast %106 : i32 to index
    %c0_44 = arith.constant 0 : index
    %130 = vector.load %arg6[%129, %c0_44] : memref<128x16xf32, #tpu.memory_space<vmem>>, vector<8x8xf32>
    tpu.vector_store %arg6[%129, %c0_44], %128 {strides = array<i32>} : memref<128x16xf32, #tpu.memory_space<vmem>>, vector<8x8xf32>,
    %c15_i32_45 = arith.constant 15 : i32
    %131 = arith.subi %c15_i32_45, %c3_i32 : i32
    %c8_i32_46 = arith.constant 8 : i32
    %132 = arith.muli %131, %c8_i32_46 : i32
    %133 = tpu.assume_multiple %132, 8 : i32
    %134 = vector.extract_strided_slice %127 {offsets = [0, 8], sizes = [8, 8], strides = [1, 1]} : vector<8x16xf32> to vector<8x8xf32>
    %135 = arith.index_cast %133 : i32 to index
    %c8_47 = arith.constant 8 : index
    %136 = vector.load %arg6[%135, %c8_47] : memref<128x16xf32, #tpu.memory_space<vmem>>, vector<8x8xf32>
    tpu.vector_store %arg6[%135, %c8_47], %134 {strides = array<i32>} : memref<128x16xf32, #tpu.memory_space<vmem>>, vector<8x8xf32>,
    %c4_i32 = arith.constant 4 : i32
    %c8_i32_48 = arith.constant 8 : i32
    %137 = arith.muli %c4_i32, %c8_i32_48 : i32
    %138 = tpu.assume_multiple %137, 8 : i32
    %139 = arith.index_cast %138 : i32 to index
    %c0_49 = arith.constant 0 : index
    %140 = vector.load %arg7[%139, %c0_49] : memref<128x64xf32, #tpu.memory_space<vmem>>, vector<8x64xf32>
    %c0_50 = arith.constant 0 : index
    %c0_51 = arith.constant 0 : index
    %141 = vector.load %arg2[%c0_50, %c0_51] : memref<16x64xf32, #tpu.memory_space<vmem>>, vector<16x64xf32>
    %cst_52 = arith.constant dense<0.000000e+00> : vector<8x64xf32>
    %142 = tpu.matmul %127, %141, %cst_52 {dimension_numbers = #tpu.dot_dimension_numbers<[1], [0], [0], [1], [0, 0, 1, 1], [], []>} : vector<8x16xf32>, vector<16x64xf32>, vector<8x64xf32> -> vector<8x64xf32>
    %143 = arith.addf %140, %142 : vector<8x64xf32>
    %144 = vector.extract_strided_slice %143 {offsets = [0, 0], sizes = [8, 48], strides = [1, 1]} : vector<8x64xf32> to vector<8x48xf32>
    %145 = arith.negf %144 : vector<8x48xf32>
    %146 = math.exp %145 : vector<8x48xf32>
    %cst_53 = arith.constant 1.000000e+00 : f32
    %147 = vector.broadcast %cst_53 : f32 to vector<8x48xf32>
    %148 = arith.addf %147, %146 : vector<8x48xf32>
    %149 = arith.divf %147, %148 : vector<8x48xf32>
    %150 = vector.extract_strided_slice %143 {offsets = [0, 48], sizes = [8, 16], strides = [1, 1]} : vector<8x64xf32> to vector<8x16xf32>
    %151 = math.tanh %150 : vector<8x16xf32>
    %152 = vector.extract_strided_slice %149 {offsets = [0, 0], sizes = [8, 16], strides = [1, 1]} : vector<8x48xf32> to vector<8x16xf32>
    %153 = vector.extract_strided_slice %149 {offsets = [0, 16], sizes = [8, 16], strides = [1, 1]} : vector<8x48xf32> to vector<8x16xf32>
    %154 = vector.extract_strided_slice %149 {offsets = [0, 32], sizes = [8, 16], strides = [1, 1]} : vector<8x48xf32> to vector<8x16xf32>
    %155 = arith.mulf %153, %125 : vector<8x16xf32>
    %156 = arith.mulf %152, %151 : vector<8x16xf32>
    %157 = arith.addf %155, %156 : vector<8x16xf32>
    %158 = math.tanh %157 : vector<8x16xf32>
    %159 = arith.mulf %154, %158 : vector<8x16xf32>
    %160 = vector.extract_strided_slice %159 {offsets = [0, 0], sizes = [8, 8], strides = [1, 1]} : vector<8x16xf32> to vector<8x8xf32>
    %161 = arith.index_cast %138 : i32 to index
    %c0_54 = arith.constant 0 : index
    %162 = vector.load %arg6[%161, %c0_54] : memref<128x16xf32, #tpu.memory_space<vmem>>, vector<8x8xf32>
    tpu.vector_store %arg6[%161, %c0_54], %160 {strides = array<i32>} : memref<128x16xf32, #tpu.memory_space<vmem>>, vector<8x8xf32>,
    %c15_i32_55 = arith.constant 15 : i32
    %163 = arith.subi %c15_i32_55, %c4_i32 : i32
    %c8_i32_56 = arith.constant 8 : i32
    %164 = arith.muli %163, %c8_i32_56 : i32
    %165 = tpu.assume_multiple %164, 8 : i32
    %166 = vector.extract_strided_slice %159 {offsets = [0, 8], sizes = [8, 8], strides = [1, 1]} : vector<8x16xf32> to vector<8x8xf32>
    %167 = arith.index_cast %165 : i32 to index
    %c8_57 = arith.constant 8 : index
    %168 = vector.load %arg6[%167, %c8_57] : memref<128x16xf32, #tpu.memory_space<vmem>>, vector<8x8xf32>
    tpu.vector_store %arg6[%167, %c8_57], %166 {strides = array<i32>} : memref<128x16xf32, #tpu.memory_space<vmem>>, vector<8x8xf32>,
    %c5_i32 = arith.constant 5 : i32
    %c8_i32_58 = arith.constant 8 : i32
    %169 = arith.muli %c5_i32, %c8_i32_58 : i32
    %170 = tpu.assume_multiple %169, 8 : i32
    %171 = arith.index_cast %170 : i32 to index
    %c0_59 = arith.constant 0 : index
    %172 = vector.load %arg7[%171, %c0_59] : memref<128x64xf32, #tpu.memory_space<vmem>>, vector<8x64xf32>
    %c0_60 = arith.constant 0 : index
    %c0_61 = arith.constant 0 : index
    %173 = vector.load %arg2[%c0_60, %c0_61] : memref<16x64xf32, #tpu.memory_space<vmem>>, vector<16x64xf32>
    %cst_62 = arith.constant dense<0.000000e+00> : vector<8x64xf32>
    %174 = tpu.matmul %159, %173, %cst_62 {dimension_numbers = #tpu.dot_dimension_numbers<[1], [0], [0], [1], [0, 0, 1, 1], [], []>} : vector<8x16xf32>, vector<16x64xf32>, vector<8x64xf32> -> vector<8x64xf32>
    %175 = arith.addf %172, %174 : vector<8x64xf32>
    %176 = vector.extract_strided_slice %175 {offsets = [0, 0], sizes = [8, 48], strides = [1, 1]} : vector<8x64xf32> to vector<8x48xf32>
    %177 = arith.negf %176 : vector<8x48xf32>
    %178 = math.exp %177 : vector<8x48xf32>
    %cst_63 = arith.constant 1.000000e+00 : f32
    %179 = vector.broadcast %cst_63 : f32 to vector<8x48xf32>
    %180 = arith.addf %179, %178 : vector<8x48xf32>
    %181 = arith.divf %179, %180 : vector<8x48xf32>
    %182 = vector.extract_strided_slice %175 {offsets = [0, 48], sizes = [8, 16], strides = [1, 1]} : vector<8x64xf32> to vector<8x16xf32>
    %183 = math.tanh %182 : vector<8x16xf32>
    %184 = vector.extract_strided_slice %181 {offsets = [0, 0], sizes = [8, 16], strides = [1, 1]} : vector<8x48xf32> to vector<8x16xf32>
    %185 = vector.extract_strided_slice %181 {offsets = [0, 16], sizes = [8, 16], strides = [1, 1]} : vector<8x48xf32> to vector<8x16xf32>
    %186 = vector.extract_strided_slice %181 {offsets = [0, 32], sizes = [8, 16], strides = [1, 1]} : vector<8x48xf32> to vector<8x16xf32>
    %187 = arith.mulf %185, %157 : vector<8x16xf32>
    %188 = arith.mulf %184, %183 : vector<8x16xf32>
    %189 = arith.addf %187, %188 : vector<8x16xf32>
    %190 = math.tanh %189 : vector<8x16xf32>
    %191 = arith.mulf %186, %190 : vector<8x16xf32>
    %192 = vector.extract_strided_slice %191 {offsets = [0, 0], sizes = [8, 8], strides = [1, 1]} : vector<8x16xf32> to vector<8x8xf32>
    %193 = arith.index_cast %170 : i32 to index
    %c0_64 = arith.constant 0 : index
    %194 = vector.load %arg6[%193, %c0_64] : memref<128x16xf32, #tpu.memory_space<vmem>>, vector<8x8xf32>
    tpu.vector_store %arg6[%193, %c0_64], %192 {strides = array<i32>} : memref<128x16xf32, #tpu.memory_space<vmem>>, vector<8x8xf32>,
    %c15_i32_65 = arith.constant 15 : i32
    %195 = arith.subi %c15_i32_65, %c5_i32 : i32
    %c8_i32_66 = arith.constant 8 : i32
    %196 = arith.muli %195, %c8_i32_66 : i32
    %197 = tpu.assume_multiple %196, 8 : i32
    %198 = vector.extract_strided_slice %191 {offsets = [0, 8], sizes = [8, 8], strides = [1, 1]} : vector<8x16xf32> to vector<8x8xf32>
    %199 = arith.index_cast %197 : i32 to index
    %c8_67 = arith.constant 8 : index
    %200 = vector.load %arg6[%199, %c8_67] : memref<128x16xf32, #tpu.memory_space<vmem>>, vector<8x8xf32>
    tpu.vector_store %arg6[%199, %c8_67], %198 {strides = array<i32>} : memref<128x16xf32, #tpu.memory_space<vmem>>, vector<8x8xf32>,
    %c6_i32 = arith.constant 6 : i32
    %c8_i32_68 = arith.constant 8 : i32
    %201 = arith.muli %c6_i32, %c8_i32_68 : i32
    %202 = tpu.assume_multiple %201, 8 : i32
    %203 = arith.index_cast %202 : i32 to index
    %c0_69 = arith.constant 0 : index
    %204 = vector.load %arg7[%203, %c0_69] : memref<128x64xf32, #tpu.memory_space<vmem>>, vector<8x64xf32>
    %c0_70 = arith.constant 0 : index
    %c0_71 = arith.constant 0 : index
    %205 = vector.load %arg2[%c0_70, %c0_71] : memref<16x64xf32, #tpu.memory_space<vmem>>, vector<16x64xf32>
    %cst_72 = arith.constant dense<0.000000e+00> : vector<8x64xf32>
    %206 = tpu.matmul %191, %205, %cst_72 {dimension_numbers = #tpu.dot_dimension_numbers<[1], [0], [0], [1], [0, 0, 1, 1], [], []>} : vector<8x16xf32>, vector<16x64xf32>, vector<8x64xf32> -> vector<8x64xf32>
    %207 = arith.addf %204, %206 : vector<8x64xf32>
    %208 = vector.extract_strided_slice %207 {offsets = [0, 0], sizes = [8, 48], strides = [1, 1]} : vector<8x64xf32> to vector<8x48xf32>
    %209 = arith.negf %208 : vector<8x48xf32>
    %210 = math.exp %209 : vector<8x48xf32>
    %cst_73 = arith.constant 1.000000e+00 : f32
    %211 = vector.broadcast %cst_73 : f32 to vector<8x48xf32>
    %212 = arith.addf %211, %210 : vector<8x48xf32>
    %213 = arith.divf %211, %212 : vector<8x48xf32>
    %214 = vector.extract_strided_slice %207 {offsets = [0, 48], sizes = [8, 16], strides = [1, 1]} : vector<8x64xf32> to vector<8x16xf32>
    %215 = math.tanh %214 : vector<8x16xf32>
    %216 = vector.extract_strided_slice %213 {offsets = [0, 0], sizes = [8, 16], strides = [1, 1]} : vector<8x48xf32> to vector<8x16xf32>
    %217 = vector.extract_strided_slice %213 {offsets = [0, 16], sizes = [8, 16], strides = [1, 1]} : vector<8x48xf32> to vector<8x16xf32>
    %218 = vector.extract_strided_slice %213 {offsets = [0, 32], sizes = [8, 16], strides = [1, 1]} : vector<8x48xf32> to vector<8x16xf32>
    %219 = arith.mulf %217, %189 : vector<8x16xf32>
    %220 = arith.mulf %216, %215 : vector<8x16xf32>
    %221 = arith.addf %219, %220 : vector<8x16xf32>
    %222 = math.tanh %221 : vector<8x16xf32>
    %223 = arith.mulf %218, %222 : vector<8x16xf32>
    %224 = vector.extract_strided_slice %223 {offsets = [0, 0], sizes = [8, 8], strides = [1, 1]} : vector<8x16xf32> to vector<8x8xf32>
    %225 = arith.index_cast %202 : i32 to index
    %c0_74 = arith.constant 0 : index
    %226 = vector.load %arg6[%225, %c0_74] : memref<128x16xf32, #tpu.memory_space<vmem>>, vector<8x8xf32>
    tpu.vector_store %arg6[%225, %c0_74], %224 {strides = array<i32>} : memref<128x16xf32, #tpu.memory_space<vmem>>, vector<8x8xf32>,
    %c15_i32_75 = arith.constant 15 : i32
    %227 = arith.subi %c15_i32_75, %c6_i32 : i32
    %c8_i32_76 = arith.constant 8 : i32
    %228 = arith.muli %227, %c8_i32_76 : i32
    %229 = tpu.assume_multiple %228, 8 : i32
    %230 = vector.extract_strided_slice %223 {offsets = [0, 8], sizes = [8, 8], strides = [1, 1]} : vector<8x16xf32> to vector<8x8xf32>
    %231 = arith.index_cast %229 : i32 to index
    %c8_77 = arith.constant 8 : index
    %232 = vector.load %arg6[%231, %c8_77] : memref<128x16xf32, #tpu.memory_space<vmem>>, vector<8x8xf32>
    tpu.vector_store %arg6[%231, %c8_77], %230 {strides = array<i32>} : memref<128x16xf32, #tpu.memory_space<vmem>>, vector<8x8xf32>,
    %c7_i32 = arith.constant 7 : i32
    %c8_i32_78 = arith.constant 8 : i32
    %233 = arith.muli %c7_i32, %c8_i32_78 : i32
    %234 = tpu.assume_multiple %233, 8 : i32
    %235 = arith.index_cast %234 : i32 to index
    %c0_79 = arith.constant 0 : index
    %236 = vector.load %arg7[%235, %c0_79] : memref<128x64xf32, #tpu.memory_space<vmem>>, vector<8x64xf32>
    %c0_80 = arith.constant 0 : index
    %c0_81 = arith.constant 0 : index
    %237 = vector.load %arg2[%c0_80, %c0_81] : memref<16x64xf32, #tpu.memory_space<vmem>>, vector<16x64xf32>
    %cst_82 = arith.constant dense<0.000000e+00> : vector<8x64xf32>
    %238 = tpu.matmul %223, %237, %cst_82 {dimension_numbers = #tpu.dot_dimension_numbers<[1], [0], [0], [1], [0, 0, 1, 1], [], []>} : vector<8x16xf32>, vector<16x64xf32>, vector<8x64xf32> -> vector<8x64xf32>
    %239 = arith.addf %236, %238 : vector<8x64xf32>
    %240 = vector.extract_strided_slice %239 {offsets = [0, 0], sizes = [8, 48], strides = [1, 1]} : vector<8x64xf32> to vector<8x48xf32>
    %241 = arith.negf %240 : vector<8x48xf32>
    %242 = math.exp %241 : vector<8x48xf32>
    %cst_83 = arith.constant 1.000000e+00 : f32
    %243 = vector.broadcast %cst_83 : f32 to vector<8x48xf32>
    %244 = arith.addf %243, %242 : vector<8x48xf32>
    %245 = arith.divf %243, %244 : vector<8x48xf32>
    %246 = vector.extract_strided_slice %239 {offsets = [0, 48], sizes = [8, 16], strides = [1, 1]} : vector<8x64xf32> to vector<8x16xf32>
    %247 = math.tanh %246 : vector<8x16xf32>
    %248 = vector.extract_strided_slice %245 {offsets = [0, 0], sizes = [8, 16], strides = [1, 1]} : vector<8x48xf32> to vector<8x16xf32>
    %249 = vector.extract_strided_slice %245 {offsets = [0, 16], sizes = [8, 16], strides = [1, 1]} : vector<8x48xf32> to vector<8x16xf32>
    %250 = vector.extract_strided_slice %245 {offsets = [0, 32], sizes = [8, 16], strides = [1, 1]} : vector<8x48xf32> to vector<8x16xf32>
    %251 = arith.mulf %249, %221 : vector<8x16xf32>
    %252 = arith.mulf %248, %247 : vector<8x16xf32>
    %253 = arith.addf %251, %252 : vector<8x16xf32>
    %254 = math.tanh %253 : vector<8x16xf32>
    %255 = arith.mulf %250, %254 : vector<8x16xf32>
    %256 = vector.extract_strided_slice %255 {offsets = [0, 0], sizes = [8, 8], strides = [1, 1]} : vector<8x16xf32> to vector<8x8xf32>
    %257 = arith.index_cast %234 : i32 to index
    %c0_84 = arith.constant 0 : index
    %258 = vector.load %arg6[%257, %c0_84] : memref<128x16xf32, #tpu.memory_space<vmem>>, vector<8x8xf32>
    tpu.vector_store %arg6[%257, %c0_84], %256 {strides = array<i32>} : memref<128x16xf32, #tpu.memory_space<vmem>>, vector<8x8xf32>,
    %c15_i32_85 = arith.constant 15 : i32
    %259 = arith.subi %c15_i32_85, %c7_i32 : i32
    %c8_i32_86 = arith.constant 8 : i32
    %260 = arith.muli %259, %c8_i32_86 : i32
    %261 = tpu.assume_multiple %260, 8 : i32
    %262 = vector.extract_strided_slice %255 {offsets = [0, 8], sizes = [8, 8], strides = [1, 1]} : vector<8x16xf32> to vector<8x8xf32>
    %263 = arith.index_cast %261 : i32 to index
    %c8_87 = arith.constant 8 : index
    %264 = vector.load %arg6[%263, %c8_87] : memref<128x16xf32, #tpu.memory_space<vmem>>, vector<8x8xf32>
    tpu.vector_store %arg6[%263, %c8_87], %262 {strides = array<i32>} : memref<128x16xf32, #tpu.memory_space<vmem>>, vector<8x8xf32>,
    %c8_i32_88 = arith.constant 8 : i32
    %c8_i32_89 = arith.constant 8 : i32
    %265 = arith.muli %c8_i32_88, %c8_i32_89 : i32
    %266 = tpu.assume_multiple %265, 8 : i32
    %267 = arith.index_cast %266 : i32 to index
    %c0_90 = arith.constant 0 : index
    %268 = vector.load %arg7[%267, %c0_90] : memref<128x64xf32, #tpu.memory_space<vmem>>, vector<8x64xf32>
    %c0_91 = arith.constant 0 : index
    %c0_92 = arith.constant 0 : index
    %269 = vector.load %arg2[%c0_91, %c0_92] : memref<16x64xf32, #tpu.memory_space<vmem>>, vector<16x64xf32>
    %cst_93 = arith.constant dense<0.000000e+00> : vector<8x64xf32>
    %270 = tpu.matmul %255, %269, %cst_93 {dimension_numbers = #tpu.dot_dimension_numbers<[1], [0], [0], [1], [0, 0, 1, 1], [], []>} : vector<8x16xf32>, vector<16x64xf32>, vector<8x64xf32> -> vector<8x64xf32>
    %271 = arith.addf %268, %270 : vector<8x64xf32>
    %272 = vector.extract_strided_slice %271 {offsets = [0, 0], sizes = [8, 48], strides = [1, 1]} : vector<8x64xf32> to vector<8x48xf32>
    %273 = arith.negf %272 : vector<8x48xf32>
    %274 = math.exp %273 : vector<8x48xf32>
    %cst_94 = arith.constant 1.000000e+00 : f32
    %275 = vector.broadcast %cst_94 : f32 to vector<8x48xf32>
    %276 = arith.addf %275, %274 : vector<8x48xf32>
    %277 = arith.divf %275, %276 : vector<8x48xf32>
    %278 = vector.extract_strided_slice %271 {offsets = [0, 48], sizes = [8, 16], strides = [1, 1]} : vector<8x64xf32> to vector<8x16xf32>
    %279 = math.tanh %278 : vector<8x16xf32>
    %280 = vector.extract_strided_slice %277 {offsets = [0, 0], sizes = [8, 16], strides = [1, 1]} : vector<8x48xf32> to vector<8x16xf32>
    %281 = vector.extract_strided_slice %277 {offsets = [0, 16], sizes = [8, 16], strides = [1, 1]} : vector<8x48xf32> to vector<8x16xf32>
    %282 = vector.extract_strided_slice %277 {offsets = [0, 32], sizes = [8, 16], strides = [1, 1]} : vector<8x48xf32> to vector<8x16xf32>
    %283 = arith.mulf %281, %253 : vector<8x16xf32>
    %284 = arith.mulf %280, %279 : vector<8x16xf32>
    %285 = arith.addf %283, %284 : vector<8x16xf32>
    %286 = math.tanh %285 : vector<8x16xf32>
    %287 = arith.mulf %282, %286 : vector<8x16xf32>
    %288 = vector.extract_strided_slice %287 {offsets = [0, 0], sizes = [8, 8], strides = [1, 1]} : vector<8x16xf32> to vector<8x8xf32>
    %289 = arith.index_cast %266 : i32 to index
    %c0_95 = arith.constant 0 : index
    %290 = vector.load %arg6[%289, %c0_95] : memref<128x16xf32, #tpu.memory_space<vmem>>, vector<8x8xf32>
    tpu.vector_store %arg6[%289, %c0_95], %288 {strides = array<i32>} : memref<128x16xf32, #tpu.memory_space<vmem>>, vector<8x8xf32>,
    %c15_i32_96 = arith.constant 15 : i32
    %291 = arith.subi %c15_i32_96, %c8_i32_88 : i32
    %c8_i32_97 = arith.constant 8 : i32
    %292 = arith.muli %291, %c8_i32_97 : i32
    %293 = tpu.assume_multiple %292, 8 : i32
    %294 = vector.extract_strided_slice %287 {offsets = [0, 8], sizes = [8, 8], strides = [1, 1]} : vector<8x16xf32> to vector<8x8xf32>
    %295 = arith.index_cast %293 : i32 to index
    %c8_98 = arith.constant 8 : index
    %296 = vector.load %arg6[%295, %c8_98] : memref<128x16xf32, #tpu.memory_space<vmem>>, vector<8x8xf32>
    tpu.vector_store %arg6[%295, %c8_98], %294 {strides = array<i32>} : memref<128x16xf32, #tpu.memory_space<vmem>>, vector<8x8xf32>,
    %c9_i32 = arith.constant 9 : i32
    %c8_i32_99 = arith.constant 8 : i32
    %297 = arith.muli %c9_i32, %c8_i32_99 : i32
    %298 = tpu.assume_multiple %297, 8 : i32
    %299 = arith.index_cast %298 : i32 to index
    %c0_100 = arith.constant 0 : index
    %300 = vector.load %arg7[%299, %c0_100] : memref<128x64xf32, #tpu.memory_space<vmem>>, vector<8x64xf32>
    %c0_101 = arith.constant 0 : index
    %c0_102 = arith.constant 0 : index
    %301 = vector.load %arg2[%c0_101, %c0_102] : memref<16x64xf32, #tpu.memory_space<vmem>>, vector<16x64xf32>
    %cst_103 = arith.constant dense<0.000000e+00> : vector<8x64xf32>
    %302 = tpu.matmul %287, %301, %cst_103 {dimension_numbers = #tpu.dot_dimension_numbers<[1], [0], [0], [1], [0, 0, 1, 1], [], []>} : vector<8x16xf32>, vector<16x64xf32>, vector<8x64xf32> -> vector<8x64xf32>
    %303 = arith.addf %300, %302 : vector<8x64xf32>
    %304 = vector.extract_strided_slice %303 {offsets = [0, 0], sizes = [8, 48], strides = [1, 1]} : vector<8x64xf32> to vector<8x48xf32>
    %305 = arith.negf %304 : vector<8x48xf32>
    %306 = math.exp %305 : vector<8x48xf32>
    %cst_104 = arith.constant 1.000000e+00 : f32
    %307 = vector.broadcast %cst_104 : f32 to vector<8x48xf32>
    %308 = arith.addf %307, %306 : vector<8x48xf32>
    %309 = arith.divf %307, %308 : vector<8x48xf32>
    %310 = vector.extract_strided_slice %303 {offsets = [0, 48], sizes = [8, 16], strides = [1, 1]} : vector<8x64xf32> to vector<8x16xf32>
    %311 = math.tanh %310 : vector<8x16xf32>
    %312 = vector.extract_strided_slice %309 {offsets = [0, 0], sizes = [8, 16], strides = [1, 1]} : vector<8x48xf32> to vector<8x16xf32>
    %313 = vector.extract_strided_slice %309 {offsets = [0, 16], sizes = [8, 16], strides = [1, 1]} : vector<8x48xf32> to vector<8x16xf32>
    %314 = vector.extract_strided_slice %309 {offsets = [0, 32], sizes = [8, 16], strides = [1, 1]} : vector<8x48xf32> to vector<8x16xf32>
    %315 = arith.mulf %313, %285 : vector<8x16xf32>
    %316 = arith.mulf %312, %311 : vector<8x16xf32>
    %317 = arith.addf %315, %316 : vector<8x16xf32>
    %318 = math.tanh %317 : vector<8x16xf32>
    %319 = arith.mulf %314, %318 : vector<8x16xf32>
    %320 = vector.extract_strided_slice %319 {offsets = [0, 0], sizes = [8, 8], strides = [1, 1]} : vector<8x16xf32> to vector<8x8xf32>
    %321 = arith.index_cast %298 : i32 to index
    %c0_105 = arith.constant 0 : index
    %322 = vector.load %arg6[%321, %c0_105] : memref<128x16xf32, #tpu.memory_space<vmem>>, vector<8x8xf32>
    tpu.vector_store %arg6[%321, %c0_105], %320 {strides = array<i32>} : memref<128x16xf32, #tpu.memory_space<vmem>>, vector<8x8xf32>,
    %c15_i32_106 = arith.constant 15 : i32
    %323 = arith.subi %c15_i32_106, %c9_i32 : i32
    %c8_i32_107 = arith.constant 8 : i32
    %324 = arith.muli %323, %c8_i32_107 : i32
    %325 = tpu.assume_multiple %324, 8 : i32
    %326 = vector.extract_strided_slice %319 {offsets = [0, 8], sizes = [8, 8], strides = [1, 1]} : vector<8x16xf32> to vector<8x8xf32>
    %327 = arith.index_cast %325 : i32 to index
    %c8_108 = arith.constant 8 : index
    %328 = vector.load %arg6[%327, %c8_108] : memref<128x16xf32, #tpu.memory_space<vmem>>, vector<8x8xf32>
    tpu.vector_store %arg6[%327, %c8_108], %326 {strides = array<i32>} : memref<128x16xf32, #tpu.memory_space<vmem>>, vector<8x8xf32>,
    %c10_i32 = arith.constant 10 : i32
    %c8_i32_109 = arith.constant 8 : i32
    %329 = arith.muli %c10_i32, %c8_i32_109 : i32
    %330 = tpu.assume_multiple %329, 8 : i32
    %331 = arith.index_cast %330 : i32 to index
    %c0_110 = arith.constant 0 : index
    %332 = vector.load %arg7[%331, %c0_110] : memref<128x64xf32, #tpu.memory_space<vmem>>, vector<8x64xf32>
    %c0_111 = arith.constant 0 : index
    %c0_112 = arith.constant 0 : index
    %333 = vector.load %arg2[%c0_111, %c0_112] : memref<16x64xf32, #tpu.memory_space<vmem>>, vector<16x64xf32>
    %cst_113 = arith.constant dense<0.000000e+00> : vector<8x64xf32>
    %334 = tpu.matmul %319, %333, %cst_113 {dimension_numbers = #tpu.dot_dimension_numbers<[1], [0], [0], [1], [0, 0, 1, 1], [], []>} : vector<8x16xf32>, vector<16x64xf32>, vector<8x64xf32> -> vector<8x64xf32>
    %335 = arith.addf %332, %334 : vector<8x64xf32>
    %336 = vector.extract_strided_slice %335 {offsets = [0, 0], sizes = [8, 48], strides = [1, 1]} : vector<8x64xf32> to vector<8x48xf32>
    %337 = arith.negf %336 : vector<8x48xf32>
    %338 = math.exp %337 : vector<8x48xf32>
    %cst_114 = arith.constant 1.000000e+00 : f32
    %339 = vector.broadcast %cst_114 : f32 to vector<8x48xf32>
    %340 = arith.addf %339, %338 : vector<8x48xf32>
    %341 = arith.divf %339, %340 : vector<8x48xf32>
    %342 = vector.extract_strided_slice %335 {offsets = [0, 48], sizes = [8, 16], strides = [1, 1]} : vector<8x64xf32> to vector<8x16xf32>
    %343 = math.tanh %342 : vector<8x16xf32>
    %344 = vector.extract_strided_slice %341 {offsets = [0, 0], sizes = [8, 16], strides = [1, 1]} : vector<8x48xf32> to vector<8x16xf32>
    %345 = vector.extract_strided_slice %341 {offsets = [0, 16], sizes = [8, 16], strides = [1, 1]} : vector<8x48xf32> to vector<8x16xf32>
    %346 = vector.extract_strided_slice %341 {offsets = [0, 32], sizes = [8, 16], strides = [1, 1]} : vector<8x48xf32> to vector<8x16xf32>
    %347 = arith.mulf %345, %317 : vector<8x16xf32>
    %348 = arith.mulf %344, %343 : vector<8x16xf32>
    %349 = arith.addf %347, %348 : vector<8x16xf32>
    %350 = math.tanh %349 : vector<8x16xf32>
    %351 = arith.mulf %346, %350 : vector<8x16xf32>
    %352 = vector.extract_strided_slice %351 {offsets = [0, 0], sizes = [8, 8], strides = [1, 1]} : vector<8x16xf32> to vector<8x8xf32>
    %353 = arith.index_cast %330 : i32 to index
    %c0_115 = arith.constant 0 : index
    %354 = vector.load %arg6[%353, %c0_115] : memref<128x16xf32, #tpu.memory_space<vmem>>, vector<8x8xf32>
    tpu.vector_store %arg6[%353, %c0_115], %352 {strides = array<i32>} : memref<128x16xf32, #tpu.memory_space<vmem>>, vector<8x8xf32>,
    %c15_i32_116 = arith.constant 15 : i32
    %355 = arith.subi %c15_i32_116, %c10_i32 : i32
    %c8_i32_117 = arith.constant 8 : i32
    %356 = arith.muli %355, %c8_i32_117 : i32
    %357 = tpu.assume_multiple %356, 8 : i32
    %358 = vector.extract_strided_slice %351 {offsets = [0, 8], sizes = [8, 8], strides = [1, 1]} : vector<8x16xf32> to vector<8x8xf32>
    %359 = arith.index_cast %357 : i32 to index
    %c8_118 = arith.constant 8 : index
    %360 = vector.load %arg6[%359, %c8_118] : memref<128x16xf32, #tpu.memory_space<vmem>>, vector<8x8xf32>
    tpu.vector_store %arg6[%359, %c8_118], %358 {strides = array<i32>} : memref<128x16xf32, #tpu.memory_space<vmem>>, vector<8x8xf32>,
    %c11_i32 = arith.constant 11 : i32
    %c8_i32_119 = arith.constant 8 : i32
    %361 = arith.muli %c11_i32, %c8_i32_119 : i32
    %362 = tpu.assume_multiple %361, 8 : i32
    %363 = arith.index_cast %362 : i32 to index
    %c0_120 = arith.constant 0 : index
    %364 = vector.load %arg7[%363, %c0_120] : memref<128x64xf32, #tpu.memory_space<vmem>>, vector<8x64xf32>
    %c0_121 = arith.constant 0 : index
    %c0_122 = arith.constant 0 : index
    %365 = vector.load %arg2[%c0_121, %c0_122] : memref<16x64xf32, #tpu.memory_space<vmem>>, vector<16x64xf32>
    %cst_123 = arith.constant dense<0.000000e+00> : vector<8x64xf32>
    %366 = tpu.matmul %351, %365, %cst_123 {dimension_numbers = #tpu.dot_dimension_numbers<[1], [0], [0], [1], [0, 0, 1, 1], [], []>} : vector<8x16xf32>, vector<16x64xf32>, vector<8x64xf32> -> vector<8x64xf32>
    %367 = arith.addf %364, %366 : vector<8x64xf32>
    %368 = vector.extract_strided_slice %367 {offsets = [0, 0], sizes = [8, 48], strides = [1, 1]} : vector<8x64xf32> to vector<8x48xf32>
    %369 = arith.negf %368 : vector<8x48xf32>
    %370 = math.exp %369 : vector<8x48xf32>
    %cst_124 = arith.constant 1.000000e+00 : f32
    %371 = vector.broadcast %cst_124 : f32 to vector<8x48xf32>
    %372 = arith.addf %371, %370 : vector<8x48xf32>
    %373 = arith.divf %371, %372 : vector<8x48xf32>
    %374 = vector.extract_strided_slice %367 {offsets = [0, 48], sizes = [8, 16], strides = [1, 1]} : vector<8x64xf32> to vector<8x16xf32>
    %375 = math.tanh %374 : vector<8x16xf32>
    %376 = vector.extract_strided_slice %373 {offsets = [0, 0], sizes = [8, 16], strides = [1, 1]} : vector<8x48xf32> to vector<8x16xf32>
    %377 = vector.extract_strided_slice %373 {offsets = [0, 16], sizes = [8, 16], strides = [1, 1]} : vector<8x48xf32> to vector<8x16xf32>
    %378 = vector.extract_strided_slice %373 {offsets = [0, 32], sizes = [8, 16], strides = [1, 1]} : vector<8x48xf32> to vector<8x16xf32>
    %379 = arith.mulf %377, %349 : vector<8x16xf32>
    %380 = arith.mulf %376, %375 : vector<8x16xf32>
    %381 = arith.addf %379, %380 : vector<8x16xf32>
    %382 = math.tanh %381 : vector<8x16xf32>
    %383 = arith.mulf %378, %382 : vector<8x16xf32>
    %384 = vector.extract_strided_slice %383 {offsets = [0, 0], sizes = [8, 8], strides = [1, 1]} : vector<8x16xf32> to vector<8x8xf32>
    %385 = arith.index_cast %362 : i32 to index
    %c0_125 = arith.constant 0 : index
    %386 = vector.load %arg6[%385, %c0_125] : memref<128x16xf32, #tpu.memory_space<vmem>>, vector<8x8xf32>
    tpu.vector_store %arg6[%385, %c0_125], %384 {strides = array<i32>} : memref<128x16xf32, #tpu.memory_space<vmem>>, vector<8x8xf32>,
    %c15_i32_126 = arith.constant 15 : i32
    %387 = arith.subi %c15_i32_126, %c11_i32 : i32
    %c8_i32_127 = arith.constant 8 : i32
    %388 = arith.muli %387, %c8_i32_127 : i32
    %389 = tpu.assume_multiple %388, 8 : i32
    %390 = vector.extract_strided_slice %383 {offsets = [0, 8], sizes = [8, 8], strides = [1, 1]} : vector<8x16xf32> to vector<8x8xf32>
    %391 = arith.index_cast %389 : i32 to index
    %c8_128 = arith.constant 8 : index
    %392 = vector.load %arg6[%391, %c8_128] : memref<128x16xf32, #tpu.memory_space<vmem>>, vector<8x8xf32>
    tpu.vector_store %arg6[%391, %c8_128], %390 {strides = array<i32>} : memref<128x16xf32, #tpu.memory_space<vmem>>, vector<8x8xf32>,
    %c12_i32 = arith.constant 12 : i32
    %c8_i32_129 = arith.constant 8 : i32
    %393 = arith.muli %c12_i32, %c8_i32_129 : i32
    %394 = tpu.assume_multiple %393, 8 : i32
    %395 = arith.index_cast %394 : i32 to index
    %c0_130 = arith.constant 0 : index
    %396 = vector.load %arg7[%395, %c0_130] : memref<128x64xf32, #tpu.memory_space<vmem>>, vector<8x64xf32>
    %c0_131 = arith.constant 0 : index
    %c0_132 = arith.constant 0 : index
    %397 = vector.load %arg2[%c0_131, %c0_132] : memref<16x64xf32, #tpu.memory_space<vmem>>, vector<16x64xf32>
    %cst_133 = arith.constant dense<0.000000e+00> : vector<8x64xf32>
    %398 = tpu.matmul %383, %397, %cst_133 {dimension_numbers = #tpu.dot_dimension_numbers<[1], [0], [0], [1], [0, 0, 1, 1], [], []>} : vector<8x16xf32>, vector<16x64xf32>, vector<8x64xf32> -> vector<8x64xf32>
    %399 = arith.addf %396, %398 : vector<8x64xf32>
    %400 = vector.extract_strided_slice %399 {offsets = [0, 0], sizes = [8, 48], strides = [1, 1]} : vector<8x64xf32> to vector<8x48xf32>
    %401 = arith.negf %400 : vector<8x48xf32>
    %402 = math.exp %401 : vector<8x48xf32>
    %cst_134 = arith.constant 1.000000e+00 : f32
    %403 = vector.broadcast %cst_134 : f32 to vector<8x48xf32>
    %404 = arith.addf %403, %402 : vector<8x48xf32>
    %405 = arith.divf %403, %404 : vector<8x48xf32>
    %406 = vector.extract_strided_slice %399 {offsets = [0, 48], sizes = [8, 16], strides = [1, 1]} : vector<8x64xf32> to vector<8x16xf32>
    %407 = math.tanh %406 : vector<8x16xf32>
    %408 = vector.extract_strided_slice %405 {offsets = [0, 0], sizes = [8, 16], strides = [1, 1]} : vector<8x48xf32> to vector<8x16xf32>
    %409 = vector.extract_strided_slice %405 {offsets = [0, 16], sizes = [8, 16], strides = [1, 1]} : vector<8x48xf32> to vector<8x16xf32>
    %410 = vector.extract_strided_slice %405 {offsets = [0, 32], sizes = [8, 16], strides = [1, 1]} : vector<8x48xf32> to vector<8x16xf32>
    %411 = arith.mulf %409, %381 : vector<8x16xf32>
    %412 = arith.mulf %408, %407 : vector<8x16xf32>
    %413 = arith.addf %411, %412 : vector<8x16xf32>
    %414 = math.tanh %413 : vector<8x16xf32>
    %415 = arith.mulf %410, %414 : vector<8x16xf32>
    %416 = vector.extract_strided_slice %415 {offsets = [0, 0], sizes = [8, 8], strides = [1, 1]} : vector<8x16xf32> to vector<8x8xf32>
    %417 = arith.index_cast %394 : i32 to index
    %c0_135 = arith.constant 0 : index
    %418 = vector.load %arg6[%417, %c0_135] : memref<128x16xf32, #tpu.memory_space<vmem>>, vector<8x8xf32>
    tpu.vector_store %arg6[%417, %c0_135], %416 {strides = array<i32>} : memref<128x16xf32, #tpu.memory_space<vmem>>, vector<8x8xf32>,
    %c15_i32_136 = arith.constant 15 : i32
    %419 = arith.subi %c15_i32_136, %c12_i32 : i32
    %c8_i32_137 = arith.constant 8 : i32
    %420 = arith.muli %419, %c8_i32_137 : i32
    %421 = tpu.assume_multiple %420, 8 : i32
    %422 = vector.extract_strided_slice %415 {offsets = [0, 8], sizes = [8, 8], strides = [1, 1]} : vector<8x16xf32> to vector<8x8xf32>
    %423 = arith.index_cast %421 : i32 to index
    %c8_138 = arith.constant 8 : index
    %424 = vector.load %arg6[%423, %c8_138] : memref<128x16xf32, #tpu.memory_space<vmem>>, vector<8x8xf32>
    tpu.vector_store %arg6[%423, %c8_138], %422 {strides = array<i32>} : memref<128x16xf32, #tpu.memory_space<vmem>>, vector<8x8xf32>,
    %c13_i32 = arith.constant 13 : i32
    %c8_i32_139 = arith.constant 8 : i32
    %425 = arith.muli %c13_i32, %c8_i32_139 : i32
    %426 = tpu.assume_multiple %425, 8 : i32
    %427 = arith.index_cast %426 : i32 to index
    %c0_140 = arith.constant 0 : index
    %428 = vector.load %arg7[%427, %c0_140] : memref<128x64xf32, #tpu.memory_space<vmem>>, vector<8x64xf32>
    %c0_141 = arith.constant 0 : index
    %c0_142 = arith.constant 0 : index
    %429 = vector.load %arg2[%c0_141, %c0_142] : memref<16x64xf32, #tpu.memory_space<vmem>>, vector<16x64xf32>
    %cst_143 = arith.constant dense<0.000000e+00> : vector<8x64xf32>
    %430 = tpu.matmul %415, %429, %cst_143 {dimension_numbers = #tpu.dot_dimension_numbers<[1], [0], [0], [1], [0, 0, 1, 1], [], []>} : vector<8x16xf32>, vector<16x64xf32>, vector<8x64xf32> -> vector<8x64xf32>
    %431 = arith.addf %428, %430 : vector<8x64xf32>
    %432 = vector.extract_strided_slice %431 {offsets = [0, 0], sizes = [8, 48], strides = [1, 1]} : vector<8x64xf32> to vector<8x48xf32>
    %433 = arith.negf %432 : vector<8x48xf32>
    %434 = math.exp %433 : vector<8x48xf32>
    %cst_144 = arith.constant 1.000000e+00 : f32
    %435 = vector.broadcast %cst_144 : f32 to vector<8x48xf32>
    %436 = arith.addf %435, %434 : vector<8x48xf32>
    %437 = arith.divf %435, %436 : vector<8x48xf32>
    %438 = vector.extract_strided_slice %431 {offsets = [0, 48], sizes = [8, 16], strides = [1, 1]} : vector<8x64xf32> to vector<8x16xf32>
    %439 = math.tanh %438 : vector<8x16xf32>
    %440 = vector.extract_strided_slice %437 {offsets = [0, 0], sizes = [8, 16], strides = [1, 1]} : vector<8x48xf32> to vector<8x16xf32>
    %441 = vector.extract_strided_slice %437 {offsets = [0, 16], sizes = [8, 16], strides = [1, 1]} : vector<8x48xf32> to vector<8x16xf32>
    %442 = vector.extract_strided_slice %437 {offsets = [0, 32], sizes = [8, 16], strides = [1, 1]} : vector<8x48xf32> to vector<8x16xf32>
    %443 = arith.mulf %441, %413 : vector<8x16xf32>
    %444 = arith.mulf %440, %439 : vector<8x16xf32>
    %445 = arith.addf %443, %444 : vector<8x16xf32>
    %446 = math.tanh %445 : vector<8x16xf32>
    %447 = arith.mulf %442, %446 : vector<8x16xf32>
    %448 = vector.extract_strided_slice %447 {offsets = [0, 0], sizes = [8, 8], strides = [1, 1]} : vector<8x16xf32> to vector<8x8xf32>
    %449 = arith.index_cast %426 : i32 to index
    %c0_145 = arith.constant 0 : index
    %450 = vector.load %arg6[%449, %c0_145] : memref<128x16xf32, #tpu.memory_space<vmem>>, vector<8x8xf32>
    tpu.vector_store %arg6[%449, %c0_145], %448 {strides = array<i32>} : memref<128x16xf32, #tpu.memory_space<vmem>>, vector<8x8xf32>,
    %c15_i32_146 = arith.constant 15 : i32
    %451 = arith.subi %c15_i32_146, %c13_i32 : i32
    %c8_i32_147 = arith.constant 8 : i32
    %452 = arith.muli %451, %c8_i32_147 : i32
    %453 = tpu.assume_multiple %452, 8 : i32
    %454 = vector.extract_strided_slice %447 {offsets = [0, 8], sizes = [8, 8], strides = [1, 1]} : vector<8x16xf32> to vector<8x8xf32>
    %455 = arith.index_cast %453 : i32 to index
    %c8_148 = arith.constant 8 : index
    %456 = vector.load %arg6[%455, %c8_148] : memref<128x16xf32, #tpu.memory_space<vmem>>, vector<8x8xf32>
    tpu.vector_store %arg6[%455, %c8_148], %454 {strides = array<i32>} : memref<128x16xf32, #tpu.memory_space<vmem>>, vector<8x8xf32>,
    %c14_i32 = arith.constant 14 : i32
    %c8_i32_149 = arith.constant 8 : i32
    %457 = arith.muli %c14_i32, %c8_i32_149 : i32
    %458 = tpu.assume_multiple %457, 8 : i32
    %459 = arith.index_cast %458 : i32 to index
    %c0_150 = arith.constant 0 : index
    %460 = vector.load %arg7[%459, %c0_150] : memref<128x64xf32, #tpu.memory_space<vmem>>, vector<8x64xf32>
    %c0_151 = arith.constant 0 : index
    %c0_152 = arith.constant 0 : index
    %461 = vector.load %arg2[%c0_151, %c0_152] : memref<16x64xf32, #tpu.memory_space<vmem>>, vector<16x64xf32>
    %cst_153 = arith.constant dense<0.000000e+00> : vector<8x64xf32>
    %462 = tpu.matmul %447, %461, %cst_153 {dimension_numbers = #tpu.dot_dimension_numbers<[1], [0], [0], [1], [0, 0, 1, 1], [], []>} : vector<8x16xf32>, vector<16x64xf32>, vector<8x64xf32> -> vector<8x64xf32>
    %463 = arith.addf %460, %462 : vector<8x64xf32>
    %464 = vector.extract_strided_slice %463 {offsets = [0, 0], sizes = [8, 48], strides = [1, 1]} : vector<8x64xf32> to vector<8x48xf32>
    %465 = arith.negf %464 : vector<8x48xf32>
    %466 = math.exp %465 : vector<8x48xf32>
    %cst_154 = arith.constant 1.000000e+00 : f32
    %467 = vector.broadcast %cst_154 : f32 to vector<8x48xf32>
    %468 = arith.addf %467, %466 : vector<8x48xf32>
    %469 = arith.divf %467, %468 : vector<8x48xf32>
    %470 = vector.extract_strided_slice %463 {offsets = [0, 48], sizes = [8, 16], strides = [1, 1]} : vector<8x64xf32> to vector<8x16xf32>
    %471 = math.tanh %470 : vector<8x16xf32>
    %472 = vector.extract_strided_slice %469 {offsets = [0, 0], sizes = [8, 16], strides = [1, 1]} : vector<8x48xf32> to vector<8x16xf32>
    %473 = vector.extract_strided_slice %469 {offsets = [0, 16], sizes = [8, 16], strides = [1, 1]} : vector<8x48xf32> to vector<8x16xf32>
    %474 = vector.extract_strided_slice %469 {offsets = [0, 32], sizes = [8, 16], strides = [1, 1]} : vector<8x48xf32> to vector<8x16xf32>
    %475 = arith.mulf %473, %445 : vector<8x16xf32>
    %476 = arith.mulf %472, %471 : vector<8x16xf32>
    %477 = arith.addf %475, %476 : vector<8x16xf32>
    %478 = math.tanh %477 : vector<8x16xf32>
    %479 = arith.mulf %474, %478 : vector<8x16xf32>
    %480 = vector.extract_strided_slice %479 {offsets = [0, 0], sizes = [8, 8], strides = [1, 1]} : vector<8x16xf32> to vector<8x8xf32>
    %481 = arith.index_cast %458 : i32 to index
    %c0_155 = arith.constant 0 : index
    %482 = vector.load %arg6[%481, %c0_155] : memref<128x16xf32, #tpu.memory_space<vmem>>, vector<8x8xf32>
    tpu.vector_store %arg6[%481, %c0_155], %480 {strides = array<i32>} : memref<128x16xf32, #tpu.memory_space<vmem>>, vector<8x8xf32>,
    %c15_i32_156 = arith.constant 15 : i32
    %483 = arith.subi %c15_i32_156, %c14_i32 : i32
    %c8_i32_157 = arith.constant 8 : i32
    %484 = arith.muli %483, %c8_i32_157 : i32
    %485 = tpu.assume_multiple %484, 8 : i32
    %486 = vector.extract_strided_slice %479 {offsets = [0, 8], sizes = [8, 8], strides = [1, 1]} : vector<8x16xf32> to vector<8x8xf32>
    %487 = arith.index_cast %485 : i32 to index
    %c8_158 = arith.constant 8 : index
    %488 = vector.load %arg6[%487, %c8_158] : memref<128x16xf32, #tpu.memory_space<vmem>>, vector<8x8xf32>
    tpu.vector_store %arg6[%487, %c8_158], %486 {strides = array<i32>} : memref<128x16xf32, #tpu.memory_space<vmem>>, vector<8x8xf32>,
    %c15_i32_159 = arith.constant 15 : i32
    %c8_i32_160 = arith.constant 8 : i32
    %489 = arith.muli %c15_i32_159, %c8_i32_160 : i32
    %490 = tpu.assume_multiple %489, 8 : i32
    %491 = arith.index_cast %490 : i32 to index
    %c0_161 = arith.constant 0 : index
    %492 = vector.load %arg7[%491, %c0_161] : memref<128x64xf32, #tpu.memory_space<vmem>>, vector<8x64xf32>
    %c0_162 = arith.constant 0 : index
    %c0_163 = arith.constant 0 : index
    %493 = vector.load %arg2[%c0_162, %c0_163] : memref<16x64xf32, #tpu.memory_space<vmem>>, vector<16x64xf32>
    %cst_164 = arith.constant dense<0.000000e+00> : vector<8x64xf32>
    %494 = tpu.matmul %479, %493, %cst_164 {dimension_numbers = #tpu.dot_dimension_numbers<[1], [0], [0], [1], [0, 0, 1, 1], [], []>} : vector<8x16xf32>, vector<16x64xf32>, vector<8x64xf32> -> vector<8x64xf32>
    %495 = arith.addf %492, %494 : vector<8x64xf32>
    %496 = vector.extract_strided_slice %495 {offsets = [0, 0], sizes = [8, 48], strides = [1, 1]} : vector<8x64xf32> to vector<8x48xf32>
    %497 = arith.negf %496 : vector<8x48xf32>
    %498 = math.exp %497 : vector<8x48xf32>
    %cst_165 = arith.constant 1.000000e+00 : f32
    %499 = vector.broadcast %cst_165 : f32 to vector<8x48xf32>
    %500 = arith.addf %499, %498 : vector<8x48xf32>
    %501 = arith.divf %499, %500 : vector<8x48xf32>
    %502 = vector.extract_strided_slice %495 {offsets = [0, 48], sizes = [8, 16], strides = [1, 1]} : vector<8x64xf32> to vector<8x16xf32>
    %503 = math.tanh %502 : vector<8x16xf32>
    %504 = vector.extract_strided_slice %501 {offsets = [0, 0], sizes = [8, 16], strides = [1, 1]} : vector<8x48xf32> to vector<8x16xf32>
    %505 = vector.extract_strided_slice %501 {offsets = [0, 16], sizes = [8, 16], strides = [1, 1]} : vector<8x48xf32> to vector<8x16xf32>
    %506 = vector.extract_strided_slice %501 {offsets = [0, 32], sizes = [8, 16], strides = [1, 1]} : vector<8x48xf32> to vector<8x16xf32>
    %507 = arith.mulf %505, %477 : vector<8x16xf32>
    %508 = arith.mulf %504, %503 : vector<8x16xf32>
    %509 = arith.addf %507, %508 : vector<8x16xf32>
    %510 = math.tanh %509 : vector<8x16xf32>
    %511 = arith.mulf %506, %510 : vector<8x16xf32>
    %512 = vector.extract_strided_slice %511 {offsets = [0, 0], sizes = [8, 8], strides = [1, 1]} : vector<8x16xf32> to vector<8x8xf32>
    %513 = arith.index_cast %490 : i32 to index
    %c0_166 = arith.constant 0 : index
    %514 = vector.load %arg6[%513, %c0_166] : memref<128x16xf32, #tpu.memory_space<vmem>>, vector<8x8xf32>
    tpu.vector_store %arg6[%513, %c0_166], %512 {strides = array<i32>} : memref<128x16xf32, #tpu.memory_space<vmem>>, vector<8x8xf32>,
    %c15_i32_167 = arith.constant 15 : i32
    %515 = arith.subi %c15_i32_167, %c15_i32_159 : i32
    %c8_i32_168 = arith.constant 8 : i32
    %516 = arith.muli %515, %c8_i32_168 : i32
    %517 = tpu.assume_multiple %516, 8 : i32
    %518 = vector.extract_strided_slice %511 {offsets = [0, 8], sizes = [8, 8], strides = [1, 1]} : vector<8x16xf32> to vector<8x8xf32>
    %519 = arith.index_cast %517 : i32 to index
    %c8_169 = arith.constant 8 : index
    %520 = vector.load %arg6[%519, %c8_169] : memref<128x16xf32, #tpu.memory_space<vmem>>, vector<8x8xf32>
    tpu.vector_store %arg6[%519, %c8_169], %518 {strides = array<i32>} : memref<128x16xf32, #tpu.memory_space<vmem>>, vector<8x8xf32>,
    %c16_i32 = arith.constant 16 : i32
    return
  }
}

</mosaic_0001>

<llo_original>
// kernel: mv_lstm_forward.2
$region0: #{mv_lstm_forward.2}
  #allocation0 [shape = 'u32[]', space=smem, size = 0x4, offset = 0x4, fixed_abs, tag = 'smem constant byte address 0x4 - core index']
  #allocation1 [shape = 'u32[144,128]{1,0:T(1,128)}', space=vmem, size = 0x12000, scoped, tag = 'internal scratch']
  #allocation2 [shape = 'f32[128,64]{1,0:T(8,128)}', space=vmem, size = 0x10000, scoped, tag = 'scratch operand']
  %s0 = inlined_call_operand.vmem [shape: f32[128,32], index: 0, kind: input, shape index: {}]
  %s1 = inlined_call_operand.vmem [shape: f32[32,64], index: 1, kind: input, shape index: {}]
  %s2 = inlined_call_operand.vmem [shape: f32[16,64], index: 2, kind: input, shape index: {}]
  %s3 = inlined_call_operand.vmem [shape: f32[1,64], index: 3, kind: input, shape index: {}]
  %s4 = inlined_call_operand.vmem [shape: f32[8,16], index: 4, kind: input, shape index: {}]
  %s5 = inlined_call_operand.vmem [shape: f32[8,16], index: 5, kind: input, shape index: {}]
  %s6 = inlined_call_operand.vmem [shape: f32[128,16], index: 6, kind: output, shape index: {}]
  %s7 = sld [smem:[#allocation0]]
  $region34: #{mv_lstm_forward.2} parent=0
    _
  %s9 = ssub.s32 1, %s7
  %s10 = scalar_select 0, %s9, %s7
  // Predicated region
  $region2: #{mv_lstm_forward.2} parent=0 // pred_check
    _
  $region3: #{mv_lstm_forward.2} parent=0 // pred_check_branch
    %12 = sbr.rel (0) target = $region5
  $region4: #{mv_lstm_forward.2} parent=0 // pred_region
    _
  $region5: #{mv_lstm_forward.2} parent=0 // pred_fallthru
    _
  // Predicated region
  $region6: #{mv_lstm_forward.2} parent=0 // pred_check
    _
  $region7: #{mv_lstm_forward.2} parent=0 // pred_check_branch
    %14 = sbr.rel (0) target = $region9
  $region8: #{mv_lstm_forward.2} parent=0 // pred_region
    _
  $region9: #{mv_lstm_forward.2} parent=0 // pred_fallthru
    _
  // Predicated region
  $region10: #{mv_lstm_forward.2} parent=0 // pred_check
    _
  $region11: #{mv_lstm_forward.2} parent=0 // pred_check_branch
    %16 = sbr.rel (0) target = $region13
  $region12: #{mv_lstm_forward.2} parent=0 // pred_region
    _
  $region13: #{mv_lstm_forward.2} parent=0 // pred_fallthru
    _
  // Predicated region
  $region14: #{mv_lstm_forward.2} parent=0 // pred_check
    _
  $region15: #{mv_lstm_forward.2} parent=0 // pred_check_branch
    %18 = sbr.rel (0) target = $region17
  $region16: #{mv_lstm_forward.2} parent=0 // pred_region
    _
  $region17: #{mv_lstm_forward.2} parent=0 // pred_fallthru
    _
  // Predicated region
  $region18: #{mv_lstm_forward.2} parent=0 // pred_check
    _
  $region19: #{mv_lstm_forward.2} parent=0 // pred_check_branch
    %20 = sbr.rel (0) target = $region21
  $region20: #{mv_lstm_forward.2} parent=0 // pred_region
    _
  $region21: #{mv_lstm_forward.2} parent=0 // pred_fallthru
    _
  // Predicated region
  $region22: #{mv_lstm_forward.2} parent=0 // pred_check
    _
  $region23: #{mv_lstm_forward.2} parent=0 // pred_check_branch
    %22 = sbr.rel (0) target = $region25
  $region24: #{mv_lstm_forward.2} parent=0 // pred_region
    _
  $region25: #{mv_lstm_forward.2} parent=0 // pred_fallthru
    _
  %v23 = vld [vmem:[%s0] sm:$0xff]
  %v24 = vld [vmem:[%s0 + $0x8] sm:$0xff]
  %v25 = vld [vmem:[%s0 + $0x10] sm:$0xff]
  %v26 = vld [vmem:[%s0 + $0x18] sm:$0xff]
  %v27 = vld [vmem:[%s0 + $0x20] sm:$0xff]
  %v28 = vld [vmem:[%s0 + $0x28] sm:$0xff]
  %v29 = vld [vmem:[%s0 + $0x30] sm:$0xff]
  %v30 = vld [vmem:[%s0 + $0x38] sm:$0xff]
  %v31 = vld [vmem:[%s0 + $0x40] sm:$0xff]
  %v32 = vld [vmem:[%s0 + $0x48] sm:$0xff]
  %v33 = vld [vmem:[%s0 + $0x50] sm:$0xff]
  %v34 = vld [vmem:[%s0 + $0x58] sm:$0xff]
  %v35 = vld [vmem:[%s0 + $0x60] sm:$0xff]
  %v36 = vld [vmem:[%s0 + $0x68] sm:$0xff]
  %v37 = vld [vmem:[%s0 + $0x70] sm:$0xff]
  %v38 = vld [vmem:[%s0 + $0x78] sm:$0xff]
  %v39 = vld [vmem:[%s1] sm:$0xff]
  %v40 = vld [vmem:[%s1 + $0x8] sm:$0xff]
  %v41 = vld [vmem:[%s1 + $0x10] sm:$0xff]
  %v42 = vld [vmem:[%s1 + $0x18] sm:$0xff]
  %v43 = vld [vmem:[%s3] sm:$0x1]
  %v45 = vlaneseq
  %v46 = vshrl.u32 %v45, 7
  %v47 = vsub.s32 0, %v46
  %v48 = vrot.slane %v43, %v47
  %vm50 = vcmask 261120
  %v52 = vsel %vm50, %v23, 0
  %v55 = vsel %vm50, %v24, 0
  %v58 = vsel %vm50, %v25, 0
  %v61 = vsel %vm50, %v26, 0
  %v64 = vsel %vm50, %v27, 0
  %v67 = vsel %vm50, %v28, 0
  %v70 = vsel %vm50, %v29, 0
  %v73 = vsel %vm50, %v30, 0
  %v76 = vsel %vm50, %v31, 0
  %v79 = vsel %vm50, %v32, 0
  %v82 = vsel %vm50, %v33, 0
  %v85 = vsel %vm50, %v34, 0
  %v88 = vsel %vm50, %v35, 0
  %v91 = vsel %vm50, %v36, 0
  %v94 = vsel %vm50, %v37, 0
  %v97 = vsel %vm50, %v38, 0
  %99 = vmatprep.subr.mxu0 0.0
  %100 = vmatpush1.msra.mxu0 %v39
  %101 = vmatprep.subr.mxu0 0.0
  %102 = vmatpush1.msra.mxu0 %v40
  %103 = vmatprep.subr.mxu0 0.0
  %104 = vmatpush1.msra.mxu0 %v41
  %105 = vmatprep.subr.mxu0 0.0
  %106 = vmatpush1.msra.mxu0 %v42
  %107 = vmatprep.subr.mxu0 0.0
  %108 = vmatpush1.msra.mxu0 0.0
  %109 = vmatprep.subr.mxu0 0.0
  %110 = vmatpush1.msra.mxu0 0.0
  %111 = vmatprep.subr.mxu0 0.0
  %112 = vmatpush1.msra.mxu0 0.0
  %113 = vmatprep.subr.mxu0 0.0
  %114 = vmatpush1.msra.mxu0 0.0
  %115 = vmatprep.subr.mxu0 0.0
  %116 = vmatpush1.msra.mxu0 0.0
  %117 = vmatprep.subr.mxu0 0.0
  %118 = vmatpush1.msra.mxu0 0.0
  %119 = vmatprep.subr.mxu0 0.0
  %120 = vmatpush1.msra.mxu0 0.0
  %121 = vmatprep.subr.mxu0 0.0
  %122 = vmatpush1.msra.mxu0 0.0
  %123 = vmatprep.subr.mxu0 0.0
  %124 = vmatpush1.msra.mxu0 0.0
  %125 = vmatprep.subr.mxu0 0.0
  %126 = vmatpush1.msra.mxu0 0.0
  %127 = vmatprep.subr.mxu0 0.0
  %128 = vmatpush1.msra.mxu0 0.0
  %129 = vmatprep.subr.mxu0 0.0
  %130 = vmatpush1.msra.mxu0 0.0
  %131 = vmatprep.subr.mxu0 0.0
  %132 = vmatpush1.msra.mxu0 0.0
  %133 = vmatprep.subr.mxu0 0.0
  %134 = vmatpush1.msra.mxu0 0.0
  %135 = vmatprep.subr.mxu0 0.0
  %136 = vmatpush1.msra.mxu0 0.0
  %137 = vmatprep.subr.mxu0 0.0
  %138 = vmatpush1.msra.mxu0 0.0
  %139 = vmatprep.subr.mxu0 0.0
  %140 = vmatpush1.msra.mxu0 0.0
  %141 = vmatprep.subr.mxu0 0.0
  %142 = vmatpush1.msra.mxu0 0.0
  %143 = vmatprep.subr.mxu0 0.0
  %144 = vmatpush1.msra.mxu0 0.0
  %145 = vmatprep.subr.mxu0 0.0
  %146 = vmatpush1.msra.mxu0 0.0
  %147 = vmatprep.subr.mxu0 0.0
  %148 = vmatpush1.msra.mxu0 0.0
  %149 = vmatprep.subr.mxu0 0.0
  %150 = vmatpush1.msra.mxu0 0.0
  %151 = vmatprep.subr.mxu0 0.0
  %152 = vmatpush1.msra.mxu0 0.0
  %153 = vmatprep.subr.mxu0 0.0
  %154 = vmatpush1.msra.mxu0 0.0
  %155 = vmatprep.subr.mxu0 0.0
  %156 = vmatpush1.msra.mxu0 0.0
  %157 = vmatprep.subr.mxu0 0.0
  %158 = vmatpush1.msra.mxu0 0.0
  %159 = vmatprep.subr.mxu0 0.0
  %160 = vmatpush1.msra.mxu0 0.0
  %161 = vmatprep.subr.mxu0 0.0
  %162 = vmatpush1.msra.mxu0 0.0
  %163 = vmatprep.mubr.f32.mxu0 0.0
  %164 = vmatmul.mubr.f32.gmra.mrb[0].mxu0 %v52
  %v165 = vpop.f32.mrb[0].mxu0
  %v166 = vadd.f32 %v48, %v165
  %v167 = vpop.f32.mrb[0].mxu0
  %168 = vmatprep.mubr.f32.mxu0 0.0
  %169 = vmatmul.mubr.f32.gmra.mrb[0].mxu0 %v55
  %v170 = vpop.f32.mrb[0].mxu0
  %v171 = vadd.f32 %v48, %v170
  %v172 = vpop.f32.mrb[0].mxu0
  %173 = vmatprep.mubr.f32.mxu0 0.0
  %174 = vmatmul.mubr.f32.gmra.mrb[0].mxu0 %v58
  %v175 = vpop.f32.mrb[0].mxu0
  %v176 = vadd.f32 %v48, %v175
  %v177 = vpop.f32.mrb[0].mxu0
  %178 = vmatprep.mubr.f32.mxu0 0.0
  %179 = vmatmul.mubr.f32.gmra.mrb[0].mxu0 %v61
  %v180 = vpop.f32.mrb[0].mxu0
  %v181 = vadd.f32 %v48, %v180
  %v182 = vpop.f32.mrb[0].mxu0
  %183 = vmatprep.mubr.f32.mxu0 0.0
  %184 = vmatmul.mubr.f32.gmra.mrb[0].mxu0 %v64
  %v185 = vpop.f32.mrb[0].mxu0
  %v186 = vadd.f32 %v48, %v185
  %v187 = vpop.f32.mrb[0].mxu0
  %188 = vmatprep.mubr.f32.mxu0 0.0
  %189 = vmatmul.mubr.f32.gmra.mrb[0].mxu0 %v67
  %v190 = vpop.f32.mrb[0].mxu0
  %v191 = vadd.f32 %v48, %v190
  %v192 = vpop.f32.mrb[0].mxu0
  %193 = vmatprep.mubr.f32.mxu0 0.0
  %194 = vmatmul.mubr.f32.gmra.mrb[0].mxu0 %v70
  %v195 = vpop.f32.mrb[0].mxu0
  %v196 = vadd.f32 %v48, %v195
  %v197 = vpop.f32.mrb[0].mxu0
  %198 = vmatprep.mubr.f32.mxu0 0.0
  %199 = vmatmul.mubr.f32.gmra.mrb[0].mxu0 %v73
  %v200 = vpop.f32.mrb[0].mxu0
  %v201 = vadd.f32 %v48, %v200
  %v202 = vpop.f32.mrb[0].mxu0
  %203 = vmatprep.mubr.f32.mxu0 0.0
  %204 = vmatmul.mubr.f32.gmra.mrb[0].mxu0 %v76
  %v205 = vpop.f32.mrb[0].mxu0
  %v206 = vadd.f32 %v48, %v205
  %v207 = vpop.f32.mrb[0].mxu0
  %208 = vmatprep.mubr.f32.mxu0 0.0
  %209 = vmatmul.mubr.f32.gmra.mrb[0].mxu0 %v79
  %v210 = vpop.f32.mrb[0].mxu0
  %v211 = vadd.f32 %v48, %v210
  %v212 = vpop.f32.mrb[0].mxu0
  %213 = vmatprep.mubr.f32.mxu0 0.0
  %214 = vmatmul.mubr.f32.gmra.mrb[0].mxu0 %v82
  %v215 = vpop.f32.mrb[0].mxu0
  %v216 = vadd.f32 %v48, %v215
  %v217 = vpop.f32.mrb[0].mxu0
  %218 = vmatprep.mubr.f32.mxu0 0.0
  %219 = vmatmul.mubr.f32.gmra.mrb[0].mxu0 %v85
  %v220 = vpop.f32.mrb[0].mxu0
  %v221 = vadd.f32 %v48, %v220
  %v222 = vpop.f32.mrb[0].mxu0
  %223 = vmatprep.mubr.f32.mxu0 0.0
  %224 = vmatmul.mubr.f32.gmra.mrb[0].mxu0 %v88
  %v225 = vpop.f32.mrb[0].mxu0
  %v226 = vadd.f32 %v48, %v225
  %v227 = vpop.f32.mrb[0].mxu0
  %228 = vmatprep.mubr.f32.mxu0 0.0
  %229 = vmatmul.mubr.f32.gmra.mrb[0].mxu0 %v91
  %v230 = vpop.f32.mrb[0].mxu0
  %v231 = vadd.f32 %v48, %v230
  %v232 = vpop.f32.mrb[0].mxu0
  %233 = vmatprep.mubr.f32.mxu0 0.0
  %234 = vmatmul.mubr.f32.gmra.mrb[0].mxu0 %v94
  %v235 = vpop.f32.mrb[0].mxu0
  %v236 = vadd.f32 %v48, %v235
  %v237 = vpop.f32.mrb[0].mxu0
  %238 = vmatprep.mubr.f32.mxu0 0.0
  %239 = vmatmul.mubr.f32.gmra.mrb[0].mxu0 %v97
  %v240 = vpop.f32.mrb[0].mxu0
  %v241 = vadd.f32 %v48, %v240
  %v242 = vpop.f32.mrb[0].mxu0
  %243 = vdwg.mxu0
  %vm244 = vcmask 523264
  %245 = vst.msk [vmem:[#allocation2] sm:$0xff] %vm244, %v166
  %246 = vst.msk [vmem:[#allocation2 + $0x8] sm:$0xff] %vm244, %v171
  %247 = vst.msk [vmem:[#allocation2 + $0x10] sm:$0xff] %vm244, %v176
  %248 = vst.msk [vmem:[#allocation2 + $0x18] sm:$0xff] %vm244, %v181
  %249 = vst.msk [vmem:[#allocation2 + $0x20] sm:$0xff] %vm244, %v186
  %250 = vst.msk [vmem:[#allocation2 + $0x28] sm:$0xff] %vm244, %v191
  %251 = vst.msk [vmem:[#allocation2 + $0x30] sm:$0xff] %vm244, %v196
  %252 = vst.msk [vmem:[#allocation2 + $0x38] sm:$0xff] %vm244, %v201
  %253 = vst.msk [vmem:[#allocation2 + $0x40] sm:$0xff] %vm244, %v206
  %254 = vst.msk [vmem:[#allocation2 + $0x48] sm:$0xff] %vm244, %v211
  %255 = vst.msk [vmem:[#allocation2 + $0x50] sm:$0xff] %vm244, %v216
  %256 = vst.msk [vmem:[#allocation2 + $0x58] sm:$0xff] %vm244, %v221
  %257 = vst.msk [vmem:[#allocation2 + $0x60] sm:$0xff] %vm244, %v226
  %258 = vst.msk [vmem:[#allocation2 + $0x68] sm:$0xff] %vm244, %v231
  %259 = vst.msk [vmem:[#allocation2 + $0x70] sm:$0xff] %vm244, %v236
  %260 = vst.msk [vmem:[#allocation2 + $0x78] sm:$0xff] %vm244, %v241
  %v261 = vld [vmem:[%s4] sm:$0xff]
  %v262 = vld [vmem:[%s5] sm:$0xff]
  %v263 = vld [vmem:[#allocation2] sm:$0xff]
  %v264 = vld [vmem:[%s2] sm:$0xff]
  %v265 = vld [vmem:[%s2 + $0x8] sm:$0xff]
  %vm266 = vcmask 130048
  %v268 = vsel %vm266, %v261, 0
  %270 = vmatprep.subr.mxu0 0.0
  %271 = vmatpush1.msra.mxu0 %v264
  %272 = vmatprep.subr.mxu0 0.0
  %273 = vmatpush1.msra.mxu0 %v265
  %274 = vmatprep.subr.mxu0 0.0
  %275 = vmatpush1.msra.mxu0 0.0
  %276 = vmatprep.subr.mxu0 0.0
  %277 = vmatpush1.msra.mxu0 0.0
  %278 = vmatprep.subr.mxu0 0.0
  %279 = vmatpush1.msra.mxu0 0.0
  %280 = vmatprep.subr.mxu0 0.0
  %281 = vmatpush1.msra.mxu0 0.0
  %282 = vmatprep.subr.mxu0 0.0
  %283 = vmatpush1.msra.mxu0 0.0
  %284 = vmatprep.subr.mxu0 0.0
  %285 = vmatpush1.msra.mxu0 0.0
  %286 = vmatprep.subr.mxu0 0.0
  %287 = vmatpush1.msra.mxu0 0.0
  %288 = vmatprep.subr.mxu0 0.0
  %289 = vmatpush1.msra.mxu0 0.0
  %290 = vmatprep.subr.mxu0 0.0
  %291 = vmatpush1.msra.mxu0 0.0
  %292 = vmatprep.subr.mxu0 0.0
  %293 = vmatpush1.msra.mxu0 0.0
  %294 = vmatprep.subr.mxu0 0.0
  %295 = vmatpush1.msra.mxu0 0.0
  %296 = vmatprep.subr.mxu0 0.0
  %297 = vmatpush1.msra.mxu0 0.0
  %298 = vmatprep.subr.mxu0 0.0
  %299 = vmatpush1.msra.mxu0 0.0
  %300 = vmatprep.subr.mxu0 0.0
  %301 = vmatpush1.msra.mxu0 0.0
  %302 = vmatprep.subr.mxu0 0.0
  %303 = vmatpush1.msra.mxu0 0.0
  %304 = vmatprep.subr.mxu0 0.0
  %305 = vmatpush1.msra.mxu0 0.0
  %306 = vmatprep.subr.mxu0 0.0
  %307 = vmatpush1.msra.mxu0 0.0
  %308 = vmatprep.subr.mxu0 0.0
  %309 = vmatpush1.msra.mxu0 0.0
  %310 = vmatprep.subr.mxu0 0.0
  %311 = vmatpush1.msra.mxu0 0.0
  %312 = vmatprep.subr.mxu0 0.0
  %313 = vmatpush1.msra.mxu0 0.0
  %314 = vmatprep.subr.mxu0 0.0
  %315 = vmatpush1.msra.mxu0 0.0
  %316 = vmatprep.subr.mxu0 0.0
  %317 = vmatpush1.msra.mxu0 0.0
  %318 = vmatprep.subr.mxu0 0.0
  %319 = vmatpush1.msra.mxu0 0.0
  %320 = vmatprep.subr.mxu0 0.0
  %321 = vmatpush1.msra.mxu0 0.0
  %322 = vmatprep.subr.mxu0 0.0
  %323 = vmatpush1.msra.mxu0 0.0
  %324 = vmatprep.subr.mxu0 0.0
  %325 = vmatpush1.msra.mxu0 0.0
  %326 = vmatprep.subr.mxu0 0.0
  %327 = vmatpush1.msra.mxu0 0.0
  %328 = vmatprep.subr.mxu0 0.0
  %329 = vmatpush1.msra.mxu0 0.0
  %330 = vmatprep.subr.mxu0 0.0
  %331 = vmatpush1.msra.mxu0 0.0
  %332 = vmatprep.subr.mxu0 0.0
  %333 = vmatpush1.msra.mxu0 0.0
  %334 = vmatprep.mubr.f32.mxu0 0.0
  %335 = vmatmul.mubr.f32.gmra.mrb[0].mxu0 %v268
  %v336 = vpop.f32.mrb[0].mxu0
  %v337 = vadd.f32 0.0, %v336
  %v338 = vpop.f32.mrb[0].mxu0
  %339 = vdwg.mxu0
  %v340 = vadd.f32 %v263, %v337
  %v341 = vxor.u32 %v340, 2147483648
  %v342 = vmul.f32 %v341, 1.442695
  %v343 = vpow.pop %v342
  %v344 = vadd.f32 %v343, 1.0
  %v345 = vrcp.pop %v344
  %v346 = vmul.f32 1.0, %v345
  %v347 = vtanh.pop %v340
  %349 = vrot.lane.b32.xlu0 %v262, 16
  %v350 = vpop.permute.xlu0 %349
  %v352 = vmul.f32 %v346, %v350
  %354 = vrot.lane.b32.xlu0 %v347, 80
  %v355 = vpop.permute.xlu0 %354
  %v357 = vmul.f32 %v346, %v355
  %359 = vrot.lane.b32.xlu0 %v357, 16
  %v360 = vpop.permute.xlu0 %359
  %v362 = vadd.f32 %v352, %v360
  %v363 = vtanh.pop %v362
  %365 = vrot.lane.b32.xlu0 %v363, 16
  %v366 = vpop.permute.xlu0 %365
  %v368 = vmul.f32 %v346, %v366
  %370 = vrot.lane.b32.xlu0 %v368, 96
  %v371 = vpop.permute.xlu0 %370
  %vm373 = vcmask 64512
  %374 = vst.msk [vmem:[%s6] sm:$0xff] %vm373, %v371
  %s375 = scalar_lea.vmem %s6, 120
  %vm376 = vcmask 130112
  %377 = vst.msk [vmem:[%s375] sm:$0xff] %vm376, %v371
  %s378 = scalar_lea.vmem [#allocation2], 8
  %v379 = vld [vmem:[%s378] sm:$0xff]
  %v380 = vld [vmem:[%s2] sm:$0xff]
  %v381 = vld [vmem:[%s2 + $0x8] sm:$0xff]
  %v382 = vsel %vm266, %v371, 0
  %384 = vmatprep.subr.mxu0 0.0
  %385 = vmatpush1.msra.mxu0 %v380
  %386 = vmatprep.subr.mxu0 0.0
  %387 = vmatpush1.msra.mxu0 %v381
  %388 = vmatprep.subr.mxu0 0.0
  %389 = vmatpush1.msra.mxu0 0.0
  %390 = vmatprep.subr.mxu0 0.0
  %391 = vmatpush1.msra.mxu0 0.0
  %392 = vmatprep.subr.mxu0 0.0
  %393 = vmatpush1.msra.mxu0 0.0
  %394 = vmatprep.subr.mxu0 0.0
  %395 = vmatpush1.msra.mxu0 0.0
  %396 = vmatprep.subr.mxu0 0.0
  %397 = vmatpush1.msra.mxu0 0.0
  %398 = vmatprep.subr.mxu0 0.0
  %399 = vmatpush1.msra.mxu0 0.0
  %400 = vmatprep.subr.mxu0 0.0
  %401 = vmatpush1.msra.mxu0 0.0
  %402 = vmatprep.subr.mxu0 0.0
  %403 = vmatpush1.msra.mxu0 0.0
  %404 = vmatprep.subr.mxu0 0.0
  %405 = vmatpush1.msra.mxu0 0.0
  %406 = vmatprep.subr.mxu0 0.0
  %407 = vmatpush1.msra.mxu0 0.0
  %408 = vmatprep.subr.mxu0 0.0
  %409 = vmatpush1.msra.mxu0 0.0
  %410 = vmatprep.subr.mxu0 0.0
  %411 = vmatpush1.msra.mxu0 0.0
  %412 = vmatprep.subr.mxu0 0.0
  %413 = vmatpush1.msra.mxu0 0.0
  %414 = vmatprep.subr.mxu0 0.0
  %415 = vmatpush1.msra.mxu0 0.0
  %416 = vmatprep.subr.mxu0 0.0
  %417 = vmatpush1.msra.mxu0 0.0
  %418 = vmatprep.subr.mxu0 0.0
  %419 = vmatpush1.msra.mxu0 0.0
  %420 = vmatprep.subr.mxu0 0.0
  %421 = vmatpush1.msra.mxu0 0.0
  %422 = vmatprep.subr.mxu0 0.0
  %423 = vmatpush1.msra.mxu0 0.0
  %424 = vmatprep.subr.mxu0 0.0
  %425 = vmatpush1.msra.mxu0 0.0
  %426 = vmatprep.subr.mxu0 0.0
  %427 = vmatpush1.msra.mxu0 0.0
  %428 = vmatprep.subr.mxu0 0.0
  %429 = vmatpush1.msra.mxu0 0.0
  %430 = vmatprep.subr.mxu0 0.0
  %431 = vmatpush1.msra.mxu0 0.0
  %432 = vmatprep.subr.mxu0 0.0
  %433 = vmatpush1.msra.mxu0 0.0
  %434 = vmatprep.subr.mxu0 0.0
  %435 = vmatpush1.msra.mxu0 0.0
  %436 = vmatprep.subr.mxu0 0.0
  %437 = vmatpush1.msra.mxu0 0.0
  %438 = vmatprep.subr.mxu0 0.0
  %439 = vmatpush1.msra.mxu0 0.0
  %440 = vmatprep.subr.mxu0 0.0
  %441 = vmatpush1.msra.mxu0 0.0
  %442 = vmatprep.subr.mxu0 0.0
  %443 = vmatpush1.msra.mxu0 0.0
  %444 = vmatprep.subr.mxu0 0.0
  %445 = vmatpush1.msra.mxu0 0.0
  %446 = vmatprep.subr.mxu0 0.0
  %447 = vmatpush1.msra.mxu0 0.0
  %448 = vmatprep.mubr.f32.mxu0 0.0
  %449 = vmatmul.mubr.f32.gmra.mrb[0].mxu0 %v382
  %v450 = vpop.f32.mrb[0].mxu0
  %v451 = vadd.f32 0.0, %v450
  %v452 = vpop.f32.mrb[0].mxu0
  %453 = vdwg.mxu0
  %v454 = vadd.f32 %v379, %v451
  %v455 = vxor.u32 %v454, 2147483648
  %v456 = vmul.f32 %v455, 1.442695
  %v457 = vpow.pop %v456
  %v458 = vadd.f32 %v457, 1.0
  %v459 = vrcp.pop %v458
  %v460 = vmul.f32 1.0, %v459
  %v461 = vtanh.pop %v454
  %v462 = vmul.f32 %v460, %v362
  %464 = vrot.lane.b32.xlu0 %v461, 80
  %v465 = vpop.permute.xlu0 %464
  %v467 = vmul.f32 %v460, %v465
  %469 = vrot.lane.b32.xlu0 %v467, 16
  %v470 = vpop.permute.xlu0 %469
  %v472 = vadd.f32 %v462, %v470
  %v473 = vtanh.pop %v472
  %475 = vrot.lane.b32.xlu0 %v473, 16
  %v476 = vpop.permute.xlu0 %475
  %v478 = vmul.f32 %v460, %v476
  %480 = vrot.lane.b32.xlu0 %v478, 96
  %v481 = vpop.permute.xlu0 %480
  %s483 = scalar_lea.vmem %s6, 8
  %484 = vst.msk [vmem:[%s483] sm:$0xff] %vm373, %v481
  %s485 = scalar_lea.vmem %s6, 112
  %486 = vst.msk [vmem:[%s485] sm:$0xff] %vm376, %v481
  %s487 = scalar_lea.vmem [#allocation2], 16
  %v488 = vld [vmem:[%s487] sm:$0xff]
  %v489 = vld [vmem:[%s2] sm:$0xff]
  %v490 = vld [vmem:[%s2 + $0x8] sm:$0xff]
  %v491 = vsel %vm266, %v481, 0
  %493 = vmatprep.subr.mxu0 0.0
  %494 = vmatpush1.msra.mxu0 %v489
  %495 = vmatprep.subr.mxu0 0.0
  %496 = vmatpush1.msra.mxu0 %v490
  %497 = vmatprep.subr.mxu0 0.0
  %498 = vmatpush1.msra.mxu0 0.0
  %499 = vmatprep.subr.mxu0 0.0
  %500 = vmatpush1.msra.mxu0 0.0
  %501 = vmatprep.subr.mxu0 0.0
  %502 = vmatpush1.msra.mxu0 0.0
  %503 = vmatprep.subr.mxu0 0.0
  %504 = vmatpush1.msra.mxu0 0.0
  %505 = vmatprep.subr.mxu0 0.0
  %506 = vmatpush1.msra.mxu0 0.0
  %507 = vmatprep.subr.mxu0 0.0
  %508 = vmatpush1.msra.mxu0 0.0
  %509 = vmatprep.subr.mxu0 0.0
  %510 = vmatpush1.msra.mxu0 0.0
  %511 = vmatprep.subr.mxu0 0.0
  %512 = vmatpush1.msra.mxu0 0.0
  %513 = vmatprep.subr.mxu0 0.0
  %514 = vmatpush1.msra.mxu0 0.0
  %515 = vmatprep.subr.mxu0 0.0
  %516 = vmatpush1.msra.mxu0 0.0
  %517 = vmatprep.subr.mxu0 0.0
  %518 = vmatpush1.msra.mxu0 0.0
  %519 = vmatprep.subr.mxu0 0.0
  %520 = vmatpush1.msra.mxu0 0.0
  %521 = vmatprep.subr.mxu0 0.0
  %522 = vmatpush1.msra.mxu0 0.0
  %523 = vmatprep.subr.mxu0 0.0
  %524 = vmatpush1.msra.mxu0 0.0
  %525 = vmatprep.subr.mxu0 0.0
  %526 = vmatpush1.msra.mxu0 0.0
  %527 = vmatprep.subr.mxu0 0.0
  %528 = vmatpush1.msra.mxu0 0.0
  %529 = vmatprep.subr.mxu0 0.0
  %530 = vmatpush1.msra.mxu0 0.0
  %531 = vmatprep.subr.mxu0 0.0
  %532 = vmatpush1.msra.mxu0 0.0
  %533 = vmatprep.subr.mxu0 0.0
  %534 = vmatpush1.msra.mxu0 0.0
  %535 = vmatprep.subr.mxu0 0.0
  %536 = vmatpush1.msra.mxu0 0.0
  %537 = vmatprep.subr.mxu0 0.0
  %538 = vmatpush1.msra.mxu0 0.0
  %539 = vmatprep.subr.mxu0 0.0
  %540 = vmatpush1.msra.mxu0 0.0
  %541 = vmatprep.subr.mxu0 0.0
  %542 = vmatpush1.msra.mxu0 0.0
  %543 = vmatprep.subr.mxu0 0.0
  %544 = vmatpush1.msra.mxu0 0.0
  %545 = vmatprep.subr.mxu0 0.0
  %546 = vmatpush1.msra.mxu0 0.0
  %547 = vmatprep.subr.mxu0 0.0
  %548 = vmatpush1.msra.mxu0 0.0
  %549 = vmatprep.subr.mxu0 0.0
  %550 = vmatpush1.msra.mxu0 0.0
  %551 = vmatprep.subr.mxu0 0.0
  %552 = vmatpush1.msra.mxu0 0.0
  %553 = vmatprep.subr.mxu0 0.0
  %554 = vmatpush1.msra.mxu0 0.0
  %555 = vmatprep.subr.mxu0 0.0
  %556 = vmatpush1.msra.mxu0 0.0
  %557 = vmatprep.mubr.f32.mxu0 0.0
  %558 = vmatmul.mubr.f32.gmra.mrb[0].mxu0 %v491
  %v559 = vpop.f32.mrb[0].mxu0
  %v560 = vadd.f32 0.0, %v559
  %v561 = vpop.f32.mrb[0].mxu0
  %562 = vdwg.mxu0
  %v563 = vadd.f32 %v488, %v560
  %v564 = vxor.u32 %v563, 2147483648
  %v565 = vmul.f32 %v564, 1.442695
  %v566 = vpow.pop %v565
  %v567 = vadd.f32 %v566, 1.0
  %v568 = vrcp.pop %v567
  %v569 = vmul.f32 1.0, %v568
  %v570 = vtanh.pop %v563
  %v571 = vmul.f32 %v569, %v472
  %573 = vrot.lane.b32.xlu0 %v570, 80
  %v574 = vpop.permute.xlu0 %573
  %v576 = vmul.f32 %v569, %v574
  %578 = vrot.lane.b32.xlu0 %v576, 16
  %v579 = vpop.permute.xlu0 %578
  %v581 = vadd.f32 %v571, %v579
  %v582 = vtanh.pop %v581
  %584 = vrot.lane.b32.xlu0 %v582, 16
  %v585 = vpop.permute.xlu0 %584
  %v587 = vmul.f32 %v569, %v585
  %589 = vrot.lane.b32.xlu0 %v587, 96
  %v590 = vpop.permute.xlu0 %589
  %s592 = scalar_lea.vmem %s6, 16
  %593 = vst.msk [vmem:[%s592] sm:$0xff] %vm373, %v590
  %s594 = scalar_lea.vmem %s6, 104
  %595 = vst.msk [vmem:[%s594] sm:$0xff] %vm376, %v590
  %s596 = scalar_lea.vmem [#allocation2], 24
  %v597 = vld [vmem:[%s596] sm:$0xff]
  %v598 = vld [vmem:[%s2] sm:$0xff]
  %v599 = vld [vmem:[%s2 + $0x8] sm:$0xff]
  %v600 = vsel %vm266, %v590, 0
  %602 = vmatprep.subr.mxu0 0.0
  %603 = vmatpush1.msra.mxu0 %v598
  %604 = vmatprep.subr.mxu0 0.0
  %605 = vmatpush1.msra.mxu0 %v599
  %606 = vmatprep.subr.mxu0 0.0
  %607 = vmatpush1.msra.mxu0 0.0
  %608 = vmatprep.subr.mxu0 0.0
  %609 = vmatpush1.msra.mxu0 0.0
  %610 = vmatprep.subr.mxu0 0.0
  %611 = vmatpush1.msra.mxu0 0.0
  %612 = vmatprep.subr.mxu0 0.0
  %613 = vmatpush1.msra.mxu0 0.0
  %614 = vmatprep.subr.mxu0 0.0
  %615 = vmatpush1.msra.mxu0 0.0
  %616 = vmatprep.subr.mxu0 0.0
  %617 = vmatpush1.msra.mxu0 0.0
  %618 = vmatprep.subr.mxu0 0.0
  %619 = vmatpush1.msra.mxu0 0.0
  %620 = vmatprep.subr.mxu0 0.0
  %621 = vmatpush1.msra.mxu0 0.0
  %622 = vmatprep.subr.mxu0 0.0
  %623 = vmatpush1.msra.mxu0 0.0
  %624 = vmatprep.subr.mxu0 0.0
  %625 = vmatpush1.msra.mxu0 0.0
  %626 = vmatprep.subr.mxu0 0.0
  %627 = vmatpush1.msra.mxu0 0.0
  %628 = vmatprep.subr.mxu0 0.0
  %629 = vmatpush1.msra.mxu0 0.0
  %630 = vmatprep.subr.mxu0 0.0
  %631 = vmatpush1.msra.mxu0 0.0
  %632 = vmatprep.subr.mxu0 0.0
  %633 = vmatpush1.msra.mxu0 0.0
  %634 = vmatprep.subr.mxu0 0.0
  %635 = vmatpush1.msra.mxu0 0.0
  %636 = vmatprep.subr.mxu0 0.0
  %637 = vmatpush1.msra.mxu0 0.0
  %638 = vmatprep.subr.mxu0 0.0
  %639 = vmatpush1.msra.mxu0 0.0
  %640 = vmatprep.subr.mxu0 0.0
  %641 = vmatpush1.msra.mxu0 0.0
  %642 = vmatprep.subr.mxu0 0.0
  %643 = vmatpush1.msra.mxu0 0.0
  %644 = vmatprep.subr.mxu0 0.0
  %645 = vmatpush1.msra.mxu0 0.0
  %646 = vmatprep.subr.mxu0 0.0
  %647 = vmatpush1.msra.mxu0 0.0
  %648 = vmatprep.subr.mxu0 0.0
  %649 = vmatpush1.msra.mxu0 0.0
  %650 = vmatprep.subr.mxu0 0.0
  %651 = vmatpush1.msra.mxu0 0.0
  %652 = vmatprep.subr.mxu0 0.0
  %653 = vmatpush1.msra.mxu0 0.0
  %654 = vmatprep.subr.mxu0 0.0
  %655 = vmatpush1.msra.mxu0 0.0
  %656 = vmatprep.subr.mxu0 0.0
  %657 = vmatpush1.msra.mxu0 0.0
  %658 = vmatprep.subr.mxu0 0.0
  %659 = vmatpush1.msra.mxu0 0.0
  %660 = vmatprep.subr.mxu0 0.0
  %661 = vmatpush1.msra.mxu0 0.0
  %662 = vmatprep.subr.mxu0 0.0
  %663 = vmatpush1.msra.mxu0 0.0
  %664 = vmatprep.subr.mxu0 0.0
  %665 = vmatpush1.msra.mxu0 0.0
  %666 = vmatprep.mubr.f32.mxu0 0.0
  %667 = vmatmul.mubr.f32.gmra.mrb[0].mxu0 %v600
  %v668 = vpop.f32.mrb[0].mxu0
  %v669 = vadd.f32 0.0, %v668
  %v670 = vpop.f32.mrb[0].mxu0
  %671 = vdwg.mxu0
  %v672 = vadd.f32 %v597, %v669
  %v673 = vxor.u32 %v672, 2147483648
  %v674 = vmul.f32 %v673, 1.442695
  %v675 = vpow.pop %v674
  %v676 = vadd.f32 %v675, 1.0
  %v677 = vrcp.pop %v676
  %v678 = vmul.f32 1.0, %v677
  %v679 = vtanh.pop %v672
  %v680 = vmul.f32 %v678, %v581
  %682 = vrot.lane.b32.xlu0 %v679, 80
  %v683 = vpop.permute.xlu0 %682
  %v685 = vmul.f32 %v678, %v683
  %687 = vrot.lane.b32.xlu0 %v685, 16
  %v688 = vpop.permute.xlu0 %687
  %v690 = vadd.f32 %v680, %v688
  %v691 = vtanh.pop %v690
  %693 = vrot.lane.b32.xlu0 %v691, 16
  %v694 = vpop.permute.xlu0 %693
  %v696 = vmul.f32 %v678, %v694
  %698 = vrot.lane.b32.xlu0 %v696, 96
  %v699 = vpop.permute.xlu0 %698
  %s701 = scalar_lea.vmem %s6, 24
  %702 = vst.msk [vmem:[%s701] sm:$0xff] %vm373, %v699
  %s703 = scalar_lea.vmem %s6, 96
  %704 = vst.msk [vmem:[%s703] sm:$0xff] %vm376, %v699
  %s705 = scalar_lea.vmem [#allocation2], 32
  %v706 = vld [vmem:[%s705] sm:$0xff]
  %v707 = vld [vmem:[%s2] sm:$0xff]
  %v708 = vld [vmem:[%s2 + $0x8] sm:$0xff]
  %v709 = vsel %vm266, %v699, 0
  %711 = vmatprep.subr.mxu0 0.0
  %712 = vmatpush1.msra.mxu0 %v707
  %713 = vmatprep.subr.mxu0 0.0
  %714 = vmatpush1.msra.mxu0 %v708
  %715 = vmatprep.subr.mxu0 0.0
  %716 = vmatpush1.msra.mxu0 0.0
  %717 = vmatprep.subr.mxu0 0.0
  %718 = vmatpush1.msra.mxu0 0.0
  %719 = vmatprep.subr.mxu0 0.0
  %720 = vmatpush1.msra.mxu0 0.0
  %721 = vmatprep.subr.mxu0 0.0
  %722 = vmatpush1.msra.mxu0 0.0
  %723 = vmatprep.subr.mxu0 0.0
  %724 = vmatpush1.msra.mxu0 0.0
  %725 = vmatprep.subr.mxu0 0.0
  %726 = vmatpush1.msra.mxu0 0.0
  %727 = vmatprep.subr.mxu0 0.0
  %728 = vmatpush1.msra.mxu0 0.0
  %729 = vmatprep.subr.mxu0 0.0
  %730 = vmatpush1.msra.mxu0 0.0
  %731 = vmatprep.subr.mxu0 0.0
  %732 = vmatpush1.msra.mxu0 0.0
  %733 = vmatprep.subr.mxu0 0.0
  %734 = vmatpush1.msra.mxu0 0.0
  %735 = vmatprep.subr.mxu0 0.0
  %736 = vmatpush1.msra.mxu0 0.0
  %737 = vmatprep.subr.mxu0 0.0
  %738 = vmatpush1.msra.mxu0 0.0
  %739 = vmatprep.subr.mxu0 0.0
  %740 = vmatpush1.msra.mxu0 0.0
  %741 = vmatprep.subr.mxu0 0.0
  %742 = vmatpush1.msra.mxu0 0.0
  %743 = vmatprep.subr.mxu0 0.0
  %744 = vmatpush1.msra.mxu0 0.0
  %745 = vmatprep.subr.mxu0 0.0
  %746 = vmatpush1.msra.mxu0 0.0
  %747 = vmatprep.subr.mxu0 0.0
  %748 = vmatpush1.msra.mxu0 0.0
  %749 = vmatprep.subr.mxu0 0.0
  %750 = vmatpush1.msra.mxu0 0.0
  %751 = vmatprep.subr.mxu0 0.0
  %752 = vmatpush1.msra.mxu0 0.0
  %753 = vmatprep.subr.mxu0 0.0
  %754 = vmatpush1.msra.mxu0 0.0
  %755 = vmatprep.subr.mxu0 0.0
  %756 = vmatpush1.msra.mxu0 0.0
  %757 = vmatprep.subr.mxu0 0.0
  %758 = vmatpush1.msra.mxu0 0.0
  %759 = vmatprep.subr.mxu0 0.0
  %760 = vmatpush1.msra.mxu0 0.0
  %761 = vmatprep.subr.mxu0 0.0
  %762 = vmatpush1.msra.mxu0 0.0
  %763 = vmatprep.subr.mxu0 0.0
  %764 = vmatpush1.msra.mxu0 0.0
  %765 = vmatprep.subr.mxu0 0.0
  %766 = vmatpush1.msra.mxu0 0.0
  %767 = vmatprep.subr.mxu0 0.0
  %768 = vmatpush1.msra.mxu0 0.0
  %769 = vmatprep.subr.mxu0 0.0
  %770 = vmatpush1.msra.mxu0 0.0
  %771 = vmatprep.subr.mxu0 0.0
  %772 = vmatpush1.msra.mxu0 0.0
  %773 = vmatprep.subr.mxu0 0.0
  %774 = vmatpush1.msra.mxu0 0.0
  %775 = vmatprep.mubr.f32.mxu0 0.0
  %776 = vmatmul.mubr.f32.gmra.mrb[0].mxu0 %v709
  %v777 = vpop.f32.mrb[0].mxu0
  %v778 = vadd.f32 0.0, %v777
  %v779 = vpop.f32.mrb[0].mxu0
  %780 = vdwg.mxu0
  %v781 = vadd.f32 %v706, %v778
  %v782 = vxor.u32 %v781, 2147483648
  %v783 = vmul.f32 %v782, 1.442695
  %v784 = vpow.pop %v783
  %v785 = vadd.f32 %v784, 1.0
  %v786 = vrcp.pop %v785
  %v787 = vmul.f32 1.0, %v786
  %v788 = vtanh.pop %v781
  %v789 = vmul.f32 %v787, %v690
  %791 = vrot.lane.b32.xlu0 %v788, 80
  %v792 = vpop.permute.xlu0 %791
  %v794 = vmul.f32 %v787, %v792
  %796 = vrot.lane.b32.xlu0 %v794, 16
  %v797 = vpop.permute.xlu0 %796
  %v799 = vadd.f32 %v789, %v797
  %v800 = vtanh.pop %v799
  %802 = vrot.lane.b32.xlu0 %v800, 16
  %v803 = vpop.permute.xlu0 %802
  %v805 = vmul.f32 %v787, %v803
  %807 = vrot.lane.b32.xlu0 %v805, 96
  %v808 = vpop.permute.xlu0 %807
  %s810 = scalar_lea.vmem %s6, 32
  %811 = vst.msk [vmem:[%s810] sm:$0xff] %vm373, %v808
  %s812 = scalar_lea.vmem %s6, 88
  %813 = vst.msk [vmem:[%s812] sm:$0xff] %vm376, %v808
  %s814 = scalar_lea.vmem [#allocation2], 40
  %v815 = vld [vmem:[%s814] sm:$0xff]
  %v816 = vld [vmem:[%s2] sm:$0xff]
  %v817 = vld [vmem:[%s2 + $0x8] sm:$0xff]
  %v818 = vsel %vm266, %v808, 0
  %820 = vmatprep.subr.mxu0 0.0
  %821 = vmatpush1.msra.mxu0 %v816
  %822 = vmatprep.subr.mxu0 0.0
  %823 = vmatpush1.msra.mxu0 %v817
  %824 = vmatprep.subr.mxu0 0.0
  %825 = vmatpush1.msra.mxu0 0.0
  %826 = vmatprep.subr.mxu0 0.0
  %827 = vmatpush1.msra.mxu0 0.0
  %828 = vmatprep.subr.mxu0 0.0
  %829 = vmatpush1.msra.mxu0 0.0
  %830 = vmatprep.subr.mxu0 0.0
  %831 = vmatpush1.msra.mxu0 0.0
  %832 = vmatprep.subr.mxu0 0.0
  %833 = vmatpush1.msra.mxu0 0.0
  %834 = vmatprep.subr.mxu0 0.0
  %835 = vmatpush1.msra.mxu0 0.0
  %836 = vmatprep.subr.mxu0 0.0
  %837 = vmatpush1.msra.mxu0 0.0
  %838 = vmatprep.subr.mxu0 0.0
  %839 = vmatpush1.msra.mxu0 0.0
  %840 = vmatprep.subr.mxu0 0.0
  %841 = vmatpush1.msra.mxu0 0.0
  %842 = vmatprep.subr.mxu0 0.0
  %843 = vmatpush1.msra.mxu0 0.0
  %844 = vmatprep.subr.mxu0 0.0
  %845 = vmatpush1.msra.mxu0 0.0
  %846 = vmatprep.subr.mxu0 0.0
  %847 = vmatpush1.msra.mxu0 0.0
  %848 = vmatprep.subr.mxu0 0.0
  %849 = vmatpush1.msra.mxu0 0.0
  %850 = vmatprep.subr.mxu0 0.0
  %851 = vmatpush1.msra.mxu0 0.0
  %852 = vmatprep.subr.mxu0 0.0
  %853 = vmatpush1.msra.mxu0 0.0
  %854 = vmatprep.subr.mxu0 0.0
  %855 = vmatpush1.msra.mxu0 0.0
  %856 = vmatprep.subr.mxu0 0.0
  %857 = vmatpush1.msra.mxu0 0.0
  %858 = vmatprep.subr.mxu0 0.0
  %859 = vmatpush1.msra.mxu0 0.0
  %860 = vmatprep.subr.mxu0 0.0
  %861 = vmatpush1.msra.mxu0 0.0
  %862 = vmatprep.subr.mxu0 0.0
  %863 = vmatpush1.msra.mxu0 0.0
  %864 = vmatprep.subr.mxu0 0.0
  %865 = vmatpush1.msra.mxu0 0.0
  %866 = vmatprep.subr.mxu0 0.0
  %867 = vmatpush1.msra.mxu0 0.0
  %868 = vmatprep.subr.mxu0 0.0
  %869 = vmatpush1.msra.mxu0 0.0
  %870 = vmatprep.subr.mxu0 0.0
  %871 = vmatpush1.msra.mxu0 0.0
  %872 = vmatprep.subr.mxu0 0.0
  %873 = vmatpush1.msra.mxu0 0.0
  %874 = vmatprep.subr.mxu0 0.0
  %875 = vmatpush1.msra.mxu0 0.0
  %876 = vmatprep.subr.mxu0 0.0
  %877 = vmatpush1.msra.mxu0 0.0
  %878 = vmatprep.subr.mxu0 0.0
  %879 = vmatpush1.msra.mxu0 0.0
  %880 = vmatprep.subr.mxu0 0.0
  %881 = vmatpush1.msra.mxu0 0.0
  %882 = vmatprep.subr.mxu0 0.0
  %883 = vmatpush1.msra.mxu0 0.0
  %884 = vmatprep.mubr.f32.mxu0 0.0
  %885 = vmatmul.mubr.f32.gmra.mrb[0].mxu0 %v818
  %v886 = vpop.f32.mrb[0].mxu0
  %v887 = vadd.f32 0.0, %v886
  %v888 = vpop.f32.mrb[0].mxu0
  %889 = vdwg.mxu0
  %v890 = vadd.f32 %v815, %v887
  %v891 = vxor.u32 %v890, 2147483648
  %v892 = vmul.f32 %v891, 1.442695
  %v893 = vpow.pop %v892
  %v894 = vadd.f32 %v893, 1.0
  %v895 = vrcp.pop %v894
  %v896 = vmul.f32 1.0, %v895
  %v897 = vtanh.pop %v890
  %v898 = vmul.f32 %v896, %v799
  %900 = vrot.lane.b32.xlu0 %v897, 80
  %v901 = vpop.permute.xlu0 %900
  %v903 = vmul.f32 %v896, %v901
  %905 = vrot.lane.b32.xlu0 %v903, 16
  %v906 = vpop.permute.xlu0 %905
  %v908 = vadd.f32 %v898, %v906
  %v909 = vtanh.pop %v908
  %911 = vrot.lane.b32.xlu0 %v909, 16
  %v912 = vpop.permute.xlu0 %911
  %v914 = vmul.f32 %v896, %v912
  %916 = vrot.lane.b32.xlu0 %v914, 96
  %v917 = vpop.permute.xlu0 %916
  %s919 = scalar_lea.vmem %s6, 40
  %920 = vst.msk [vmem:[%s919] sm:$0xff] %vm373, %v917
  %s921 = scalar_lea.vmem %s6, 80
  %922 = vst.msk [vmem:[%s921] sm:$0xff] %vm376, %v917
  %s923 = scalar_lea.vmem [#allocation2], 48
  %v924 = vld [vmem:[%s923] sm:$0xff]
  %v925 = vld [vmem:[%s2] sm:$0xff]
  %v926 = vld [vmem:[%s2 + $0x8] sm:$0xff]
  %v927 = vsel %vm266, %v917, 0
  %929 = vmatprep.subr.mxu0 0.0
  %930 = vmatpush1.msra.mxu0 %v925
  %931 = vmatprep.subr.mxu0 0.0
  %932 = vmatpush1.msra.mxu0 %v926
  %933 = vmatprep.subr.mxu0 0.0
  %934 = vmatpush1.msra.mxu0 0.0
  %935 = vmatprep.subr.mxu0 0.0
  %936 = vmatpush1.msra.mxu0 0.0
  %937 = vmatprep.subr.mxu0 0.0
  %938 = vmatpush1.msra.mxu0 0.0
  %939 = vmatprep.subr.mxu0 0.0
  %940 = vmatpush1.msra.mxu0 0.0
  %941 = vmatprep.subr.mxu0 0.0
  %942 = vmatpush1.msra.mxu0 0.0
  %943 = vmatprep.subr.mxu0 0.0
  %944 = vmatpush1.msra.mxu0 0.0
  %945 = vmatprep.subr.mxu0 0.0
  %946 = vmatpush1.msra.mxu0 0.0
  %947 = vmatprep.subr.mxu0 0.0
  %948 = vmatpush1.msra.mxu0 0.0
  %949 = vmatprep.subr.mxu0 0.0
  %950 = vmatpush1.msra.mxu0 0.0
  %951 = vmatprep.subr.mxu0 0.0
  %952 = vmatpush1.msra.mxu0 0.0
  %953 = vmatprep.subr.mxu0 0.0
  %954 = vmatpush1.msra.mxu0 0.0
  %955 = vmatprep.subr.mxu0 0.0
  %956 = vmatpush1.msra.mxu0 0.0
  %957 = vmatprep.subr.mxu0 0.0
  %958 = vmatpush1.msra.mxu0 0.0
  %959 = vmatprep.subr.mxu0 0.0
  %960 = vmatpush1.msra.mxu0 0.0
  %961 = vmatprep.subr.mxu0 0.0
  %962 = vmatpush1.msra.mxu0 0.0
  %963 = vmatprep.subr.mxu0 0.0
  %964 = vmatpush1.msra.mxu0 0.0
  %965 = vmatprep.subr.mxu0 0.0
  %966 = vmatpush1.msra.mxu0 0.0
  %967 = vmatprep.subr.mxu0 0.0
  %968 = vmatpush1.msra.mxu0 0.0
  %969 = vmatprep.subr.mxu0 0.0
  %970 = vmatpush1.msra.mxu0 0.0
  %971 = vmatprep.subr.mxu0 0.0
  %972 = vmatpush1.msra.mxu0 0.0
  %973 = vmatprep.subr.mxu0 0.0
  %974 = vmatpush1.msra.mxu0 0.0
  %975 = vmatprep.subr.mxu0 0.0
  %976 = vmatpush1.msra.mxu0 0.0
  %977 = vmatprep.subr.mxu0 0.0
  %978 = vmatpush1.msra.mxu0 0.0
  %979 = vmatprep.subr.mxu0 0.0
  %980 = vmatpush1.msra.mxu0 0.0
  %981 = vmatprep.subr.mxu0 0.0
  %982 = vmatpush1.msra.mxu0 0.0
  %983 = vmatprep.subr.mxu0 0.0
  %984 = vmatpush1.msra.mxu0 0.0
  %985 = vmatprep.subr.mxu0 0.0
  %986 = vmatpush1.msra.mxu0 0.0
  %987 = vmatprep.subr.mxu0 0.0
  %988 = vmatpush1.msra.mxu0 0.0
  %989 = vmatprep.subr.mxu0 0.0
  %990 = vmatpush1.msra.mxu0 0.0
  %991 = vmatprep.subr.mxu0 0.0
  %992 = vmatpush1.msra.mxu0 0.0
  %993 = vmatprep.mubr.f32.mxu0 0.0
  %994 = vmatmul.mubr.f32.gmra.mrb[0].mxu0 %v927
  %v995 = vpop.f32.mrb[0].mxu0
  %v996 = vadd.f32 0.0, %v995
  %v997 = vpop.f32.mrb[0].mxu0
  %998 = vdwg.mxu0
  %v999 = vadd.f32 %v924, %v996
  %v1000 = vxor.u32 %v999, 2147483648
  %v1001 = vmul.f32 %v1000, 1.442695
  %v1002 = vpow.pop %v1001
  %v1003 = vadd.f32 %v1002, 1.0
  %v1004 = vrcp.pop %v1003
  %v1005 = vmul.f32 1.0, %v1004
  %v1006 = vtanh.pop %v999
  %v1007 = vmul.f32 %v1005, %v908
  %1009 = vrot.lane.b32.xlu0 %v1006, 80
  %v1010 = vpop.permute.xlu0 %1009
  %v1012 = vmul.f32 %v1005, %v1010
  %1014 = vrot.lane.b32.xlu0 %v1012, 16
  %v1015 = vpop.permute.xlu0 %1014
  %v1017 = vadd.f32 %v1007, %v1015
  %v1018 = vtanh.pop %v1017
  %1020 = vrot.lane.b32.xlu0 %v1018, 16
  %v1021 = vpop.permute.xlu0 %1020
  %v1023 = vmul.f32 %v1005, %v1021
  %1025 = vrot.lane.b32.xlu0 %v1023, 96
  %v1026 = vpop.permute.xlu0 %1025
  %s1028 = scalar_lea.vmem %s6, 48
  %1029 = vst.msk [vmem:[%s1028] sm:$0xff] %vm373, %v1026
  %s1030 = scalar_lea.vmem %s6, 72
  %1031 = vst.msk [vmem:[%s1030] sm:$0xff] %vm376, %v1026
  %s1032 = scalar_lea.vmem [#allocation2], 56
  %v1033 = vld [vmem:[%s1032] sm:$0xff]
  %v1034 = vld [vmem:[%s2] sm:$0xff]
  %v1035 = vld [vmem:[%s2 + $0x8] sm:$0xff]
  %v1036 = vsel %vm266, %v1026, 0
  %1038 = vmatprep.subr.mxu0 0.0
  %1039 = vmatpush1.msra.mxu0 %v1034
  %1040 = vmatprep.subr.mxu0 0.0
  %1041 = vmatpush1.msra.mxu0 %v1035
  %1042 = vmatprep.subr.mxu0 0.0
  %1043 = vmatpush1.msra.mxu0 0.0
  %1044 = vmatprep.subr.mxu0 0.0
  %1045 = vmatpush1.msra.mxu0 0.0
  %1046 = vmatprep.subr.mxu0 0.0
  %1047 = vmatpush1.msra.mxu0 0.0
  %1048 = vmatprep.subr.mxu0 0.0
  %1049 = vmatpush1.msra.mxu0 0.0
  %1050 = vmatprep.subr.mxu0 0.0
  %1051 = vmatpush1.msra.mxu0 0.0
  %1052 = vmatprep.subr.mxu0 0.0
  %1053 = vmatpush1.msra.mxu0 0.0
  %1054 = vmatprep.subr.mxu0 0.0
  %1055 = vmatpush1.msra.mxu0 0.0
  %1056 = vmatprep.subr.mxu0 0.0
  %1057 = vmatpush1.msra.mxu0 0.0
  %1058 = vmatprep.subr.mxu0 0.0
  %1059 = vmatpush1.msra.mxu0 0.0
  %1060 = vmatprep.subr.mxu0 0.0
  %1061 = vmatpush1.msra.mxu0 0.0
  %1062 = vmatprep.subr.mxu0 0.0
  %1063 = vmatpush1.msra.mxu0 0.0
  %1064 = vmatprep.subr.mxu0 0.0
  %1065 = vmatpush1.msra.mxu0 0.0
  %1066 = vmatprep.subr.mxu0 0.0
  %1067 = vmatpush1.msra.mxu0 0.0
  %1068 = vmatprep.subr.mxu0 0.0
  %1069 = vmatpush1.msra.mxu0 0.0
  %1070 = vmatprep.subr.mxu0 0.0
  %1071 = vmatpush1.msra.mxu0 0.0
  %1072 = vmatprep.subr.mxu0 0.0
  %1073 = vmatpush1.msra.mxu0 0.0
  %1074 = vmatprep.subr.mxu0 0.0
  %1075 = vmatpush1.msra.mxu0 0.0
  %1076 = vmatprep.subr.mxu0 0.0
  %1077 = vmatpush1.msra.mxu0 0.0
  %1078 = vmatprep.subr.mxu0 0.0
  %1079 = vmatpush1.msra.mxu0 0.0
  %1080 = vmatprep.subr.mxu0 0.0
  %1081 = vmatpush1.msra.mxu0 0.0
  %1082 = vmatprep.subr.mxu0 0.0
  %1083 = vmatpush1.msra.mxu0 0.0
  %1084 = vmatprep.subr.mxu0 0.0
  %1085 = vmatpush1.msra.mxu0 0.0
  %1086 = vmatprep.subr.mxu0 0.0
  %1087 = vmatpush1.msra.mxu0 0.0
  %1088 = vmatprep.subr.mxu0 0.0
  %1089 = vmatpush1.msra.mxu0 0.0
  %1090 = vmatprep.subr.mxu0 0.0
  %1091 = vmatpush1.msra.mxu0 0.0
  %1092 = vmatprep.subr.mxu0 0.0
  %1093 = vmatpush1.msra.mxu0 0.0
  %1094 = vmatprep.subr.mxu0 0.0
  %1095 = vmatpush1.msra.mxu0 0.0
  %1096 = vmatprep.subr.mxu0 0.0
  %1097 = vmatpush1.msra.mxu0 0.0
  %1098 = vmatprep.subr.mxu0 0.0
  %1099 = vmatpush1.msra.mxu0 0.0
  %1100 = vmatprep.subr.mxu0 0.0
  %1101 = vmatpush1.msra.mxu0 0.0
  %1102 = vmatprep.mubr.f32.mxu0 0.0
  %1103 = vmatmul.mubr.f32.gmra.mrb[0].mxu0 %v1036
  %v1104 = vpop.f32.mrb[0].mxu0
  %v1105 = vadd.f32 0.0, %v1104
  %v1106 = vpop.f32.mrb[0].mxu0
  %1107 = vdwg.mxu0
  %v1108 = vadd.f32 %v1033, %v1105
  %v1109 = vxor.u32 %v1108, 2147483648
  %v1110 = vmul.f32 %v1109, 1.442695
  %v1111 = vpow.pop %v1110
  %v1112 = vadd.f32 %v1111, 1.0
  %v1113 = vrcp.pop %v1112
  %v1114 = vmul.f32 1.0, %v1113
  %v1115 = vtanh.pop %v1108
  %v1116 = vmul.f32 %v1114, %v1017
  %1118 = vrot.lane.b32.xlu0 %v1115, 80
  %v1119 = vpop.permute.xlu0 %1118
  %v1121 = vmul.f32 %v1114, %v1119
  %1123 = vrot.lane.b32.xlu0 %v1121, 16
  %v1124 = vpop.permute.xlu0 %1123
  %v1126 = vadd.f32 %v1116, %v1124
  %v1127 = vtanh.pop %v1126
  %1129 = vrot.lane.b32.xlu0 %v1127, 16
  %v1130 = vpop.permute.xlu0 %1129
  %v1132 = vmul.f32 %v1114, %v1130
  %1134 = vrot.lane.b32.xlu0 %v1132, 96
  %v1135 = vpop.permute.xlu0 %1134
  %s1137 = scalar_lea.vmem %s6, 56
  %1138 = vst.msk [vmem:[%s1137] sm:$0xff] %vm373, %v1135
  %s1139 = scalar_lea.vmem %s6, 64
  %1140 = vst.msk [vmem:[%s1139] sm:$0xff] %vm376, %v1135
  %s1141 = scalar_lea.vmem [#allocation2], 64
  %v1142 = vld [vmem:[%s1141] sm:$0xff]
  %v1143 = vld [vmem:[%s2] sm:$0xff]
  %v1144 = vld [vmem:[%s2 + $0x8] sm:$0xff]
  %v1145 = vsel %vm266, %v1135, 0
  %1147 = vmatprep.subr.mxu0 0.0
  %1148 = vmatpush1.msra.mxu0 %v1143
  %1149 = vmatprep.subr.mxu0 0.0
  %1150 = vmatpush1.msra.mxu0 %v1144
  %1151 = vmatprep.subr.mxu0 0.0
  %1152 = vmatpush1.msra.mxu0 0.0
  %1153 = vmatprep.subr.mxu0 0.0
  %1154 = vmatpush1.msra.mxu0 0.0
  %1155 = vmatprep.subr.mxu0 0.0
  %1156 = vmatpush1.msra.mxu0 0.0
  %1157 = vmatprep.subr.mxu0 0.0
  %1158 = vmatpush1.msra.mxu0 0.0
  %1159 = vmatprep.subr.mxu0 0.0
  %1160 = vmatpush1.msra.mxu0 0.0
  %1161 = vmatprep.subr.mxu0 0.0
  %1162 = vmatpush1.msra.mxu0 0.0
  %1163 = vmatprep.subr.mxu0 0.0
  %1164 = vmatpush1.msra.mxu0 0.0
  %1165 = vmatprep.subr.mxu0 0.0
  %1166 = vmatpush1.msra.mxu0 0.0
  %1167 = vmatprep.subr.mxu0 0.0
  %1168 = vmatpush1.msra.mxu0 0.0
  %1169 = vmatprep.subr.mxu0 0.0
  %1170 = vmatpush1.msra.mxu0 0.0
  %1171 = vmatprep.subr.mxu0 0.0
  %1172 = vmatpush1.msra.mxu0 0.0
  %1173 = vmatprep.subr.mxu0 0.0
  %1174 = vmatpush1.msra.mxu0 0.0
  %1175 = vmatprep.subr.mxu0 0.0
  %1176 = vmatpush1.msra.mxu0 0.0
  %1177 = vmatprep.subr.mxu0 0.0
  %1178 = vmatpush1.msra.mxu0 0.0
  %1179 = vmatprep.subr.mxu0 0.0
  %1180 = vmatpush1.msra.mxu0 0.0
  %1181 = vmatprep.subr.mxu0 0.0
  %1182 = vmatpush1.msra.mxu0 0.0
  %1183 = vmatprep.subr.mxu0 0.0
  %1184 = vmatpush1.msra.mxu0 0.0
  %1185 = vmatprep.subr.mxu0 0.0
  %1186 = vmatpush1.msra.mxu0 0.0
  %1187 = vmatprep.subr.mxu0 0.0
  %1188 = vmatpush1.msra.mxu0 0.0
  %1189 = vmatprep.subr.mxu0 0.0
  %1190 = vmatpush1.msra.mxu0 0.0
  %1191 = vmatprep.subr.mxu0 0.0
  %1192 = vmatpush1.msra.mxu0 0.0
  %1193 = vmatprep.subr.mxu0 0.0
  %1194 = vmatpush1.msra.mxu0 0.0
  %1195 = vmatprep.subr.mxu0 0.0
  %1196 = vmatpush1.msra.mxu0 0.0
  %1197 = vmatprep.subr.mxu0 0.0
  %1198 = vmatpush1.msra.mxu0 0.0
  %1199 = vmatprep.subr.mxu0 0.0
  %1200 = vmatpush1.msra.mxu0 0.0
  %1201 = vmatprep.subr.mxu0 0.0
  %1202 = vmatpush1.msra.mxu0 0.0
  %1203 = vmatprep.subr.mxu0 0.0
  %1204 = vmatpush1.msra.mxu0 0.0
  %1205 = vmatprep.subr.mxu0 0.0
  %1206 = vmatpush1.msra.mxu0 0.0
  %1207 = vmatprep.subr.mxu0 0.0
  %1208 = vmatpush1.msra.mxu0 0.0
  %1209 = vmatprep.subr.mxu0 0.0
  %1210 = vmatpush1.msra.mxu0 0.0
  %1211 = vmatprep.mubr.f32.mxu0 0.0
  %1212 = vmatmul.mubr.f32.gmra.mrb[0].mxu0 %v1145
  %v1213 = vpop.f32.mrb[0].mxu0
  %v1214 = vadd.f32 0.0, %v1213
  %v1215 = vpop.f32.mrb[0].mxu0
  %1216 = vdwg.mxu0
  %v1217 = vadd.f32 %v1142, %v1214
  %v1218 = vxor.u32 %v1217, 2147483648
  %v1219 = vmul.f32 %v1218, 1.442695
  %v1220 = vpow.pop %v1219
  %v1221 = vadd.f32 %v1220, 1.0
  %v1222 = vrcp.pop %v1221
  %v1223 = vmul.f32 1.0, %v1222
  %v1224 = vtanh.pop %v1217
  %v1225 = vmul.f32 %v1223, %v1126
  %1227 = vrot.lane.b32.xlu0 %v1224, 80
  %v1228 = vpop.permute.xlu0 %1227
  %v1230 = vmul.f32 %v1223, %v1228
  %1232 = vrot.lane.b32.xlu0 %v1230, 16
  %v1233 = vpop.permute.xlu0 %1232
  %v1235 = vadd.f32 %v1225, %v1233
  %v1236 = vtanh.pop %v1235
  %1238 = vrot.lane.b32.xlu0 %v1236, 16
  %v1239 = vpop.permute.xlu0 %1238
  %v1241 = vmul.f32 %v1223, %v1239
  %1243 = vrot.lane.b32.xlu0 %v1241, 96
  %v1244 = vpop.permute.xlu0 %1243
  %1246 = vst.msk [vmem:[%s1139] sm:$0xff] %vm373, %v1244
  %1247 = vst.msk [vmem:[%s1137] sm:$0xff] %vm376, %v1244
  %s1248 = scalar_lea.vmem [#allocation2], 72
  %v1249 = vld [vmem:[%s1248] sm:$0xff]
  %v1250 = vld [vmem:[%s2] sm:$0xff]
  %v1251 = vld [vmem:[%s2 + $0x8] sm:$0xff]
  %v1252 = vsel %vm266, %v1244, 0
  %1254 = vmatprep.subr.mxu0 0.0
  %1255 = vmatpush1.msra.mxu0 %v1250
  %1256 = vmatprep.subr.mxu0 0.0
  %1257 = vmatpush1.msra.mxu0 %v1251
  %1258 = vmatprep.subr.mxu0 0.0
  %1259 = vmatpush1.msra.mxu0 0.0
  %1260 = vmatprep.subr.mxu0 0.0
  %1261 = vmatpush1.msra.mxu0 0.0
  %1262 = vmatprep.subr.mxu0 0.0
  %1263 = vmatpush1.msra.mxu0 0.0
  %1264 = vmatprep.subr.mxu0 0.0
  %1265 = vmatpush1.msra.mxu0 0.0
  %1266 = vmatprep.subr.mxu0 0.0
  %1267 = vmatpush1.msra.mxu0 0.0
  %1268 = vmatprep.subr.mxu0 0.0
  %1269 = vmatpush1.msra.mxu0 0.0
  %1270 = vmatprep.subr.mxu0 0.0
  %1271 = vmatpush1.msra.mxu0 0.0
  %1272 = vmatprep.subr.mxu0 0.0
  %1273 = vmatpush1.msra.mxu0 0.0
  %1274 = vmatprep.subr.mxu0 0.0
  %1275 = vmatpush1.msra.mxu0 0.0
  %1276 = vmatprep.subr.mxu0 0.0
  %1277 = vmatpush1.msra.mxu0 0.0
  %1278 = vmatprep.subr.mxu0 0.0
  %1279 = vmatpush1.msra.mxu0 0.0
  %1280 = vmatprep.subr.mxu0 0.0
  %1281 = vmatpush1.msra.mxu0 0.0
  %1282 = vmatprep.subr.mxu0 0.0
  %1283 = vmatpush1.msra.mxu0 0.0
  %1284 = vmatprep.subr.mxu0 0.0
  %1285 = vmatpush1.msra.mxu0 0.0
  %1286 = vmatprep.subr.mxu0 0.0
  %1287 = vmatpush1.msra.mxu0 0.0
  %1288 = vmatprep.subr.mxu0 0.0
  %1289 = vmatpush1.msra.mxu0 0.0
  %1290 = vmatprep.subr.mxu0 0.0
  %1291 = vmatpush1.msra.mxu0 0.0
  %1292 = vmatprep.subr.mxu0 0.0
  %1293 = vmatpush1.msra.mxu0 0.0
  %1294 = vmatprep.subr.mxu0 0.0
  %1295 = vmatpush1.msra.mxu0 0.0
  %1296 = vmatprep.subr.mxu0 0.0
  %1297 = vmatpush1.msra.mxu0 0.0
  %1298 = vmatprep.subr.mxu0 0.0
  %1299 = vmatpush1.msra.mxu0 0.0
  %1300 = vmatprep.subr.mxu0 0.0
  %1301 = vmatpush1.msra.mxu0 0.0
  %1302 = vmatprep.subr.mxu0 0.0
  %1303 = vmatpush1.msra.mxu0 0.0
  %1304 = vmatprep.subr.mxu0 0.0
  %1305 = vmatpush1.msra.mxu0 0.0
  %1306 = vmatprep.subr.mxu0 0.0
  %1307 = vmatpush1.msra.mxu0 0.0
  %1308 = vmatprep.subr.mxu0 0.0
  %1309 = vmatpush1.msra.mxu0 0.0
  %1310 = vmatprep.subr.mxu0 0.0
  %1311 = vmatpush1.msra.mxu0 0.0
  %1312 = vmatprep.subr.mxu0 0.0
  %1313 = vmatpush1.msra.mxu0 0.0
  %1314 = vmatprep.subr.mxu0 0.0
  %1315 = vmatpush1.msra.mxu0 0.0
  %1316 = vmatprep.subr.mxu0 0.0
  %1317 = vmatpush1.msra.mxu0 0.0
  %1318 = vmatprep.mubr.f32.mxu0 0.0
  %1319 = vmatmul.mubr.f32.gmra.mrb[0].mxu0 %v1252
  %v1320 = vpop.f32.mrb[0].mxu0
  %v1321 = vadd.f32 0.0, %v1320
  %v1322 = vpop.f32.mrb[0].mxu0
  %1323 = vdwg.mxu0
  %v1324 = vadd.f32 %v1249, %v1321
  %v1325 = vxor.u32 %v1324, 2147483648
  %v1326 = vmul.f32 %v1325, 1.442695
  %v1327 = vpow.pop %v1326
  %v1328 = vadd.f32 %v1327, 1.0
  %v1329 = vrcp.pop %v1328
  %v1330 = vmul.f32 1.0, %v1329
  %v1331 = vtanh.pop %v1324
  %v1332 = vmul.f32 %v1330, %v1235
  %1334 = vrot.lane.b32.xlu0 %v1331, 80
  %v1335 = vpop.permute.xlu0 %1334
  %v1337 = vmul.f32 %v1330, %v1335
  %1339 = vrot.lane.b32.xlu0 %v1337, 16
  %v1340 = vpop.permute.xlu0 %1339
  %v1342 = vadd.f32 %v1332, %v1340
  %v1343 = vtanh.pop %v1342
  %1345 = vrot.lane.b32.xlu0 %v1343, 16
  %v1346 = vpop.permute.xlu0 %1345
  %v1348 = vmul.f32 %v1330, %v1346
  %1350 = vrot.lane.b32.xlu0 %v1348, 96
  %v1351 = vpop.permute.xlu0 %1350
  %1353 = vst.msk [vmem:[%s1030] sm:$0xff] %vm373, %v1351
  %1354 = vst.msk [vmem:[%s1028] sm:$0xff] %vm376, %v1351
  %s1355 = scalar_lea.vmem [#allocation2], 80
  %v1356 = vld [vmem:[%s1355] sm:$0xff]
  %v1357 = vld [vmem:[%s2] sm:$0xff]
  %v1358 = vld [vmem:[%s2 + $0x8] sm:$0xff]
  %v1359 = vsel %vm266, %v1351, 0
  %1361 = vmatprep.subr.mxu0 0.0
  %1362 = vmatpush1.msra.mxu0 %v1357
  %1363 = vmatprep.subr.mxu0 0.0
  %1364 = vmatpush1.msra.mxu0 %v1358
  %1365 = vmatprep.subr.mxu0 0.0
  %1366 = vmatpush1.msra.mxu0 0.0
  %1367 = vmatprep.subr.mxu0 0.0
  %1368 = vmatpush1.msra.mxu0 0.0
  %1369 = vmatprep.subr.mxu0 0.0
  %1370 = vmatpush1.msra.mxu0 0.0
  %1371 = vmatprep.subr.mxu0 0.0
  %1372 = vmatpush1.msra.mxu0 0.0
  %1373 = vmatprep.subr.mxu0 0.0
  %1374 = vmatpush1.msra.mxu0 0.0
  %1375 = vmatprep.subr.mxu0 0.0
  %1376 = vmatpush1.msra.mxu0 0.0
  %1377 = vmatprep.subr.mxu0 0.0
  %1378 = vmatpush1.msra.mxu0 0.0
  %1379 = vmatprep.subr.mxu0 0.0
  %1380 = vmatpush1.msra.mxu0 0.0
  %1381 = vmatprep.subr.mxu0 0.0
  %1382 = vmatpush1.msra.mxu0 0.0
  %1383 = vmatprep.subr.mxu0 0.0
  %1384 = vmatpush1.msra.mxu0 0.0
  %1385 = vmatprep.subr.mxu0 0.0
  %1386 = vmatpush1.msra.mxu0 0.0
  %1387 = vmatprep.subr.mxu0 0.0
  %1388 = vmatpush1.msra.mxu0 0.0
  %1389 = vmatprep.subr.mxu0 0.0
  %1390 = vmatpush1.msra.mxu0 0.0
  %1391 = vmatprep.subr.mxu0 0.0
  %1392 = vmatpush1.msra.mxu0 0.0
  %1393 = vmatprep.subr.mxu0 0.0
  %1394 = vmatpush1.msra.mxu0 0.0
  %1395 = vmatprep.subr.mxu0 0.0
  %1396 = vmatpush1.msra.mxu0 0.0
  %1397 = vmatprep.subr.mxu0 0.0
  %1398 = vmatpush1.msra.mxu0 0.0
  %1399 = vmatprep.subr.mxu0 0.0
  %1400 = vmatpush1.msra.mxu0 0.0
  %1401 = vmatprep.subr.mxu0 0.0
  %1402 = vmatpush1.msra.mxu0 0.0
  %1403 = vmatprep.subr.mxu0 0.0
  %1404 = vmatpush1.msra.mxu0 0.0
  %1405 = vmatprep.subr.mxu0 0.0
  %1406 = vmatpush1.msra.mxu0 0.0
  %1407 = vmatprep.subr.mxu0 0.0
  %1408 = vmatpush1.msra.mxu0 0.0
  %1409 = vmatprep.subr.mxu0 0.0
  %1410 = vmatpush1.msra.mxu0 0.0
  %1411 = vmatprep.subr.mxu0 0.0
  %1412 = vmatpush1.msra.mxu0 0.0
  %1413 = vmatprep.subr.mxu0 0.0
  %1414 = vmatpush1.msra.mxu0 0.0
  %1415 = vmatprep.subr.mxu0 0.0
  %1416 = vmatpush1.msra.mxu0 0.0
  %1417 = vmatprep.subr.mxu0 0.0
  %1418 = vmatpush1.msra.mxu0 0.0
  %1419 = vmatprep.subr.mxu0 0.0
  %1420 = vmatpush1.msra.mxu0 0.0
  %1421 = vmatprep.subr.mxu0 0.0
  %1422 = vmatpush1.msra.mxu0 0.0
  %1423 = vmatprep.subr.mxu0 0.0
  %1424 = vmatpush1.msra.mxu0 0.0
  %1425 = vmatprep.mubr.f32.mxu0 0.0
  %1426 = vmatmul.mubr.f32.gmra.mrb[0].mxu0 %v1359
  %v1427 = vpop.f32.mrb[0].mxu0
  %v1428 = vadd.f32 0.0, %v1427
  %v1429 = vpop.f32.mrb[0].mxu0
  %1430 = vdwg.mxu0
  %v1431 = vadd.f32 %v1356, %v1428
  %v1432 = vxor.u32 %v1431, 2147483648
  %v1433 = vmul.f32 %v1432, 1.442695
  %v1434 = vpow.pop %v1433
  %v1435 = vadd.f32 %v1434, 1.0
  %v1436 = vrcp.pop %v1435
  %v1437 = vmul.f32 1.0, %v1436
  %v1438 = vtanh.pop %v1431
  %v1439 = vmul.f32 %v1437, %v1342
  %1441 = vrot.lane.b32.xlu0 %v1438, 80
  %v1442 = vpop.permute.xlu0 %1441
  %v1444 = vmul.f32 %v1437, %v1442
  %1446 = vrot.lane.b32.xlu0 %v1444, 16
  %v1447 = vpop.permute.xlu0 %1446
  %v1449 = vadd.f32 %v1439, %v1447
  %v1450 = vtanh.pop %v1449
  %1452 = vrot.lane.b32.xlu0 %v1450, 16
  %v1453 = vpop.permute.xlu0 %1452
  %v1455 = vmul.f32 %v1437, %v1453
  %1457 = vrot.lane.b32.xlu0 %v1455, 96
  %v1458 = vpop.permute.xlu0 %1457
  %1460 = vst.msk [vmem:[%s921] sm:$0xff] %vm373, %v1458
  %1461 = vst.msk [vmem:[%s919] sm:$0xff] %vm376, %v1458
  %s1462 = scalar_lea.vmem [#allocation2], 88
  %v1463 = vld [vmem:[%s1462] sm:$0xff]
  %v1464 = vld [vmem:[%s2] sm:$0xff]
  %v1465 = vld [vmem:[%s2 + $0x8] sm:$0xff]
  %v1466 = vsel %vm266, %v1458, 0
  %1468 = vmatprep.subr.mxu0 0.0
  %1469 = vmatpush1.msra.mxu0 %v1464
  %1470 = vmatprep.subr.mxu0 0.0
  %1471 = vmatpush1.msra.mxu0 %v1465
  %1472 = vmatprep.subr.mxu0 0.0
  %1473 = vmatpush1.msra.mxu0 0.0
  %1474 = vmatprep.subr.mxu0 0.0
  %1475 = vmatpush1.msra.mxu0 0.0
  %1476 = vmatprep.subr.mxu0 0.0
  %1477 = vmatpush1.msra.mxu0 0.0
  %1478 = vmatprep.subr.mxu0 0.0
  %1479 = vmatpush1.msra.mxu0 0.0
  %1480 = vmatprep.subr.mxu0 0.0
  %1481 = vmatpush1.msra.mxu0 0.0
  %1482 = vmatprep.subr.mxu0 0.0
  %1483 = vmatpush1.msra.mxu0 0.0
  %1484 = vmatprep.subr.mxu0 0.0
  %1485 = vmatpush1.msra.mxu0 0.0
  %1486 = vmatprep.subr.mxu0 0.0
  %1487 = vmatpush1.msra.mxu0 0.0
  %1488 = vmatprep.subr.mxu0 0.0
  %1489 = vmatpush1.msra.mxu0 0.0
  %1490 = vmatprep.subr.mxu0 0.0
  %1491 = vmatpush1.msra.mxu0 0.0
  %1492 = vmatprep.subr.mxu0 0.0
  %1493 = vmatpush1.msra.mxu0 0.0
  %1494 = vmatprep.subr.mxu0 0.0
  %1495 = vmatpush1.msra.mxu0 0.0
  %1496 = vmatprep.subr.mxu0 0.0
  %1497 = vmatpush1.msra.mxu0 0.0
  %1498 = vmatprep.subr.mxu0 0.0
  %1499 = vmatpush1.msra.mxu0 0.0
  %1500 = vmatprep.subr.mxu0 0.0
  %1501 = vmatpush1.msra.mxu0 0.0
  %1502 = vmatprep.subr.mxu0 0.0
  %1503 = vmatpush1.msra.mxu0 0.0
  %1504 = vmatprep.subr.mxu0 0.0
  %1505 = vmatpush1.msra.mxu0 0.0
  %1506 = vmatprep.subr.mxu0 0.0
  %1507 = vmatpush1.msra.mxu0 0.0
  %1508 = vmatprep.subr.mxu0 0.0
  %1509 = vmatpush1.msra.mxu0 0.0
  %1510 = vmatprep.subr.mxu0 0.0
  %1511 = vmatpush1.msra.mxu0 0.0
  %1512 = vmatprep.subr.mxu0 0.0
  %1513 = vmatpush1.msra.mxu0 0.0
  %1514 = vmatprep.subr.mxu0 0.0
  %1515 = vmatpush1.msra.mxu0 0.0
  %1516 = vmatprep.subr.mxu0 0.0
  %1517 = vmatpush1.msra.mxu0 0.0
  %1518 = vmatprep.subr.mxu0 0.0
  %1519 = vmatpush1.msra.mxu0 0.0
  %1520 = vmatprep.subr.mxu0 0.0
  %1521 = vmatpush1.msra.mxu0 0.0
  %1522 = vmatprep.subr.mxu0 0.0
  %1523 = vmatpush1.msra.mxu0 0.0
  %1524 = vmatprep.subr.mxu0 0.0
  %1525 = vmatpush1.msra.mxu0 0.0
  %1526 = vmatprep.subr.mxu0 0.0
  %1527 = vmatpush1.msra.mxu0 0.0
  %1528 = vmatprep.subr.mxu0 0.0
  %1529 = vmatpush1.msra.mxu0 0.0
  %1530 = vmatprep.subr.mxu0 0.0
  %1531 = vmatpush1.msra.mxu0 0.0
  %1532 = vmatprep.mubr.f32.mxu0 0.0
  %1533 = vmatmul.mubr.f32.gmra.mrb[0].mxu0 %v1466
  %v1534 = vpop.f32.mrb[0].mxu0
  %v1535 = vadd.f32 0.0, %v1534
  %v1536 = vpop.f32.mrb[0].mxu0
  %1537 = vdwg.mxu0
  %v1538 = vadd.f32 %v1463, %v1535
  %v1539 = vxor.u32 %v1538, 2147483648
  %v1540 = vmul.f32 %v1539, 1.442695
  %v1541 = vpow.pop %v1540
  %v1542 = vadd.f32 %v1541, 1.0
  %v1543 = vrcp.pop %v1542
  %v1544 = vmul.f32 1.0, %v1543
  %v1545 = vtanh.pop %v1538
  %v1546 = vmul.f32 %v1544, %v1449
  %1548 = vrot.lane.b32.xlu0 %v1545, 80
  %v1549 = vpop.permute.xlu0 %1548
  %v1551 = vmul.f32 %v1544, %v1549
  %1553 = vrot.lane.b32.xlu0 %v1551, 16
  %v1554 = vpop.permute.xlu0 %1553
  %v1556 = vadd.f32 %v1546, %v1554
  %v1557 = vtanh.pop %v1556
  %1559 = vrot.lane.b32.xlu0 %v1557, 16
  %v1560 = vpop.permute.xlu0 %1559
  %v1562 = vmul.f32 %v1544, %v1560
  %1564 = vrot.lane.b32.xlu0 %v1562, 96
  %v1565 = vpop.permute.xlu0 %1564
  %1567 = vst.msk [vmem:[%s812] sm:$0xff] %vm373, %v1565
  %1568 = vst.msk [vmem:[%s810] sm:$0xff] %vm376, %v1565
  %s1569 = scalar_lea.vmem [#allocation2], 96
  %v1570 = vld [vmem:[%s1569] sm:$0xff]
  %v1571 = vld [vmem:[%s2] sm:$0xff]
  %v1572 = vld [vmem:[%s2 + $0x8] sm:$0xff]
  %v1573 = vsel %vm266, %v1565, 0
  %1575 = vmatprep.subr.mxu0 0.0
  %1576 = vmatpush1.msra.mxu0 %v1571
  %1577 = vmatprep.subr.mxu0 0.0
  %1578 = vmatpush1.msra.mxu0 %v1572
  %1579 = vmatprep.subr.mxu0 0.0
  %1580 = vmatpush1.msra.mxu0 0.0
  %1581 = vmatprep.subr.mxu0 0.0
  %1582 = vmatpush1.msra.mxu0 0.0
  %1583 = vmatprep.subr.mxu0 0.0
  %1584 = vmatpush1.msra.mxu0 0.0
  %1585 = vmatprep.subr.mxu0 0.0
  %1586 = vmatpush1.msra.mxu0 0.0
  %1587 = vmatprep.subr.mxu0 0.0
  %1588 = vmatpush1.msra.mxu0 0.0
  %1589 = vmatprep.subr.mxu0 0.0
  %1590 = vmatpush1.msra.mxu0 0.0
  %1591 = vmatprep.subr.mxu0 0.0
  %1592 = vmatpush1.msra.mxu0 0.0
  %1593 = vmatprep.subr.mxu0 0.0
  %1594 = vmatpush1.msra.mxu0 0.0
  %1595 = vmatprep.subr.mxu0 0.0
  %1596 = vmatpush1.msra.mxu0 0.0
  %1597 = vmatprep.subr.mxu0 0.0
  %1598 = vmatpush1.msra.mxu0 0.0
  %1599 = vmatprep.subr.mxu0 0.0
  %1600 = vmatpush1.msra.mxu0 0.0
  %1601 = vmatprep.subr.mxu0 0.0
  %1602 = vmatpush1.msra.mxu0 0.0
  %1603 = vmatprep.subr.mxu0 0.0
  %1604 = vmatpush1.msra.mxu0 0.0
  %1605 = vmatprep.subr.mxu0 0.0
  %1606 = vmatpush1.msra.mxu0 0.0
  %1607 = vmatprep.subr.mxu0 0.0
  %1608 = vmatpush1.msra.mxu0 0.0
  %1609 = vmatprep.subr.mxu0 0.0
  %1610 = vmatpush1.msra.mxu0 0.0
  %1611 = vmatprep.subr.mxu0 0.0
  %1612 = vmatpush1.msra.mxu0 0.0
  %1613 = vmatprep.subr.mxu0 0.0
  %1614 = vmatpush1.msra.mxu0 0.0
  %1615 = vmatprep.subr.mxu0 0.0
  %1616 = vmatpush1.msra.mxu0 0.0
  %1617 = vmatprep.subr.mxu0 0.0
  %1618 = vmatpush1.msra.mxu0 0.0
  %1619 = vmatprep.subr.mxu0 0.0
  %1620 = vmatpush1.msra.mxu0 0.0
  %1621 = vmatprep.subr.mxu0 0.0
  %1622 = vmatpush1.msra.mxu0 0.0
  %1623 = vmatprep.subr.mxu0 0.0
  %1624 = vmatpush1.msra.mxu0 0.0
  %1625 = vmatprep.subr.mxu0 0.0
  %1626 = vmatpush1.msra.mxu0 0.0
  %1627 = vmatprep.subr.mxu0 0.0
  %1628 = vmatpush1.msra.mxu0 0.0
  %1629 = vmatprep.subr.mxu0 0.0
  %1630 = vmatpush1.msra.mxu0 0.0
  %1631 = vmatprep.subr.mxu0 0.0
  %1632 = vmatpush1.msra.mxu0 0.0
  %1633 = vmatprep.subr.mxu0 0.0
  %1634 = vmatpush1.msra.mxu0 0.0
  %1635 = vmatprep.subr.mxu0 0.0
  %1636 = vmatpush1.msra.mxu0 0.0
  %1637 = vmatprep.subr.mxu0 0.0
  %1638 = vmatpush1.msra.mxu0 0.0
  %1639 = vmatprep.mubr.f32.mxu0 0.0
  %1640 = vmatmul.mubr.f32.gmra.mrb[0].mxu0 %v1573
  %v1641 = vpop.f32.mrb[0].mxu0
  %v1642 = vadd.f32 0.0, %v1641
  %v1643 = vpop.f32.mrb[0].mxu0
  %1644 = vdwg.mxu0
  %v1645 = vadd.f32 %v1570, %v1642
  %v1646 = vxor.u32 %v1645, 2147483648
  %v1647 = vmul.f32 %v1646, 1.442695
  %v1648 = vpow.pop %v1647
  %v1649 = vadd.f32 %v1648, 1.0
  %v1650 = vrcp.pop %v1649
  %v1651 = vmul.f32 1.0, %v1650
  %v1652 = vtanh.pop %v1645
  %v1653 = vmul.f32 %v1651, %v1556
  %1655 = vrot.lane.b32.xlu0 %v1652, 80
  %v1656 = vpop.permute.xlu0 %1655
  %v1658 = vmul.f32 %v1651, %v1656
  %1660 = vrot.lane.b32.xlu0 %v1658, 16
  %v1661 = vpop.permute.xlu0 %1660
  %v1663 = vadd.f32 %v1653, %v1661
  %v1664 = vtanh.pop %v1663
  %1666 = vrot.lane.b32.xlu0 %v1664, 16
  %v1667 = vpop.permute.xlu0 %1666
  %v1669 = vmul.f32 %v1651, %v1667
  %1671 = vrot.lane.b32.xlu0 %v1669, 96
  %v1672 = vpop.permute.xlu0 %1671
  %1674 = vst.msk [vmem:[%s703] sm:$0xff] %vm373, %v1672
  %1675 = vst.msk [vmem:[%s701] sm:$0xff] %vm376, %v1672
  %s1676 = scalar_lea.vmem [#allocation2], 104
  %v1677 = vld [vmem:[%s1676] sm:$0xff]
  %v1678 = vld [vmem:[%s2] sm:$0xff]
  %v1679 = vld [vmem:[%s2 + $0x8] sm:$0xff]
  %v1680 = vsel %vm266, %v1672, 0
  %1682 = vmatprep.subr.mxu0 0.0
  %1683 = vmatpush1.msra.mxu0 %v1678
  %1684 = vmatprep.subr.mxu0 0.0
  %1685 = vmatpush1.msra.mxu0 %v1679
  %1686 = vmatprep.subr.mxu0 0.0
  %1687 = vmatpush1.msra.mxu0 0.0
  %1688 = vmatprep.subr.mxu0 0.0
  %1689 = vmatpush1.msra.mxu0 0.0
  %1690 = vmatprep.subr.mxu0 0.0
  %1691 = vmatpush1.msra.mxu0 0.0
  %1692 = vmatprep.subr.mxu0 0.0
  %1693 = vmatpush1.msra.mxu0 0.0
  %1694 = vmatprep.subr.mxu0 0.0
  %1695 = vmatpush1.msra.mxu0 0.0
  %1696 = vmatprep.subr.mxu0 0.0
  %1697 = vmatpush1.msra.mxu0 0.0
  %1698 = vmatprep.subr.mxu0 0.0
  %1699 = vmatpush1.msra.mxu0 0.0
  %1700 = vmatprep.subr.mxu0 0.0
  %1701 = vmatpush1.msra.mxu0 0.0
  %1702 = vmatprep.subr.mxu0 0.0
  %1703 = vmatpush1.msra.mxu0 0.0
  %1704 = vmatprep.subr.mxu0 0.0
  %1705 = vmatpush1.msra.mxu0 0.0
  %1706 = vmatprep.subr.mxu0 0.0
  %1707 = vmatpush1.msra.mxu0 0.0
  %1708 = vmatprep.subr.mxu0 0.0
  %1709 = vmatpush1.msra.mxu0 0.0
  %1710 = vmatprep.subr.mxu0 0.0
  %1711 = vmatpush1.msra.mxu0 0.0
  %1712 = vmatprep.subr.mxu0 0.0
  %1713 = vmatpush1.msra.mxu0 0.0
  %1714 = vmatprep.subr.mxu0 0.0
  %1715 = vmatpush1.msra.mxu0 0.0
  %1716 = vmatprep.subr.mxu0 0.0
  %1717 = vmatpush1.msra.mxu0 0.0
  %1718 = vmatprep.subr.mxu0 0.0
  %1719 = vmatpush1.msra.mxu0 0.0
  %1720 = vmatprep.subr.mxu0 0.0
  %1721 = vmatpush1.msra.mxu0 0.0
  %1722 = vmatprep.subr.mxu0 0.0
  %1723 = vmatpush1.msra.mxu0 0.0
  %1724 = vmatprep.subr.mxu0 0.0
  %1725 = vmatpush1.msra.mxu0 0.0
  %1726 = vmatprep.subr.mxu0 0.0
  %1727 = vmatpush1.msra.mxu0 0.0
  %1728 = vmatprep.subr.mxu0 0.0
  %1729 = vmatpush1.msra.mxu0 0.0
  %1730 = vmatprep.subr.mxu0 0.0
  %1731 = vmatpush1.msra.mxu0 0.0
  %1732 = vmatprep.subr.mxu0 0.0
  %1733 = vmatpush1.msra.mxu0 0.0
  %1734 = vmatprep.subr.mxu0 0.0
  %1735 = vmatpush1.msra.mxu0 0.0
  %1736 = vmatprep.subr.mxu0 0.0
  %1737 = vmatpush1.msra.mxu0 0.0
  %1738 = vmatprep.subr.mxu0 0.0
  %1739 = vmatpush1.msra.mxu0 0.0
  %1740 = vmatprep.subr.mxu0 0.0
  %1741 = vmatpush1.msra.mxu0 0.0
  %1742 = vmatprep.subr.mxu0 0.0
  %1743 = vmatpush1.msra.mxu0 0.0
  %1744 = vmatprep.subr.mxu0 0.0
  %1745 = vmatpush1.msra.mxu0 0.0
  %1746 = vmatprep.mubr.f32.mxu0 0.0
  %1747 = vmatmul.mubr.f32.gmra.mrb[0].mxu0 %v1680
  %v1748 = vpop.f32.mrb[0].mxu0
  %v1749 = vadd.f32 0.0, %v1748
  %v1750 = vpop.f32.mrb[0].mxu0
  %1751 = vdwg.mxu0
  %v1752 = vadd.f32 %v1677, %v1749
  %v1753 = vxor.u32 %v1752, 2147483648
  %v1754 = vmul.f32 %v1753, 1.442695
  %v1755 = vpow.pop %v1754
  %v1756 = vadd.f32 %v1755, 1.0
  %v1757 = vrcp.pop %v1756
  %v1758 = vmul.f32 1.0, %v1757
  %v1759 = vtanh.pop %v1752
  %v1760 = vmul.f32 %v1758, %v1663
  %1762 = vrot.lane.b32.xlu0 %v1759, 80
  %v1763 = vpop.permute.xlu0 %1762
  %v1765 = vmul.f32 %v1758, %v1763
  %1767 = vrot.lane.b32.xlu0 %v1765, 16
  %v1768 = vpop.permute.xlu0 %1767
  %v1770 = vadd.f32 %v1760, %v1768
  %v1771 = vtanh.pop %v1770
  %1773 = vrot.lane.b32.xlu0 %v1771, 16
  %v1774 = vpop.permute.xlu0 %1773
  %v1776 = vmul.f32 %v1758, %v1774
  %1778 = vrot.lane.b32.xlu0 %v1776, 96
  %v1779 = vpop.permute.xlu0 %1778
  %1781 = vst.msk [vmem:[%s594] sm:$0xff] %vm373, %v1779
  %1782 = vst.msk [vmem:[%s592] sm:$0xff] %vm376, %v1779
  %s1783 = scalar_lea.vmem [#allocation2], 112
  %v1784 = vld [vmem:[%s1783] sm:$0xff]
  %v1785 = vld [vmem:[%s2] sm:$0xff]
  %v1786 = vld [vmem:[%s2 + $0x8] sm:$0xff]
  %v1787 = vsel %vm266, %v1779, 0
  %1789 = vmatprep.subr.mxu0 0.0
  %1790 = vmatpush1.msra.mxu0 %v1785
  %1791 = vmatprep.subr.mxu0 0.0
  %1792 = vmatpush1.msra.mxu0 %v1786
  %1793 = vmatprep.subr.mxu0 0.0
  %1794 = vmatpush1.msra.mxu0 0.0
  %1795 = vmatprep.subr.mxu0 0.0
  %1796 = vmatpush1.msra.mxu0 0.0
  %1797 = vmatprep.subr.mxu0 0.0
  %1798 = vmatpush1.msra.mxu0 0.0
  %1799 = vmatprep.subr.mxu0 0.0
  %1800 = vmatpush1.msra.mxu0 0.0
  %1801 = vmatprep.subr.mxu0 0.0
  %1802 = vmatpush1.msra.mxu0 0.0
  %1803 = vmatprep.subr.mxu0 0.0
  %1804 = vmatpush1.msra.mxu0 0.0
  %1805 = vmatprep.subr.mxu0 0.0
  %1806 = vmatpush1.msra.mxu0 0.0
  %1807 = vmatprep.subr.mxu0 0.0
  %1808 = vmatpush1.msra.mxu0 0.0
  %1809 = vmatprep.subr.mxu0 0.0
  %1810 = vmatpush1.msra.mxu0 0.0
  %1811 = vmatprep.subr.mxu0 0.0
  %1812 = vmatpush1.msra.mxu0 0.0
  %1813 = vmatprep.subr.mxu0 0.0
  %1814 = vmatpush1.msra.mxu0 0.0
  %1815 = vmatprep.subr.mxu0 0.0
  %1816 = vmatpush1.msra.mxu0 0.0
  %1817 = vmatprep.subr.mxu0 0.0
  %1818 = vmatpush1.msra.mxu0 0.0
  %1819 = vmatprep.subr.mxu0 0.0
  %1820 = vmatpush1.msra.mxu0 0.0
  %1821 = vmatprep.subr.mxu0 0.0
  %1822 = vmatpush1.msra.mxu0 0.0
  %1823 = vmatprep.subr.mxu0 0.0
  %1824 = vmatpush1.msra.mxu0 0.0
  %1825 = vmatprep.subr.mxu0 0.0
  %1826 = vmatpush1.msra.mxu0 0.0
  %1827 = vmatprep.subr.mxu0 0.0
  %1828 = vmatpush1.msra.mxu0 0.0
  %1829 = vmatprep.subr.mxu0 0.0
  %1830 = vmatpush1.msra.mxu0 0.0
  %1831 = vmatprep.subr.mxu0 0.0
  %1832 = vmatpush1.msra.mxu0 0.0
  %1833 = vmatprep.subr.mxu0 0.0
  %1834 = vmatpush1.msra.mxu0 0.0
  %1835 = vmatprep.subr.mxu0 0.0
  %1836 = vmatpush1.msra.mxu0 0.0
  %1837 = vmatprep.subr.mxu0 0.0
  %1838 = vmatpush1.msra.mxu0 0.0
  %1839 = vmatprep.subr.mxu0 0.0
  %1840 = vmatpush1.msra.mxu0 0.0
  %1841 = vmatprep.subr.mxu0 0.0
  %1842 = vmatpush1.msra.mxu0 0.0
  %1843 = vmatprep.subr.mxu0 0.0
  %1844 = vmatpush1.msra.mxu0 0.0
  %1845 = vmatprep.subr.mxu0 0.0
  %1846 = vmatpush1.msra.mxu0 0.0
  %1847 = vmatprep.subr.mxu0 0.0
  %1848 = vmatpush1.msra.mxu0 0.0
  %1849 = vmatprep.subr.mxu0 0.0
  %1850 = vmatpush1.msra.mxu0 0.0
  %1851 = vmatprep.subr.mxu0 0.0
  %1852 = vmatpush1.msra.mxu0 0.0
  %1853 = vmatprep.mubr.f32.mxu0 0.0
  %1854 = vmatmul.mubr.f32.gmra.mrb[0].mxu0 %v1787
  %v1855 = vpop.f32.mrb[0].mxu0
  %v1856 = vadd.f32 0.0, %v1855
  %v1857 = vpop.f32.mrb[0].mxu0
  %1858 = vdwg.mxu0
  %v1859 = vadd.f32 %v1784, %v1856
  %v1860 = vxor.u32 %v1859, 2147483648
  %v1861 = vmul.f32 %v1860, 1.442695
  %v1862 = vpow.pop %v1861
  %v1863 = vadd.f32 %v1862, 1.0
  %v1864 = vrcp.pop %v1863
  %v1865 = vmul.f32 1.0, %v1864
  %v1866 = vtanh.pop %v1859
  %v1867 = vmul.f32 %v1865, %v1770
  %1869 = vrot.lane.b32.xlu0 %v1866, 80
  %v1870 = vpop.permute.xlu0 %1869
  %v1872 = vmul.f32 %v1865, %v1870
  %1874 = vrot.lane.b32.xlu0 %v1872, 16
  %v1875 = vpop.permute.xlu0 %1874
  %v1877 = vadd.f32 %v1867, %v1875
  %v1878 = vtanh.pop %v1877
  %1880 = vrot.lane.b32.xlu0 %v1878, 16
  %v1881 = vpop.permute.xlu0 %1880
  %v1883 = vmul.f32 %v1865, %v1881
  %1885 = vrot.lane.b32.xlu0 %v1883, 96
  %v1886 = vpop.permute.xlu0 %1885
  %1888 = vst.msk [vmem:[%s485] sm:$0xff] %vm373, %v1886
  %1889 = vst.msk [vmem:[%s483] sm:$0xff] %vm376, %v1886
  %s1890 = scalar_lea.vmem [#allocation2], 120
  %v1891 = vld [vmem:[%s1890] sm:$0xff]
  %v1892 = vld [vmem:[%s2] sm:$0xff]
  %v1893 = vld [vmem:[%s2 + $0x8] sm:$0xff]
  %v1894 = vsel %vm266, %v1886, 0
  %1896 = vmatprep.subr.mxu0 0.0
  %1897 = vmatpush1.msra.mxu0 %v1892
  %1898 = vmatprep.subr.mxu0 0.0
  %1899 = vmatpush1.msra.mxu0 %v1893
  %1900 = vmatprep.subr.mxu0 0.0
  %1901 = vmatpush1.msra.mxu0 0.0
  %1902 = vmatprep.subr.mxu0 0.0
  %1903 = vmatpush1.msra.mxu0 0.0
  %1904 = vmatprep.subr.mxu0 0.0
  %1905 = vmatpush1.msra.mxu0 0.0
  %1906 = vmatprep.subr.mxu0 0.0
  %1907 = vmatpush1.msra.mxu0 0.0
  %1908 = vmatprep.subr.mxu0 0.0
  %1909 = vmatpush1.msra.mxu0 0.0
  %1910 = vmatprep.subr.mxu0 0.0
  %1911 = vmatpush1.msra.mxu0 0.0
  %1912 = vmatprep.subr.mxu0 0.0
  %1913 = vmatpush1.msra.mxu0 0.0
  %1914 = vmatprep.subr.mxu0 0.0
  %1915 = vmatpush1.msra.mxu0 0.0
  %1916 = vmatprep.subr.mxu0 0.0
  %1917 = vmatpush1.msra.mxu0 0.0
  %1918 = vmatprep.subr.mxu0 0.0
  %1919 = vmatpush1.msra.mxu0 0.0
  %1920 = vmatprep.subr.mxu0 0.0
  %1921 = vmatpush1.msra.mxu0 0.0
  %1922 = vmatprep.subr.mxu0 0.0
  %1923 = vmatpush1.msra.mxu0 0.0
  %1924 = vmatprep.subr.mxu0 0.0
  %1925 = vmatpush1.msra.mxu0 0.0
  %1926 = vmatprep.subr.mxu0 0.0
  %1927 = vmatpush1.msra.mxu0 0.0
  %1928 = vmatprep.subr.mxu0 0.0
  %1929 = vmatpush1.msra.mxu0 0.0
  %1930 = vmatprep.subr.mxu0 0.0
  %1931 = vmatpush1.msra.mxu0 0.0
  %1932 = vmatprep.subr.mxu0 0.0
  %1933 = vmatpush1.msra.mxu0 0.0
  %1934 = vmatprep.subr.mxu0 0.0
  %1935 = vmatpush1.msra.mxu0 0.0
  %1936 = vmatprep.subr.mxu0 0.0
  %1937 = vmatpush1.msra.mxu0 0.0
  %1938 = vmatprep.subr.mxu0 0.0
  %1939 = vmatpush1.msra.mxu0 0.0
  %1940 = vmatprep.subr.mxu0 0.0
  %1941 = vmatpush1.msra.mxu0 0.0
  %1942 = vmatprep.subr.mxu0 0.0
  %1943 = vmatpush1.msra.mxu0 0.0
  %1944 = vmatprep.subr.mxu0 0.0
  %1945 = vmatpush1.msra.mxu0 0.0
  %1946 = vmatprep.subr.mxu0 0.0
  %1947 = vmatpush1.msra.mxu0 0.0
  %1948 = vmatprep.subr.mxu0 0.0
  %1949 = vmatpush1.msra.mxu0 0.0
  %1950 = vmatprep.subr.mxu0 0.0
  %1951 = vmatpush1.msra.mxu0 0.0
  %1952 = vmatprep.subr.mxu0 0.0
  %1953 = vmatpush1.msra.mxu0 0.0
  %1954 = vmatprep.subr.mxu0 0.0
  %1955 = vmatpush1.msra.mxu0 0.0
  %1956 = vmatprep.subr.mxu0 0.0
  %1957 = vmatpush1.msra.mxu0 0.0
  %1958 = vmatprep.subr.mxu0 0.0
  %1959 = vmatpush1.msra.mxu0 0.0
  %1960 = vmatprep.mubr.f32.mxu0 0.0
  %1961 = vmatmul.mubr.f32.gmra.mrb[0].mxu0 %v1894
  %v1962 = vpop.f32.mrb[0].mxu0
  %v1963 = vadd.f32 0.0, %v1962
  %v1964 = vpop.f32.mrb[0].mxu0
  %1965 = vdwg.mxu0
  %v1966 = vadd.f32 %v1891, %v1963
  %v1967 = vxor.u32 %v1966, 2147483648
  %v1968 = vmul.f32 %v1967, 1.442695
  %v1969 = vpow.pop %v1968
  %v1970 = vadd.f32 %v1969, 1.0
  %v1971 = vrcp.pop %v1970
  %v1972 = vmul.f32 1.0, %v1971
  %v1973 = vtanh.pop %v1966
  %v1974 = vmul.f32 %v1972, %v1877
  %1976 = vrot.lane.b32.xlu0 %v1973, 80
  %v1977 = vpop.permute.xlu0 %1976
  %v1979 = vmul.f32 %v1972, %v1977
  %1981 = vrot.lane.b32.xlu0 %v1979, 16
  %v1982 = vpop.permute.xlu0 %1981
  %v1984 = vadd.f32 %v1974, %v1982
  %v1985 = vtanh.pop %v1984
  %1987 = vrot.lane.b32.xlu0 %v1985, 16
  %v1988 = vpop.permute.xlu0 %1987
  %v1990 = vmul.f32 %v1972, %v1988
  %1992 = vrot.lane.b32.xlu0 %v1990, 96
  %v1993 = vpop.permute.xlu0 %1992
  %1995 = vst.msk [vmem:[%s375] sm:$0xff] %vm373, %v1993
  %1996 = vst.msk [vmem:[%s6] sm:$0xff] %vm376, %v1993
  // Predicated region
  $region26: #{mv_lstm_forward.2} parent=0 // pred_check
    _
  $region27: #{mv_lstm_forward.2} parent=0 // pred_check_branch
    %1998 = sbr.rel (0) target = $region29
  $region28: #{mv_lstm_forward.2} parent=0 // pred_region
    _
  $region29: #{mv_lstm_forward.2} parent=0 // pred_fallthru
    _
  // Predicated region
  $region30: #{mv_lstm_forward.2} parent=0 // pred_check
    _
  $region31: #{mv_lstm_forward.2} parent=0 // pred_check_branch
    %2000 = sbr.rel (0) target = $region33
  $region32: #{mv_lstm_forward.2} parent=0 // pred_region
    _
  $region33: #{mv_lstm_forward.2} parent=0 // pred_fallthru
    _

// kernel: mv_lstm_forward.3
$region0: #{mv_lstm_forward.3}
  #allocation0 [shape = 'u32[]', space=smem, size = 0x4, offset = 0x4, fixed_abs, tag = 'smem constant byte address 0x4 - core index']
  #allocation1 [shape = 'u32[144,128]{1,0:T(1,128)}', space=vmem, size = 0x12000, scoped, tag = 'internal scratch']
  #allocation2 [shape = 'f32[1,1]{1,0:T(1,128)S(1)}', space=vmem, size = 0x200, scoped, tag = 'scoped memory for mv_lstm_forward.3']
  %s0 = inlined_call_operand.vmem [shape: f32[128,16], index: 0, kind: input, shape index: {}]
  %s1 = inlined_call_operand.vmem [shape: f32[16,16,16], index: 1, kind: input, shape index: {}]
  %s2 = inlined_call_operand.vmem [shape: f32[16,16], index: 2, kind: input, shape index: {}]
  %s3 = inlined_call_operand.vmem [shape: f32[16,1], index: 3, kind: input, shape index: {}]
  %s4 = inlined_call_operand.vmem [shape: f32[8,16], index: 4, kind: input, shape index: {}]
  %s5 = inlined_call_operand.vmem [shape: f32[8,1], index: 5, kind: input, shape index: {}]
  %s6 = inlined_call_operand.vmem [shape: f32[1,8], index: 6, kind: input, shape index: {}]
  %s7 = inlined_call_operand.<no memory space> [shape: f32[1,1], index: 7, kind: input, shape index: {}]
  %s8 = inlined_call_operand.vmem [shape: f32[1,48], index: 8, kind: output, shape index: {}]
  %s9 = sld [smem:[#allocation0]]
  $region42: #{mv_lstm_forward.3} parent=0
    _
  %s11 = ssub.s32 1, %s9
  %s12 = scalar_select 0, %s11, %s9
  %v13 = vstv %s7
  %14 = vst [vmem:[#allocation2] sm:$0x1] %v13
  // Predicated region
  $region2: #{mv_lstm_forward.3} parent=0 // pred_check
    _
  $region3: #{mv_lstm_forward.3} parent=0 // pred_check_branch
    %16 = sbr.rel (0) target = $region5
  $region4: #{mv_lstm_forward.3} parent=0 // pred_region
    _
  $region5: #{mv_lstm_forward.3} parent=0 // pred_fallthru
    _
  // Predicated region
  $region6: #{mv_lstm_forward.3} parent=0 // pred_check
    _
  $region7: #{mv_lstm_forward.3} parent=0 // pred_check_branch
    %18 = sbr.rel (0) target = $region9
  $region8: #{mv_lstm_forward.3} parent=0 // pred_region
    _
  $region9: #{mv_lstm_forward.3} parent=0 // pred_fallthru
    _
  // Predicated region
  $region10: #{mv_lstm_forward.3} parent=0 // pred_check
    _
  $region11: #{mv_lstm_forward.3} parent=0 // pred_check_branch
    %20 = sbr.rel (0) target = $region13
  $region12: #{mv_lstm_forward.3} parent=0 // pred_region
    _
  $region13: #{mv_lstm_forward.3} parent=0 // pred_fallthru
    _
  // Predicated region
  $region14: #{mv_lstm_forward.3} parent=0 // pred_check
    _
  $region15: #{mv_lstm_forward.3} parent=0 // pred_check_branch
    %22 = sbr.rel (0) target = $region17
  $region16: #{mv_lstm_forward.3} parent=0 // pred_region
    _
  $region17: #{mv_lstm_forward.3} parent=0 // pred_fallthru
    _
  // Predicated region
  $region18: #{mv_lstm_forward.3} parent=0 // pred_check
    _
  $region19: #{mv_lstm_forward.3} parent=0 // pred_check_branch
    %24 = sbr.rel (0) target = $region21
  $region20: #{mv_lstm_forward.3} parent=0 // pred_region
    _
  $region21: #{mv_lstm_forward.3} parent=0 // pred_fallthru
    _
  // Predicated region
  $region22: #{mv_lstm_forward.3} parent=0 // pred_check
    _
  $region23: #{mv_lstm_forward.3} parent=0 // pred_check_branch
    %26 = sbr.rel (0) target = $region25
  $region24: #{mv_lstm_forward.3} parent=0 // pred_region
    _
  $region25: #{mv_lstm_forward.3} parent=0 // pred_fallthru
    _
  // Predicated region
  $region26: #{mv_lstm_forward.3} parent=0 // pred_check
    _
  $region27: #{mv_lstm_forward.3} parent=0 // pred_check_branch
    %28 = sbr.rel (0) target = $region29
  $region28: #{mv_lstm_forward.3} parent=0 // pred_region
    _
  $region29: #{mv_lstm_forward.3} parent=0 // pred_fallthru
    _
  // Predicated region
  $region30: #{mv_lstm_forward.3} parent=0 // pred_check
    _
  $region31: #{mv_lstm_forward.3} parent=0 // pred_check_branch
    %30 = sbr.rel (0) target = $region33
  $region32: #{mv_lstm_forward.3} parent=0 // pred_region
    _
  $region33: #{mv_lstm_forward.3} parent=0 // pred_fallthru
    _
  %s31 = scalar_lea.vmem %s0, 1
  %v32 = vld [vmem:[%s31] ss:$8 sm:$0xf]
  %v33 = vld [vmem:[%s31] ss:$8 sm:$0xf0]
  %v34 = vor.u32 %v32, %v33
  %s35 = scalar_lea.vmem %s0, 65
  %v36 = vld [vmem:[%s35] ss:$8 sm:$0xf]
  %v37 = vld [vmem:[%s35] ss:$8 sm:$0xf0]
  %v38 = vor.u32 %v36, %v37
  %s39 = scalar_lea.vmem %s0, 3
  %v40 = vld [vmem:[%s39] ss:$8 sm:$0xf]
  %v41 = vld [vmem:[%s39] ss:$8 sm:$0xf0]
  %v42 = vor.u32 %v40, %v41
  %s43 = scalar_lea.vmem %s0, 67
  %v44 = vld [vmem:[%s43] ss:$8 sm:$0xf]
  %v45 = vld [vmem:[%s43] ss:$8 sm:$0xf0]
  %v46 = vor.u32 %v44, %v45
  %s47 = scalar_lea.vmem %s0, 5
  %v48 = vld [vmem:[%s47] ss:$8 sm:$0xf]
  %v49 = vld [vmem:[%s47] ss:$8 sm:$0xf0]
  %v50 = vor.u32 %v48, %v49
  %s51 = scalar_lea.vmem %s0, 69
  %v52 = vld [vmem:[%s51] ss:$8 sm:$0xf]
  %v53 = vld [vmem:[%s51] ss:$8 sm:$0xf0]
  %v54 = vor.u32 %v52, %v53
  %s55 = scalar_lea.vmem %s0, 7
  %v56 = vld [vmem:[%s55] ss:$8 sm:$0xf]
  %v57 = vld [vmem:[%s55] ss:$8 sm:$0xf0]
  %v58 = vor.u32 %v56, %v57
  %s59 = scalar_lea.vmem %s0, 71
  %v60 = vld [vmem:[%s59] ss:$8 sm:$0xf]
  %v61 = vld [vmem:[%s59] ss:$8 sm:$0xf0]
  %v62 = vor.u32 %v60, %v61
  %v63 = vld [vmem:[%s1] sm:$0xff]
  %v64 = vld [vmem:[%s1 + $0x8] sm:$0xff]
  %v65 = vld [vmem:[%s1 + $0x10] sm:$0xff]
  %v66 = vld [vmem:[%s1 + $0x18] sm:$0xff]
  %v67 = vld [vmem:[%s1 + $0x20] sm:$0xff]
  %v68 = vld [vmem:[%s1 + $0x28] sm:$0xff]
  %v69 = vld [vmem:[%s1 + $0x30] sm:$0xff]
  %v70 = vld [vmem:[%s1 + $0x38] sm:$0xff]
  %v71 = vld [vmem:[%s1 + $0x40] sm:$0xff]
  %v72 = vld [vmem:[%s1 + $0x48] sm:$0xff]
  %v73 = vld [vmem:[%s1 + $0x50] sm:$0xff]
  %v74 = vld [vmem:[%s1 + $0x58] sm:$0xff]
  %v75 = vld [vmem:[%s1 + $0x60] sm:$0xff]
  %v76 = vld [vmem:[%s1 + $0x68] sm:$0xff]
  %v77 = vld [vmem:[%s1 + $0x70] sm:$0xff]
  %v78 = vld [vmem:[%s1 + $0x78] sm:$0xff]
  %v79 = vld [vmem:[%s1 + $0x80] sm:$0xff]
  %v80 = vld [vmem:[%s1 + $0x88] sm:$0xff]
  %v81 = vld [vmem:[%s1 + $0x90] sm:$0xff]
  %v82 = vld [vmem:[%s1 + $0x98] sm:$0xff]
  %v83 = vld [vmem:[%s1 + $0xa0] sm:$0xff]
  %v84 = vld [vmem:[%s1 + $0xa8] sm:$0xff]
  %v85 = vld [vmem:[%s1 + $0xb0] sm:$0xff]
  %v86 = vld [vmem:[%s1 + $0xb8] sm:$0xff]
  %v87 = vld [vmem:[%s1 + $0xc0] sm:$0xff]
  %v88 = vld [vmem:[%s1 + $0xc8] sm:$0xff]
  %v89 = vld [vmem:[%s1 + $0xd0] sm:$0xff]
  %v90 = vld [vmem:[%s1 + $0xd8] sm:$0xff]
  %v91 = vld [vmem:[%s1 + $0xe0] sm:$0xff]
  %v92 = vld [vmem:[%s1 + $0xe8] sm:$0xff]
  %v93 = vld [vmem:[%s1 + $0xf0] sm:$0xff]
  %v94 = vld [vmem:[%s1 + $0xf8] sm:$0xff]
  %vm95 = vcmask 130048
  %v97 = vsel %vm95, %v34, 0
  %v100 = vsel %vm95, %v38, 0
  %v103 = vsel %vm95, %v63, 0
  %v106 = vsel %vm95, %v64, 0
  %108 = vmatprep.subr.mxu0 0.0
  %109 = vmatpush1.xpose.msra.mxu0 %v103
  %110 = vmatprep.subr.mxu0 0.0
  %111 = vmatpush1.xpose.msra.mxu0 %v106
  %112 = vmatprep.subr.mxu0 0.0
  %113 = vmatpush1.xpose.msra.mxu0 0.0
  %114 = vmatprep.subr.mxu0 0.0
  %115 = vmatpush1.xpose.msra.mxu0 0.0
  %116 = vmatprep.subr.mxu0 0.0
  %117 = vmatpush1.xpose.msra.mxu0 0.0
  %118 = vmatprep.subr.mxu0 0.0
  %119 = vmatpush1.xpose.msra.mxu0 0.0
  %120 = vmatprep.subr.mxu0 0.0
  %121 = vmatpush1.xpose.msra.mxu0 0.0
  %122 = vmatprep.subr.mxu0 0.0
  %123 = vmatpush1.xpose.msra.mxu0 0.0
  %124 = vmatprep.subr.mxu0 0.0
  %125 = vmatpush1.xpose.msra.mxu0 0.0
  %126 = vmatprep.subr.mxu0 0.0
  %127 = vmatpush1.xpose.msra.mxu0 0.0
  %128 = vmatprep.subr.mxu0 0.0
  %129 = vmatpush1.xpose.msra.mxu0 0.0
  %130 = vmatprep.subr.mxu0 0.0
  %131 = vmatpush1.xpose.msra.mxu0 0.0
  %132 = vmatprep.subr.mxu0 0.0
  %133 = vmatpush1.xpose.msra.mxu0 0.0
  %134 = vmatprep.subr.mxu0 0.0
  %135 = vmatpush1.xpose.msra.mxu0 0.0
  %136 = vmatprep.subr.mxu0 0.0
  %137 = vmatpush1.xpose.msra.mxu0 0.0
  %138 = vmatprep.subr.mxu0 0.0
  %139 = vmatpush1.xpose.msra.mxu0 0.0
  %140 = vmatprep.subr.mxu0 0.0
  %141 = vmatpush1.xpose.msra.mxu0 0.0
  %142 = vmatprep.subr.mxu0 0.0
  %143 = vmatpush1.xpose.msra.mxu0 0.0
  %144 = vmatprep.subr.mxu0 0.0
  %145 = vmatpush1.xpose.msra.mxu0 0.0
  %146 = vmatprep.subr.mxu0 0.0
  %147 = vmatpush1.xpose.msra.mxu0 0.0
  %148 = vmatprep.subr.mxu0 0.0
  %149 = vmatpush1.xpose.msra.mxu0 0.0
  %150 = vmatprep.subr.mxu0 0.0
  %151 = vmatpush1.xpose.msra.mxu0 0.0
  %152 = vmatprep.subr.mxu0 0.0
  %153 = vmatpush1.xpose.msra.mxu0 0.0
  %154 = vmatprep.subr.mxu0 0.0
  %155 = vmatpush1.xpose.msra.mxu0 0.0
  %156 = vmatprep.subr.mxu0 0.0
  %157 = vmatpush1.xpose.msra.mxu0 0.0
  %158 = vmatprep.subr.mxu0 0.0
  %159 = vmatpush1.xpose.msra.mxu0 0.0
  %160 = vmatprep.subr.mxu0 0.0
  %161 = vmatpush1.xpose.msra.mxu0 0.0
  %162 = vmatprep.subr.mxu0 0.0
  %163 = vmatpush1.xpose.msra.mxu0 0.0
  %164 = vmatprep.subr.mxu0 0.0
  %165 = vmatpush1.xpose.msra.mxu0 0.0
  %166 = vmatprep.subr.mxu0 0.0
  %167 = vmatpush1.xpose.msra.mxu0 0.0
  %168 = vmatprep.subr.mxu0 0.0
  %169 = vmatpush1.xpose.msra.mxu0 0.0
  %170 = vmatprep.subr.mxu0 0.0
  %171 = vmatpush1.xpose.msra.mxu0 0.0
  %172 = vmatprep.mubr.f32.mxu0 0.0
  %173 = vmatmul.mubr.f32.gmra.mrb[0].mxu0 %v97
  %v174 = vpop.f32.mrb[0].mxu0
  %v175 = vadd.f32 0.0, %v174
  %v176 = vpop.f32.mrb[0].mxu0
  %177 = vmatprep.mubr.f32.mxu0 0.0
  %178 = vmatmul.mubr.f32.gmra.mrb[0].mxu0 %v100
  %v179 = vpop.f32.mrb[0].mxu0
  %v180 = vadd.f32 0.0, %v179
  %v181 = vpop.f32.mrb[0].mxu0
  %182 = vdwg.mxu0
  %v184 = vsel %vm95, %v65, 0
  %v187 = vsel %vm95, %v66, 0
  %189 = vmatprep.subr.mxu0 0.0
  %190 = vmatpush1.xpose.msra.mxu0 %v184
  %191 = vmatprep.subr.mxu0 0.0
  %192 = vmatpush1.xpose.msra.mxu0 %v187
  %193 = vmatprep.subr.mxu0 0.0
  %194 = vmatpush1.xpose.msra.mxu0 0.0
  %195 = vmatprep.subr.mxu0 0.0
  %196 = vmatpush1.xpose.msra.mxu0 0.0
  %197 = vmatprep.subr.mxu0 0.0
  %198 = vmatpush1.xpose.msra.mxu0 0.0
  %199 = vmatprep.subr.mxu0 0.0
  %200 = vmatpush1.xpose.msra.mxu0 0.0
  %201 = vmatprep.subr.mxu0 0.0
  %202 = vmatpush1.xpose.msra.mxu0 0.0
  %203 = vmatprep.subr.mxu0 0.0
  %204 = vmatpush1.xpose.msra.mxu0 0.0
  %205 = vmatprep.subr.mxu0 0.0
  %206 = vmatpush1.xpose.msra.mxu0 0.0
  %207 = vmatprep.subr.mxu0 0.0
  %208 = vmatpush1.xpose.msra.mxu0 0.0
  %209 = vmatprep.subr.mxu0 0.0
  %210 = vmatpush1.xpose.msra.mxu0 0.0
  %211 = vmatprep.subr.mxu0 0.0
  %212 = vmatpush1.xpose.msra.mxu0 0.0
  %213 = vmatprep.subr.mxu0 0.0
  %214 = vmatpush1.xpose.msra.mxu0 0.0
  %215 = vmatprep.subr.mxu0 0.0
  %216 = vmatpush1.xpose.msra.mxu0 0.0
  %217 = vmatprep.subr.mxu0 0.0
  %218 = vmatpush1.xpose.msra.mxu0 0.0
  %219 = vmatprep.subr.mxu0 0.0
  %220 = vmatpush1.xpose.msra.mxu0 0.0
  %221 = vmatprep.subr.mxu0 0.0
  %222 = vmatpush1.xpose.msra.mxu0 0.0
  %223 = vmatprep.subr.mxu0 0.0
  %224 = vmatpush1.xpose.msra.mxu0 0.0
  %225 = vmatprep.subr.mxu0 0.0
  %226 = vmatpush1.xpose.msra.mxu0 0.0
  %227 = vmatprep.subr.mxu0 0.0
  %228 = vmatpush1.xpose.msra.mxu0 0.0
  %229 = vmatprep.subr.mxu0 0.0
  %230 = vmatpush1.xpose.msra.mxu0 0.0
  %231 = vmatprep.subr.mxu0 0.0
  %232 = vmatpush1.xpose.msra.mxu0 0.0
  %233 = vmatprep.subr.mxu0 0.0
  %234 = vmatpush1.xpose.msra.mxu0 0.0
  %235 = vmatprep.subr.mxu0 0.0
  %236 = vmatpush1.xpose.msra.mxu0 0.0
  %237 = vmatprep.subr.mxu0 0.0
  %238 = vmatpush1.xpose.msra.mxu0 0.0
  %239 = vmatprep.subr.mxu0 0.0
  %240 = vmatpush1.xpose.msra.mxu0 0.0
  %241 = vmatprep.subr.mxu0 0.0
  %242 = vmatpush1.xpose.msra.mxu0 0.0
  %243 = vmatprep.subr.mxu0 0.0
  %244 = vmatpush1.xpose.msra.mxu0 0.0
  %245 = vmatprep.subr.mxu0 0.0
  %246 = vmatpush1.xpose.msra.mxu0 0.0
  %247 = vmatprep.subr.mxu0 0.0
  %248 = vmatpush1.xpose.msra.mxu0 0.0
  %249 = vmatprep.subr.mxu0 0.0
  %250 = vmatpush1.xpose.msra.mxu0 0.0
  %251 = vmatprep.subr.mxu0 0.0
  %252 = vmatpush1.xpose.msra.mxu0 0.0
  %253 = vmatprep.mubr.f32.mxu0 0.0
  %254 = vmatmul.mubr.f32.gmra.mrb[0].mxu0 %v97
  %v255 = vpop.f32.mrb[0].mxu0
  %v256 = vadd.f32 0.0, %v255
  %v257 = vpop.f32.mrb[0].mxu0
  %258 = vmatprep.mubr.f32.mxu0 0.0
  %259 = vmatmul.mubr.f32.gmra.mrb[0].mxu0 %v100
  %v260 = vpop.f32.mrb[0].mxu0
  %v261 = vadd.f32 0.0, %v260
  %v262 = vpop.f32.mrb[0].mxu0
  %263 = vdwg.mxu0
  %v265 = vsel %vm95, %v67, 0
  %v268 = vsel %vm95, %v68, 0
  %270 = vmatprep.subr.mxu0 0.0
  %271 = vmatpush1.xpose.msra.mxu0 %v265
  %272 = vmatprep.subr.mxu0 0.0
  %273 = vmatpush1.xpose.msra.mxu0 %v268
  %274 = vmatprep.subr.mxu0 0.0
  %275 = vmatpush1.xpose.msra.mxu0 0.0
  %276 = vmatprep.subr.mxu0 0.0
  %277 = vmatpush1.xpose.msra.mxu0 0.0
  %278 = vmatprep.subr.mxu0 0.0
  %279 = vmatpush1.xpose.msra.mxu0 0.0
  %280 = vmatprep.subr.mxu0 0.0
  %281 = vmatpush1.xpose.msra.mxu0 0.0
  %282 = vmatprep.subr.mxu0 0.0
  %283 = vmatpush1.xpose.msra.mxu0 0.0
  %284 = vmatprep.subr.mxu0 0.0
  %285 = vmatpush1.xpose.msra.mxu0 0.0
  %286 = vmatprep.subr.mxu0 0.0
  %287 = vmatpush1.xpose.msra.mxu0 0.0
  %288 = vmatprep.subr.mxu0 0.0
  %289 = vmatpush1.xpose.msra.mxu0 0.0
  %290 = vmatprep.subr.mxu0 0.0
  %291 = vmatpush1.xpose.msra.mxu0 0.0
  %292 = vmatprep.subr.mxu0 0.0
  %293 = vmatpush1.xpose.msra.mxu0 0.0
  %294 = vmatprep.subr.mxu0 0.0
  %295 = vmatpush1.xpose.msra.mxu0 0.0
  %296 = vmatprep.subr.mxu0 0.0
  %297 = vmatpush1.xpose.msra.mxu0 0.0
  %298 = vmatprep.subr.mxu0 0.0
  %299 = vmatpush1.xpose.msra.mxu0 0.0
  %300 = vmatprep.subr.mxu0 0.0
  %301 = vmatpush1.xpose.msra.mxu0 0.0
  %302 = vmatprep.subr.mxu0 0.0
  %303 = vmatpush1.xpose.msra.mxu0 0.0
  %304 = vmatprep.subr.mxu0 0.0
  %305 = vmatpush1.xpose.msra.mxu0 0.0
  %306 = vmatprep.subr.mxu0 0.0
  %307 = vmatpush1.xpose.msra.mxu0 0.0
  %308 = vmatprep.subr.mxu0 0.0
  %309 = vmatpush1.xpose.msra.mxu0 0.0
  %310 = vmatprep.subr.mxu0 0.0
  %311 = vmatpush1.xpose.msra.mxu0 0.0
  %312 = vmatprep.subr.mxu0 0.0
  %313 = vmatpush1.xpose.msra.mxu0 0.0
  %314 = vmatprep.subr.mxu0 0.0
  %315 = vmatpush1.xpose.msra.mxu0 0.0
  %316 = vmatprep.subr.mxu0 0.0
  %317 = vmatpush1.xpose.msra.mxu0 0.0
  %318 = vmatprep.subr.mxu0 0.0
  %319 = vmatpush1.xpose.msra.mxu0 0.0
  %320 = vmatprep.subr.mxu0 0.0
  %321 = vmatpush1.xpose.msra.mxu0 0.0
  %322 = vmatprep.subr.mxu0 0.0
  %323 = vmatpush1.xpose.msra.mxu0 0.0
  %324 = vmatprep.subr.mxu0 0.0
  %325 = vmatpush1.xpose.msra.mxu0 0.0
  %326 = vmatprep.subr.mxu0 0.0
  %327 = vmatpush1.xpose.msra.mxu0 0.0
  %328 = vmatprep.subr.mxu0 0.0
  %329 = vmatpush1.xpose.msra.mxu0 0.0
  %330 = vmatprep.subr.mxu0 0.0
  %331 = vmatpush1.xpose.msra.mxu0 0.0
  %332 = vmatprep.subr.mxu0 0.0
  %333 = vmatpush1.xpose.msra.mxu0 0.0
  %334 = vmatprep.mubr.f32.mxu0 0.0
  %335 = vmatmul.mubr.f32.gmra.mrb[0].mxu0 %v97
  %v336 = vpop.f32.mrb[0].mxu0
  %v337 = vadd.f32 0.0, %v336
  %v338 = vpop.f32.mrb[0].mxu0
  %339 = vmatprep.mubr.f32.mxu0 0.0
  %340 = vmatmul.mubr.f32.gmra.mrb[0].mxu0 %v100
  %v341 = vpop.f32.mrb[0].mxu0
  %v342 = vadd.f32 0.0, %v341
  %v343 = vpop.f32.mrb[0].mxu0
  %344 = vdwg.mxu0
  %v346 = vsel %vm95, %v69, 0
  %v349 = vsel %vm95, %v70, 0
  %351 = vmatprep.subr.mxu0 0.0
  %352 = vmatpush1.xpose.msra.mxu0 %v346
  %353 = vmatprep.subr.mxu0 0.0
  %354 = vmatpush1.xpose.msra.mxu0 %v349
  %355 = vmatprep.subr.mxu0 0.0
  %356 = vmatpush1.xpose.msra.mxu0 0.0
  %357 = vmatprep.subr.mxu0 0.0
  %358 = vmatpush1.xpose.msra.mxu0 0.0
  %359 = vmatprep.subr.mxu0 0.0
  %360 = vmatpush1.xpose.msra.mxu0 0.0
  %361 = vmatprep.subr.mxu0 0.0
  %362 = vmatpush1.xpose.msra.mxu0 0.0
  %363 = vmatprep.subr.mxu0 0.0
  %364 = vmatpush1.xpose.msra.mxu0 0.0
  %365 = vmatprep.subr.mxu0 0.0
  %366 = vmatpush1.xpose.msra.mxu0 0.0
  %367 = vmatprep.subr.mxu0 0.0
  %368 = vmatpush1.xpose.msra.mxu0 0.0
  %369 = vmatprep.subr.mxu0 0.0
  %370 = vmatpush1.xpose.msra.mxu0 0.0
  %371 = vmatprep.subr.mxu0 0.0
  %372 = vmatpush1.xpose.msra.mxu0 0.0
  %373 = vmatprep.subr.mxu0 0.0
  %374 = vmatpush1.xpose.msra.mxu0 0.0
  %375 = vmatprep.subr.mxu0 0.0
  %376 = vmatpush1.xpose.msra.mxu0 0.0
  %377 = vmatprep.subr.mxu0 0.0
  %378 = vmatpush1.xpose.msra.mxu0 0.0
  %379 = vmatprep.subr.mxu0 0.0
  %380 = vmatpush1.xpose.msra.mxu0 0.0
  %381 = vmatprep.subr.mxu0 0.0
  %382 = vmatpush1.xpose.msra.mxu0 0.0
  %383 = vmatprep.subr.mxu0 0.0
  %384 = vmatpush1.xpose.msra.mxu0 0.0
  %385 = vmatprep.subr.mxu0 0.0
  %386 = vmatpush1.xpose.msra.mxu0 0.0
  %387 = vmatprep.subr.mxu0 0.0
  %388 = vmatpush1.xpose.msra.mxu0 0.0
  %389 = vmatprep.subr.mxu0 0.0
  %390 = vmatpush1.xpose.msra.mxu0 0.0
  %391 = vmatprep.subr.mxu0 0.0
  %392 = vmatpush1.xpose.msra.mxu0 0.0
  %393 = vmatprep.subr.mxu0 0.0
  %394 = vmatpush1.xpose.msra.mxu0 0.0
  %395 = vmatprep.subr.mxu0 0.0
  %396 = vmatpush1.xpose.msra.mxu0 0.0
  %397 = vmatprep.subr.mxu0 0.0
  %398 = vmatpush1.xpose.msra.mxu0 0.0
  %399 = vmatprep.subr.mxu0 0.0
  %400 = vmatpush1.xpose.msra.mxu0 0.0
  %401 = vmatprep.subr.mxu0 0.0
  %402 = vmatpush1.xpose.msra.mxu0 0.0
  %403 = vmatprep.subr.mxu0 0.0
  %404 = vmatpush1.xpose.msra.mxu0 0.0
  %405 = vmatprep.subr.mxu0 0.0
  %406 = vmatpush1.xpose.msra.mxu0 0.0
  %407 = vmatprep.subr.mxu0 0.0
  %408 = vmatpush1.xpose.msra.mxu0 0.0
  %409 = vmatprep.subr.mxu0 0.0
  %410 = vmatpush1.xpose.msra.mxu0 0.0
  %411 = vmatprep.subr.mxu0 0.0
  %412 = vmatpush1.xpose.msra.mxu0 0.0
  %413 = vmatprep.subr.mxu0 0.0
  %414 = vmatpush1.xpose.msra.mxu0 0.0
  %415 = vmatprep.mubr.f32.mxu0 0.0
  %416 = vmatmul.mubr.f32.gmra.mrb[0].mxu0 %v97
  %v417 = vpop.f32.mrb[0].mxu0
  %v418 = vadd.f32 0.0, %v417
  %v419 = vpop.f32.mrb[0].mxu0
  %420 = vmatprep.mubr.f32.mxu0 0.0
  %421 = vmatmul.mubr.f32.gmra.mrb[0].mxu0 %v100
  %v422 = vpop.f32.mrb[0].mxu0
  %v423 = vadd.f32 0.0, %v422
  %v424 = vpop.f32.mrb[0].mxu0
  %425 = vdwg.mxu0
  %v427 = vsel %vm95, %v71, 0
  %v430 = vsel %vm95, %v72, 0
  %432 = vmatprep.subr.mxu0 0.0
  %433 = vmatpush1.xpose.msra.mxu0 %v427
  %434 = vmatprep.subr.mxu0 0.0
  %435 = vmatpush1.xpose.msra.mxu0 %v430
  %436 = vmatprep.subr.mxu0 0.0
  %437 = vmatpush1.xpose.msra.mxu0 0.0
  %438 = vmatprep.subr.mxu0 0.0
  %439 = vmatpush1.xpose.msra.mxu0 0.0
  %440 = vmatprep.subr.mxu0 0.0
  %441 = vmatpush1.xpose.msra.mxu0 0.0
  %442 = vmatprep.subr.mxu0 0.0
  %443 = vmatpush1.xpose.msra.mxu0 0.0
  %444 = vmatprep.subr.mxu0 0.0
  %445 = vmatpush1.xpose.msra.mxu0 0.0
  %446 = vmatprep.subr.mxu0 0.0
  %447 = vmatpush1.xpose.msra.mxu0 0.0
  %448 = vmatprep.subr.mxu0 0.0
  %449 = vmatpush1.xpose.msra.mxu0 0.0
  %450 = vmatprep.subr.mxu0 0.0
  %451 = vmatpush1.xpose.msra.mxu0 0.0
  %452 = vmatprep.subr.mxu0 0.0
  %453 = vmatpush1.xpose.msra.mxu0 0.0
  %454 = vmatprep.subr.mxu0 0.0
  %455 = vmatpush1.xpose.msra.mxu0 0.0
  %456 = vmatprep.subr.mxu0 0.0
  %457 = vmatpush1.xpose.msra.mxu0 0.0
  %458 = vmatprep.subr.mxu0 0.0
  %459 = vmatpush1.xpose.msra.mxu0 0.0
  %460 = vmatprep.subr.mxu0 0.0
  %461 = vmatpush1.xpose.msra.mxu0 0.0
  %462 = vmatprep.subr.mxu0 0.0
  %463 = vmatpush1.xpose.msra.mxu0 0.0
  %464 = vmatprep.subr.mxu0 0.0
  %465 = vmatpush1.xpose.msra.mxu0 0.0
  %466 = vmatprep.subr.mxu0 0.0
  %467 = vmatpush1.xpose.msra.mxu0 0.0
  %468 = vmatprep.subr.mxu0 0.0
  %469 = vmatpush1.xpose.msra.mxu0 0.0
  %470 = vmatprep.subr.mxu0 0.0
  %471 = vmatpush1.xpose.msra.mxu0 0.0
  %472 = vmatprep.subr.mxu0 0.0
  %473 = vmatpush1.xpose.msra.mxu0 0.0
  %474 = vmatprep.subr.mxu0 0.0
  %475 = vmatpush1.xpose.msra.mxu0 0.0
  %476 = vmatprep.subr.mxu0 0.0
  %477 = vmatpush1.xpose.msra.mxu0 0.0
  %478 = vmatprep.subr.mxu0 0.0
  %479 = vmatpush1.xpose.msra.mxu0 0.0
  %480 = vmatprep.subr.mxu0 0.0
  %481 = vmatpush1.xpose.msra.mxu0 0.0
  %482 = vmatprep.subr.mxu0 0.0
  %483 = vmatpush1.xpose.msra.mxu0 0.0
  %484 = vmatprep.subr.mxu0 0.0
  %485 = vmatpush1.xpose.msra.mxu0 0.0
  %486 = vmatprep.subr.mxu0 0.0
  %487 = vmatpush1.xpose.msra.mxu0 0.0
  %488 = vmatprep.subr.mxu0 0.0
  %489 = vmatpush1.xpose.msra.mxu0 0.0
  %490 = vmatprep.subr.mxu0 0.0
  %491 = vmatpush1.xpose.msra.mxu0 0.0
  %492 = vmatprep.subr.mxu0 0.0
  %493 = vmatpush1.xpose.msra.mxu0 0.0
  %494 = vmatprep.subr.mxu0 0.0
  %495 = vmatpush1.xpose.msra.mxu0 0.0
  %496 = vmatprep.mubr.f32.mxu0 0.0
  %497 = vmatmul.mubr.f32.gmra.mrb[0].mxu0 %v97
  %v498 = vpop.f32.mrb[0].mxu0
  %v499 = vadd.f32 0.0, %v498
  %v500 = vpop.f32.mrb[0].mxu0
  %501 = vmatprep.mubr.f32.mxu0 0.0
  %502 = vmatmul.mubr.f32.gmra.mrb[0].mxu0 %v100
  %v503 = vpop.f32.mrb[0].mxu0
  %v504 = vadd.f32 0.0, %v503
  %v505 = vpop.f32.mrb[0].mxu0
  %506 = vdwg.mxu0
  %v508 = vsel %vm95, %v73, 0
  %v511 = vsel %vm95, %v74, 0
  %513 = vmatprep.subr.mxu0 0.0
  %514 = vmatpush1.xpose.msra.mxu0 %v508
  %515 = vmatprep.subr.mxu0 0.0
  %516 = vmatpush1.xpose.msra.mxu0 %v511
  %517 = vmatprep.subr.mxu0 0.0
  %518 = vmatpush1.xpose.msra.mxu0 0.0
  %519 = vmatprep.subr.mxu0 0.0
  %520 = vmatpush1.xpose.msra.mxu0 0.0
  %521 = vmatprep.subr.mxu0 0.0
  %522 = vmatpush1.xpose.msra.mxu0 0.0
  %523 = vmatprep.subr.mxu0 0.0
  %524 = vmatpush1.xpose.msra.mxu0 0.0
  %525 = vmatprep.subr.mxu0 0.0
  %526 = vmatpush1.xpose.msra.mxu0 0.0
  %527 = vmatprep.subr.mxu0 0.0
  %528 = vmatpush1.xpose.msra.mxu0 0.0
  %529 = vmatprep.subr.mxu0 0.0
  %530 = vmatpush1.xpose.msra.mxu0 0.0
  %531 = vmatprep.subr.mxu0 0.0
  %532 = vmatpush1.xpose.msra.mxu0 0.0
  %533 = vmatprep.subr.mxu0 0.0
  %534 = vmatpush1.xpose.msra.mxu0 0.0
  %535 = vmatprep.subr.mxu0 0.0
  %536 = vmatpush1.xpose.msra.mxu0 0.0
  %537 = vmatprep.subr.mxu0 0.0
  %538 = vmatpush1.xpose.msra.mxu0 0.0
  %539 = vmatprep.subr.mxu0 0.0
  %540 = vmatpush1.xpose.msra.mxu0 0.0
  %541 = vmatprep.subr.mxu0 0.0
  %542 = vmatpush1.xpose.msra.mxu0 0.0
  %543 = vmatprep.subr.mxu0 0.0
  %544 = vmatpush1.xpose.msra.mxu0 0.0
  %545 = vmatprep.subr.mxu0 0.0
  %546 = vmatpush1.xpose.msra.mxu0 0.0
  %547 = vmatprep.subr.mxu0 0.0
  %548 = vmatpush1.xpose.msra.mxu0 0.0
  %549 = vmatprep.subr.mxu0 0.0
  %550 = vmatpush1.xpose.msra.mxu0 0.0
  %551 = vmatprep.subr.mxu0 0.0
  %552 = vmatpush1.xpose.msra.mxu0 0.0
  %553 = vmatprep.subr.mxu0 0.0
  %554 = vmatpush1.xpose.msra.mxu0 0.0
  %555 = vmatprep.subr.mxu0 0.0
  %556 = vmatpush1.xpose.msra.mxu0 0.0
  %557 = vmatprep.subr.mxu0 0.0
  %558 = vmatpush1.xpose.msra.mxu0 0.0
  %559 = vmatprep.subr.mxu0 0.0
  %560 = vmatpush1.xpose.msra.mxu0 0.0
  %561 = vmatprep.subr.mxu0 0.0
  %562 = vmatpush1.xpose.msra.mxu0 0.0
  %563 = vmatprep.subr.mxu0 0.0
  %564 = vmatpush1.xpose.msra.mxu0 0.0
  %565 = vmatprep.subr.mxu0 0.0
  %566 = vmatpush1.xpose.msra.mxu0 0.0
  %567 = vmatprep.subr.mxu0 0.0
  %568 = vmatpush1.xpose.msra.mxu0 0.0
  %569 = vmatprep.subr.mxu0 0.0
  %570 = vmatpush1.xpose.msra.mxu0 0.0
  %571 = vmatprep.subr.mxu0 0.0
  %572 = vmatpush1.xpose.msra.mxu0 0.0
  %573 = vmatprep.subr.mxu0 0.0
  %574 = vmatpush1.xpose.msra.mxu0 0.0
  %575 = vmatprep.subr.mxu0 0.0
  %576 = vmatpush1.xpose.msra.mxu0 0.0
  %577 = vmatprep.mubr.f32.mxu0 0.0
  %578 = vmatmul.mubr.f32.gmra.mrb[0].mxu0 %v97
  %v579 = vpop.f32.mrb[0].mxu0
  %v580 = vadd.f32 0.0, %v579
  %v581 = vpop.f32.mrb[0].mxu0
  %582 = vmatprep.mubr.f32.mxu0 0.0
  %583 = vmatmul.mubr.f32.gmra.mrb[0].mxu0 %v100
  %v584 = vpop.f32.mrb[0].mxu0
  %v585 = vadd.f32 0.0, %v584
  %v586 = vpop.f32.mrb[0].mxu0
  %587 = vdwg.mxu0
  %v589 = vsel %vm95, %v75, 0
  %v592 = vsel %vm95, %v76, 0
  %594 = vmatprep.subr.mxu0 0.0
  %595 = vmatpush1.xpose.msra.mxu0 %v589
  %596 = vmatprep.subr.mxu0 0.0
  %597 = vmatpush1.xpose.msra.mxu0 %v592
  %598 = vmatprep.subr.mxu0 0.0
  %599 = vmatpush1.xpose.msra.mxu0 0.0
  %600 = vmatprep.subr.mxu0 0.0
  %601 = vmatpush1.xpose.msra.mxu0 0.0
  %602 = vmatprep.subr.mxu0 0.0
  %603 = vmatpush1.xpose.msra.mxu0 0.0
  %604 = vmatprep.subr.mxu0 0.0
  %605 = vmatpush1.xpose.msra.mxu0 0.0
  %606 = vmatprep.subr.mxu0 0.0
  %607 = vmatpush1.xpose.msra.mxu0 0.0
  %608 = vmatprep.subr.mxu0 0.0
  %609 = vmatpush1.xpose.msra.mxu0 0.0
  %610 = vmatprep.subr.mxu0 0.0
  %611 = vmatpush1.xpose.msra.mxu0 0.0
  %612 = vmatprep.subr.mxu0 0.0
  %613 = vmatpush1.xpose.msra.mxu0 0.0
  %614 = vmatprep.subr.mxu0 0.0
  %615 = vmatpush1.xpose.msra.mxu0 0.0
  %616 = vmatprep.subr.mxu0 0.0
  %617 = vmatpush1.xpose.msra.mxu0 0.0
  %618 = vmatprep.subr.mxu0 0.0
  %619 = vmatpush1.xpose.msra.mxu0 0.0
  %620 = vmatprep.subr.mxu0 0.0
  %621 = vmatpush1.xpose.msra.mxu0 0.0
  %622 = vmatprep.subr.mxu0 0.0
  %623 = vmatpush1.xpose.msra.mxu0 0.0
  %624 = vmatprep.subr.mxu0 0.0
  %625 = vmatpush1.xpose.msra.mxu0 0.0
  %626 = vmatprep.subr.mxu0 0.0
  %627 = vmatpush1.xpose.msra.mxu0 0.0
  %628 = vmatprep.subr.mxu0 0.0
  %629 = vmatpush1.xpose.msra.mxu0 0.0
  %630 = vmatprep.subr.mxu0 0.0
  %631 = vmatpush1.xpose.msra.mxu0 0.0
  %632 = vmatprep.subr.mxu0 0.0
  %633 = vmatpush1.xpose.msra.mxu0 0.0
  %634 = vmatprep.subr.mxu0 0.0
  %635 = vmatpush1.xpose.msra.mxu0 0.0
  %636 = vmatprep.subr.mxu0 0.0
  %637 = vmatpush1.xpose.msra.mxu0 0.0
  %638 = vmatprep.subr.mxu0 0.0
  %639 = vmatpush1.xpose.msra.mxu0 0.0
  %640 = vmatprep.subr.mxu0 0.0
  %641 = vmatpush1.xpose.msra.mxu0 0.0
  %642 = vmatprep.subr.mxu0 0.0
  %643 = vmatpush1.xpose.msra.mxu0 0.0
  %644 = vmatprep.subr.mxu0 0.0
  %645 = vmatpush1.xpose.msra.mxu0 0.0
  %646 = vmatprep.subr.mxu0 0.0
  %647 = vmatpush1.xpose.msra.mxu0 0.0
  %648 = vmatprep.subr.mxu0 0.0
  %649 = vmatpush1.xpose.msra.mxu0 0.0
  %650 = vmatprep.subr.mxu0 0.0
  %651 = vmatpush1.xpose.msra.mxu0 0.0
  %652 = vmatprep.subr.mxu0 0.0
  %653 = vmatpush1.xpose.msra.mxu0 0.0
  %654 = vmatprep.subr.mxu0 0.0
  %655 = vmatpush1.xpose.msra.mxu0 0.0
  %656 = vmatprep.subr.mxu0 0.0
  %657 = vmatpush1.xpose.msra.mxu0 0.0
  %658 = vmatprep.mubr.f32.mxu0 0.0
  %659 = vmatmul.mubr.f32.gmra.mrb[0].mxu0 %v97
  %v660 = vpop.f32.mrb[0].mxu0
  %v661 = vadd.f32 0.0, %v660
  %v662 = vpop.f32.mrb[0].mxu0
  %663 = vmatprep.mubr.f32.mxu0 0.0
  %664 = vmatmul.mubr.f32.gmra.mrb[0].mxu0 %v100
  %v665 = vpop.f32.mrb[0].mxu0
  %v666 = vadd.f32 0.0, %v665
  %v667 = vpop.f32.mrb[0].mxu0
  %668 = vdwg.mxu0
  %v670 = vsel %vm95, %v77, 0
  %v673 = vsel %vm95, %v78, 0
  %675 = vmatprep.subr.mxu0 0.0
  %676 = vmatpush1.xpose.msra.mxu0 %v670
  %677 = vmatprep.subr.mxu0 0.0
  %678 = vmatpush1.xpose.msra.mxu0 %v673
  %679 = vmatprep.subr.mxu0 0.0
  %680 = vmatpush1.xpose.msra.mxu0 0.0
  %681 = vmatprep.subr.mxu0 0.0
  %682 = vmatpush1.xpose.msra.mxu0 0.0
  %683 = vmatprep.subr.mxu0 0.0
  %684 = vmatpush1.xpose.msra.mxu0 0.0
  %685 = vmatprep.subr.mxu0 0.0
  %686 = vmatpush1.xpose.msra.mxu0 0.0
  %687 = vmatprep.subr.mxu0 0.0
  %688 = vmatpush1.xpose.msra.mxu0 0.0
  %689 = vmatprep.subr.mxu0 0.0
  %690 = vmatpush1.xpose.msra.mxu0 0.0
  %691 = vmatprep.subr.mxu0 0.0
  %692 = vmatpush1.xpose.msra.mxu0 0.0
  %693 = vmatprep.subr.mxu0 0.0
  %694 = vmatpush1.xpose.msra.mxu0 0.0
  %695 = vmatprep.subr.mxu0 0.0
  %696 = vmatpush1.xpose.msra.mxu0 0.0
  %697 = vmatprep.subr.mxu0 0.0
  %698 = vmatpush1.xpose.msra.mxu0 0.0
  %699 = vmatprep.subr.mxu0 0.0
  %700 = vmatpush1.xpose.msra.mxu0 0.0
  %701 = vmatprep.subr.mxu0 0.0
  %702 = vmatpush1.xpose.msra.mxu0 0.0
  %703 = vmatprep.subr.mxu0 0.0
  %704 = vmatpush1.xpose.msra.mxu0 0.0
  %705 = vmatprep.subr.mxu0 0.0
  %706 = vmatpush1.xpose.msra.mxu0 0.0
  %707 = vmatprep.subr.mxu0 0.0
  %708 = vmatpush1.xpose.msra.mxu0 0.0
  %709 = vmatprep.subr.mxu0 0.0
  %710 = vmatpush1.xpose.msra.mxu0 0.0
  %711 = vmatprep.subr.mxu0 0.0
  %712 = vmatpush1.xpose.msra.mxu0 0.0
  %713 = vmatprep.subr.mxu0 0.0
  %714 = vmatpush1.xpose.msra.mxu0 0.0
  %715 = vmatprep.subr.mxu0 0.0
  %716 = vmatpush1.xpose.msra.mxu0 0.0
  %717 = vmatprep.subr.mxu0 0.0
  %718 = vmatpush1.xpose.msra.mxu0 0.0
  %719 = vmatprep.subr.mxu0 0.0
  %720 = vmatpush1.xpose.msra.mxu0 0.0
  %721 = vmatprep.subr.mxu0 0.0
  %722 = vmatpush1.xpose.msra.mxu0 0.0
  %723 = vmatprep.subr.mxu0 0.0
  %724 = vmatpush1.xpose.msra.mxu0 0.0
  %725 = vmatprep.subr.mxu0 0.0
  %726 = vmatpush1.xpose.msra.mxu0 0.0
  %727 = vmatprep.subr.mxu0 0.0
  %728 = vmatpush1.xpose.msra.mxu0 0.0
  %729 = vmatprep.subr.mxu0 0.0
  %730 = vmatpush1.xpose.msra.mxu0 0.0
  %731 = vmatprep.subr.mxu0 0.0
  %732 = vmatpush1.xpose.msra.mxu0 0.0
  %733 = vmatprep.subr.mxu0 0.0
  %734 = vmatpush1.xpose.msra.mxu0 0.0
  %735 = vmatprep.subr.mxu0 0.0
  %736 = vmatpush1.xpose.msra.mxu0 0.0
  %737 = vmatprep.subr.mxu0 0.0
  %738 = vmatpush1.xpose.msra.mxu0 0.0
  %739 = vmatprep.mubr.f32.mxu0 0.0
  %740 = vmatmul.mubr.f32.gmra.mrb[0].mxu0 %v97
  %v741 = vpop.f32.mrb[0].mxu0
  %v742 = vadd.f32 0.0, %v741
  %v743 = vpop.f32.mrb[0].mxu0
  %744 = vmatprep.mubr.f32.mxu0 0.0
  %745 = vmatmul.mubr.f32.gmra.mrb[0].mxu0 %v100
  %v746 = vpop.f32.mrb[0].mxu0
  %v747 = vadd.f32 0.0, %v746
  %v748 = vpop.f32.mrb[0].mxu0
  %749 = vdwg.mxu0
  %v751 = vsel %vm95, %v79, 0
  %v754 = vsel %vm95, %v80, 0
  %756 = vmatprep.subr.mxu0 0.0
  %757 = vmatpush1.xpose.msra.mxu0 %v751
  %758 = vmatprep.subr.mxu0 0.0
  %759 = vmatpush1.xpose.msra.mxu0 %v754
  %760 = vmatprep.subr.mxu0 0.0
  %761 = vmatpush1.xpose.msra.mxu0 0.0
  %762 = vmatprep.subr.mxu0 0.0
  %763 = vmatpush1.xpose.msra.mxu0 0.0
  %764 = vmatprep.subr.mxu0 0.0
  %765 = vmatpush1.xpose.msra.mxu0 0.0
  %766 = vmatprep.subr.mxu0 0.0
  %767 = vmatpush1.xpose.msra.mxu0 0.0
  %768 = vmatprep.subr.mxu0 0.0
  %769 = vmatpush1.xpose.msra.mxu0 0.0
  %770 = vmatprep.subr.mxu0 0.0
  %771 = vmatpush1.xpose.msra.mxu0 0.0
  %772 = vmatprep.subr.mxu0 0.0
  %773 = vmatpush1.xpose.msra.mxu0 0.0
  %774 = vmatprep.subr.mxu0 0.0
  %775 = vmatpush1.xpose.msra.mxu0 0.0
  %776 = vmatprep.subr.mxu0 0.0
  %777 = vmatpush1.xpose.msra.mxu0 0.0
  %778 = vmatprep.subr.mxu0 0.0
  %779 = vmatpush1.xpose.msra.mxu0 0.0
  %780 = vmatprep.subr.mxu0 0.0
  %781 = vmatpush1.xpose.msra.mxu0 0.0
  %782 = vmatprep.subr.mxu0 0.0
  %783 = vmatpush1.xpose.msra.mxu0 0.0
  %784 = vmatprep.subr.mxu0 0.0
  %785 = vmatpush1.xpose.msra.mxu0 0.0
  %786 = vmatprep.subr.mxu0 0.0
  %787 = vmatpush1.xpose.msra.mxu0 0.0
  %788 = vmatprep.subr.mxu0 0.0
  %789 = vmatpush1.xpose.msra.mxu0 0.0
  %790 = vmatprep.subr.mxu0 0.0
  %791 = vmatpush1.xpose.msra.mxu0 0.0
  %792 = vmatprep.subr.mxu0 0.0
  %793 = vmatpush1.xpose.msra.mxu0 0.0
  %794 = vmatprep.subr.mxu0 0.0
  %795 = vmatpush1.xpose.msra.mxu0 0.0
  %796 = vmatprep.subr.mxu0 0.0
  %797 = vmatpush1.xpose.msra.mxu0 0.0
  %798 = vmatprep.subr.mxu0 0.0
  %799 = vmatpush1.xpose.msra.mxu0 0.0
  %800 = vmatprep.subr.mxu0 0.0
  %801 = vmatpush1.xpose.msra.mxu0 0.0
  %802 = vmatprep.subr.mxu0 0.0
  %803 = vmatpush1.xpose.msra.mxu0 0.0
  %804 = vmatprep.subr.mxu0 0.0
  %805 = vmatpush1.xpose.msra.mxu0 0.0
  %806 = vmatprep.subr.mxu0 0.0
  %807 = vmatpush1.xpose.msra.mxu0 0.0
  %808 = vmatprep.subr.mxu0 0.0
  %809 = vmatpush1.xpose.msra.mxu0 0.0
  %810 = vmatprep.subr.mxu0 0.0
  %811 = vmatpush1.xpose.msra.mxu0 0.0
  %812 = vmatprep.subr.mxu0 0.0
  %813 = vmatpush1.xpose.msra.mxu0 0.0
  %814 = vmatprep.subr.mxu0 0.0
  %815 = vmatpush1.xpose.msra.mxu0 0.0
  %816 = vmatprep.subr.mxu0 0.0
  %817 = vmatpush1.xpose.msra.mxu0 0.0
  %818 = vmatprep.subr.mxu0 0.0
  %819 = vmatpush1.xpose.msra.mxu0 0.0
  %820 = vmatprep.mubr.f32.mxu0 0.0
  %821 = vmatmul.mubr.f32.gmra.mrb[0].mxu0 %v97
  %v822 = vpop.f32.mrb[0].mxu0
  %v823 = vadd.f32 0.0, %v822
  %v824 = vpop.f32.mrb[0].mxu0
  %825 = vmatprep.mubr.f32.mxu0 0.0
  %826 = vmatmul.mubr.f32.gmra.mrb[0].mxu0 %v100
  %v827 = vpop.f32.mrb[0].mxu0
  %v828 = vadd.f32 0.0, %v827
  %v829 = vpop.f32.mrb[0].mxu0
  %830 = vdwg.mxu0
  %v832 = vsel %vm95, %v81, 0
  %v835 = vsel %vm95, %v82, 0
  %837 = vmatprep.subr.mxu0 0.0
  %838 = vmatpush1.xpose.msra.mxu0 %v832
  %839 = vmatprep.subr.mxu0 0.0
  %840 = vmatpush1.xpose.msra.mxu0 %v835
  %841 = vmatprep.subr.mxu0 0.0
  %842 = vmatpush1.xpose.msra.mxu0 0.0
  %843 = vmatprep.subr.mxu0 0.0
  %844 = vmatpush1.xpose.msra.mxu0 0.0
  %845 = vmatprep.subr.mxu0 0.0
  %846 = vmatpush1.xpose.msra.mxu0 0.0
  %847 = vmatprep.subr.mxu0 0.0
  %848 = vmatpush1.xpose.msra.mxu0 0.0
  %849 = vmatprep.subr.mxu0 0.0
  %850 = vmatpush1.xpose.msra.mxu0 0.0
  %851 = vmatprep.subr.mxu0 0.0
  %852 = vmatpush1.xpose.msra.mxu0 0.0
  %853 = vmatprep.subr.mxu0 0.0
  %854 = vmatpush1.xpose.msra.mxu0 0.0
  %855 = vmatprep.subr.mxu0 0.0
  %856 = vmatpush1.xpose.msra.mxu0 0.0
  %857 = vmatprep.subr.mxu0 0.0
  %858 = vmatpush1.xpose.msra.mxu0 0.0
  %859 = vmatprep.subr.mxu0 0.0
  %860 = vmatpush1.xpose.msra.mxu0 0.0
  %861 = vmatprep.subr.mxu0 0.0
  %862 = vmatpush1.xpose.msra.mxu0 0.0
  %863 = vmatprep.subr.mxu0 0.0
  %864 = vmatpush1.xpose.msra.mxu0 0.0
  %865 = vmatprep.subr.mxu0 0.0
  %866 = vmatpush1.xpose.msra.mxu0 0.0
  %867 = vmatprep.subr.mxu0 0.0
  %868 = vmatpush1.xpose.msra.mxu0 0.0
  %869 = vmatprep.subr.mxu0 0.0
  %870 = vmatpush1.xpose.msra.mxu0 0.0
  %871 = vmatprep.subr.mxu0 0.0
  %872 = vmatpush1.xpose.msra.mxu0 0.0
  %873 = vmatprep.subr.mxu0 0.0
  %874 = vmatpush1.xpose.msra.mxu0 0.0
  %875 = vmatprep.subr.mxu0 0.0
  %876 = vmatpush1.xpose.msra.mxu0 0.0
  %877 = vmatprep.subr.mxu0 0.0
  %878 = vmatpush1.xpose.msra.mxu0 0.0
  %879 = vmatprep.subr.mxu0 0.0
  %880 = vmatpush1.xpose.msra.mxu0 0.0
  %881 = vmatprep.subr.mxu0 0.0
  %882 = vmatpush1.xpose.msra.mxu0 0.0
  %883 = vmatprep.subr.mxu0 0.0
  %884 = vmatpush1.xpose.msra.mxu0 0.0
  %885 = vmatprep.subr.mxu0 0.0
  %886 = vmatpush1.xpose.msra.mxu0 0.0
  %887 = vmatprep.subr.mxu0 0.0
  %888 = vmatpush1.xpose.msra.mxu0 0.0
  %889 = vmatprep.subr.mxu0 0.0
  %890 = vmatpush1.xpose.msra.mxu0 0.0
  %891 = vmatprep.subr.mxu0 0.0
  %892 = vmatpush1.xpose.msra.mxu0 0.0
  %893 = vmatprep.subr.mxu0 0.0
  %894 = vmatpush1.xpose.msra.mxu0 0.0
  %895 = vmatprep.subr.mxu0 0.0
  %896 = vmatpush1.xpose.msra.mxu0 0.0
  %897 = vmatprep.subr.mxu0 0.0
  %898 = vmatpush1.xpose.msra.mxu0 0.0
  %899 = vmatprep.subr.mxu0 0.0
  %900 = vmatpush1.xpose.msra.mxu0 0.0
  %901 = vmatprep.mubr.f32.mxu0 0.0
  %902 = vmatmul.mubr.f32.gmra.mrb[0].mxu0 %v97
  %v903 = vpop.f32.mrb[0].mxu0
  %v904 = vadd.f32 0.0, %v903
  %v905 = vpop.f32.mrb[0].mxu0
  %906 = vmatprep.mubr.f32.mxu0 0.0
  %907 = vmatmul.mubr.f32.gmra.mrb[0].mxu0 %v100
  %v908 = vpop.f32.mrb[0].mxu0
  %v909 = vadd.f32 0.0, %v908
  %v910 = vpop.f32.mrb[0].mxu0
  %911 = vdwg.mxu0
  %v913 = vsel %vm95, %v83, 0
  %v916 = vsel %vm95, %v84, 0
  %918 = vmatprep.subr.mxu0 0.0
  %919 = vmatpush1.xpose.msra.mxu0 %v913
  %920 = vmatprep.subr.mxu0 0.0
  %921 = vmatpush1.xpose.msra.mxu0 %v916
  %922 = vmatprep.subr.mxu0 0.0
  %923 = vmatpush1.xpose.msra.mxu0 0.0
  %924 = vmatprep.subr.mxu0 0.0
  %925 = vmatpush1.xpose.msra.mxu0 0.0
  %926 = vmatprep.subr.mxu0 0.0
  %927 = vmatpush1.xpose.msra.mxu0 0.0
  %928 = vmatprep.subr.mxu0 0.0
  %929 = vmatpush1.xpose.msra.mxu0 0.0
  %930 = vmatprep.subr.mxu0 0.0
  %931 = vmatpush1.xpose.msra.mxu0 0.0
  %932 = vmatprep.subr.mxu0 0.0
  %933 = vmatpush1.xpose.msra.mxu0 0.0
  %934 = vmatprep.subr.mxu0 0.0
  %935 = vmatpush1.xpose.msra.mxu0 0.0
  %936 = vmatprep.subr.mxu0 0.0
  %937 = vmatpush1.xpose.msra.mxu0 0.0
  %938 = vmatprep.subr.mxu0 0.0
  %939 = vmatpush1.xpose.msra.mxu0 0.0
  %940 = vmatprep.subr.mxu0 0.0
  %941 = vmatpush1.xpose.msra.mxu0 0.0
  %942 = vmatprep.subr.mxu0 0.0
  %943 = vmatpush1.xpose.msra.mxu0 0.0
  %944 = vmatprep.subr.mxu0 0.0
  %945 = vmatpush1.xpose.msra.mxu0 0.0
  %946 = vmatprep.subr.mxu0 0.0
  %947 = vmatpush1.xpose.msra.mxu0 0.0
  %948 = vmatprep.subr.mxu0 0.0
  %949 = vmatpush1.xpose.msra.mxu0 0.0
  %950 = vmatprep.subr.mxu0 0.0
  %951 = vmatpush1.xpose.msra.mxu0 0.0
  %952 = vmatprep.subr.mxu0 0.0
  %953 = vmatpush1.xpose.msra.mxu0 0.0
  %954 = vmatprep.subr.mxu0 0.0
  %955 = vmatpush1.xpose.msra.mxu0 0.0
  %956 = vmatprep.subr.mxu0 0.0
  %957 = vmatpush1.xpose.msra.mxu0 0.0
  %958 = vmatprep.subr.mxu0 0.0
  %959 = vmatpush1.xpose.msra.mxu0 0.0
  %960 = vmatprep.subr.mxu0 0.0
  %961 = vmatpush1.xpose.msra.mxu0 0.0
  %962 = vmatprep.subr.mxu0 0.0
  %963 = vmatpush1.xpose.msra.mxu0 0.0
  %964 = vmatprep.subr.mxu0 0.0
  %965 = vmatpush1.xpose.msra.mxu0 0.0
  %966 = vmatprep.subr.mxu0 0.0
  %967 = vmatpush1.xpose.msra.mxu0 0.0
  %968 = vmatprep.subr.mxu0 0.0
  %969 = vmatpush1.xpose.msra.mxu0 0.0
  %970 = vmatprep.subr.mxu0 0.0
  %971 = vmatpush1.xpose.msra.mxu0 0.0
  %972 = vmatprep.subr.mxu0 0.0
  %973 = vmatpush1.xpose.msra.mxu0 0.0
  %974 = vmatprep.subr.mxu0 0.0
  %975 = vmatpush1.xpose.msra.mxu0 0.0
  %976 = vmatprep.subr.mxu0 0.0
  %977 = vmatpush1.xpose.msra.mxu0 0.0
  %978 = vmatprep.subr.mxu0 0.0
  %979 = vmatpush1.xpose.msra.mxu0 0.0
  %980 = vmatprep.subr.mxu0 0.0
  %981 = vmatpush1.xpose.msra.mxu0 0.0
  %982 = vmatprep.mubr.f32.mxu0 0.0
  %983 = vmatmul.mubr.f32.gmra.mrb[0].mxu0 %v97
  %v984 = vpop.f32.mrb[0].mxu0
  %v985 = vadd.f32 0.0, %v984
  %v986 = vpop.f32.mrb[0].mxu0
  %987 = vmatprep.mubr.f32.mxu0 0.0
  %988 = vmatmul.mubr.f32.gmra.mrb[0].mxu0 %v100
  %v989 = vpop.f32.mrb[0].mxu0
  %v990 = vadd.f32 0.0, %v989
  %v991 = vpop.f32.mrb[0].mxu0
  %992 = vdwg.mxu0
  %v994 = vsel %vm95, %v85, 0
  %v997 = vsel %vm95, %v86, 0
  %999 = vmatprep.subr.mxu0 0.0
  %1000 = vmatpush1.xpose.msra.mxu0 %v994
  %1001 = vmatprep.subr.mxu0 0.0
  %1002 = vmatpush1.xpose.msra.mxu0 %v997
  %1003 = vmatprep.subr.mxu0 0.0
  %1004 = vmatpush1.xpose.msra.mxu0 0.0
  %1005 = vmatprep.subr.mxu0 0.0
  %1006 = vmatpush1.xpose.msra.mxu0 0.0
  %1007 = vmatprep.subr.mxu0 0.0
  %1008 = vmatpush1.xpose.msra.mxu0 0.0
  %1009 = vmatprep.subr.mxu0 0.0
  %1010 = vmatpush1.xpose.msra.mxu0 0.0
  %1011 = vmatprep.subr.mxu0 0.0
  %1012 = vmatpush1.xpose.msra.mxu0 0.0
  %1013 = vmatprep.subr.mxu0 0.0
  %1014 = vmatpush1.xpose.msra.mxu0 0.0
  %1015 = vmatprep.subr.mxu0 0.0
  %1016 = vmatpush1.xpose.msra.mxu0 0.0
  %1017 = vmatprep.subr.mxu0 0.0
  %1018 = vmatpush1.xpose.msra.mxu0 0.0
  %1019 = vmatprep.subr.mxu0 0.0
  %1020 = vmatpush1.xpose.msra.mxu0 0.0
  %1021 = vmatprep.subr.mxu0 0.0
  %1022 = vmatpush1.xpose.msra.mxu0 0.0
  %1023 = vmatprep.subr.mxu0 0.0
  %1024 = vmatpush1.xpose.msra.mxu0 0.0
  %1025 = vmatprep.subr.mxu0 0.0
  %1026 = vmatpush1.xpose.msra.mxu0 0.0
  %1027 = vmatprep.subr.mxu0 0.0
  %1028 = vmatpush1.xpose.msra.mxu0 0.0
  %1029 = vmatprep.subr.mxu0 0.0
  %1030 = vmatpush1.xpose.msra.mxu0 0.0
  %1031 = vmatprep.subr.mxu0 0.0
  %1032 = vmatpush1.xpose.msra.mxu0 0.0
  %1033 = vmatprep.subr.mxu0 0.0
  %1034 = vmatpush1.xpose.msra.mxu0 0.0
  %1035 = vmatprep.subr.mxu0 0.0
  %1036 = vmatpush1.xpose.msra.mxu0 0.0
  %1037 = vmatprep.subr.mxu0 0.0
  %1038 = vmatpush1.xpose.msra.mxu0 0.0
  %1039 = vmatprep.subr.mxu0 0.0
  %1040 = vmatpush1.xpose.msra.mxu0 0.0
  %1041 = vmatprep.subr.mxu0 0.0
  %1042 = vmatpush1.xpose.msra.mxu0 0.0
  %1043 = vmatprep.subr.mxu0 0.0
  %1044 = vmatpush1.xpose.msra.mxu0 0.0
  %1045 = vmatprep.subr.mxu0 0.0
  %1046 = vmatpush1.xpose.msra.mxu0 0.0
  %1047 = vmatprep.subr.mxu0 0.0
  %1048 = vmatpush1.xpose.msra.mxu0 0.0
  %1049 = vmatprep.subr.mxu0 0.0
  %1050 = vmatpush1.xpose.msra.mxu0 0.0
  %1051 = vmatprep.subr.mxu0 0.0
  %1052 = vmatpush1.xpose.msra.mxu0 0.0
  %1053 = vmatprep.subr.mxu0 0.0
  %1054 = vmatpush1.xpose.msra.mxu0 0.0
  %1055 = vmatprep.subr.mxu0 0.0
  %1056 = vmatpush1.xpose.msra.mxu0 0.0
  %1057 = vmatprep.subr.mxu0 0.0
  %1058 = vmatpush1.xpose.msra.mxu0 0.0
  %1059 = vmatprep.subr.mxu0 0.0
  %1060 = vmatpush1.xpose.msra.mxu0 0.0
  %1061 = vmatprep.subr.mxu0 0.0
  %1062 = vmatpush1.xpose.msra.mxu0 0.0
  %1063 = vmatprep.mubr.f32.mxu0 0.0
  %1064 = vmatmul.mubr.f32.gmra.mrb[0].mxu0 %v97
  %v1065 = vpop.f32.mrb[0].mxu0
  %v1066 = vadd.f32 0.0, %v1065
  %v1067 = vpop.f32.mrb[0].mxu0
  %1068 = vmatprep.mubr.f32.mxu0 0.0
  %1069 = vmatmul.mubr.f32.gmra.mrb[0].mxu0 %v100
  %v1070 = vpop.f32.mrb[0].mxu0
  %v1071 = vadd.f32 0.0, %v1070
  %v1072 = vpop.f32.mrb[0].mxu0
  %1073 = vdwg.mxu0
  %v1075 = vsel %vm95, %v87, 0
  %v1078 = vsel %vm95, %v88, 0
  %1080 = vmatprep.subr.mxu0 0.0
  %1081 = vmatpush1.xpose.msra.mxu0 %v1075
  %1082 = vmatprep.subr.mxu0 0.0
  %1083 = vmatpush1.xpose.msra.mxu0 %v1078
  %1084 = vmatprep.subr.mxu0 0.0
  %1085 = vmatpush1.xpose.msra.mxu0 0.0
  %1086 = vmatprep.subr.mxu0 0.0
  %1087 = vmatpush1.xpose.msra.mxu0 0.0
  %1088 = vmatprep.subr.mxu0 0.0
  %1089 = vmatpush1.xpose.msra.mxu0 0.0
  %1090 = vmatprep.subr.mxu0 0.0
  %1091 = vmatpush1.xpose.msra.mxu0 0.0
  %1092 = vmatprep.subr.mxu0 0.0
  %1093 = vmatpush1.xpose.msra.mxu0 0.0
  %1094 = vmatprep.subr.mxu0 0.0
  %1095 = vmatpush1.xpose.msra.mxu0 0.0
  %1096 = vmatprep.subr.mxu0 0.0
  %1097 = vmatpush1.xpose.msra.mxu0 0.0
  %1098 = vmatprep.subr.mxu0 0.0
  %1099 = vmatpush1.xpose.msra.mxu0 0.0
  %1100 = vmatprep.subr.mxu0 0.0
  %1101 = vmatpush1.xpose.msra.mxu0 0.0
  %1102 = vmatprep.subr.mxu0 0.0
  %1103 = vmatpush1.xpose.msra.mxu0 0.0
  %1104 = vmatprep.subr.mxu0 0.0
  %1105 = vmatpush1.xpose.msra.mxu0 0.0
  %1106 = vmatprep.subr.mxu0 0.0
  %1107 = vmatpush1.xpose.msra.mxu0 0.0
  %1108 = vmatprep.subr.mxu0 0.0
  %1109 = vmatpush1.xpose.msra.mxu0 0.0
  %1110 = vmatprep.subr.mxu0 0.0
  %1111 = vmatpush1.xpose.msra.mxu0 0.0
  %1112 = vmatprep.subr.mxu0 0.0
  %1113 = vmatpush1.xpose.msra.mxu0 0.0
  %1114 = vmatprep.subr.mxu0 0.0
  %1115 = vmatpush1.xpose.msra.mxu0 0.0
  %1116 = vmatprep.subr.mxu0 0.0
  %1117 = vmatpush1.xpose.msra.mxu0 0.0
  %1118 = vmatprep.subr.mxu0 0.0
  %1119 = vmatpush1.xpose.msra.mxu0 0.0
  %1120 = vmatprep.subr.mxu0 0.0
  %1121 = vmatpush1.xpose.msra.mxu0 0.0
  %1122 = vmatprep.subr.mxu0 0.0
  %1123 = vmatpush1.xpose.msra.mxu0 0.0
  %1124 = vmatprep.subr.mxu0 0.0
  %1125 = vmatpush1.xpose.msra.mxu0 0.0
  %1126 = vmatprep.subr.mxu0 0.0
  %1127 = vmatpush1.xpose.msra.mxu0 0.0
  %1128 = vmatprep.subr.mxu0 0.0
  %1129 = vmatpush1.xpose.msra.mxu0 0.0
  %1130 = vmatprep.subr.mxu0 0.0
  %1131 = vmatpush1.xpose.msra.mxu0 0.0
  %1132 = vmatprep.subr.mxu0 0.0
  %1133 = vmatpush1.xpose.msra.mxu0 0.0
  %1134 = vmatprep.subr.mxu0 0.0
  %1135 = vmatpush1.xpose.msra.mxu0 0.0
  %1136 = vmatprep.subr.mxu0 0.0
  %1137 = vmatpush1.xpose.msra.mxu0 0.0
  %1138 = vmatprep.subr.mxu0 0.0
  %1139 = vmatpush1.xpose.msra.mxu0 0.0
  %1140 = vmatprep.subr.mxu0 0.0
  %1141 = vmatpush1.xpose.msra.mxu0 0.0
  %1142 = vmatprep.subr.mxu0 0.0
  %1143 = vmatpush1.xpose.msra.mxu0 0.0
  %1144 = vmatprep.mubr.f32.mxu0 0.0
  %1145 = vmatmul.mubr.f32.gmra.mrb[0].mxu0 %v97
  %v1146 = vpop.f32.mrb[0].mxu0
  %v1147 = vadd.f32 0.0, %v1146
  %v1148 = vpop.f32.mrb[0].mxu0
  %1149 = vmatprep.mubr.f32.mxu0 0.0
  %1150 = vmatmul.mubr.f32.gmra.mrb[0].mxu0 %v100
  %v1151 = vpop.f32.mrb[0].mxu0
  %v1152 = vadd.f32 0.0, %v1151
  %v1153 = vpop.f32.mrb[0].mxu0
  %1154 = vdwg.mxu0
  %v1156 = vsel %vm95, %v89, 0
  %v1159 = vsel %vm95, %v90, 0
  %1161 = vmatprep.subr.mxu0 0.0
  %1162 = vmatpush1.xpose.msra.mxu0 %v1156
  %1163 = vmatprep.subr.mxu0 0.0
  %1164 = vmatpush1.xpose.msra.mxu0 %v1159
  %1165 = vmatprep.subr.mxu0 0.0
  %1166 = vmatpush1.xpose.msra.mxu0 0.0
  %1167 = vmatprep.subr.mxu0 0.0
  %1168 = vmatpush1.xpose.msra.mxu0 0.0
  %1169 = vmatprep.subr.mxu0 0.0
  %1170 = vmatpush1.xpose.msra.mxu0 0.0
  %1171 = vmatprep.subr.mxu0 0.0
  %1172 = vmatpush1.xpose.msra.mxu0 0.0
  %1173 = vmatprep.subr.mxu0 0.0
  %1174 = vmatpush1.xpose.msra.mxu0 0.0
  %1175 = vmatprep.subr.mxu0 0.0
  %1176 = vmatpush1.xpose.msra.mxu0 0.0
  %1177 = vmatprep.subr.mxu0 0.0
  %1178 = vmatpush1.xpose.msra.mxu0 0.0
  %1179 = vmatprep.subr.mxu0 0.0
  %1180 = vmatpush1.xpose.msra.mxu0 0.0
  %1181 = vmatprep.subr.mxu0 0.0
  %1182 = vmatpush1.xpose.msra.mxu0 0.0
  %1183 = vmatprep.subr.mxu0 0.0
  %1184 = vmatpush1.xpose.msra.mxu0 0.0
  %1185 = vmatprep.subr.mxu0 0.0
  %1186 = vmatpush1.xpose.msra.mxu0 0.0
  %1187 = vmatprep.subr.mxu0 0.0
  %1188 = vmatpush1.xpose.msra.mxu0 0.0
  %1189 = vmatprep.subr.mxu0 0.0
  %1190 = vmatpush1.xpose.msra.mxu0 0.0
  %1191 = vmatprep.subr.mxu0 0.0
  %1192 = vmatpush1.xpose.msra.mxu0 0.0
  %1193 = vmatprep.subr.mxu0 0.0
  %1194 = vmatpush1.xpose.msra.mxu0 0.0
  %1195 = vmatprep.subr.mxu0 0.0
  %1196 = vmatpush1.xpose.msra.mxu0 0.0
  %1197 = vmatprep.subr.mxu0 0.0
  %1198 = vmatpush1.xpose.msra.mxu0 0.0
  %1199 = vmatprep.subr.mxu0 0.0
  %1200 = vmatpush1.xpose.msra.mxu0 0.0
  %1201 = vmatprep.subr.mxu0 0.0
  %1202 = vmatpush1.xpose.msra.mxu0 0.0
  %1203 = vmatprep.subr.mxu0 0.0
  %1204 = vmatpush1.xpose.msra.mxu0 0.0
  %1205 = vmatprep.subr.mxu0 0.0
  %1206 = vmatpush1.xpose.msra.mxu0 0.0
  %1207 = vmatprep.subr.mxu0 0.0
  %1208 = vmatpush1.xpose.msra.mxu0 0.0
  %1209 = vmatprep.subr.mxu0 0.0
  %1210 = vmatpush1.xpose.msra.mxu0 0.0
  %1211 = vmatprep.subr.mxu0 0.0
  %1212 = vmatpush1.xpose.msra.mxu0 0.0
  %1213 = vmatprep.subr.mxu0 0.0
  %1214 = vmatpush1.xpose.msra.mxu0 0.0
  %1215 = vmatprep.subr.mxu0 0.0
  %1216 = vmatpush1.xpose.msra.mxu0 0.0
  %1217 = vmatprep.subr.mxu0 0.0
  %1218 = vmatpush1.xpose.msra.mxu0 0.0
  %1219 = vmatprep.subr.mxu0 0.0
  %1220 = vmatpush1.xpose.msra.mxu0 0.0
  %1221 = vmatprep.subr.mxu0 0.0
  %1222 = vmatpush1.xpose.msra.mxu0 0.0
  %1223 = vmatprep.subr.mxu0 0.0
  %1224 = vmatpush1.xpose.msra.mxu0 0.0
  %1225 = vmatprep.mubr.f32.mxu0 0.0
  %1226 = vmatmul.mubr.f32.gmra.mrb[0].mxu0 %v97
  %v1227 = vpop.f32.mrb[0].mxu0
  %v1228 = vadd.f32 0.0, %v1227
  %v1229 = vpop.f32.mrb[0].mxu0
  %1230 = vmatprep.mubr.f32.mxu0 0.0
  %1231 = vmatmul.mubr.f32.gmra.mrb[0].mxu0 %v100
  %v1232 = vpop.f32.mrb[0].mxu0
  %v1233 = vadd.f32 0.0, %v1232
  %v1234 = vpop.f32.mrb[0].mxu0
  %1235 = vdwg.mxu0
  %v1237 = vsel %vm95, %v91, 0
  %v1240 = vsel %vm95, %v92, 0
  %1242 = vmatprep.subr.mxu0 0.0
  %1243 = vmatpush1.xpose.msra.mxu0 %v1237
  %1244 = vmatprep.subr.mxu0 0.0
  %1245 = vmatpush1.xpose.msra.mxu0 %v1240
  %1246 = vmatprep.subr.mxu0 0.0
  %1247 = vmatpush1.xpose.msra.mxu0 0.0
  %1248 = vmatprep.subr.mxu0 0.0
  %1249 = vmatpush1.xpose.msra.mxu0 0.0
  %1250 = vmatprep.subr.mxu0 0.0
  %1251 = vmatpush1.xpose.msra.mxu0 0.0
  %1252 = vmatprep.subr.mxu0 0.0
  %1253 = vmatpush1.xpose.msra.mxu0 0.0
  %1254 = vmatprep.subr.mxu0 0.0
  %1255 = vmatpush1.xpose.msra.mxu0 0.0
  %1256 = vmatprep.subr.mxu0 0.0
  %1257 = vmatpush1.xpose.msra.mxu0 0.0
  %1258 = vmatprep.subr.mxu0 0.0
  %1259 = vmatpush1.xpose.msra.mxu0 0.0
  %1260 = vmatprep.subr.mxu0 0.0
  %1261 = vmatpush1.xpose.msra.mxu0 0.0
  %1262 = vmatprep.subr.mxu0 0.0
  %1263 = vmatpush1.xpose.msra.mxu0 0.0
  %1264 = vmatprep.subr.mxu0 0.0
  %1265 = vmatpush1.xpose.msra.mxu0 0.0
  %1266 = vmatprep.subr.mxu0 0.0
  %1267 = vmatpush1.xpose.msra.mxu0 0.0
  %1268 = vmatprep.subr.mxu0 0.0
  %1269 = vmatpush1.xpose.msra.mxu0 0.0
  %1270 = vmatprep.subr.mxu0 0.0
  %1271 = vmatpush1.xpose.msra.mxu0 0.0
  %1272 = vmatprep.subr.mxu0 0.0
  %1273 = vmatpush1.xpose.msra.mxu0 0.0
  %1274 = vmatprep.subr.mxu0 0.0
  %1275 = vmatpush1.xpose.msra.mxu0 0.0
  %1276 = vmatprep.subr.mxu0 0.0
  %1277 = vmatpush1.xpose.msra.mxu0 0.0
  %1278 = vmatprep.subr.mxu0 0.0
  %1279 = vmatpush1.xpose.msra.mxu0 0.0
  %1280 = vmatprep.subr.mxu0 0.0
  %1281 = vmatpush1.xpose.msra.mxu0 0.0
  %1282 = vmatprep.subr.mxu0 0.0
  %1283 = vmatpush1.xpose.msra.mxu0 0.0
  %1284 = vmatprep.subr.mxu0 0.0
  %1285 = vmatpush1.xpose.msra.mxu0 0.0
  %1286 = vmatprep.subr.mxu0 0.0
  %1287 = vmatpush1.xpose.msra.mxu0 0.0
  %1288 = vmatprep.subr.mxu0 0.0
  %1289 = vmatpush1.xpose.msra.mxu0 0.0
  %1290 = vmatprep.subr.mxu0 0.0
  %1291 = vmatpush1.xpose.msra.mxu0 0.0
  %1292 = vmatprep.subr.mxu0 0.0
  %1293 = vmatpush1.xpose.msra.mxu0 0.0
  %1294 = vmatprep.subr.mxu0 0.0
  %1295 = vmatpush1.xpose.msra.mxu0 0.0
  %1296 = vmatprep.subr.mxu0 0.0
  %1297 = vmatpush1.xpose.msra.mxu0 0.0
  %1298 = vmatprep.subr.mxu0 0.0
  %1299 = vmatpush1.xpose.msra.mxu0 0.0
  %1300 = vmatprep.subr.mxu0 0.0
  %1301 = vmatpush1.xpose.msra.mxu0 0.0
  %1302 = vmatprep.subr.mxu0 0.0
  %1303 = vmatpush1.xpose.msra.mxu0 0.0
  %1304 = vmatprep.subr.mxu0 0.0
  %1305 = vmatpush1.xpose.msra.mxu0 0.0
  %1306 = vmatprep.mubr.f32.mxu0 0.0
  %1307 = vmatmul.mubr.f32.gmra.mrb[0].mxu0 %v97
  %v1308 = vpop.f32.mrb[0].mxu0
  %v1309 = vadd.f32 0.0, %v1308
  %v1310 = vpop.f32.mrb[0].mxu0
  %1311 = vmatprep.mubr.f32.mxu0 0.0
  %1312 = vmatmul.mubr.f32.gmra.mrb[0].mxu0 %v100
  %v1313 = vpop.f32.mrb[0].mxu0
  %v1314 = vadd.f32 0.0, %v1313
  %v1315 = vpop.f32.mrb[0].mxu0
  %1316 = vdwg.mxu0
  %v1318 = vsel %vm95, %v93, 0
  %v1321 = vsel %vm95, %v94, 0
  %1323 = vmatprep.subr.mxu0 0.0
  %1324 = vmatpush1.xpose.msra.mxu0 %v1318
  %1325 = vmatprep.subr.mxu0 0.0
  %1326 = vmatpush1.xpose.msra.mxu0 %v1321
  %1327 = vmatprep.subr.mxu0 0.0
  %1328 = vmatpush1.xpose.msra.mxu0 0.0
  %1329 = vmatprep.subr.mxu0 0.0
  %1330 = vmatpush1.xpose.msra.mxu0 0.0
  %1331 = vmatprep.subr.mxu0 0.0
  %1332 = vmatpush1.xpose.msra.mxu0 0.0
  %1333 = vmatprep.subr.mxu0 0.0
  %1334 = vmatpush1.xpose.msra.mxu0 0.0
  %1335 = vmatprep.subr.mxu0 0.0
  %1336 = vmatpush1.xpose.msra.mxu0 0.0
  %1337 = vmatprep.subr.mxu0 0.0
  %1338 = vmatpush1.xpose.msra.mxu0 0.0
  %1339 = vmatprep.subr.mxu0 0.0
  %1340 = vmatpush1.xpose.msra.mxu0 0.0
  %1341 = vmatprep.subr.mxu0 0.0
  %1342 = vmatpush1.xpose.msra.mxu0 0.0
  %1343 = vmatprep.subr.mxu0 0.0
  %1344 = vmatpush1.xpose.msra.mxu0 0.0
  %1345 = vmatprep.subr.mxu0 0.0
  %1346 = vmatpush1.xpose.msra.mxu0 0.0
  %1347 = vmatprep.subr.mxu0 0.0
  %1348 = vmatpush1.xpose.msra.mxu0 0.0
  %1349 = vmatprep.subr.mxu0 0.0
  %1350 = vmatpush1.xpose.msra.mxu0 0.0
  %1351 = vmatprep.subr.mxu0 0.0
  %1352 = vmatpush1.xpose.msra.mxu0 0.0
  %1353 = vmatprep.subr.mxu0 0.0
  %1354 = vmatpush1.xpose.msra.mxu0 0.0
  %1355 = vmatprep.subr.mxu0 0.0
  %1356 = vmatpush1.xpose.msra.mxu0 0.0
  %1357 = vmatprep.subr.mxu0 0.0
  %1358 = vmatpush1.xpose.msra.mxu0 0.0
  %1359 = vmatprep.subr.mxu0 0.0
  %1360 = vmatpush1.xpose.msra.mxu0 0.0
  %1361 = vmatprep.subr.mxu0 0.0
  %1362 = vmatpush1.xpose.msra.mxu0 0.0
  %1363 = vmatprep.subr.mxu0 0.0
  %1364 = vmatpush1.xpose.msra.mxu0 0.0
  %1365 = vmatprep.subr.mxu0 0.0
  %1366 = vmatpush1.xpose.msra.mxu0 0.0
  %1367 = vmatprep.subr.mxu0 0.0
  %1368 = vmatpush1.xpose.msra.mxu0 0.0
  %1369 = vmatprep.subr.mxu0 0.0
  %1370 = vmatpush1.xpose.msra.mxu0 0.0
  %1371 = vmatprep.subr.mxu0 0.0
  %1372 = vmatpush1.xpose.msra.mxu0 0.0
  %1373 = vmatprep.subr.mxu0 0.0
  %1374 = vmatpush1.xpose.msra.mxu0 0.0
  %1375 = vmatprep.subr.mxu0 0.0
  %1376 = vmatpush1.xpose.msra.mxu0 0.0
  %1377 = vmatprep.subr.mxu0 0.0
  %1378 = vmatpush1.xpose.msra.mxu0 0.0
  %1379 = vmatprep.subr.mxu0 0.0
  %1380 = vmatpush1.xpose.msra.mxu0 0.0
  %1381 = vmatprep.subr.mxu0 0.0
  %1382 = vmatpush1.xpose.msra.mxu0 0.0
  %1383 = vmatprep.subr.mxu0 0.0
  %1384 = vmatpush1.xpose.msra.mxu0 0.0
  %1385 = vmatprep.subr.mxu0 0.0
  %1386 = vmatpush1.xpose.msra.mxu0 0.0
  %1387 = vmatprep.mubr.f32.mxu0 0.0
  %1388 = vmatmul.mubr.f32.gmra.mrb[0].mxu0 %v97
  %v1389 = vpop.f32.mrb[0].mxu0
  %v1390 = vadd.f32 0.0, %v1389
  %v1391 = vpop.f32.mrb[0].mxu0
  %1392 = vmatprep.mubr.f32.mxu0 0.0
  %1393 = vmatmul.mubr.f32.gmra.mrb[0].mxu0 %v100
  %v1394 = vpop.f32.mrb[0].mxu0
  %v1395 = vadd.f32 0.0, %v1394
  %v1396 = vpop.f32.mrb[0].mxu0
  %1397 = vdwg.mxu0
  %v1398 = vld [vmem:[%s2] sm:$0xff]
  %v1399 = vld [vmem:[%s2 + $0x8] sm:$0xff]
  %v1400 = vld [vmem:[%s3] sm:$0xff]
  %v1401 = vld [vmem:[%s3 + $0x8] sm:$0xff]
  %1403 = vset.pattern.permute.xlu0 0
  %1404 = vperm.xlu0 %1403, %v1400
  %v1405 = vpop.permute.xlu0 %1404
  %1408 = vset.pattern.permute.xlu0 0
  %1409 = vperm.xlu0 %1408, %v1401
  %v1410 = vpop.permute.xlu0 %1409
  %v1413 = vsel %vm95, %v1398, 0
  %v1416 = vsel %vm95, %v1399, 0
  %1418 = vmatprep.subr.mxu0 0.0
  %1419 = vmatpush1.xpose.msra.mxu0 %v97
  %1420 = vmatprep.subr.mxu0 0.0
  %1421 = vmatpush1.xpose.msra.mxu0 %v100
  %1422 = vmatprep.subr.mxu0 0.0
  %1423 = vmatpush1.xpose.msra.mxu0 0.0
  %1424 = vmatprep.subr.mxu0 0.0
  %1425 = vmatpush1.xpose.msra.mxu0 0.0
  %1426 = vmatprep.subr.mxu0 0.0
  %1427 = vmatpush1.xpose.msra.mxu0 0.0
  %1428 = vmatprep.subr.mxu0 0.0
  %1429 = vmatpush1.xpose.msra.mxu0 0.0
  %1430 = vmatprep.subr.mxu0 0.0
  %1431 = vmatpush1.xpose.msra.mxu0 0.0
  %1432 = vmatprep.subr.mxu0 0.0
  %1433 = vmatpush1.xpose.msra.mxu0 0.0
  %1434 = vmatprep.subr.mxu0 0.0
  %1435 = vmatpush1.xpose.msra.mxu0 0.0
  %1436 = vmatprep.subr.mxu0 0.0
  %1437 = vmatpush1.xpose.msra.mxu0 0.0
  %1438 = vmatprep.subr.mxu0 0.0
  %1439 = vmatpush1.xpose.msra.mxu0 0.0
  %1440 = vmatprep.subr.mxu0 0.0
  %1441 = vmatpush1.xpose.msra.mxu0 0.0
  %1442 = vmatprep.subr.mxu0 0.0
  %1443 = vmatpush1.xpose.msra.mxu0 0.0
  %1444 = vmatprep.subr.mxu0 0.0
  %1445 = vmatpush1.xpose.msra.mxu0 0.0
  %1446 = vmatprep.subr.mxu0 0.0
  %1447 = vmatpush1.xpose.msra.mxu0 0.0
  %1448 = vmatprep.subr.mxu0 0.0
  %1449 = vmatpush1.xpose.msra.mxu0 0.0
  %1450 = vmatprep.subr.mxu0 0.0
  %1451 = vmatpush1.xpose.msra.mxu0 0.0
  %1452 = vmatprep.subr.mxu0 0.0
  %1453 = vmatpush1.xpose.msra.mxu0 0.0
  %1454 = vmatprep.subr.mxu0 0.0
  %1455 = vmatpush1.xpose.msra.mxu0 0.0
  %1456 = vmatprep.subr.mxu0 0.0
  %1457 = vmatpush1.xpose.msra.mxu0 0.0
  %1458 = vmatprep.subr.mxu0 0.0
  %1459 = vmatpush1.xpose.msra.mxu0 0.0
  %1460 = vmatprep.subr.mxu0 0.0
  %1461 = vmatpush1.xpose.msra.mxu0 0.0
  %1462 = vmatprep.subr.mxu0 0.0
  %1463 = vmatpush1.xpose.msra.mxu0 0.0
  %1464 = vmatprep.subr.mxu0 0.0
  %1465 = vmatpush1.xpose.msra.mxu0 0.0
  %1466 = vmatprep.subr.mxu0 0.0
  %1467 = vmatpush1.xpose.msra.mxu0 0.0
  %1468 = vmatprep.subr.mxu0 0.0
  %1469 = vmatpush1.xpose.msra.mxu0 0.0
  %1470 = vmatprep.subr.mxu0 0.0
  %1471 = vmatpush1.xpose.msra.mxu0 0.0
  %1472 = vmatprep.subr.mxu0 0.0
  %1473 = vmatpush1.xpose.msra.mxu0 0.0
  %1474 = vmatprep.subr.mxu0 0.0
  %1475 = vmatpush1.xpose.msra.mxu0 0.0
  %1476 = vmatprep.subr.mxu0 0.0
  %1477 = vmatpush1.xpose.msra.mxu0 0.0
  %1478 = vmatprep.subr.mxu0 0.0
  %1479 = vmatpush1.xpose.msra.mxu0 0.0
  %1480 = vmatprep.subr.mxu0 0.0
  %1481 = vmatpush1.xpose.msra.mxu0 0.0
  %1482 = vmatprep.mubr.f32.mxu0 0.0
  %1483 = vmatmul.mubr.f32.gmra.mrb[0].mxu0 %v1413
  %v1484 = vpop.f32.mrb[0].mxu0
  %v1485 = vadd.f32 %v1405, %v1484
  %v1486 = vpop.f32.mrb[0].mxu0
  %1487 = vmatprep.mubr.f32.mxu0 0.0
  %1488 = vmatmul.mubr.f32.gmra.mrb[0].mxu0 %v1416
  %v1489 = vpop.f32.mrb[0].mxu0
  %v1490 = vadd.f32 %v1410, %v1489
  %v1491 = vpop.f32.mrb[0].mxu0
  %1492 = vdwg.mxu0
  %v1493 = vld [vmem:[%s2] sm:$0xff]
  %v1494 = vld [vmem:[%s2 + $0x8] sm:$0xff]
  %v1495 = vld [vmem:[%s3] sm:$0xff]
  %v1496 = vld [vmem:[%s3 + $0x8] sm:$0xff]
  %1498 = vset.pattern.permute.xlu0 0
  %1499 = vperm.xlu0 %1498, %v1495
  %v1500 = vpop.permute.xlu0 %1499
  %1503 = vset.pattern.permute.xlu0 0
  %1504 = vperm.xlu0 %1503, %v1496
  %v1505 = vpop.permute.xlu0 %1504
  %v1508 = vsel %vm95, %v1493, 0
  %v1511 = vsel %vm95, %v1494, 0
  %v1514 = vsel %vm95, %v42, 0
  %v1517 = vsel %vm95, %v46, 0
  %v1520 = vsel %vm95, %v50, 0
  %v1523 = vsel %vm95, %v54, 0
  %v1526 = vsel %vm95, %v58, 0
  %v1529 = vsel %vm95, %v62, 0
  %1531 = vmatprep.subr.mxu0 0.0
  %1532 = vmatpush1.xpose.msra.mxu0 %v1514
  %1533 = vmatprep.subr.mxu0 0.0
  %1534 = vmatpush1.xpose.msra.mxu0 %v1517
  %1535 = vmatprep.subr.mxu0 0.0
  %1536 = vmatpush1.xpose.msra.mxu0 %v1520
  %1537 = vmatprep.subr.mxu0 0.0
  %1538 = vmatpush1.xpose.msra.mxu0 %v1523
  %1539 = vmatprep.subr.mxu0 0.0
  %1540 = vmatpush1.xpose.msra.mxu0 %v1526
  %1541 = vmatprep.subr.mxu0 0.0
  %1542 = vmatpush1.xpose.msra.mxu0 %v1529
  %1543 = vmatprep.subr.mxu0 0.0
  %1544 = vmatpush1.xpose.msra.mxu0 0.0
  %1545 = vmatprep.subr.mxu0 0.0
  %1546 = vmatpush1.xpose.msra.mxu0 0.0
  %1547 = vmatprep.subr.mxu0 0.0
  %1548 = vmatpush1.xpose.msra.mxu0 0.0
  %1549 = vmatprep.subr.mxu0 0.0
  %1550 = vmatpush1.xpose.msra.mxu0 0.0
  %1551 = vmatprep.subr.mxu0 0.0
  %1552 = vmatpush1.xpose.msra.mxu0 0.0
  %1553 = vmatprep.subr.mxu0 0.0
  %1554 = vmatpush1.xpose.msra.mxu0 0.0
  %1555 = vmatprep.subr.mxu0 0.0
  %1556 = vmatpush1.xpose.msra.mxu0 0.0
  %1557 = vmatprep.subr.mxu0 0.0
  %1558 = vmatpush1.xpose.msra.mxu0 0.0
  %1559 = vmatprep.subr.mxu0 0.0
  %1560 = vmatpush1.xpose.msra.mxu0 0.0
  %1561 = vmatprep.subr.mxu0 0.0
  %1562 = vmatpush1.xpose.msra.mxu0 0.0
  %1563 = vmatprep.subr.mxu0 0.0
  %1564 = vmatpush1.xpose.msra.mxu0 0.0
  %1565 = vmatprep.subr.mxu0 0.0
  %1566 = vmatpush1.xpose.msra.mxu0 0.0
  %1567 = vmatprep.subr.mxu0 0.0
  %1568 = vmatpush1.xpose.msra.mxu0 0.0
  %1569 = vmatprep.subr.mxu0 0.0
  %1570 = vmatpush1.xpose.msra.mxu0 0.0
  %1571 = vmatprep.subr.mxu0 0.0
  %1572 = vmatpush1.xpose.msra.mxu0 0.0
  %1573 = vmatprep.subr.mxu0 0.0
  %1574 = vmatpush1.xpose.msra.mxu0 0.0
  %1575 = vmatprep.subr.mxu0 0.0
  %1576 = vmatpush1.xpose.msra.mxu0 0.0
  %1577 = vmatprep.subr.mxu0 0.0
  %1578 = vmatpush1.xpose.msra.mxu0 0.0
  %1579 = vmatprep.subr.mxu0 0.0
  %1580 = vmatpush1.xpose.msra.mxu0 0.0
  %1581 = vmatprep.subr.mxu0 0.0
  %1582 = vmatpush1.xpose.msra.mxu0 0.0
  %1583 = vmatprep.subr.mxu0 0.0
  %1584 = vmatpush1.xpose.msra.mxu0 0.0
  %1585 = vmatprep.subr.mxu0 0.0
  %1586 = vmatpush1.xpose.msra.mxu0 0.0
  %1587 = vmatprep.subr.mxu0 0.0
  %1588 = vmatpush1.xpose.msra.mxu0 0.0
  %1589 = vmatprep.subr.mxu0 0.0
  %1590 = vmatpush1.xpose.msra.mxu0 0.0
  %1591 = vmatprep.subr.mxu0 0.0
  %1592 = vmatpush1.xpose.msra.mxu0 0.0
  %1593 = vmatprep.subr.mxu0 0.0
  %1594 = vmatpush1.xpose.msra.mxu0 0.0
  %1595 = vmatprep.mubr.f32.mxu0 0.0
  %1596 = vmatmul.mubr.f32.gmra.mrb[0].mxu0 %v1508
  %v1597 = vpop.f32.mrb[0].mxu0
  %v1598 = vadd.f32 %v1500, %v1597
  %v1599 = vpop.f32.mrb[0].mxu0
  %1600 = vmatprep.mubr.f32.mxu0 0.0
  %1601 = vmatmul.mubr.f32.gmra.mrb[0].mxu0 %v1511
  %v1602 = vpop.f32.mrb[0].mxu0
  %v1603 = vadd.f32 %v1505, %v1602
  %v1604 = vpop.f32.mrb[0].mxu0
  %1605 = vdwg.mxu0
  %v1606 = vlaneseq
  %v1607 = vshrl.u32 %v1606, 7
  %v1608 = vsub.s32 0, %v1607
  %v1609 = vrot.slane %v1485, %v1608
  %1611 = vbcast.lane.b32.xlu0 %v1609, 256
  %v1612 = vpop.permute.xlu0 %1611
  %s1614 = sor.u32 256, 8
  %1615 = vbcast.lane.b32.xlu0 %v1609, %s1614
  %v1616 = vpop.permute.xlu0 %1615
  %v1617 = vlaneseq
  %v1618 = vshrl.u32 %v1617, 7
  %v1619 = vsub.s32 1, %v1618
  %v1620 = vrot.slane %v1485, %v1619
  %1622 = vbcast.lane.b32.xlu0 %v1620, 256
  %v1623 = vpop.permute.xlu0 %1622
  %s1625 = sor.u32 256, 8
  %1626 = vbcast.lane.b32.xlu0 %v1620, %s1625
  %v1627 = vpop.permute.xlu0 %1626
  %v1628 = vlaneseq
  %v1629 = vshrl.u32 %v1628, 7
  %v1630 = vsub.s32 2, %v1629
  %v1631 = vrot.slane %v1485, %v1630
  %1633 = vbcast.lane.b32.xlu0 %v1631, 256
  %v1634 = vpop.permute.xlu0 %1633
  %s1636 = sor.u32 256, 8
  %1637 = vbcast.lane.b32.xlu0 %v1631, %s1636
  %v1638 = vpop.permute.xlu0 %1637
  %v1639 = vlaneseq
  %v1640 = vshrl.u32 %v1639, 7
  %v1641 = vsub.s32 3, %v1640
  %v1642 = vrot.slane %v1485, %v1641
  %1644 = vbcast.lane.b32.xlu0 %v1642, 256
  %v1645 = vpop.permute.xlu0 %1644
  %s1647 = sor.u32 256, 8
  %1648 = vbcast.lane.b32.xlu0 %v1642, %s1647
  %v1649 = vpop.permute.xlu0 %1648
  %v1650 = vlaneseq
  %v1651 = vshrl.u32 %v1650, 7
  %v1652 = vsub.s32 4, %v1651
  %v1653 = vrot.slane %v1485, %v1652
  %1655 = vbcast.lane.b32.xlu0 %v1653, 256
  %v1656 = vpop.permute.xlu0 %1655
  %s1658 = sor.u32 256, 8
  %1659 = vbcast.lane.b32.xlu0 %v1653, %s1658
  %v1660 = vpop.permute.xlu0 %1659
  %v1661 = vlaneseq
  %v1662 = vshrl.u32 %v1661, 7
  %v1663 = vsub.s32 5, %v1662
  %v1664 = vrot.slane %v1485, %v1663
  %1666 = vbcast.lane.b32.xlu0 %v1664, 256
  %v1667 = vpop.permute.xlu0 %1666
  %s1669 = sor.u32 256, 8
  %1670 = vbcast.lane.b32.xlu0 %v1664, %s1669
  %v1671 = vpop.permute.xlu0 %1670
  %v1672 = vlaneseq
  %v1673 = vshrl.u32 %v1672, 7
  %v1674 = vsub.s32 6, %v1673
  %v1675 = vrot.slane %v1485, %v1674
  %1677 = vbcast.lane.b32.xlu0 %v1675, 256
  %v1678 = vpop.permute.xlu0 %1677
  %s1680 = sor.u32 256, 8
  %1681 = vbcast.lane.b32.xlu0 %v1675, %s1680
  %v1682 = vpop.permute.xlu0 %1681
  %v1683 = vlaneseq
  %v1684 = vshrl.u32 %v1683, 7
  %v1685 = vsub.s32 7, %v1684
  %v1686 = vrot.slane %v1485, %v1685
  %1688 = vbcast.lane.b32.xlu0 %v1686, 256
  %v1689 = vpop.permute.xlu0 %1688
  %s1691 = sor.u32 256, 8
  %1692 = vbcast.lane.b32.xlu0 %v1686, %s1691
  %v1693 = vpop.permute.xlu0 %1692
  %v1694 = vlaneseq
  %v1695 = vshrl.u32 %v1694, 7
  %v1696 = vsub.s32 0, %v1695
  %v1697 = vrot.slane %v1490, %v1696
  %1699 = vbcast.lane.b32.xlu0 %v1697, 256
  %v1700 = vpop.permute.xlu0 %1699
  %s1702 = sor.u32 256, 8
  %1703 = vbcast.lane.b32.xlu0 %v1697, %s1702
  %v1704 = vpop.permute.xlu0 %1703
  %v1705 = vlaneseq
  %v1706 = vshrl.u32 %v1705, 7
  %v1707 = vsub.s32 1, %v1706
  %v1708 = vrot.slane %v1490, %v1707
  %1710 = vbcast.lane.b32.xlu0 %v1708, 256
  %v1711 = vpop.permute.xlu0 %1710
  %s1713 = sor.u32 256, 8
  %1714 = vbcast.lane.b32.xlu0 %v1708, %s1713
  %v1715 = vpop.permute.xlu0 %1714
  %v1716 = vlaneseq
  %v1717 = vshrl.u32 %v1716, 7
  %v1718 = vsub.s32 2, %v1717
  %v1719 = vrot.slane %v1490, %v1718
  %1721 = vbcast.lane.b32.xlu0 %v1719, 256
  %v1722 = vpop.permute.xlu0 %1721
  %s1724 = sor.u32 256, 8
  %1725 = vbcast.lane.b32.xlu0 %v1719, %s1724
  %v1726 = vpop.permute.xlu0 %1725
  %v1727 = vlaneseq
  %v1728 = vshrl.u32 %v1727, 7
  %v1729 = vsub.s32 3, %v1728
  %v1730 = vrot.slane %v1490, %v1729
  %1732 = vbcast.lane.b32.xlu0 %v1730, 256
  %v1733 = vpop.permute.xlu0 %1732
  %s1735 = sor.u32 256, 8
  %1736 = vbcast.lane.b32.xlu0 %v1730, %s1735
  %v1737 = vpop.permute.xlu0 %1736
  %v1738 = vlaneseq
  %v1739 = vshrl.u32 %v1738, 7
  %v1740 = vsub.s32 4, %v1739
  %v1741 = vrot.slane %v1490, %v1740
  %1743 = vbcast.lane.b32.xlu0 %v1741, 256
  %v1744 = vpop.permute.xlu0 %1743
  %s1746 = sor.u32 256, 8
  %1747 = vbcast.lane.b32.xlu0 %v1741, %s1746
  %v1748 = vpop.permute.xlu0 %1747
  %v1749 = vlaneseq
  %v1750 = vshrl.u32 %v1749, 7
  %v1751 = vsub.s32 5, %v1750
  %v1752 = vrot.slane %v1490, %v1751
  %1754 = vbcast.lane.b32.xlu0 %v1752, 256
  %v1755 = vpop.permute.xlu0 %1754
  %s1757 = sor.u32 256, 8
  %1758 = vbcast.lane.b32.xlu0 %v1752, %s1757
  %v1759 = vpop.permute.xlu0 %1758
  %v1760 = vlaneseq
  %v1761 = vshrl.u32 %v1760, 7
  %v1762 = vsub.s32 6, %v1761
  %v1763 = vrot.slane %v1490, %v1762
  %1765 = vbcast.lane.b32.xlu0 %v1763, 256
  %v1766 = vpop.permute.xlu0 %1765
  %s1768 = sor.u32 256, 8
  %1769 = vbcast.lane.b32.xlu0 %v1763, %s1768
  %v1770 = vpop.permute.xlu0 %1769
  %v1771 = vlaneseq
  %v1772 = vshrl.u32 %v1771, 7
  %v1773 = vsub.s32 7, %v1772
  %v1774 = vrot.slane %v1490, %v1773
  %1776 = vbcast.lane.b32.xlu0 %v1774, 256
  %v1777 = vpop.permute.xlu0 %1776
  %s1779 = sor.u32 256, 8
  %1780 = vbcast.lane.b32.xlu0 %v1774, %s1779
  %v1781 = vpop.permute.xlu0 %1780
  %v1784 = vcombine.high %v1598, %v1598
  %v1786 = vunpack.c.l.s4 1966171168
  %v1787 = vunpack.c.0.s8 %v1786
  %v1788 = vlaneseq
  %v1789 = vshrl.u32 %v1788, 7
  %v1790 = vsub.s32 %v1787, %v1789
  %v1791 = vrot.slane %v1598, %v1790
  %v1793 = vunpack.c.l.s4 1966171168
  %v1794 = vunpack.c.0.s8 %v1793
  %v1795 = vlaneseq
  %v1796 = vshrl.u32 %v1795, 7
  %v1797 = vsub.s32 %v1794, %v1796
  %v1798 = vrot.slane %v1784, %v1797
  %v1799 = vcombine.high %v1791, %v1791
  %v1800 = vcombine.high %v1798, %v1798
  %v1802 = vunpack.c.l.s4 1966171168
  %v1803 = vunpack.c.0.s8 %v1802
  %v1804 = vlaneseq
  %v1805 = vshrl.u32 %v1804, 7
  %v1806 = vsub.s32 %v1803, %v1805
  %v1807 = vrot.slane %v1791, %v1806
  %v1809 = vunpack.c.l.s4 1966171168
  %v1810 = vunpack.c.0.s8 %v1809
  %v1811 = vlaneseq
  %v1812 = vshrl.u32 %v1811, 7
  %v1813 = vsub.s32 %v1810, %v1812
  %v1814 = vrot.slane %v1798, %v1813
  %v1816 = vunpack.c.l.s4 1966171168
  %v1817 = vunpack.c.0.s8 %v1816
  %v1818 = vlaneseq
  %v1819 = vshrl.u32 %v1818, 7
  %v1820 = vsub.s32 %v1817, %v1819
  %v1821 = vrot.slane %v1799, %v1820
  %v1823 = vunpack.c.l.s4 1966171168
  %v1824 = vunpack.c.0.s8 %v1823
  %v1825 = vlaneseq
  %v1826 = vshrl.u32 %v1825, 7
  %v1827 = vsub.s32 %v1824, %v1826
  %v1828 = vrot.slane %v1800, %v1827
  %v1829 = vcombine.high %v1807, %v1807
  %v1830 = vcombine.high %v1814, %v1814
  %v1831 = vcombine.high %v1821, %v1821
  %v1832 = vcombine.high %v1828, %v1828
  %v1833 = vcombine.high %v1603, %v1603
  %v1835 = vunpack.c.l.s4 1966171168
  %v1836 = vunpack.c.0.s8 %v1835
  %v1837 = vlaneseq
  %v1838 = vshrl.u32 %v1837, 7
  %v1839 = vsub.s32 %v1836, %v1838
  %v1840 = vrot.slane %v1603, %v1839
  %v1842 = vunpack.c.l.s4 1966171168
  %v1843 = vunpack.c.0.s8 %v1842
  %v1844 = vlaneseq
  %v1845 = vshrl.u32 %v1844, 7
  %v1846 = vsub.s32 %v1843, %v1845
  %v1847 = vrot.slane %v1833, %v1846
  %v1848 = vcombine.high %v1840, %v1840
  %v1849 = vcombine.high %v1847, %v1847
  %v1851 = vunpack.c.l.s4 1966171168
  %v1852 = vunpack.c.0.s8 %v1851
  %v1853 = vlaneseq
  %v1854 = vshrl.u32 %v1853, 7
  %v1855 = vsub.s32 %v1852, %v1854
  %v1856 = vrot.slane %v1840, %v1855
  %v1858 = vunpack.c.l.s4 1966171168
  %v1859 = vunpack.c.0.s8 %v1858
  %v1860 = vlaneseq
  %v1861 = vshrl.u32 %v1860, 7
  %v1862 = vsub.s32 %v1859, %v1861
  %v1863 = vrot.slane %v1847, %v1862
  %v1865 = vunpack.c.l.s4 1966171168
  %v1866 = vunpack.c.0.s8 %v1865
  %v1867 = vlaneseq
  %v1868 = vshrl.u32 %v1867, 7
  %v1869 = vsub.s32 %v1866, %v1868
  %v1870 = vrot.slane %v1848, %v1869
  %v1872 = vunpack.c.l.s4 1966171168
  %v1873 = vunpack.c.0.s8 %v1872
  %v1874 = vlaneseq
  %v1875 = vshrl.u32 %v1874, 7
  %v1876 = vsub.s32 %v1873, %v1875
  %v1877 = vrot.slane %v1849, %v1876
  %v1878 = vcombine.high %v1856, %v1856
  %v1879 = vcombine.high %v1863, %v1863
  %v1880 = vcombine.high %v1870, %v1870
  %v1881 = vcombine.high %v1877, %v1877
  %v1882 = vlaneseq
  %v1883 = vshrl.u32 %v1882, 7
  %v1884 = vsub.s32 0, %v1883
  %v1885 = vrot.slane %v1807, %v1884
  %v1886 = vlaneseq
  %v1887 = vshrl.u32 %v1886, 7
  %v1888 = vsub.s32 0, %v1887
  %v1889 = vrot.slane %v1821, %v1888
  %v1890 = vlaneseq
  %v1891 = vshrl.u32 %v1890, 7
  %v1892 = vsub.s32 0, %v1891
  %v1893 = vrot.slane %v1829, %v1892
  %v1894 = vlaneseq
  %v1895 = vshrl.u32 %v1894, 7
  %v1896 = vsub.s32 0, %v1895
  %v1897 = vrot.slane %v1831, %v1896
  %v1898 = vlaneseq
  %v1899 = vshrl.u32 %v1898, 7
  %v1900 = vsub.s32 0, %v1899
  %v1901 = vrot.slane %v1814, %v1900
  %v1902 = vlaneseq
  %v1903 = vshrl.u32 %v1902, 7
  %v1904 = vsub.s32 0, %v1903
  %v1905 = vrot.slane %v1828, %v1904
  %v1906 = vlaneseq
  %v1907 = vshrl.u32 %v1906, 7
  %v1908 = vsub.s32 0, %v1907
  %v1909 = vrot.slane %v1830, %v1908
  %v1910 = vlaneseq
  %v1911 = vshrl.u32 %v1910, 7
  %v1912 = vsub.s32 0, %v1911
  %v1913 = vrot.slane %v1832, %v1912
  %v1914 = vlaneseq
  %v1915 = vshrl.u32 %v1914, 7
  %v1916 = vsub.s32 0, %v1915
  %v1917 = vrot.slane %v1856, %v1916
  %v1918 = vlaneseq
  %v1919 = vshrl.u32 %v1918, 7
  %v1920 = vsub.s32 0, %v1919
  %v1921 = vrot.slane %v1870, %v1920
  %v1922 = vlaneseq
  %v1923 = vshrl.u32 %v1922, 7
  %v1924 = vsub.s32 0, %v1923
  %v1925 = vrot.slane %v1878, %v1924
  %v1926 = vlaneseq
  %v1927 = vshrl.u32 %v1926, 7
  %v1928 = vsub.s32 0, %v1927
  %v1929 = vrot.slane %v1880, %v1928
  %v1930 = vlaneseq
  %v1931 = vshrl.u32 %v1930, 7
  %v1932 = vsub.s32 0, %v1931
  %v1933 = vrot.slane %v1863, %v1932
  %v1934 = vlaneseq
  %v1935 = vshrl.u32 %v1934, 7
  %v1936 = vsub.s32 0, %v1935
  %v1937 = vrot.slane %v1877, %v1936
  %v1938 = vlaneseq
  %v1939 = vshrl.u32 %v1938, 7
  %v1940 = vsub.s32 0, %v1939
  %v1941 = vrot.slane %v1879, %v1940
  %v1942 = vlaneseq
  %v1943 = vshrl.u32 %v1942, 7
  %v1944 = vsub.s32 0, %v1943
  %v1945 = vrot.slane %v1881, %v1944
  %v1962 = vmax.f32 %v1612, %v1885
  %v1963 = vmax.f32 %v1616, %v1885
  %v1964 = vmax.f32 %v1623, %v1889
  %v1965 = vmax.f32 %v1627, %v1889
  %v1966 = vmax.f32 %v1634, %v1893
  %v1967 = vmax.f32 %v1638, %v1893
  %v1968 = vmax.f32 %v1645, %v1897
  %v1969 = vmax.f32 %v1649, %v1897
  %v1970 = vmax.f32 %v1656, %v1901
  %v1971 = vmax.f32 %v1660, %v1901
  %v1972 = vmax.f32 %v1667, %v1905
  %v1973 = vmax.f32 %v1671, %v1905
  %v1974 = vmax.f32 %v1678, %v1909
  %v1975 = vmax.f32 %v1682, %v1909
  %v1976 = vmax.f32 %v1689, %v1913
  %v1977 = vmax.f32 %v1693, %v1913
  %v1978 = vmax.f32 %v1700, %v1917
  %v1979 = vmax.f32 %v1704, %v1917
  %v1980 = vmax.f32 %v1711, %v1921
  %v1981 = vmax.f32 %v1715, %v1921
  %v1982 = vmax.f32 %v1722, %v1925
  %v1983 = vmax.f32 %v1726, %v1925
  %v1984 = vmax.f32 %v1733, %v1929
  %v1985 = vmax.f32 %v1737, %v1929
  %v1986 = vmax.f32 %v1744, %v1933
  %v1987 = vmax.f32 %v1748, %v1933
  %v1988 = vmax.f32 %v1755, %v1937
  %v1989 = vmax.f32 %v1759, %v1937
  %v1990 = vmax.f32 %v1766, %v1941
  %v1991 = vmax.f32 %v1770, %v1941
  %v1992 = vmax.f32 %v1777, %v1945
  %v1993 = vmax.f32 %v1781, %v1945
  %v1995 = vsel %vm95, %v175, 0
  %v1998 = vsel %vm95, %v180, 0
  %2000 = vmatprep.subr.mxu0 0.0
  %2001 = vmatpush1.xpose.msra.mxu0 %v1514
  %2002 = vmatprep.subr.mxu0 0.0
  %2003 = vmatpush1.xpose.msra.mxu0 %v1517
  %2004 = vmatprep.subr.mxu0 0.0
  %2005 = vmatpush1.xpose.msra.mxu0 %v1520
  %2006 = vmatprep.subr.mxu0 0.0
  %2007 = vmatpush1.xpose.msra.mxu0 %v1523
  %2008 = vmatprep.subr.mxu0 0.0
  %2009 = vmatpush1.xpose.msra.mxu0 %v1526
  %2010 = vmatprep.subr.mxu0 0.0
  %2011 = vmatpush1.xpose.msra.mxu0 %v1529
  %2012 = vmatprep.subr.mxu0 0.0
  %2013 = vmatpush1.xpose.msra.mxu0 0.0
  %2014 = vmatprep.subr.mxu0 0.0
  %2015 = vmatpush1.xpose.msra.mxu0 0.0
  %2016 = vmatprep.subr.mxu0 0.0
  %2017 = vmatpush1.xpose.msra.mxu0 0.0
  %2018 = vmatprep.subr.mxu0 0.0
  %2019 = vmatpush1.xpose.msra.mxu0 0.0
  %2020 = vmatprep.subr.mxu0 0.0
  %2021 = vmatpush1.xpose.msra.mxu0 0.0
  %2022 = vmatprep.subr.mxu0 0.0
  %2023 = vmatpush1.xpose.msra.mxu0 0.0
  %2024 = vmatprep.subr.mxu0 0.0
  %2025 = vmatpush1.xpose.msra.mxu0 0.0
  %2026 = vmatprep.subr.mxu0 0.0
  %2027 = vmatpush1.xpose.msra.mxu0 0.0
  %2028 = vmatprep.subr.mxu0 0.0
  %2029 = vmatpush1.xpose.msra.mxu0 0.0
  %2030 = vmatprep.subr.mxu0 0.0
  %2031 = vmatpush1.xpose.msra.mxu0 0.0
  %2032 = vmatprep.subr.mxu0 0.0
  %2033 = vmatpush1.xpose.msra.mxu0 0.0
  %2034 = vmatprep.subr.mxu0 0.0
  %2035 = vmatpush1.xpose.msra.mxu0 0.0
  %2036 = vmatprep.subr.mxu0 0.0
  %2037 = vmatpush1.xpose.msra.mxu0 0.0
  %2038 = vmatprep.subr.mxu0 0.0
  %2039 = vmatpush1.xpose.msra.mxu0 0.0
  %2040 = vmatprep.subr.mxu0 0.0
  %2041 = vmatpush1.xpose.msra.mxu0 0.0
  %2042 = vmatprep.subr.mxu0 0.0
  %2043 = vmatpush1.xpose.msra.mxu0 0.0
  %2044 = vmatprep.subr.mxu0 0.0
  %2045 = vmatpush1.xpose.msra.mxu0 0.0
  %2046 = vmatprep.subr.mxu0 0.0
  %2047 = vmatpush1.xpose.msra.mxu0 0.0
  %2048 = vmatprep.subr.mxu0 0.0
  %2049 = vmatpush1.xpose.msra.mxu0 0.0
  %2050 = vmatprep.subr.mxu0 0.0
  %2051 = vmatpush1.xpose.msra.mxu0 0.0
  %2052 = vmatprep.subr.mxu0 0.0
  %2053 = vmatpush1.xpose.msra.mxu0 0.0
  %2054 = vmatprep.subr.mxu0 0.0
  %2055 = vmatpush1.xpose.msra.mxu0 0.0
  %2056 = vmatprep.subr.mxu0 0.0
  %2057 = vmatpush1.xpose.msra.mxu0 0.0
  %2058 = vmatprep.subr.mxu0 0.0
  %2059 = vmatpush1.xpose.msra.mxu0 0.0
  %2060 = vmatprep.subr.mxu0 0.0
  %2061 = vmatpush1.xpose.msra.mxu0 0.0
  %2062 = vmatprep.subr.mxu0 0.0
  %2063 = vmatpush1.xpose.msra.mxu0 0.0
  %2064 = vmatprep.mubr.f32.mxu0 0.0
  %2065 = vmatmul.mubr.f32.gmra.mrb[0].mxu0 %v1995
  %v2066 = vpop.f32.mrb[0].mxu0
  %v2067 = vadd.f32 %v1962, %v2066
  %v2068 = vpop.f32.mrb[0].mxu0
  %2069 = vmatprep.mubr.f32.mxu0 0.0
  %2070 = vmatmul.mubr.f32.gmra.mrb[0].mxu0 %v1998
  %v2071 = vpop.f32.mrb[0].mxu0
  %v2072 = vadd.f32 %v1963, %v2071
  %v2073 = vpop.f32.mrb[0].mxu0
  %2074 = vdwg.mxu0
  %v2076 = vsel %vm95, %v256, 0
  %v2079 = vsel %vm95, %v261, 0
  %2081 = vmatprep.subr.mxu0 0.0
  %2082 = vmatpush1.xpose.msra.mxu0 %v1514
  %2083 = vmatprep.subr.mxu0 0.0
  %2084 = vmatpush1.xpose.msra.mxu0 %v1517
  %2085 = vmatprep.subr.mxu0 0.0
  %2086 = vmatpush1.xpose.msra.mxu0 %v1520
  %2087 = vmatprep.subr.mxu0 0.0
  %2088 = vmatpush1.xpose.msra.mxu0 %v1523
  %2089 = vmatprep.subr.mxu0 0.0
  %2090 = vmatpush1.xpose.msra.mxu0 %v1526
  %2091 = vmatprep.subr.mxu0 0.0
  %2092 = vmatpush1.xpose.msra.mxu0 %v1529
  %2093 = vmatprep.subr.mxu0 0.0
  %2094 = vmatpush1.xpose.msra.mxu0 0.0
  %2095 = vmatprep.subr.mxu0 0.0
  %2096 = vmatpush1.xpose.msra.mxu0 0.0
  %2097 = vmatprep.subr.mxu0 0.0
  %2098 = vmatpush1.xpose.msra.mxu0 0.0
  %2099 = vmatprep.subr.mxu0 0.0
  %2100 = vmatpush1.xpose.msra.mxu0 0.0
  %2101 = vmatprep.subr.mxu0 0.0
  %2102 = vmatpush1.xpose.msra.mxu0 0.0
  %2103 = vmatprep.subr.mxu0 0.0
  %2104 = vmatpush1.xpose.msra.mxu0 0.0
  %2105 = vmatprep.subr.mxu0 0.0
  %2106 = vmatpush1.xpose.msra.mxu0 0.0
  %2107 = vmatprep.subr.mxu0 0.0
  %2108 = vmatpush1.xpose.msra.mxu0 0.0
  %2109 = vmatprep.subr.mxu0 0.0
  %2110 = vmatpush1.xpose.msra.mxu0 0.0
  %2111 = vmatprep.subr.mxu0 0.0
  %2112 = vmatpush1.xpose.msra.mxu0 0.0
  %2113 = vmatprep.subr.mxu0 0.0
  %2114 = vmatpush1.xpose.msra.mxu0 0.0
  %2115 = vmatprep.subr.mxu0 0.0
  %2116 = vmatpush1.xpose.msra.mxu0 0.0
  %2117 = vmatprep.subr.mxu0 0.0
  %2118 = vmatpush1.xpose.msra.mxu0 0.0
  %2119 = vmatprep.subr.mxu0 0.0
  %2120 = vmatpush1.xpose.msra.mxu0 0.0
  %2121 = vmatprep.subr.mxu0 0.0
  %2122 = vmatpush1.xpose.msra.mxu0 0.0
  %2123 = vmatprep.subr.mxu0 0.0
  %2124 = vmatpush1.xpose.msra.mxu0 0.0
  %2125 = vmatprep.subr.mxu0 0.0
  %2126 = vmatpush1.xpose.msra.mxu0 0.0
  %2127 = vmatprep.subr.mxu0 0.0
  %2128 = vmatpush1.xpose.msra.mxu0 0.0
  %2129 = vmatprep.subr.mxu0 0.0
  %2130 = vmatpush1.xpose.msra.mxu0 0.0
  %2131 = vmatprep.subr.mxu0 0.0
  %2132 = vmatpush1.xpose.msra.mxu0 0.0
  %2133 = vmatprep.subr.mxu0 0.0
  %2134 = vmatpush1.xpose.msra.mxu0 0.0
  %2135 = vmatprep.subr.mxu0 0.0
  %2136 = vmatpush1.xpose.msra.mxu0 0.0
  %2137 = vmatprep.subr.mxu0 0.0
  %2138 = vmatpush1.xpose.msra.mxu0 0.0
  %2139 = vmatprep.subr.mxu0 0.0
  %2140 = vmatpush1.xpose.msra.mxu0 0.0
  %2141 = vmatprep.subr.mxu0 0.0
  %2142 = vmatpush1.xpose.msra.mxu0 0.0
  %2143 = vmatprep.subr.mxu0 0.0
  %2144 = vmatpush1.xpose.msra.mxu0 0.0
  %2145 = vmatprep.mubr.f32.mxu0 0.0
  %2146 = vmatmul.mubr.f32.gmra.mrb[0].mxu0 %v2076
  %v2147 = vpop.f32.mrb[0].mxu0
  %v2148 = vadd.f32 %v1964, %v2147
  %v2149 = vpop.f32.mrb[0].mxu0
  %2150 = vmatprep.mubr.f32.mxu0 0.0
  %2151 = vmatmul.mubr.f32.gmra.mrb[0].mxu0 %v2079
  %v2152 = vpop.f32.mrb[0].mxu0
  %v2153 = vadd.f32 %v1965, %v2152
  %v2154 = vpop.f32.mrb[0].mxu0
  %2155 = vdwg.mxu0
  %v2157 = vsel %vm95, %v337, 0
  %v2160 = vsel %vm95, %v342, 0
  %2162 = vmatprep.subr.mxu0 0.0
  %2163 = vmatpush1.xpose.msra.mxu0 %v1514
  %2164 = vmatprep.subr.mxu0 0.0
  %2165 = vmatpush1.xpose.msra.mxu0 %v1517
  %2166 = vmatprep.subr.mxu0 0.0
  %2167 = vmatpush1.xpose.msra.mxu0 %v1520
  %2168 = vmatprep.subr.mxu0 0.0
  %2169 = vmatpush1.xpose.msra.mxu0 %v1523
  %2170 = vmatprep.subr.mxu0 0.0
  %2171 = vmatpush1.xpose.msra.mxu0 %v1526
  %2172 = vmatprep.subr.mxu0 0.0
  %2173 = vmatpush1.xpose.msra.mxu0 %v1529
  %2174 = vmatprep.subr.mxu0 0.0
  %2175 = vmatpush1.xpose.msra.mxu0 0.0
  %2176 = vmatprep.subr.mxu0 0.0
  %2177 = vmatpush1.xpose.msra.mxu0 0.0
  %2178 = vmatprep.subr.mxu0 0.0
  %2179 = vmatpush1.xpose.msra.mxu0 0.0
  %2180 = vmatprep.subr.mxu0 0.0
  %2181 = vmatpush1.xpose.msra.mxu0 0.0
  %2182 = vmatprep.subr.mxu0 0.0
  %2183 = vmatpush1.xpose.msra.mxu0 0.0
  %2184 = vmatprep.subr.mxu0 0.0
  %2185 = vmatpush1.xpose.msra.mxu0 0.0
  %2186 = vmatprep.subr.mxu0 0.0
  %2187 = vmatpush1.xpose.msra.mxu0 0.0
  %2188 = vmatprep.subr.mxu0 0.0
  %2189 = vmatpush1.xpose.msra.mxu0 0.0
  %2190 = vmatprep.subr.mxu0 0.0
  %2191 = vmatpush1.xpose.msra.mxu0 0.0
  %2192 = vmatprep.subr.mxu0 0.0
  %2193 = vmatpush1.xpose.msra.mxu0 0.0
  %2194 = vmatprep.subr.mxu0 0.0
  %2195 = vmatpush1.xpose.msra.mxu0 0.0
  %2196 = vmatprep.subr.mxu0 0.0
  %2197 = vmatpush1.xpose.msra.mxu0 0.0
  %2198 = vmatprep.subr.mxu0 0.0
  %2199 = vmatpush1.xpose.msra.mxu0 0.0
  %2200 = vmatprep.subr.mxu0 0.0
  %2201 = vmatpush1.xpose.msra.mxu0 0.0
  %2202 = vmatprep.subr.mxu0 0.0
  %2203 = vmatpush1.xpose.msra.mxu0 0.0
  %2204 = vmatprep.subr.mxu0 0.0
  %2205 = vmatpush1.xpose.msra.mxu0 0.0
  %2206 = vmatprep.subr.mxu0 0.0
  %2207 = vmatpush1.xpose.msra.mxu0 0.0
  %2208 = vmatprep.subr.mxu0 0.0
  %2209 = vmatpush1.xpose.msra.mxu0 0.0
  %2210 = vmatprep.subr.mxu0 0.0
  %2211 = vmatpush1.xpose.msra.mxu0 0.0
  %2212 = vmatprep.subr.mxu0 0.0
  %2213 = vmatpush1.xpose.msra.mxu0 0.0
  %2214 = vmatprep.subr.mxu0 0.0
  %2215 = vmatpush1.xpose.msra.mxu0 0.0
  %2216 = vmatprep.subr.mxu0 0.0
  %2217 = vmatpush1.xpose.msra.mxu0 0.0
  %2218 = vmatprep.subr.mxu0 0.0
  %2219 = vmatpush1.xpose.msra.mxu0 0.0
  %2220 = vmatprep.subr.mxu0 0.0
  %2221 = vmatpush1.xpose.msra.mxu0 0.0
  %2222 = vmatprep.subr.mxu0 0.0
  %2223 = vmatpush1.xpose.msra.mxu0 0.0
  %2224 = vmatprep.subr.mxu0 0.0
  %2225 = vmatpush1.xpose.msra.mxu0 0.0
  %2226 = vmatprep.mubr.f32.mxu0 0.0
  %2227 = vmatmul.mubr.f32.gmra.mrb[0].mxu0 %v2157
  %v2228 = vpop.f32.mrb[0].mxu0
  %v2229 = vadd.f32 %v1966, %v2228
  %v2230 = vpop.f32.mrb[0].mxu0
  %2231 = vmatprep.mubr.f32.mxu0 0.0
  %2232 = vmatmul.mubr.f32.gmra.mrb[0].mxu0 %v2160
  %v2233 = vpop.f32.mrb[0].mxu0
  %v2234 = vadd.f32 %v1967, %v2233
  %v2235 = vpop.f32.mrb[0].mxu0
  %2236 = vdwg.mxu0
  %v2238 = vsel %vm95, %v418, 0
  %v2241 = vsel %vm95, %v423, 0
  %2243 = vmatprep.subr.mxu0 0.0
  %2244 = vmatpush1.xpose.msra.mxu0 %v1514
  %2245 = vmatprep.subr.mxu0 0.0
  %2246 = vmatpush1.xpose.msra.mxu0 %v1517
  %2247 = vmatprep.subr.mxu0 0.0
  %2248 = vmatpush1.xpose.msra.mxu0 %v1520
  %2249 = vmatprep.subr.mxu0 0.0
  %2250 = vmatpush1.xpose.msra.mxu0 %v1523
  %2251 = vmatprep.subr.mxu0 0.0
  %2252 = vmatpush1.xpose.msra.mxu0 %v1526
  %2253 = vmatprep.subr.mxu0 0.0
  %2254 = vmatpush1.xpose.msra.mxu0 %v1529
  %2255 = vmatprep.subr.mxu0 0.0
  %2256 = vmatpush1.xpose.msra.mxu0 0.0
  %2257 = vmatprep.subr.mxu0 0.0
  %2258 = vmatpush1.xpose.msra.mxu0 0.0
  %2259 = vmatprep.subr.mxu0 0.0
  %2260 = vmatpush1.xpose.msra.mxu0 0.0
  %2261 = vmatprep.subr.mxu0 0.0
  %2262 = vmatpush1.xpose.msra.mxu0 0.0
  %2263 = vmatprep.subr.mxu0 0.0
  %2264 = vmatpush1.xpose.msra.mxu0 0.0
  %2265 = vmatprep.subr.mxu0 0.0
  %2266 = vmatpush1.xpose.msra.mxu0 0.0
  %2267 = vmatprep.subr.mxu0 0.0
  %2268 = vmatpush1.xpose.msra.mxu0 0.0
  %2269 = vmatprep.subr.mxu0 0.0
  %2270 = vmatpush1.xpose.msra.mxu0 0.0
  %2271 = vmatprep.subr.mxu0 0.0
  %2272 = vmatpush1.xpose.msra.mxu0 0.0
  %2273 = vmatprep.subr.mxu0 0.0
  %2274 = vmatpush1.xpose.msra.mxu0 0.0
  %2275 = vmatprep.subr.mxu0 0.0
  %2276 = vmatpush1.xpose.msra.mxu0 0.0
  %2277 = vmatprep.subr.mxu0 0.0
  %2278 = vmatpush1.xpose.msra.mxu0 0.0
  %2279 = vmatprep.subr.mxu0 0.0
  %2280 = vmatpush1.xpose.msra.mxu0 0.0
  %2281 = vmatprep.subr.mxu0 0.0
  %2282 = vmatpush1.xpose.msra.mxu0 0.0
  %2283 = vmatprep.subr.mxu0 0.0
  %2284 = vmatpush1.xpose.msra.mxu0 0.0
  %2285 = vmatprep.subr.mxu0 0.0
  %2286 = vmatpush1.xpose.msra.mxu0 0.0
  %2287 = vmatprep.subr.mxu0 0.0
  %2288 = vmatpush1.xpose.msra.mxu0 0.0
  %2289 = vmatprep.subr.mxu0 0.0
  %2290 = vmatpush1.xpose.msra.mxu0 0.0
  %2291 = vmatprep.subr.mxu0 0.0
  %2292 = vmatpush1.xpose.msra.mxu0 0.0
  %2293 = vmatprep.subr.mxu0 0.0
  %2294 = vmatpush1.xpose.msra.mxu0 0.0
  %2295 = vmatprep.subr.mxu0 0.0
  %2296 = vmatpush1.xpose.msra.mxu0 0.0
  %2297 = vmatprep.subr.mxu0 0.0
  %2298 = vmatpush1.xpose.msra.mxu0 0.0
  %2299 = vmatprep.subr.mxu0 0.0
  %2300 = vmatpush1.xpose.msra.mxu0 0.0
  %2301 = vmatprep.subr.mxu0 0.0
  %2302 = vmatpush1.xpose.msra.mxu0 0.0
  %2303 = vmatprep.subr.mxu0 0.0
  %2304 = vmatpush1.xpose.msra.mxu0 0.0
  %2305 = vmatprep.subr.mxu0 0.0
  %2306 = vmatpush1.xpose.msra.mxu0 0.0
  %2307 = vmatprep.mubr.f32.mxu0 0.0
  %2308 = vmatmul.mubr.f32.gmra.mrb[0].mxu0 %v2238
  %v2309 = vpop.f32.mrb[0].mxu0
  %v2310 = vadd.f32 %v1968, %v2309
  %v2311 = vpop.f32.mrb[0].mxu0
  %2312 = vmatprep.mubr.f32.mxu0 0.0
  %2313 = vmatmul.mubr.f32.gmra.mrb[0].mxu0 %v2241
  %v2314 = vpop.f32.mrb[0].mxu0
  %v2315 = vadd.f32 %v1969, %v2314
  %v2316 = vpop.f32.mrb[0].mxu0
  %2317 = vdwg.mxu0
  %v2319 = vsel %vm95, %v499, 0
  %v2322 = vsel %vm95, %v504, 0
  %2324 = vmatprep.subr.mxu0 0.0
  %2325 = vmatpush1.xpose.msra.mxu0 %v1514
  %2326 = vmatprep.subr.mxu0 0.0
  %2327 = vmatpush1.xpose.msra.mxu0 %v1517
  %2328 = vmatprep.subr.mxu0 0.0
  %2329 = vmatpush1.xpose.msra.mxu0 %v1520
  %2330 = vmatprep.subr.mxu0 0.0
  %2331 = vmatpush1.xpose.msra.mxu0 %v1523
  %2332 = vmatprep.subr.mxu0 0.0
  %2333 = vmatpush1.xpose.msra.mxu0 %v1526
  %2334 = vmatprep.subr.mxu0 0.0
  %2335 = vmatpush1.xpose.msra.mxu0 %v1529
  %2336 = vmatprep.subr.mxu0 0.0
  %2337 = vmatpush1.xpose.msra.mxu0 0.0
  %2338 = vmatprep.subr.mxu0 0.0
  %2339 = vmatpush1.xpose.msra.mxu0 0.0
  %2340 = vmatprep.subr.mxu0 0.0
  %2341 = vmatpush1.xpose.msra.mxu0 0.0
  %2342 = vmatprep.subr.mxu0 0.0
  %2343 = vmatpush1.xpose.msra.mxu0 0.0
  %2344 = vmatprep.subr.mxu0 0.0
  %2345 = vmatpush1.xpose.msra.mxu0 0.0
  %2346 = vmatprep.subr.mxu0 0.0
  %2347 = vmatpush1.xpose.msra.mxu0 0.0
  %2348 = vmatprep.subr.mxu0 0.0
  %2349 = vmatpush1.xpose.msra.mxu0 0.0
  %2350 = vmatprep.subr.mxu0 0.0
  %2351 = vmatpush1.xpose.msra.mxu0 0.0
  %2352 = vmatprep.subr.mxu0 0.0
  %2353 = vmatpush1.xpose.msra.mxu0 0.0
  %2354 = vmatprep.subr.mxu0 0.0
  %2355 = vmatpush1.xpose.msra.mxu0 0.0
  %2356 = vmatprep.subr.mxu0 0.0
  %2357 = vmatpush1.xpose.msra.mxu0 0.0
  %2358 = vmatprep.subr.mxu0 0.0
  %2359 = vmatpush1.xpose.msra.mxu0 0.0
  %2360 = vmatprep.subr.mxu0 0.0
  %2361 = vmatpush1.xpose.msra.mxu0 0.0
  %2362 = vmatprep.subr.mxu0 0.0
  %2363 = vmatpush1.xpose.msra.mxu0 0.0
  %2364 = vmatprep.subr.mxu0 0.0
  %2365 = vmatpush1.xpose.msra.mxu0 0.0
  %2366 = vmatprep.subr.mxu0 0.0
  %2367 = vmatpush1.xpose.msra.mxu0 0.0
  %2368 = vmatprep.subr.mxu0 0.0
  %2369 = vmatpush1.xpose.msra.mxu0 0.0
  %2370 = vmatprep.subr.mxu0 0.0
  %2371 = vmatpush1.xpose.msra.mxu0 0.0
  %2372 = vmatprep.subr.mxu0 0.0
  %2373 = vmatpush1.xpose.msra.mxu0 0.0
  %2374 = vmatprep.subr.mxu0 0.0
  %2375 = vmatpush1.xpose.msra.mxu0 0.0
  %2376 = vmatprep.subr.mxu0 0.0
  %2377 = vmatpush1.xpose.msra.mxu0 0.0
  %2378 = vmatprep.subr.mxu0 0.0
  %2379 = vmatpush1.xpose.msra.mxu0 0.0
  %2380 = vmatprep.subr.mxu0 0.0
  %2381 = vmatpush1.xpose.msra.mxu0 0.0
  %2382 = vmatprep.subr.mxu0 0.0
  %2383 = vmatpush1.xpose.msra.mxu0 0.0
  %2384 = vmatprep.subr.mxu0 0.0
  %2385 = vmatpush1.xpose.msra.mxu0 0.0
  %2386 = vmatprep.subr.mxu0 0.0
  %2387 = vmatpush1.xpose.msra.mxu0 0.0
  %2388 = vmatprep.mubr.f32.mxu0 0.0
  %2389 = vmatmul.mubr.f32.gmra.mrb[0].mxu0 %v2319
  %v2390 = vpop.f32.mrb[0].mxu0
  %v2391 = vadd.f32 %v1970, %v2390
  %v2392 = vpop.f32.mrb[0].mxu0
  %2393 = vmatprep.mubr.f32.mxu0 0.0
  %2394 = vmatmul.mubr.f32.gmra.mrb[0].mxu0 %v2322
  %v2395 = vpop.f32.mrb[0].mxu0
  %v2396 = vadd.f32 %v1971, %v2395
  %v2397 = vpop.f32.mrb[0].mxu0
  %2398 = vdwg.mxu0
  %v2400 = vsel %vm95, %v580, 0
  %v2403 = vsel %vm95, %v585, 0
  %2405 = vmatprep.subr.mxu0 0.0
  %2406 = vmatpush1.xpose.msra.mxu0 %v1514
  %2407 = vmatprep.subr.mxu0 0.0
  %2408 = vmatpush1.xpose.msra.mxu0 %v1517
  %2409 = vmatprep.subr.mxu0 0.0
  %2410 = vmatpush1.xpose.msra.mxu0 %v1520
  %2411 = vmatprep.subr.mxu0 0.0
  %2412 = vmatpush1.xpose.msra.mxu0 %v1523
  %2413 = vmatprep.subr.mxu0 0.0
  %2414 = vmatpush1.xpose.msra.mxu0 %v1526
  %2415 = vmatprep.subr.mxu0 0.0
  %2416 = vmatpush1.xpose.msra.mxu0 %v1529
  %2417 = vmatprep.subr.mxu0 0.0
  %2418 = vmatpush1.xpose.msra.mxu0 0.0
  %2419 = vmatprep.subr.mxu0 0.0
  %2420 = vmatpush1.xpose.msra.mxu0 0.0
  %2421 = vmatprep.subr.mxu0 0.0
  %2422 = vmatpush1.xpose.msra.mxu0 0.0
  %2423 = vmatprep.subr.mxu0 0.0
  %2424 = vmatpush1.xpose.msra.mxu0 0.0
  %2425 = vmatprep.subr.mxu0 0.0
  %2426 = vmatpush1.xpose.msra.mxu0 0.0
  %2427 = vmatprep.subr.mxu0 0.0
  %2428 = vmatpush1.xpose.msra.mxu0 0.0
  %2429 = vmatprep.subr.mxu0 0.0
  %2430 = vmatpush1.xpose.msra.mxu0 0.0
  %2431 = vmatprep.subr.mxu0 0.0
  %2432 = vmatpush1.xpose.msra.mxu0 0.0
  %2433 = vmatprep.subr.mxu0 0.0
  %2434 = vmatpush1.xpose.msra.mxu0 0.0
  %2435 = vmatprep.subr.mxu0 0.0
  %2436 = vmatpush1.xpose.msra.mxu0 0.0
  %2437 = vmatprep.subr.mxu0 0.0
  %2438 = vmatpush1.xpose.msra.mxu0 0.0
  %2439 = vmatprep.subr.mxu0 0.0
  %2440 = vmatpush1.xpose.msra.mxu0 0.0
  %2441 = vmatprep.subr.mxu0 0.0
  %2442 = vmatpush1.xpose.msra.mxu0 0.0
  %2443 = vmatprep.subr.mxu0 0.0
  %2444 = vmatpush1.xpose.msra.mxu0 0.0
  %2445 = vmatprep.subr.mxu0 0.0
  %2446 = vmatpush1.xpose.msra.mxu0 0.0
  %2447 = vmatprep.subr.mxu0 0.0
  %2448 = vmatpush1.xpose.msra.mxu0 0.0
  %2449 = vmatprep.subr.mxu0 0.0
  %2450 = vmatpush1.xpose.msra.mxu0 0.0
  %2451 = vmatprep.subr.mxu0 0.0
  %2452 = vmatpush1.xpose.msra.mxu0 0.0
  %2453 = vmatprep.subr.mxu0 0.0
  %2454 = vmatpush1.xpose.msra.mxu0 0.0
  %2455 = vmatprep.subr.mxu0 0.0
  %2456 = vmatpush1.xpose.msra.mxu0 0.0
  %2457 = vmatprep.subr.mxu0 0.0
  %2458 = vmatpush1.xpose.msra.mxu0 0.0
  %2459 = vmatprep.subr.mxu0 0.0
  %2460 = vmatpush1.xpose.msra.mxu0 0.0
  %2461 = vmatprep.subr.mxu0 0.0
  %2462 = vmatpush1.xpose.msra.mxu0 0.0
  %2463 = vmatprep.subr.mxu0 0.0
  %2464 = vmatpush1.xpose.msra.mxu0 0.0
  %2465 = vmatprep.subr.mxu0 0.0
  %2466 = vmatpush1.xpose.msra.mxu0 0.0
  %2467 = vmatprep.subr.mxu0 0.0
  %2468 = vmatpush1.xpose.msra.mxu0 0.0
  %2469 = vmatprep.mubr.f32.mxu0 0.0
  %2470 = vmatmul.mubr.f32.gmra.mrb[0].mxu0 %v2400
  %v2471 = vpop.f32.mrb[0].mxu0
  %v2472 = vadd.f32 %v1972, %v2471
  %v2473 = vpop.f32.mrb[0].mxu0
  %2474 = vmatprep.mubr.f32.mxu0 0.0
  %2475 = vmatmul.mubr.f32.gmra.mrb[0].mxu0 %v2403
  %v2476 = vpop.f32.mrb[0].mxu0
  %v2477 = vadd.f32 %v1973, %v2476
  %v2478 = vpop.f32.mrb[0].mxu0
  %2479 = vdwg.mxu0
  %v2481 = vsel %vm95, %v661, 0
  %v2484 = vsel %vm95, %v666, 0
  %2486 = vmatprep.subr.mxu0 0.0
  %2487 = vmatpush1.xpose.msra.mxu0 %v1514
  %2488 = vmatprep.subr.mxu0 0.0
  %2489 = vmatpush1.xpose.msra.mxu0 %v1517
  %2490 = vmatprep.subr.mxu0 0.0
  %2491 = vmatpush1.xpose.msra.mxu0 %v1520
  %2492 = vmatprep.subr.mxu0 0.0
  %2493 = vmatpush1.xpose.msra.mxu0 %v1523
  %2494 = vmatprep.subr.mxu0 0.0
  %2495 = vmatpush1.xpose.msra.mxu0 %v1526
  %2496 = vmatprep.subr.mxu0 0.0
  %2497 = vmatpush1.xpose.msra.mxu0 %v1529
  %2498 = vmatprep.subr.mxu0 0.0
  %2499 = vmatpush1.xpose.msra.mxu0 0.0
  %2500 = vmatprep.subr.mxu0 0.0
  %2501 = vmatpush1.xpose.msra.mxu0 0.0
  %2502 = vmatprep.subr.mxu0 0.0
  %2503 = vmatpush1.xpose.msra.mxu0 0.0
  %2504 = vmatprep.subr.mxu0 0.0
  %2505 = vmatpush1.xpose.msra.mxu0 0.0
  %2506 = vmatprep.subr.mxu0 0.0
  %2507 = vmatpush1.xpose.msra.mxu0 0.0
  %2508 = vmatprep.subr.mxu0 0.0
  %2509 = vmatpush1.xpose.msra.mxu0 0.0
  %2510 = vmatprep.subr.mxu0 0.0
  %2511 = vmatpush1.xpose.msra.mxu0 0.0
  %2512 = vmatprep.subr.mxu0 0.0
  %2513 = vmatpush1.xpose.msra.mxu0 0.0
  %2514 = vmatprep.subr.mxu0 0.0
  %2515 = vmatpush1.xpose.msra.mxu0 0.0
  %2516 = vmatprep.subr.mxu0 0.0
  %2517 = vmatpush1.xpose.msra.mxu0 0.0
  %2518 = vmatprep.subr.mxu0 0.0
  %2519 = vmatpush1.xpose.msra.mxu0 0.0
  %2520 = vmatprep.subr.mxu0 0.0
  %2521 = vmatpush1.xpose.msra.mxu0 0.0
  %2522 = vmatprep.subr.mxu0 0.0
  %2523 = vmatpush1.xpose.msra.mxu0 0.0
  %2524 = vmatprep.subr.mxu0 0.0
  %2525 = vmatpush1.xpose.msra.mxu0 0.0
  %2526 = vmatprep.subr.mxu0 0.0
  %2527 = vmatpush1.xpose.msra.mxu0 0.0
  %2528 = vmatprep.subr.mxu0 0.0
  %2529 = vmatpush1.xpose.msra.mxu0 0.0
  %2530 = vmatprep.subr.mxu0 0.0
  %2531 = vmatpush1.xpose.msra.mxu0 0.0
  %2532 = vmatprep.subr.mxu0 0.0
  %2533 = vmatpush1.xpose.msra.mxu0 0.0
  %2534 = vmatprep.subr.mxu0 0.0
  %2535 = vmatpush1.xpose.msra.mxu0 0.0
  %2536 = vmatprep.subr.mxu0 0.0
  %2537 = vmatpush1.xpose.msra.mxu0 0.0
  %2538 = vmatprep.subr.mxu0 0.0
  %2539 = vmatpush1.xpose.msra.mxu0 0.0
  %2540 = vmatprep.subr.mxu0 0.0
  %2541 = vmatpush1.xpose.msra.mxu0 0.0
  %2542 = vmatprep.subr.mxu0 0.0
  %2543 = vmatpush1.xpose.msra.mxu0 0.0
  %2544 = vmatprep.subr.mxu0 0.0
  %2545 = vmatpush1.xpose.msra.mxu0 0.0
  %2546 = vmatprep.subr.mxu0 0.0
  %2547 = vmatpush1.xpose.msra.mxu0 0.0
  %2548 = vmatprep.subr.mxu0 0.0
  %2549 = vmatpush1.xpose.msra.mxu0 0.0
  %2550 = vmatprep.mubr.f32.mxu0 0.0
  %2551 = vmatmul.mubr.f32.gmra.mrb[0].mxu0 %v2481
  %v2552 = vpop.f32.mrb[0].mxu0
  %v2553 = vadd.f32 %v1974, %v2552
  %v2554 = vpop.f32.mrb[0].mxu0
  %2555 = vmatprep.mubr.f32.mxu0 0.0
  %2556 = vmatmul.mubr.f32.gmra.mrb[0].mxu0 %v2484
  %v2557 = vpop.f32.mrb[0].mxu0
  %v2558 = vadd.f32 %v1975, %v2557
  %v2559 = vpop.f32.mrb[0].mxu0
  %2560 = vdwg.mxu0
  %v2562 = vsel %vm95, %v742, 0
  %v2565 = vsel %vm95, %v747, 0
  %2567 = vmatprep.subr.mxu0 0.0
  %2568 = vmatpush1.xpose.msra.mxu0 %v1514
  %2569 = vmatprep.subr.mxu0 0.0
  %2570 = vmatpush1.xpose.msra.mxu0 %v1517
  %2571 = vmatprep.subr.mxu0 0.0
  %2572 = vmatpush1.xpose.msra.mxu0 %v1520
  %2573 = vmatprep.subr.mxu0 0.0
  %2574 = vmatpush1.xpose.msra.mxu0 %v1523
  %2575 = vmatprep.subr.mxu0 0.0
  %2576 = vmatpush1.xpose.msra.mxu0 %v1526
  %2577 = vmatprep.subr.mxu0 0.0
  %2578 = vmatpush1.xpose.msra.mxu0 %v1529
  %2579 = vmatprep.subr.mxu0 0.0
  %2580 = vmatpush1.xpose.msra.mxu0 0.0
  %2581 = vmatprep.subr.mxu0 0.0
  %2582 = vmatpush1.xpose.msra.mxu0 0.0
  %2583 = vmatprep.subr.mxu0 0.0
  %2584 = vmatpush1.xpose.msra.mxu0 0.0
  %2585 = vmatprep.subr.mxu0 0.0
  %2586 = vmatpush1.xpose.msra.mxu0 0.0
  %2587 = vmatprep.subr.mxu0 0.0
  %2588 = vmatpush1.xpose.msra.mxu0 0.0
  %2589 = vmatprep.subr.mxu0 0.0
  %2590 = vmatpush1.xpose.msra.mxu0 0.0
  %2591 = vmatprep.subr.mxu0 0.0
  %2592 = vmatpush1.xpose.msra.mxu0 0.0
  %2593 = vmatprep.subr.mxu0 0.0
  %2594 = vmatpush1.xpose.msra.mxu0 0.0
  %2595 = vmatprep.subr.mxu0 0.0
  %2596 = vmatpush1.xpose.msra.mxu0 0.0
  %2597 = vmatprep.subr.mxu0 0.0
  %2598 = vmatpush1.xpose.msra.mxu0 0.0
  %2599 = vmatprep.subr.mxu0 0.0
  %2600 = vmatpush1.xpose.msra.mxu0 0.0
  %2601 = vmatprep.subr.mxu0 0.0
  %2602 = vmatpush1.xpose.msra.mxu0 0.0
  %2603 = vmatprep.subr.mxu0 0.0
  %2604 = vmatpush1.xpose.msra.mxu0 0.0
  %2605 = vmatprep.subr.mxu0 0.0
  %2606 = vmatpush1.xpose.msra.mxu0 0.0
  %2607 = vmatprep.subr.mxu0 0.0
  %2608 = vmatpush1.xpose.msra.mxu0 0.0
  %2609 = vmatprep.subr.mxu0 0.0
  %2610 = vmatpush1.xpose.msra.mxu0 0.0
  %2611 = vmatprep.subr.mxu0 0.0
  %2612 = vmatpush1.xpose.msra.mxu0 0.0
  %2613 = vmatprep.subr.mxu0 0.0
  %2614 = vmatpush1.xpose.msra.mxu0 0.0
  %2615 = vmatprep.subr.mxu0 0.0
  %2616 = vmatpush1.xpose.msra.mxu0 0.0
  %2617 = vmatprep.subr.mxu0 0.0
  %2618 = vmatpush1.xpose.msra.mxu0 0.0
  %2619 = vmatprep.subr.mxu0 0.0
  %2620 = vmatpush1.xpose.msra.mxu0 0.0
  %2621 = vmatprep.subr.mxu0 0.0
  %2622 = vmatpush1.xpose.msra.mxu0 0.0
  %2623 = vmatprep.subr.mxu0 0.0
  %2624 = vmatpush1.xpose.msra.mxu0 0.0
  %2625 = vmatprep.subr.mxu0 0.0
  %2626 = vmatpush1.xpose.msra.mxu0 0.0
  %2627 = vmatprep.subr.mxu0 0.0
  %2628 = vmatpush1.xpose.msra.mxu0 0.0
  %2629 = vmatprep.subr.mxu0 0.0
  %2630 = vmatpush1.xpose.msra.mxu0 0.0
  %2631 = vmatprep.mubr.f32.mxu0 0.0
  %2632 = vmatmul.mubr.f32.gmra.mrb[0].mxu0 %v2562
  %v2633 = vpop.f32.mrb[0].mxu0
  %v2634 = vadd.f32 %v1976, %v2633
  %v2635 = vpop.f32.mrb[0].mxu0
  %2636 = vmatprep.mubr.f32.mxu0 0.0
  %2637 = vmatmul.mubr.f32.gmra.mrb[0].mxu0 %v2565
  %v2638 = vpop.f32.mrb[0].mxu0
  %v2639 = vadd.f32 %v1977, %v2638
  %v2640 = vpop.f32.mrb[0].mxu0
  %2641 = vdwg.mxu0
  %v2643 = vsel %vm95, %v823, 0
  %v2646 = vsel %vm95, %v828, 0
  %2648 = vmatprep.subr.mxu0 0.0
  %2649 = vmatpush1.xpose.msra.mxu0 %v1514
  %2650 = vmatprep.subr.mxu0 0.0
  %2651 = vmatpush1.xpose.msra.mxu0 %v1517
  %2652 = vmatprep.subr.mxu0 0.0
  %2653 = vmatpush1.xpose.msra.mxu0 %v1520
  %2654 = vmatprep.subr.mxu0 0.0
  %2655 = vmatpush1.xpose.msra.mxu0 %v1523
  %2656 = vmatprep.subr.mxu0 0.0
  %2657 = vmatpush1.xpose.msra.mxu0 %v1526
  %2658 = vmatprep.subr.mxu0 0.0
  %2659 = vmatpush1.xpose.msra.mxu0 %v1529
  %2660 = vmatprep.subr.mxu0 0.0
  %2661 = vmatpush1.xpose.msra.mxu0 0.0
  %2662 = vmatprep.subr.mxu0 0.0
  %2663 = vmatpush1.xpose.msra.mxu0 0.0
  %2664 = vmatprep.subr.mxu0 0.0
  %2665 = vmatpush1.xpose.msra.mxu0 0.0
  %2666 = vmatprep.subr.mxu0 0.0
  %2667 = vmatpush1.xpose.msra.mxu0 0.0
  %2668 = vmatprep.subr.mxu0 0.0
  %2669 = vmatpush1.xpose.msra.mxu0 0.0
  %2670 = vmatprep.subr.mxu0 0.0
  %2671 = vmatpush1.xpose.msra.mxu0 0.0
  %2672 = vmatprep.subr.mxu0 0.0
  %2673 = vmatpush1.xpose.msra.mxu0 0.0
  %2674 = vmatprep.subr.mxu0 0.0
  %2675 = vmatpush1.xpose.msra.mxu0 0.0
  %2676 = vmatprep.subr.mxu0 0.0
  %2677 = vmatpush1.xpose.msra.mxu0 0.0
  %2678 = vmatprep.subr.mxu0 0.0
  %2679 = vmatpush1.xpose.msra.mxu0 0.0
  %2680 = vmatprep.subr.mxu0 0.0
  %2681 = vmatpush1.xpose.msra.mxu0 0.0
  %2682 = vmatprep.subr.mxu0 0.0
  %2683 = vmatpush1.xpose.msra.mxu0 0.0
  %2684 = vmatprep.subr.mxu0 0.0
  %2685 = vmatpush1.xpose.msra.mxu0 0.0
  %2686 = vmatprep.subr.mxu0 0.0
  %2687 = vmatpush1.xpose.msra.mxu0 0.0
  %2688 = vmatprep.subr.mxu0 0.0
  %2689 = vmatpush1.xpose.msra.mxu0 0.0
  %2690 = vmatprep.subr.mxu0 0.0
  %2691 = vmatpush1.xpose.msra.mxu0 0.0
  %2692 = vmatprep.subr.mxu0 0.0
  %2693 = vmatpush1.xpose.msra.mxu0 0.0
  %2694 = vmatprep.subr.mxu0 0.0
  %2695 = vmatpush1.xpose.msra.mxu0 0.0
  %2696 = vmatprep.subr.mxu0 0.0
  %2697 = vmatpush1.xpose.msra.mxu0 0.0
  %2698 = vmatprep.subr.mxu0 0.0
  %2699 = vmatpush1.xpose.msra.mxu0 0.0
  %2700 = vmatprep.subr.mxu0 0.0
  %2701 = vmatpush1.xpose.msra.mxu0 0.0
  %2702 = vmatprep.subr.mxu0 0.0
  %2703 = vmatpush1.xpose.msra.mxu0 0.0
  %2704 = vmatprep.subr.mxu0 0.0
  %2705 = vmatpush1.xpose.msra.mxu0 0.0
  %2706 = vmatprep.subr.mxu0 0.0
  %2707 = vmatpush1.xpose.msra.mxu0 0.0
  %2708 = vmatprep.subr.mxu0 0.0
  %2709 = vmatpush1.xpose.msra.mxu0 0.0
  %2710 = vmatprep.subr.mxu0 0.0
  %2711 = vmatpush1.xpose.msra.mxu0 0.0
  %2712 = vmatprep.mubr.f32.mxu0 0.0
  %2713 = vmatmul.mubr.f32.gmra.mrb[0].mxu0 %v2643
  %v2714 = vpop.f32.mrb[0].mxu0
  %v2715 = vadd.f32 %v1978, %v2714
  %v2716 = vpop.f32.mrb[0].mxu0
  %2717 = vmatprep.mubr.f32.mxu0 0.0
  %2718 = vmatmul.mubr.f32.gmra.mrb[0].mxu0 %v2646
  %v2719 = vpop.f32.mrb[0].mxu0
  %v2720 = vadd.f32 %v1979, %v2719
  %v2721 = vpop.f32.mrb[0].mxu0
  %2722 = vdwg.mxu0
  %v2724 = vsel %vm95, %v904, 0
  %v2727 = vsel %vm95, %v909, 0
  %2729 = vmatprep.subr.mxu0 0.0
  %2730 = vmatpush1.xpose.msra.mxu0 %v1514
  %2731 = vmatprep.subr.mxu0 0.0
  %2732 = vmatpush1.xpose.msra.mxu0 %v1517
  %2733 = vmatprep.subr.mxu0 0.0
  %2734 = vmatpush1.xpose.msra.mxu0 %v1520
  %2735 = vmatprep.subr.mxu0 0.0
  %2736 = vmatpush1.xpose.msra.mxu0 %v1523
  %2737 = vmatprep.subr.mxu0 0.0
  %2738 = vmatpush1.xpose.msra.mxu0 %v1526
  %2739 = vmatprep.subr.mxu0 0.0
  %2740 = vmatpush1.xpose.msra.mxu0 %v1529
  %2741 = vmatprep.subr.mxu0 0.0
  %2742 = vmatpush1.xpose.msra.mxu0 0.0
  %2743 = vmatprep.subr.mxu0 0.0
  %2744 = vmatpush1.xpose.msra.mxu0 0.0
  %2745 = vmatprep.subr.mxu0 0.0
  %2746 = vmatpush1.xpose.msra.mxu0 0.0
  %2747 = vmatprep.subr.mxu0 0.0
  %2748 = vmatpush1.xpose.msra.mxu0 0.0
  %2749 = vmatprep.subr.mxu0 0.0
  %2750 = vmatpush1.xpose.msra.mxu0 0.0
  %2751 = vmatprep.subr.mxu0 0.0
  %2752 = vmatpush1.xpose.msra.mxu0 0.0
  %2753 = vmatprep.subr.mxu0 0.0
  %2754 = vmatpush1.xpose.msra.mxu0 0.0
  %2755 = vmatprep.subr.mxu0 0.0
  %2756 = vmatpush1.xpose.msra.mxu0 0.0
  %2757 = vmatprep.subr.mxu0 0.0
  %2758 = vmatpush1.xpose.msra.mxu0 0.0
  %2759 = vmatprep.subr.mxu0 0.0
  %2760 = vmatpush1.xpose.msra.mxu0 0.0
  %2761 = vmatprep.subr.mxu0 0.0
  %2762 = vmatpush1.xpose.msra.mxu0 0.0
  %2763 = vmatprep.subr.mxu0 0.0
  %2764 = vmatpush1.xpose.msra.mxu0 0.0
  %2765 = vmatprep.subr.mxu0 0.0
  %2766 = vmatpush1.xpose.msra.mxu0 0.0
  %2767 = vmatprep.subr.mxu0 0.0
  %2768 = vmatpush1.xpose.msra.mxu0 0.0
  %2769 = vmatprep.subr.mxu0 0.0
  %2770 = vmatpush1.xpose.msra.mxu0 0.0
  %2771 = vmatprep.subr.mxu0 0.0
  %2772 = vmatpush1.xpose.msra.mxu0 0.0
  %2773 = vmatprep.subr.mxu0 0.0
  %2774 = vmatpush1.xpose.msra.mxu0 0.0
  %2775 = vmatprep.subr.mxu0 0.0
  %2776 = vmatpush1.xpose.msra.mxu0 0.0
  %2777 = vmatprep.subr.mxu0 0.0
  %2778 = vmatpush1.xpose.msra.mxu0 0.0
  %2779 = vmatprep.subr.mxu0 0.0
  %2780 = vmatpush1.xpose.msra.mxu0 0.0
  %2781 = vmatprep.subr.mxu0 0.0
  %2782 = vmatpush1.xpose.msra.mxu0 0.0
  %2783 = vmatprep.subr.mxu0 0.0
  %2784 = vmatpush1.xpose.msra.mxu0 0.0
  %2785 = vmatprep.subr.mxu0 0.0
  %2786 = vmatpush1.xpose.msra.mxu0 0.0
  %2787 = vmatprep.subr.mxu0 0.0
  %2788 = vmatpush1.xpose.msra.mxu0 0.0
  %2789 = vmatprep.subr.mxu0 0.0
  %2790 = vmatpush1.xpose.msra.mxu0 0.0
  %2791 = vmatprep.subr.mxu0 0.0
  %2792 = vmatpush1.xpose.msra.mxu0 0.0
  %2793 = vmatprep.mubr.f32.mxu0 0.0
  %2794 = vmatmul.mubr.f32.gmra.mrb[0].mxu0 %v2724
  %v2795 = vpop.f32.mrb[0].mxu0
  %v2796 = vadd.f32 %v1980, %v2795
  %v2797 = vpop.f32.mrb[0].mxu0
  %2798 = vmatprep.mubr.f32.mxu0 0.0
  %2799 = vmatmul.mubr.f32.gmra.mrb[0].mxu0 %v2727
  %v2800 = vpop.f32.mrb[0].mxu0
  %v2801 = vadd.f32 %v1981, %v2800
  %v2802 = vpop.f32.mrb[0].mxu0
  %2803 = vdwg.mxu0
  %v2805 = vsel %vm95, %v985, 0
  %v2808 = vsel %vm95, %v990, 0
  %2810 = vmatprep.subr.mxu0 0.0
  %2811 = vmatpush1.xpose.msra.mxu0 %v1514
  %2812 = vmatprep.subr.mxu0 0.0
  %2813 = vmatpush1.xpose.msra.mxu0 %v1517
  %2814 = vmatprep.subr.mxu0 0.0
  %2815 = vmatpush1.xpose.msra.mxu0 %v1520
  %2816 = vmatprep.subr.mxu0 0.0
  %2817 = vmatpush1.xpose.msra.mxu0 %v1523
  %2818 = vmatprep.subr.mxu0 0.0
  %2819 = vmatpush1.xpose.msra.mxu0 %v1526
  %2820 = vmatprep.subr.mxu0 0.0
  %2821 = vmatpush1.xpose.msra.mxu0 %v1529
  %2822 = vmatprep.subr.mxu0 0.0
  %2823 = vmatpush1.xpose.msra.mxu0 0.0
  %2824 = vmatprep.subr.mxu0 0.0
  %2825 = vmatpush1.xpose.msra.mxu0 0.0
  %2826 = vmatprep.subr.mxu0 0.0
  %2827 = vmatpush1.xpose.msra.mxu0 0.0
  %2828 = vmatprep.subr.mxu0 0.0
  %2829 = vmatpush1.xpose.msra.mxu0 0.0
  %2830 = vmatprep.subr.mxu0 0.0
  %2831 = vmatpush1.xpose.msra.mxu0 0.0
  %2832 = vmatprep.subr.mxu0 0.0
  %2833 = vmatpush1.xpose.msra.mxu0 0.0
  %2834 = vmatprep.subr.mxu0 0.0
  %2835 = vmatpush1.xpose.msra.mxu0 0.0
  %2836 = vmatprep.subr.mxu0 0.0
  %2837 = vmatpush1.xpose.msra.mxu0 0.0
  %2838 = vmatprep.subr.mxu0 0.0
  %2839 = vmatpush1.xpose.msra.mxu0 0.0
  %2840 = vmatprep.subr.mxu0 0.0
  %2841 = vmatpush1.xpose.msra.mxu0 0.0
  %2842 = vmatprep.subr.mxu0 0.0
  %2843 = vmatpush1.xpose.msra.mxu0 0.0
  %2844 = vmatprep.subr.mxu0 0.0
  %2845 = vmatpush1.xpose.msra.mxu0 0.0
  %2846 = vmatprep.subr.mxu0 0.0
  %2847 = vmatpush1.xpose.msra.mxu0 0.0
  %2848 = vmatprep.subr.mxu0 0.0
  %2849 = vmatpush1.xpose.msra.mxu0 0.0
  %2850 = vmatprep.subr.mxu0 0.0
  %2851 = vmatpush1.xpose.msra.mxu0 0.0
  %2852 = vmatprep.subr.mxu0 0.0
  %2853 = vmatpush1.xpose.msra.mxu0 0.0
  %2854 = vmatprep.subr.mxu0 0.0
  %2855 = vmatpush1.xpose.msra.mxu0 0.0
  %2856 = vmatprep.subr.mxu0 0.0
  %2857 = vmatpush1.xpose.msra.mxu0 0.0
  %2858 = vmatprep.subr.mxu0 0.0
  %2859 = vmatpush1.xpose.msra.mxu0 0.0
  %2860 = vmatprep.subr.mxu0 0.0
  %2861 = vmatpush1.xpose.msra.mxu0 0.0
  %2862 = vmatprep.subr.mxu0 0.0
  %2863 = vmatpush1.xpose.msra.mxu0 0.0
  %2864 = vmatprep.subr.mxu0 0.0
  %2865 = vmatpush1.xpose.msra.mxu0 0.0
  %2866 = vmatprep.subr.mxu0 0.0
  %2867 = vmatpush1.xpose.msra.mxu0 0.0
  %2868 = vmatprep.subr.mxu0 0.0
  %2869 = vmatpush1.xpose.msra.mxu0 0.0
  %2870 = vmatprep.subr.mxu0 0.0
  %2871 = vmatpush1.xpose.msra.mxu0 0.0
  %2872 = vmatprep.subr.mxu0 0.0
  %2873 = vmatpush1.xpose.msra.mxu0 0.0
  %2874 = vmatprep.mubr.f32.mxu0 0.0
  %2875 = vmatmul.mubr.f32.gmra.mrb[0].mxu0 %v2805
  %v2876 = vpop.f32.mrb[0].mxu0
  %v2877 = vadd.f32 %v1982, %v2876
  %v2878 = vpop.f32.mrb[0].mxu0
  %2879 = vmatprep.mubr.f32.mxu0 0.0
  %2880 = vmatmul.mubr.f32.gmra.mrb[0].mxu0 %v2808
  %v2881 = vpop.f32.mrb[0].mxu0
  %v2882 = vadd.f32 %v1983, %v2881
  %v2883 = vpop.f32.mrb[0].mxu0
  %2884 = vdwg.mxu0
  %v2886 = vsel %vm95, %v1066, 0
  %v2889 = vsel %vm95, %v1071, 0
  %2891 = vmatprep.subr.mxu0 0.0
  %2892 = vmatpush1.xpose.msra.mxu0 %v1514
  %2893 = vmatprep.subr.mxu0 0.0
  %2894 = vmatpush1.xpose.msra.mxu0 %v1517
  %2895 = vmatprep.subr.mxu0 0.0
  %2896 = vmatpush1.xpose.msra.mxu0 %v1520
  %2897 = vmatprep.subr.mxu0 0.0
  %2898 = vmatpush1.xpose.msra.mxu0 %v1523
  %2899 = vmatprep.subr.mxu0 0.0
  %2900 = vmatpush1.xpose.msra.mxu0 %v1526
  %2901 = vmatprep.subr.mxu0 0.0
  %2902 = vmatpush1.xpose.msra.mxu0 %v1529
  %2903 = vmatprep.subr.mxu0 0.0
  %2904 = vmatpush1.xpose.msra.mxu0 0.0
  %2905 = vmatprep.subr.mxu0 0.0
  %2906 = vmatpush1.xpose.msra.mxu0 0.0
  %2907 = vmatprep.subr.mxu0 0.0
  %2908 = vmatpush1.xpose.msra.mxu0 0.0
  %2909 = vmatprep.subr.mxu0 0.0
  %2910 = vmatpush1.xpose.msra.mxu0 0.0
  %2911 = vmatprep.subr.mxu0 0.0
  %2912 = vmatpush1.xpose.msra.mxu0 0.0
  %2913 = vmatprep.subr.mxu0 0.0
  %2914 = vmatpush1.xpose.msra.mxu0 0.0
  %2915 = vmatprep.subr.mxu0 0.0
  %2916 = vmatpush1.xpose.msra.mxu0 0.0
  %2917 = vmatprep.subr.mxu0 0.0
  %2918 = vmatpush1.xpose.msra.mxu0 0.0
  %2919 = vmatprep.subr.mxu0 0.0
  %2920 = vmatpush1.xpose.msra.mxu0 0.0
  %2921 = vmatprep.subr.mxu0 0.0
  %2922 = vmatpush1.xpose.msra.mxu0 0.0
  %2923 = vmatprep.subr.mxu0 0.0
  %2924 = vmatpush1.xpose.msra.mxu0 0.0
  %2925 = vmatprep.subr.mxu0 0.0
  %2926 = vmatpush1.xpose.msra.mxu0 0.0
  %2927 = vmatprep.subr.mxu0 0.0
  %2928 = vmatpush1.xpose.msra.mxu0 0.0
  %2929 = vmatprep.subr.mxu0 0.0
  %2930 = vmatpush1.xpose.msra.mxu0 0.0
  %2931 = vmatprep.subr.mxu0 0.0
  %2932 = vmatpush1.xpose.msra.mxu0 0.0
  %2933 = vmatprep.subr.mxu0 0.0
  %2934 = vmatpush1.xpose.msra.mxu0 0.0
  %2935 = vmatprep.subr.mxu0 0.0
  %2936 = vmatpush1.xpose.msra.mxu0 0.0
  %2937 = vmatprep.subr.mxu0 0.0
  %2938 = vmatpush1.xpose.msra.mxu0 0.0
  %2939 = vmatprep.subr.mxu0 0.0
  %2940 = vmatpush1.xpose.msra.mxu0 0.0
  %2941 = vmatprep.subr.mxu0 0.0
  %2942 = vmatpush1.xpose.msra.mxu0 0.0
  %2943 = vmatprep.subr.mxu0 0.0
  %2944 = vmatpush1.xpose.msra.mxu0 0.0
  %2945 = vmatprep.subr.mxu0 0.0
  %2946 = vmatpush1.xpose.msra.mxu0 0.0
  %2947 = vmatprep.subr.mxu0 0.0
  %2948 = vmatpush1.xpose.msra.mxu0 0.0
  %2949 = vmatprep.subr.mxu0 0.0
  %2950 = vmatpush1.xpose.msra.mxu0 0.0
  %2951 = vmatprep.subr.mxu0 0.0
  %2952 = vmatpush1.xpose.msra.mxu0 0.0
  %2953 = vmatprep.subr.mxu0 0.0
  %2954 = vmatpush1.xpose.msra.mxu0 0.0
  %2955 = vmatprep.mubr.f32.mxu0 0.0
  %2956 = vmatmul.mubr.f32.gmra.mrb[0].mxu0 %v2886
  %v2957 = vpop.f32.mrb[0].mxu0
  %v2958 = vadd.f32 %v1984, %v2957
  %v2959 = vpop.f32.mrb[0].mxu0
  %2960 = vmatprep.mubr.f32.mxu0 0.0
  %2961 = vmatmul.mubr.f32.gmra.mrb[0].mxu0 %v2889
  %v2962 = vpop.f32.mrb[0].mxu0
  %v2963 = vadd.f32 %v1985, %v2962
  %v2964 = vpop.f32.mrb[0].mxu0
  %2965 = vdwg.mxu0
  %v2967 = vsel %vm95, %v1147, 0
  %v2970 = vsel %vm95, %v1152, 0
  %2972 = vmatprep.subr.mxu0 0.0
  %2973 = vmatpush1.xpose.msra.mxu0 %v1514
  %2974 = vmatprep.subr.mxu0 0.0
  %2975 = vmatpush1.xpose.msra.mxu0 %v1517
  %2976 = vmatprep.subr.mxu0 0.0
  %2977 = vmatpush1.xpose.msra.mxu0 %v1520
  %2978 = vmatprep.subr.mxu0 0.0
  %2979 = vmatpush1.xpose.msra.mxu0 %v1523
  %2980 = vmatprep.subr.mxu0 0.0
  %2981 = vmatpush1.xpose.msra.mxu0 %v1526
  %2982 = vmatprep.subr.mxu0 0.0
  %2983 = vmatpush1.xpose.msra.mxu0 %v1529
  %2984 = vmatprep.subr.mxu0 0.0
  %2985 = vmatpush1.xpose.msra.mxu0 0.0
  %2986 = vmatprep.subr.mxu0 0.0
  %2987 = vmatpush1.xpose.msra.mxu0 0.0
  %2988 = vmatprep.subr.mxu0 0.0
  %2989 = vmatpush1.xpose.msra.mxu0 0.0
  %2990 = vmatprep.subr.mxu0 0.0
  %2991 = vmatpush1.xpose.msra.mxu0 0.0
  %2992 = vmatprep.subr.mxu0 0.0
  %2993 = vmatpush1.xpose.msra.mxu0 0.0
  %2994 = vmatprep.subr.mxu0 0.0
  %2995 = vmatpush1.xpose.msra.mxu0 0.0
  %2996 = vmatprep.subr.mxu0 0.0
  %2997 = vmatpush1.xpose.msra.mxu0 0.0
  %2998 = vmatprep.subr.mxu0 0.0
  %2999 = vmatpush1.xpose.msra.mxu0 0.0
  %3000 = vmatprep.subr.mxu0 0.0
  %3001 = vmatpush1.xpose.msra.mxu0 0.0
  %3002 = vmatprep.subr.mxu0 0.0
  %3003 = vmatpush1.xpose.msra.mxu0 0.0
  %3004 = vmatprep.subr.mxu0 0.0
  %3005 = vmatpush1.xpose.msra.mxu0 0.0
  %3006 = vmatprep.subr.mxu0 0.0
  %3007 = vmatpush1.xpose.msra.mxu0 0.0
  %3008 = vmatprep.subr.mxu0 0.0
  %3009 = vmatpush1.xpose.msra.mxu0 0.0
  %3010 = vmatprep.subr.mxu0 0.0
  %3011 = vmatpush1.xpose.msra.mxu0 0.0
  %3012 = vmatprep.subr.mxu0 0.0
  %3013 = vmatpush1.xpose.msra.mxu0 0.0
  %3014 = vmatprep.subr.mxu0 0.0
  %3015 = vmatpush1.xpose.msra.mxu0 0.0
  %3016 = vmatprep.subr.mxu0 0.0
  %3017 = vmatpush1.xpose.msra.mxu0 0.0
  %3018 = vmatprep.subr.mxu0 0.0
  %3019 = vmatpush1.xpose.msra.mxu0 0.0
  %3020 = vmatprep.subr.mxu0 0.0
  %3021 = vmatpush1.xpose.msra.mxu0 0.0
  %3022 = vmatprep.subr.mxu0 0.0
  %3023 = vmatpush1.xpose.msra.mxu0 0.0
  %3024 = vmatprep.subr.mxu0 0.0
  %3025 = vmatpush1.xpose.msra.mxu0 0.0
  %3026 = vmatprep.subr.mxu0 0.0
  %3027 = vmatpush1.xpose.msra.mxu0 0.0
  %3028 = vmatprep.subr.mxu0 0.0
  %3029 = vmatpush1.xpose.msra.mxu0 0.0
  %3030 = vmatprep.subr.mxu0 0.0
  %3031 = vmatpush1.xpose.msra.mxu0 0.0
  %3032 = vmatprep.subr.mxu0 0.0
  %3033 = vmatpush1.xpose.msra.mxu0 0.0
  %3034 = vmatprep.subr.mxu0 0.0
  %3035 = vmatpush1.xpose.msra.mxu0 0.0
  %3036 = vmatprep.mubr.f32.mxu0 0.0
  %3037 = vmatmul.mubr.f32.gmra.mrb[0].mxu0 %v2967
  %v3038 = vpop.f32.mrb[0].mxu0
  %v3039 = vadd.f32 %v1986, %v3038
  %v3040 = vpop.f32.mrb[0].mxu0
  %3041 = vmatprep.mubr.f32.mxu0 0.0
  %3042 = vmatmul.mubr.f32.gmra.mrb[0].mxu0 %v2970
  %v3043 = vpop.f32.mrb[0].mxu0
  %v3044 = vadd.f32 %v1987, %v3043
  %v3045 = vpop.f32.mrb[0].mxu0
  %3046 = vdwg.mxu0
  %v3048 = vsel %vm95, %v1228, 0
  %v3051 = vsel %vm95, %v1233, 0
  %3053 = vmatprep.subr.mxu0 0.0
  %3054 = vmatpush1.xpose.msra.mxu0 %v1514
  %3055 = vmatprep.subr.mxu0 0.0
  %3056 = vmatpush1.xpose.msra.mxu0 %v1517
  %3057 = vmatprep.subr.mxu0 0.0
  %3058 = vmatpush1.xpose.msra.mxu0 %v1520
  %3059 = vmatprep.subr.mxu0 0.0
  %3060 = vmatpush1.xpose.msra.mxu0 %v1523
  %3061 = vmatprep.subr.mxu0 0.0
  %3062 = vmatpush1.xpose.msra.mxu0 %v1526
  %3063 = vmatprep.subr.mxu0 0.0
  %3064 = vmatpush1.xpose.msra.mxu0 %v1529
  %3065 = vmatprep.subr.mxu0 0.0
  %3066 = vmatpush1.xpose.msra.mxu0 0.0
  %3067 = vmatprep.subr.mxu0 0.0
  %3068 = vmatpush1.xpose.msra.mxu0 0.0
  %3069 = vmatprep.subr.mxu0 0.0
  %3070 = vmatpush1.xpose.msra.mxu0 0.0
  %3071 = vmatprep.subr.mxu0 0.0
  %3072 = vmatpush1.xpose.msra.mxu0 0.0
  %3073 = vmatprep.subr.mxu0 0.0
  %3074 = vmatpush1.xpose.msra.mxu0 0.0
  %3075 = vmatprep.subr.mxu0 0.0
  %3076 = vmatpush1.xpose.msra.mxu0 0.0
  %3077 = vmatprep.subr.mxu0 0.0
  %3078 = vmatpush1.xpose.msra.mxu0 0.0
  %3079 = vmatprep.subr.mxu0 0.0
  %3080 = vmatpush1.xpose.msra.mxu0 0.0
  %3081 = vmatprep.subr.mxu0 0.0
  %3082 = vmatpush1.xpose.msra.mxu0 0.0
  %3083 = vmatprep.subr.mxu0 0.0
  %3084 = vmatpush1.xpose.msra.mxu0 0.0
  %3085 = vmatprep.subr.mxu0 0.0
  %3086 = vmatpush1.xpose.msra.mxu0 0.0
  %3087 = vmatprep.subr.mxu0 0.0
  %3088 = vmatpush1.xpose.msra.mxu0 0.0
  %3089 = vmatprep.subr.mxu0 0.0
  %3090 = vmatpush1.xpose.msra.mxu0 0.0
  %3091 = vmatprep.subr.mxu0 0.0
  %3092 = vmatpush1.xpose.msra.mxu0 0.0
  %3093 = vmatprep.subr.mxu0 0.0
  %3094 = vmatpush1.xpose.msra.mxu0 0.0
  %3095 = vmatprep.subr.mxu0 0.0
  %3096 = vmatpush1.xpose.msra.mxu0 0.0
  %3097 = vmatprep.subr.mxu0 0.0
  %3098 = vmatpush1.xpose.msra.mxu0 0.0
  %3099 = vmatprep.subr.mxu0 0.0
  %3100 = vmatpush1.xpose.msra.mxu0 0.0
  %3101 = vmatprep.subr.mxu0 0.0
  %3102 = vmatpush1.xpose.msra.mxu0 0.0
  %3103 = vmatprep.subr.mxu0 0.0
  %3104 = vmatpush1.xpose.msra.mxu0 0.0
  %3105 = vmatprep.subr.mxu0 0.0
  %3106 = vmatpush1.xpose.msra.mxu0 0.0
  %3107 = vmatprep.subr.mxu0 0.0
  %3108 = vmatpush1.xpose.msra.mxu0 0.0
  %3109 = vmatprep.subr.mxu0 0.0
  %3110 = vmatpush1.xpose.msra.mxu0 0.0
  %3111 = vmatprep.subr.mxu0 0.0
  %3112 = vmatpush1.xpose.msra.mxu0 0.0
  %3113 = vmatprep.subr.mxu0 0.0
  %3114 = vmatpush1.xpose.msra.mxu0 0.0
  %3115 = vmatprep.subr.mxu0 0.0
  %3116 = vmatpush1.xpose.msra.mxu0 0.0
  %3117 = vmatprep.mubr.f32.mxu0 0.0
  %3118 = vmatmul.mubr.f32.gmra.mrb[0].mxu0 %v3048
  %v3119 = vpop.f32.mrb[0].mxu0
  %v3120 = vadd.f32 %v1988, %v3119
  %v3121 = vpop.f32.mrb[0].mxu0
  %3122 = vmatprep.mubr.f32.mxu0 0.0
  %3123 = vmatmul.mubr.f32.gmra.mrb[0].mxu0 %v3051
  %v3124 = vpop.f32.mrb[0].mxu0
  %v3125 = vadd.f32 %v1989, %v3124
  %v3126 = vpop.f32.mrb[0].mxu0
  %3127 = vdwg.mxu0
  %v3129 = vsel %vm95, %v1309, 0
  %v3132 = vsel %vm95, %v1314, 0
  %3134 = vmatprep.subr.mxu0 0.0
  %3135 = vmatpush1.xpose.msra.mxu0 %v1514
  %3136 = vmatprep.subr.mxu0 0.0
  %3137 = vmatpush1.xpose.msra.mxu0 %v1517
  %3138 = vmatprep.subr.mxu0 0.0
  %3139 = vmatpush1.xpose.msra.mxu0 %v1520
  %3140 = vmatprep.subr.mxu0 0.0
  %3141 = vmatpush1.xpose.msra.mxu0 %v1523
  %3142 = vmatprep.subr.mxu0 0.0
  %3143 = vmatpush1.xpose.msra.mxu0 %v1526
  %3144 = vmatprep.subr.mxu0 0.0
  %3145 = vmatpush1.xpose.msra.mxu0 %v1529
  %3146 = vmatprep.subr.mxu0 0.0
  %3147 = vmatpush1.xpose.msra.mxu0 0.0
  %3148 = vmatprep.subr.mxu0 0.0
  %3149 = vmatpush1.xpose.msra.mxu0 0.0
  %3150 = vmatprep.subr.mxu0 0.0
  %3151 = vmatpush1.xpose.msra.mxu0 0.0
  %3152 = vmatprep.subr.mxu0 0.0
  %3153 = vmatpush1.xpose.msra.mxu0 0.0
  %3154 = vmatprep.subr.mxu0 0.0
  %3155 = vmatpush1.xpose.msra.mxu0 0.0
  %3156 = vmatprep.subr.mxu0 0.0
  %3157 = vmatpush1.xpose.msra.mxu0 0.0
  %3158 = vmatprep.subr.mxu0 0.0
  %3159 = vmatpush1.xpose.msra.mxu0 0.0
  %3160 = vmatprep.subr.mxu0 0.0
  %3161 = vmatpush1.xpose.msra.mxu0 0.0
  %3162 = vmatprep.subr.mxu0 0.0
  %3163 = vmatpush1.xpose.msra.mxu0 0.0
  %3164 = vmatprep.subr.mxu0 0.0
  %3165 = vmatpush1.xpose.msra.mxu0 0.0
  %3166 = vmatprep.subr.mxu0 0.0
  %3167 = vmatpush1.xpose.msra.mxu0 0.0
  %3168 = vmatprep.subr.mxu0 0.0
  %3169 = vmatpush1.xpose.msra.mxu0 0.0
  %3170 = vmatprep.subr.mxu0 0.0
  %3171 = vmatpush1.xpose.msra.mxu0 0.0
  %3172 = vmatprep.subr.mxu0 0.0
  %3173 = vmatpush1.xpose.msra.mxu0 0.0
  %3174 = vmatprep.subr.mxu0 0.0
  %3175 = vmatpush1.xpose.msra.mxu0 0.0
  %3176 = vmatprep.subr.mxu0 0.0
  %3177 = vmatpush1.xpose.msra.mxu0 0.0
  %3178 = vmatprep.subr.mxu0 0.0
  %3179 = vmatpush1.xpose.msra.mxu0 0.0
  %3180 = vmatprep.subr.mxu0 0.0
  %3181 = vmatpush1.xpose.msra.mxu0 0.0
  %3182 = vmatprep.subr.mxu0 0.0
  %3183 = vmatpush1.xpose.msra.mxu0 0.0
  %3184 = vmatprep.subr.mxu0 0.0
  %3185 = vmatpush1.xpose.msra.mxu0 0.0
  %3186 = vmatprep.subr.mxu0 0.0
  %3187 = vmatpush1.xpose.msra.mxu0 0.0
  %3188 = vmatprep.subr.mxu0 0.0
  %3189 = vmatpush1.xpose.msra.mxu0 0.0
  %3190 = vmatprep.subr.mxu0 0.0
  %3191 = vmatpush1.xpose.msra.mxu0 0.0
  %3192 = vmatprep.subr.mxu0 0.0
  %3193 = vmatpush1.xpose.msra.mxu0 0.0
  %3194 = vmatprep.subr.mxu0 0.0
  %3195 = vmatpush1.xpose.msra.mxu0 0.0
  %3196 = vmatprep.subr.mxu0 0.0
  %3197 = vmatpush1.xpose.msra.mxu0 0.0
  %3198 = vmatprep.mubr.f32.mxu0 0.0
  %3199 = vmatmul.mubr.f32.gmra.mrb[0].mxu0 %v3129
  %v3200 = vpop.f32.mrb[0].mxu0
  %v3201 = vadd.f32 %v1990, %v3200
  %v3202 = vpop.f32.mrb[0].mxu0
  %3203 = vmatprep.mubr.f32.mxu0 0.0
  %3204 = vmatmul.mubr.f32.gmra.mrb[0].mxu0 %v3132
  %v3205 = vpop.f32.mrb[0].mxu0
  %v3206 = vadd.f32 %v1991, %v3205
  %v3207 = vpop.f32.mrb[0].mxu0
  %3208 = vdwg.mxu0
  %v3210 = vsel %vm95, %v1390, 0
  %v3213 = vsel %vm95, %v1395, 0
  %3215 = vmatprep.subr.mxu0 0.0
  %3216 = vmatpush1.xpose.msra.mxu0 %v1514
  %3217 = vmatprep.subr.mxu0 0.0
  %3218 = vmatpush1.xpose.msra.mxu0 %v1517
  %3219 = vmatprep.subr.mxu0 0.0
  %3220 = vmatpush1.xpose.msra.mxu0 %v1520
  %3221 = vmatprep.subr.mxu0 0.0
  %3222 = vmatpush1.xpose.msra.mxu0 %v1523
  %3223 = vmatprep.subr.mxu0 0.0
  %3224 = vmatpush1.xpose.msra.mxu0 %v1526
  %3225 = vmatprep.subr.mxu0 0.0
  %3226 = vmatpush1.xpose.msra.mxu0 %v1529
  %3227 = vmatprep.subr.mxu0 0.0
  %3228 = vmatpush1.xpose.msra.mxu0 0.0
  %3229 = vmatprep.subr.mxu0 0.0
  %3230 = vmatpush1.xpose.msra.mxu0 0.0
  %3231 = vmatprep.subr.mxu0 0.0
  %3232 = vmatpush1.xpose.msra.mxu0 0.0
  %3233 = vmatprep.subr.mxu0 0.0
  %3234 = vmatpush1.xpose.msra.mxu0 0.0
  %3235 = vmatprep.subr.mxu0 0.0
  %3236 = vmatpush1.xpose.msra.mxu0 0.0
  %3237 = vmatprep.subr.mxu0 0.0
  %3238 = vmatpush1.xpose.msra.mxu0 0.0
  %3239 = vmatprep.subr.mxu0 0.0
  %3240 = vmatpush1.xpose.msra.mxu0 0.0
  %3241 = vmatprep.subr.mxu0 0.0
  %3242 = vmatpush1.xpose.msra.mxu0 0.0
  %3243 = vmatprep.subr.mxu0 0.0
  %3244 = vmatpush1.xpose.msra.mxu0 0.0
  %3245 = vmatprep.subr.mxu0 0.0
  %3246 = vmatpush1.xpose.msra.mxu0 0.0
  %3247 = vmatprep.subr.mxu0 0.0
  %3248 = vmatpush1.xpose.msra.mxu0 0.0
  %3249 = vmatprep.subr.mxu0 0.0
  %3250 = vmatpush1.xpose.msra.mxu0 0.0
  %3251 = vmatprep.subr.mxu0 0.0
  %3252 = vmatpush1.xpose.msra.mxu0 0.0
  %3253 = vmatprep.subr.mxu0 0.0
  %3254 = vmatpush1.xpose.msra.mxu0 0.0
  %3255 = vmatprep.subr.mxu0 0.0
  %3256 = vmatpush1.xpose.msra.mxu0 0.0
  %3257 = vmatprep.subr.mxu0 0.0
  %3258 = vmatpush1.xpose.msra.mxu0 0.0
  %3259 = vmatprep.subr.mxu0 0.0
  %3260 = vmatpush1.xpose.msra.mxu0 0.0
  %3261 = vmatprep.subr.mxu0 0.0
  %3262 = vmatpush1.xpose.msra.mxu0 0.0
  %3263 = vmatprep.subr.mxu0 0.0
  %3264 = vmatpush1.xpose.msra.mxu0 0.0
  %3265 = vmatprep.subr.mxu0 0.0
  %3266 = vmatpush1.xpose.msra.mxu0 0.0
  %3267 = vmatprep.subr.mxu0 0.0
  %3268 = vmatpush1.xpose.msra.mxu0 0.0
  %3269 = vmatprep.subr.mxu0 0.0
  %3270 = vmatpush1.xpose.msra.mxu0 0.0
  %3271 = vmatprep.subr.mxu0 0.0
  %3272 = vmatpush1.xpose.msra.mxu0 0.0
  %3273 = vmatprep.subr.mxu0 0.0
  %3274 = vmatpush1.xpose.msra.mxu0 0.0
  %3275 = vmatprep.subr.mxu0 0.0
  %3276 = vmatpush1.xpose.msra.mxu0 0.0
  %3277 = vmatprep.subr.mxu0 0.0
  %3278 = vmatpush1.xpose.msra.mxu0 0.0
  %3279 = vmatprep.mubr.f32.mxu0 0.0
  %3280 = vmatmul.mubr.f32.gmra.mrb[0].mxu0 %v3210
  %v3281 = vpop.f32.mrb[0].mxu0
  %v3282 = vadd.f32 %v1992, %v3281
  %v3283 = vpop.f32.mrb[0].mxu0
  %3284 = vmatprep.mubr.f32.mxu0 0.0
  %3285 = vmatmul.mubr.f32.gmra.mrb[0].mxu0 %v3213
  %v3286 = vpop.f32.mrb[0].mxu0
  %v3287 = vadd.f32 %v1993, %v3286
  %v3288 = vpop.f32.mrb[0].mxu0
  %3289 = vdwg.mxu0
  %v3290 = vmax.f32 %v2067, 0.0
  %v3291 = vmax.f32 %v2072, 0.0
  %v3292 = vmax.f32 %v2148, 0.0
  %v3293 = vmax.f32 %v2153, 0.0
  %v3294 = vmax.f32 %v2229, 0.0
  %v3295 = vmax.f32 %v2234, 0.0
  %v3296 = vmax.f32 %v2310, 0.0
  %v3297 = vmax.f32 %v2315, 0.0
  %v3298 = vmax.f32 %v2391, 0.0
  %v3299 = vmax.f32 %v2396, 0.0
  %v3300 = vmax.f32 %v2472, 0.0
  %v3301 = vmax.f32 %v2477, 0.0
  %v3302 = vmax.f32 %v2553, 0.0
  %v3303 = vmax.f32 %v2558, 0.0
  %v3304 = vmax.f32 %v2634, 0.0
  %v3305 = vmax.f32 %v2639, 0.0
  %v3306 = vmax.f32 %v2715, 0.0
  %v3307 = vmax.f32 %v2720, 0.0
  %v3308 = vmax.f32 %v2796, 0.0
  %v3309 = vmax.f32 %v2801, 0.0
  %v3310 = vmax.f32 %v2877, 0.0
  %v3311 = vmax.f32 %v2882, 0.0
  %v3312 = vmax.f32 %v2958, 0.0
  %v3313 = vmax.f32 %v2963, 0.0
  %v3314 = vmax.f32 %v3039, 0.0
  %v3315 = vmax.f32 %v3044, 0.0
  %v3316 = vmax.f32 %v3120, 0.0
  %v3317 = vmax.f32 %v3125, 0.0
  %v3318 = vmax.f32 %v3201, 0.0
  %v3319 = vmax.f32 %v3206, 0.0
  %v3320 = vmax.f32 %v3282, 0.0
  %v3321 = vmax.f32 %v3287, 0.0
  %v3322 = vsel %vm95, %v3290, -inf
  %3323 = vmax.xlane.f32.xlu0 %v3322
  %v3324 = vpop.xlane.xlu0 %3323
  %v3325 = vsel %vm95, %v3291, -inf
  %3326 = vmax.xlane.f32.xlu0 %v3325
  %v3327 = vpop.xlane.xlu0 %3326
  %v3328 = vsel %vm95, %v3292, -inf
  %3329 = vmax.xlane.f32.xlu0 %v3328
  %v3330 = vpop.xlane.xlu0 %3329
  %v3331 = vsel %vm95, %v3293, -inf
  %3332 = vmax.xlane.f32.xlu0 %v3331
  %v3333 = vpop.xlane.xlu0 %3332
  %v3334 = vsel %vm95, %v3294, -inf
  %3335 = vmax.xlane.f32.xlu0 %v3334
  %v3336 = vpop.xlane.xlu0 %3335
  %v3337 = vsel %vm95, %v3295, -inf
  %3338 = vmax.xlane.f32.xlu0 %v3337
  %v3339 = vpop.xlane.xlu0 %3338
  %v3340 = vsel %vm95, %v3296, -inf
  %3341 = vmax.xlane.f32.xlu0 %v3340
  %v3342 = vpop.xlane.xlu0 %3341
  %v3343 = vsel %vm95, %v3297, -inf
  %3344 = vmax.xlane.f32.xlu0 %v3343
  %v3345 = vpop.xlane.xlu0 %3344
  %v3346 = vsel %vm95, %v3298, -inf
  %3347 = vmax.xlane.f32.xlu0 %v3346
  %v3348 = vpop.xlane.xlu0 %3347
  %v3349 = vsel %vm95, %v3299, -inf
  %3350 = vmax.xlane.f32.xlu0 %v3349
  %v3351 = vpop.xlane.xlu0 %3350
  %v3352 = vsel %vm95, %v3300, -inf
  %3353 = vmax.xlane.f32.xlu0 %v3352
  %v3354 = vpop.xlane.xlu0 %3353
  %v3355 = vsel %vm95, %v3301, -inf
  %3356 = vmax.xlane.f32.xlu0 %v3355
  %v3357 = vpop.xlane.xlu0 %3356
  %v3358 = vsel %vm95, %v3302, -inf
  %3359 = vmax.xlane.f32.xlu0 %v3358
  %v3360 = vpop.xlane.xlu0 %3359
  %v3361 = vsel %vm95, %v3303, -inf
  %3362 = vmax.xlane.f32.xlu0 %v3361
  %v3363 = vpop.xlane.xlu0 %3362
  %v3364 = vsel %vm95, %v3304, -inf
  %3365 = vmax.xlane.f32.xlu0 %v3364
  %v3366 = vpop.xlane.xlu0 %3365
  %v3367 = vsel %vm95, %v3305, -inf
  %3368 = vmax.xlane.f32.xlu0 %v3367
  %v3369 = vpop.xlane.xlu0 %3368
  %v3370 = vsel %vm95, %v3306, -inf
  %3371 = vmax.xlane.f32.xlu0 %v3370
  %v3372 = vpop.xlane.xlu0 %3371
  %v3373 = vsel %vm95, %v3307, -inf
  %3374 = vmax.xlane.f32.xlu0 %v3373
  %v3375 = vpop.xlane.xlu0 %3374
  %v3376 = vsel %vm95, %v3308, -inf
  %3377 = vmax.xlane.f32.xlu0 %v3376
  %v3378 = vpop.xlane.xlu0 %3377
  %v3379 = vsel %vm95, %v3309, -inf
  %3380 = vmax.xlane.f32.xlu0 %v3379
  %v3381 = vpop.xlane.xlu0 %3380
  %v3382 = vsel %vm95, %v3310, -inf
  %3383 = vmax.xlane.f32.xlu0 %v3382
  %v3384 = vpop.xlane.xlu0 %3383
  %v3385 = vsel %vm95, %v3311, -inf
  %3386 = vmax.xlane.f32.xlu0 %v3385
  %v3387 = vpop.xlane.xlu0 %3386
  %v3388 = vsel %vm95, %v3312, -inf
  %3389 = vmax.xlane.f32.xlu0 %v3388
  %v3390 = vpop.xlane.xlu0 %3389
  %v3391 = vsel %vm95, %v3313, -inf
  %3392 = vmax.xlane.f32.xlu0 %v3391
  %v3393 = vpop.xlane.xlu0 %3392
  %v3394 = vsel %vm95, %v3314, -inf
  %3395 = vmax.xlane.f32.xlu0 %v3394
  %v3396 = vpop.xlane.xlu0 %3395
  %v3397 = vsel %vm95, %v3315, -inf
  %3398 = vmax.xlane.f32.xlu0 %v3397
  %v3399 = vpop.xlane.xlu0 %3398
  %v3400 = vsel %vm95, %v3316, -inf
  %3401 = vmax.xlane.f32.xlu0 %v3400
  %v3402 = vpop.xlane.xlu0 %3401
  %v3403 = vsel %vm95, %v3317, -inf
  %3404 = vmax.xlane.f32.xlu0 %v3403
  %v3405 = vpop.xlane.xlu0 %3404
  %v3406 = vsel %vm95, %v3318, -inf
  %3407 = vmax.xlane.f32.xlu0 %v3406
  %v3408 = vpop.xlane.xlu0 %3407
  %v3409 = vsel %vm95, %v3319, -inf
  %3410 = vmax.xlane.f32.xlu0 %v3409
  %v3411 = vpop.xlane.xlu0 %3410
  %v3412 = vsel %vm95, %v3320, -inf
  %3413 = vmax.xlane.f32.xlu0 %v3412
  %v3414 = vpop.xlane.xlu0 %3413
  %v3415 = vsel %vm95, %v3321, -inf
  %3416 = vmax.xlane.f32.xlu0 %v3415
  %v3417 = vpop.xlane.xlu0 %3416
  %vm3418 = vcmask 261248
  %v3419 = vsel %vm3418, %v3290, -inf
  %3420 = vmax.xlane.f32.xlu0 %v3419
  %v3421 = vpop.xlane.xlu0 %3420
  %v3422 = vsel %vm3418, %v3291, -inf
  %3423 = vmax.xlane.f32.xlu0 %v3422
  %v3424 = vpop.xlane.xlu0 %3423
  %v3425 = vsel %vm3418, %v3292, -inf
  %3426 = vmax.xlane.f32.xlu0 %v3425
  %v3427 = vpop.xlane.xlu0 %3426
  %v3428 = vsel %vm3418, %v3293, -inf
  %3429 = vmax.xlane.f32.xlu0 %v3428
  %v3430 = vpop.xlane.xlu0 %3429
  %v3431 = vsel %vm3418, %v3294, -inf
  %3432 = vmax.xlane.f32.xlu0 %v3431
  %v3433 = vpop.xlane.xlu0 %3432
  %v3434 = vsel %vm3418, %v3295, -inf
  %3435 = vmax.xlane.f32.xlu0 %v3434
  %v3436 = vpop.xlane.xlu0 %3435
  %v3437 = vsel %vm3418, %v3296, -inf
  %3438 = vmax.xlane.f32.xlu0 %v3437
  %v3439 = vpop.xlane.xlu0 %3438
  %v3440 = vsel %vm3418, %v3297, -inf
  %3441 = vmax.xlane.f32.xlu0 %v3440
  %v3442 = vpop.xlane.xlu0 %3441
  %v3443 = vsel %vm3418, %v3298, -inf
  %3444 = vmax.xlane.f32.xlu0 %v3443
  %v3445 = vpop.xlane.xlu0 %3444
  %v3446 = vsel %vm3418, %v3299, -inf
  %3447 = vmax.xlane.f32.xlu0 %v3446
  %v3448 = vpop.xlane.xlu0 %3447
  %v3449 = vsel %vm3418, %v3300, -inf
  %3450 = vmax.xlane.f32.xlu0 %v3449
  %v3451 = vpop.xlane.xlu0 %3450
  %v3452 = vsel %vm3418, %v3301, -inf
  %3453 = vmax.xlane.f32.xlu0 %v3452
  %v3454 = vpop.xlane.xlu0 %3453
  %v3455 = vsel %vm3418, %v3302, -inf
  %3456 = vmax.xlane.f32.xlu0 %v3455
  %v3457 = vpop.xlane.xlu0 %3456
  %v3458 = vsel %vm3418, %v3303, -inf
  %3459 = vmax.xlane.f32.xlu0 %v3458
  %v3460 = vpop.xlane.xlu0 %3459
  %v3461 = vsel %vm3418, %v3304, -inf
  %3462 = vmax.xlane.f32.xlu0 %v3461
  %v3463 = vpop.xlane.xlu0 %3462
  %v3464 = vsel %vm3418, %v3305, -inf
  %3465 = vmax.xlane.f32.xlu0 %v3464
  %v3466 = vpop.xlane.xlu0 %3465
  %v3467 = vsel %vm3418, %v3306, -inf
  %3468 = vmax.xlane.f32.xlu0 %v3467
  %v3469 = vpop.xlane.xlu0 %3468
  %v3470 = vsel %vm3418, %v3307, -inf
  %3471 = vmax.xlane.f32.xlu0 %v3470
  %v3472 = vpop.xlane.xlu0 %3471
  %v3473 = vsel %vm3418, %v3308, -inf
  %3474 = vmax.xlane.f32.xlu0 %v3473
  %v3475 = vpop.xlane.xlu0 %3474
  %v3476 = vsel %vm3418, %v3309, -inf
  %3477 = vmax.xlane.f32.xlu0 %v3476
  %v3478 = vpop.xlane.xlu0 %3477
  %v3479 = vsel %vm3418, %v3310, -inf
  %3480 = vmax.xlane.f32.xlu0 %v3479
  %v3481 = vpop.xlane.xlu0 %3480
  %v3482 = vsel %vm3418, %v3311, -inf
  %3483 = vmax.xlane.f32.xlu0 %v3482
  %v3484 = vpop.xlane.xlu0 %3483
  %v3485 = vsel %vm3418, %v3312, -inf
  %3486 = vmax.xlane.f32.xlu0 %v3485
  %v3487 = vpop.xlane.xlu0 %3486
  %v3488 = vsel %vm3418, %v3313, -inf
  %3489 = vmax.xlane.f32.xlu0 %v3488
  %v3490 = vpop.xlane.xlu0 %3489
  %v3491 = vsel %vm3418, %v3314, -inf
  %3492 = vmax.xlane.f32.xlu0 %v3491
  %v3493 = vpop.xlane.xlu0 %3492
  %v3494 = vsel %vm3418, %v3315, -inf
  %3495 = vmax.xlane.f32.xlu0 %v3494
  %v3496 = vpop.xlane.xlu0 %3495
  %v3497 = vsel %vm3418, %v3316, -inf
  %3498 = vmax.xlane.f32.xlu0 %v3497
  %v3499 = vpop.xlane.xlu0 %3498
  %v3500 = vsel %vm3418, %v3317, -inf
  %3501 = vmax.xlane.f32.xlu0 %v3500
  %v3502 = vpop.xlane.xlu0 %3501
  %v3503 = vsel %vm3418, %v3318, -inf
  %3504 = vmax.xlane.f32.xlu0 %v3503
  %v3505 = vpop.xlane.xlu0 %3504
  %v3506 = vsel %vm3418, %v3319, -inf
  %3507 = vmax.xlane.f32.xlu0 %v3506
  %v3508 = vpop.xlane.xlu0 %3507
  %v3509 = vsel %vm3418, %v3320, -inf
  %3510 = vmax.xlane.f32.xlu0 %v3509
  %v3511 = vpop.xlane.xlu0 %3510
  %v3512 = vsel %vm3418, %v3321, -inf
  %3513 = vmax.xlane.f32.xlu0 %v3512
  %v3514 = vpop.xlane.xlu0 %3513
  %vm3515 = vcmask 392448
  %v3516 = vsel %vm3515, %v3290, -inf
  %3517 = vmax.xlane.f32.xlu0 %v3516
  %v3518 = vpop.xlane.xlu0 %3517
  %v3519 = vsel %vm3515, %v3291, -inf
  %3520 = vmax.xlane.f32.xlu0 %v3519
  %v3521 = vpop.xlane.xlu0 %3520
  %v3522 = vsel %vm3515, %v3292, -inf
  %3523 = vmax.xlane.f32.xlu0 %v3522
  %v3524 = vpop.xlane.xlu0 %3523
  %v3525 = vsel %vm3515, %v3293, -inf
  %3526 = vmax.xlane.f32.xlu0 %v3525
  %v3527 = vpop.xlane.xlu0 %3526
  %v3528 = vsel %vm3515, %v3294, -inf
  %3529 = vmax.xlane.f32.xlu0 %v3528
  %v3530 = vpop.xlane.xlu0 %3529
  %v3531 = vsel %vm3515, %v3295, -inf
  %3532 = vmax.xlane.f32.xlu0 %v3531
  %v3533 = vpop.xlane.xlu0 %3532
  %v3534 = vsel %vm3515, %v3296, -inf
  %3535 = vmax.xlane.f32.xlu0 %v3534
  %v3536 = vpop.xlane.xlu0 %3535
  %v3537 = vsel %vm3515, %v3297, -inf
  %3538 = vmax.xlane.f32.xlu0 %v3537
  %v3539 = vpop.xlane.xlu0 %3538
  %v3540 = vsel %vm3515, %v3298, -inf
  %3541 = vmax.xlane.f32.xlu0 %v3540
  %v3542 = vpop.xlane.xlu0 %3541
  %v3543 = vsel %vm3515, %v3299, -inf
  %3544 = vmax.xlane.f32.xlu0 %v3543
  %v3545 = vpop.xlane.xlu0 %3544
  %v3546 = vsel %vm3515, %v3300, -inf
  %3547 = vmax.xlane.f32.xlu0 %v3546
  %v3548 = vpop.xlane.xlu0 %3547
  %v3549 = vsel %vm3515, %v3301, -inf
  %3550 = vmax.xlane.f32.xlu0 %v3549
  %v3551 = vpop.xlane.xlu0 %3550
  %v3552 = vsel %vm3515, %v3302, -inf
  %3553 = vmax.xlane.f32.xlu0 %v3552
  %v3554 = vpop.xlane.xlu0 %3553
  %v3555 = vsel %vm3515, %v3303, -inf
  %3556 = vmax.xlane.f32.xlu0 %v3555
  %v3557 = vpop.xlane.xlu0 %3556
  %v3558 = vsel %vm3515, %v3304, -inf
  %3559 = vmax.xlane.f32.xlu0 %v3558
  %v3560 = vpop.xlane.xlu0 %3559
  %v3561 = vsel %vm3515, %v3305, -inf
  %3562 = vmax.xlane.f32.xlu0 %v3561
  %v3563 = vpop.xlane.xlu0 %3562
  %v3564 = vsel %vm3515, %v3306, -inf
  %3565 = vmax.xlane.f32.xlu0 %v3564
  %v3566 = vpop.xlane.xlu0 %3565
  %v3567 = vsel %vm3515, %v3307, -inf
  %3568 = vmax.xlane.f32.xlu0 %v3567
  %v3569 = vpop.xlane.xlu0 %3568
  %v3570 = vsel %vm3515, %v3308, -inf
  %3571 = vmax.xlane.f32.xlu0 %v3570
  %v3572 = vpop.xlane.xlu0 %3571
  %v3573 = vsel %vm3515, %v3309, -inf
  %3574 = vmax.xlane.f32.xlu0 %v3573
  %v3575 = vpop.xlane.xlu0 %3574
  %v3576 = vsel %vm3515, %v3310, -inf
  %3577 = vmax.xlane.f32.xlu0 %v3576
  %v3578 = vpop.xlane.xlu0 %3577
  %v3579 = vsel %vm3515, %v3311, -inf
  %3580 = vmax.xlane.f32.xlu0 %v3579
  %v3581 = vpop.xlane.xlu0 %3580
  %v3582 = vsel %vm3515, %v3312, -inf
  %3583 = vmax.xlane.f32.xlu0 %v3582
  %v3584 = vpop.xlane.xlu0 %3583
  %v3585 = vsel %vm3515, %v3313, -inf
  %3586 = vmax.xlane.f32.xlu0 %v3585
  %v3587 = vpop.xlane.xlu0 %3586
  %v3588 = vsel %vm3515, %v3314, -inf
  %3589 = vmax.xlane.f32.xlu0 %v3588
  %v3590 = vpop.xlane.xlu0 %3589
  %v3591 = vsel %vm3515, %v3315, -inf
  %3592 = vmax.xlane.f32.xlu0 %v3591
  %v3593 = vpop.xlane.xlu0 %3592
  %v3594 = vsel %vm3515, %v3316, -inf
  %3595 = vmax.xlane.f32.xlu0 %v3594
  %v3596 = vpop.xlane.xlu0 %3595
  %v3597 = vsel %vm3515, %v3317, -inf
  %3598 = vmax.xlane.f32.xlu0 %v3597
  %v3599 = vpop.xlane.xlu0 %3598
  %v3600 = vsel %vm3515, %v3318, -inf
  %3601 = vmax.xlane.f32.xlu0 %v3600
  %v3602 = vpop.xlane.xlu0 %3601
  %v3603 = vsel %vm3515, %v3319, -inf
  %3604 = vmax.xlane.f32.xlu0 %v3603
  %v3605 = vpop.xlane.xlu0 %3604
  %v3606 = vsel %vm3515, %v3320, -inf
  %3607 = vmax.xlane.f32.xlu0 %v3606
  %v3608 = vpop.xlane.xlu0 %3607
  %v3609 = vsel %vm3515, %v3321, -inf
  %3610 = vmax.xlane.f32.xlu0 %v3609
  %v3611 = vpop.xlane.xlu0 %3610
  %v3644 = vlaneseq
  %v3645 = vand.u32 %v3644, 127
  %v3646 = vlaneseq
  %v3647 = vshrl.u32 %v3646, 7
  %v3648 = vsub.s32 %v3645, %v3647
  %v3649 = vrot.slane %v3324, %v3648
  %v3650 = vadd.s32 %v3645, 4294967288
  %v3651 = vlaneseq
  %v3652 = vshrl.u32 %v3651, 7
  %v3653 = vsub.s32 %v3650, %v3652
  %v3654 = vrot.slane %v3327, %v3653
  %vm3655 = vcmask 130112
  %v3656 = vsel %vm3655, %v3654, %v3649
  %v3657 = vlaneseq
  %v3658 = vshrl.u32 %v3657, 7
  %v3659 = vsub.s32 %v3645, %v3658
  %v3660 = vrot.slane %v3330, %v3659
  %v3661 = vlaneseq
  %v3662 = vshrl.u32 %v3661, 7
  %v3663 = vsub.s32 %v3650, %v3662
  %v3664 = vrot.slane %v3333, %v3663
  %v3665 = vsel %vm3655, %v3664, %v3660
  %v3666 = vlaneseq
  %v3667 = vshrl.u32 %v3666, 7
  %v3668 = vsub.s32 %v3645, %v3667
  %v3669 = vrot.slane %v3336, %v3668
  %v3670 = vlaneseq
  %v3671 = vshrl.u32 %v3670, 7
  %v3672 = vsub.s32 %v3650, %v3671
  %v3673 = vrot.slane %v3339, %v3672
  %v3674 = vsel %vm3655, %v3673, %v3669
  %v3675 = vlaneseq
  %v3676 = vshrl.u32 %v3675, 7
  %v3677 = vsub.s32 %v3645, %v3676
  %v3678 = vrot.slane %v3342, %v3677
  %v3679 = vlaneseq
  %v3680 = vshrl.u32 %v3679, 7
  %v3681 = vsub.s32 %v3650, %v3680
  %v3682 = vrot.slane %v3345, %v3681
  %v3683 = vsel %vm3655, %v3682, %v3678
  %v3684 = vlaneseq
  %v3685 = vshrl.u32 %v3684, 7
  %v3686 = vsub.s32 %v3645, %v3685
  %v3687 = vrot.slane %v3348, %v3686
  %v3688 = vlaneseq
  %v3689 = vshrl.u32 %v3688, 7
  %v3690 = vsub.s32 %v3650, %v3689
  %v3691 = vrot.slane %v3351, %v3690
  %v3692 = vsel %vm3655, %v3691, %v3687
  %v3693 = vlaneseq
  %v3694 = vshrl.u32 %v3693, 7
  %v3695 = vsub.s32 %v3645, %v3694
  %v3696 = vrot.slane %v3354, %v3695
  %v3697 = vlaneseq
  %v3698 = vshrl.u32 %v3697, 7
  %v3699 = vsub.s32 %v3650, %v3698
  %v3700 = vrot.slane %v3357, %v3699
  %v3701 = vsel %vm3655, %v3700, %v3696
  %v3702 = vlaneseq
  %v3703 = vshrl.u32 %v3702, 7
  %v3704 = vsub.s32 %v3645, %v3703
  %v3705 = vrot.slane %v3360, %v3704
  %v3706 = vlaneseq
  %v3707 = vshrl.u32 %v3706, 7
  %v3708 = vsub.s32 %v3650, %v3707
  %v3709 = vrot.slane %v3363, %v3708
  %v3710 = vsel %vm3655, %v3709, %v3705
  %v3711 = vlaneseq
  %v3712 = vshrl.u32 %v3711, 7
  %v3713 = vsub.s32 %v3645, %v3712
  %v3714 = vrot.slane %v3366, %v3713
  %v3715 = vlaneseq
  %v3716 = vshrl.u32 %v3715, 7
  %v3717 = vsub.s32 %v3650, %v3716
  %v3718 = vrot.slane %v3369, %v3717
  %v3719 = vsel %vm3655, %v3718, %v3714
  %v3720 = vlaneseq
  %v3721 = vshrl.u32 %v3720, 7
  %v3722 = vsub.s32 %v3645, %v3721
  %v3723 = vrot.slane %v3372, %v3722
  %v3724 = vlaneseq
  %v3725 = vshrl.u32 %v3724, 7
  %v3726 = vsub.s32 %v3650, %v3725
  %v3727 = vrot.slane %v3375, %v3726
  %v3728 = vsel %vm3655, %v3727, %v3723
  %v3729 = vlaneseq
  %v3730 = vshrl.u32 %v3729, 7
  %v3731 = vsub.s32 %v3645, %v3730
  %v3732 = vrot.slane %v3378, %v3731
  %v3733 = vlaneseq
  %v3734 = vshrl.u32 %v3733, 7
  %v3735 = vsub.s32 %v3650, %v3734
  %v3736 = vrot.slane %v3381, %v3735
  %v3737 = vsel %vm3655, %v3736, %v3732
  %v3738 = vlaneseq
  %v3739 = vshrl.u32 %v3738, 7
  %v3740 = vsub.s32 %v3645, %v3739
  %v3741 = vrot.slane %v3384, %v3740
  %v3742 = vlaneseq
  %v3743 = vshrl.u32 %v3742, 7
  %v3744 = vsub.s32 %v3650, %v3743
  %v3745 = vrot.slane %v3387, %v3744
  %v3746 = vsel %vm3655, %v3745, %v3741
  %v3747 = vlaneseq
  %v3748 = vshrl.u32 %v3747, 7
  %v3749 = vsub.s32 %v3645, %v3748
  %v3750 = vrot.slane %v3390, %v3749
  %v3751 = vlaneseq
  %v3752 = vshrl.u32 %v3751, 7
  %v3753 = vsub.s32 %v3650, %v3752
  %v3754 = vrot.slane %v3393, %v3753
  %v3755 = vsel %vm3655, %v3754, %v3750
  %v3756 = vlaneseq
  %v3757 = vshrl.u32 %v3756, 7
  %v3758 = vsub.s32 %v3645, %v3757
  %v3759 = vrot.slane %v3396, %v3758
  %v3760 = vlaneseq
  %v3761 = vshrl.u32 %v3760, 7
  %v3762 = vsub.s32 %v3650, %v3761
  %v3763 = vrot.slane %v3399, %v3762
  %v3764 = vsel %vm3655, %v3763, %v3759
  %v3765 = vlaneseq
  %v3766 = vshrl.u32 %v3765, 7
  %v3767 = vsub.s32 %v3645, %v3766
  %v3768 = vrot.slane %v3402, %v3767
  %v3769 = vlaneseq
  %v3770 = vshrl.u32 %v3769, 7
  %v3771 = vsub.s32 %v3650, %v3770
  %v3772 = vrot.slane %v3405, %v3771
  %v3773 = vsel %vm3655, %v3772, %v3768
  %v3774 = vlaneseq
  %v3775 = vshrl.u32 %v3774, 7
  %v3776 = vsub.s32 %v3645, %v3775
  %v3777 = vrot.slane %v3408, %v3776
  %v3778 = vlaneseq
  %v3779 = vshrl.u32 %v3778, 7
  %v3780 = vsub.s32 %v3650, %v3779
  %v3781 = vrot.slane %v3411, %v3780
  %v3782 = vsel %vm3655, %v3781, %v3777
  %v3783 = vlaneseq
  %v3784 = vshrl.u32 %v3783, 7
  %v3785 = vsub.s32 %v3645, %v3784
  %v3786 = vrot.slane %v3414, %v3785
  %v3787 = vlaneseq
  %v3788 = vshrl.u32 %v3787, 7
  %v3789 = vsub.s32 %v3650, %v3788
  %v3790 = vrot.slane %v3417, %v3789
  %v3791 = vsel %vm3655, %v3790, %v3786
  %vm3792 = vcmask 1041409
  %v3793 = vsel %vm3792, %v3665, %v3656
  %vm3794 = vcmask 1042434
  %v3795 = vsel %vm3794, %v3674, %v3793
  %vm3796 = vcmask 1043459
  %v3797 = vsel %vm3796, %v3683, %v3795
  %vm3798 = vcmask 1044484
  %v3799 = vsel %vm3798, %v3692, %v3797
  %vm3800 = vcmask 1045509
  %v3801 = vsel %vm3800, %v3701, %v3799
  %vm3802 = vcmask 1046534
  %v3803 = vsel %vm3802, %v3710, %v3801
  %vm3804 = vcmask 1047559
  %v3805 = vsel %vm3804, %v3719, %v3803
  %v3806 = vsel %vm3792, %v3737, %v3728
  %v3807 = vsel %vm3794, %v3746, %v3806
  %v3808 = vsel %vm3796, %v3755, %v3807
  %v3809 = vsel %vm3798, %v3764, %v3808
  %v3810 = vsel %vm3800, %v3773, %v3809
  %v3811 = vsel %vm3802, %v3782, %v3810
  %v3812 = vsel %vm3804, %v3791, %v3811
  %v3847 = vadd.s32 %v3645, 4294967280
  %v3848 = vlaneseq
  %v3849 = vshrl.u32 %v3848, 7
  %v3850 = vsub.s32 %v3847, %v3849
  %v3851 = vrot.slane %v3421, %v3850
  %v3852 = vadd.s32 %v3645, 4294967272
  %v3853 = vlaneseq
  %v3854 = vshrl.u32 %v3853, 7
  %v3855 = vsub.s32 %v3852, %v3854
  %v3856 = vrot.slane %v3424, %v3855
  %vm3857 = vcmask 261312
  %v3858 = vsel %vm3857, %v3856, %v3851
  %v3859 = vlaneseq
  %v3860 = vshrl.u32 %v3859, 7
  %v3861 = vsub.s32 %v3847, %v3860
  %v3862 = vrot.slane %v3427, %v3861
  %v3863 = vlaneseq
  %v3864 = vshrl.u32 %v3863, 7
  %v3865 = vsub.s32 %v3852, %v3864
  %v3866 = vrot.slane %v3430, %v3865
  %v3867 = vsel %vm3857, %v3866, %v3862
  %v3868 = vlaneseq
  %v3869 = vshrl.u32 %v3868, 7
  %v3870 = vsub.s32 %v3847, %v3869
  %v3871 = vrot.slane %v3433, %v3870
  %v3872 = vlaneseq
  %v3873 = vshrl.u32 %v3872, 7
  %v3874 = vsub.s32 %v3852, %v3873
  %v3875 = vrot.slane %v3436, %v3874
  %v3876 = vsel %vm3857, %v3875, %v3871
  %v3877 = vlaneseq
  %v3878 = vshrl.u32 %v3877, 7
  %v3879 = vsub.s32 %v3847, %v3878
  %v3880 = vrot.slane %v3439, %v3879
  %v3881 = vlaneseq
  %v3882 = vshrl.u32 %v3881, 7
  %v3883 = vsub.s32 %v3852, %v3882
  %v3884 = vrot.slane %v3442, %v3883
  %v3885 = vsel %vm3857, %v3884, %v3880
  %v3886 = vlaneseq
  %v3887 = vshrl.u32 %v3886, 7
  %v3888 = vsub.s32 %v3847, %v3887
  %v3889 = vrot.slane %v3445, %v3888
  %v3890 = vlaneseq
  %v3891 = vshrl.u32 %v3890, 7
  %v3892 = vsub.s32 %v3852, %v3891
  %v3893 = vrot.slane %v3448, %v3892
  %v3894 = vsel %vm3857, %v3893, %v3889
  %v3895 = vlaneseq
  %v3896 = vshrl.u32 %v3895, 7
  %v3897 = vsub.s32 %v3847, %v3896
  %v3898 = vrot.slane %v3451, %v3897
  %v3899 = vlaneseq
  %v3900 = vshrl.u32 %v3899, 7
  %v3901 = vsub.s32 %v3852, %v3900
  %v3902 = vrot.slane %v3454, %v3901
  %v3903 = vsel %vm3857, %v3902, %v3898
  %v3904 = vlaneseq
  %v3905 = vshrl.u32 %v3904, 7
  %v3906 = vsub.s32 %v3847, %v3905
  %v3907 = vrot.slane %v3457, %v3906
  %v3908 = vlaneseq
  %v3909 = vshrl.u32 %v3908, 7
  %v3910 = vsub.s32 %v3852, %v3909
  %v3911 = vrot.slane %v3460, %v3910
  %v3912 = vsel %vm3857, %v3911, %v3907
  %v3913 = vlaneseq
  %v3914 = vshrl.u32 %v3913, 7
  %v3915 = vsub.s32 %v3847, %v3914
  %v3916 = vrot.slane %v3463, %v3915
  %v3917 = vlaneseq
  %v3918 = vshrl.u32 %v3917, 7
  %v3919 = vsub.s32 %v3852, %v3918
  %v3920 = vrot.slane %v3466, %v3919
  %v3921 = vsel %vm3857, %v3920, %v3916
  %v3922 = vlaneseq
  %v3923 = vshrl.u32 %v3922, 7
  %v3924 = vsub.s32 %v3847, %v3923
  %v3925 = vrot.slane %v3469, %v3924
  %v3926 = vlaneseq
  %v3927 = vshrl.u32 %v3926, 7
  %v3928 = vsub.s32 %v3852, %v3927
  %v3929 = vrot.slane %v3472, %v3928
  %v3930 = vsel %vm3857, %v3929, %v3925
  %v3931 = vlaneseq
  %v3932 = vshrl.u32 %v3931, 7
  %v3933 = vsub.s32 %v3847, %v3932
  %v3934 = vrot.slane %v3475, %v3933
  %v3935 = vlaneseq
  %v3936 = vshrl.u32 %v3935, 7
  %v3937 = vsub.s32 %v3852, %v3936
  %v3938 = vrot.slane %v3478, %v3937
  %v3939 = vsel %vm3857, %v3938, %v3934
  %v3940 = vlaneseq
  %v3941 = vshrl.u32 %v3940, 7
  %v3942 = vsub.s32 %v3847, %v3941
  %v3943 = vrot.slane %v3481, %v3942
  %v3944 = vlaneseq
  %v3945 = vshrl.u32 %v3944, 7
  %v3946 = vsub.s32 %v3852, %v3945
  %v3947 = vrot.slane %v3484, %v3946
  %v3948 = vsel %vm3857, %v3947, %v3943
  %v3949 = vlaneseq
  %v3950 = vshrl.u32 %v3949, 7
  %v3951 = vsub.s32 %v3847, %v3950
  %v3952 = vrot.slane %v3487, %v3951
  %v3953 = vlaneseq
  %v3954 = vshrl.u32 %v3953, 7
  %v3955 = vsub.s32 %v3852, %v3954
  %v3956 = vrot.slane %v3490, %v3955
  %v3957 = vsel %vm3857, %v3956, %v3952
  %v3958 = vlaneseq
  %v3959 = vshrl.u32 %v3958, 7
  %v3960 = vsub.s32 %v3847, %v3959
  %v3961 = vrot.slane %v3493, %v3960
  %v3962 = vlaneseq
  %v3963 = vshrl.u32 %v3962, 7
  %v3964 = vsub.s32 %v3852, %v3963
  %v3965 = vrot.slane %v3496, %v3964
  %v3966 = vsel %vm3857, %v3965, %v3961
  %v3967 = vlaneseq
  %v3968 = vshrl.u32 %v3967, 7
  %v3969 = vsub.s32 %v3847, %v3968
  %v3970 = vrot.slane %v3499, %v3969
  %v3971 = vlaneseq
  %v3972 = vshrl.u32 %v3971, 7
  %v3973 = vsub.s32 %v3852, %v3972
  %v3974 = vrot.slane %v3502, %v3973
  %v3975 = vsel %vm3857, %v3974, %v3970
  %v3976 = vlaneseq
  %v3977 = vshrl.u32 %v3976, 7
  %v3978 = vsub.s32 %v3847, %v3977
  %v3979 = vrot.slane %v3505, %v3978
  %v3980 = vlaneseq
  %v3981 = vshrl.u32 %v3980, 7
  %v3982 = vsub.s32 %v3852, %v3981
  %v3983 = vrot.slane %v3508, %v3982
  %v3984 = vsel %vm3857, %v3983, %v3979
  %v3985 = vlaneseq
  %v3986 = vshrl.u32 %v3985, 7
  %v3987 = vsub.s32 %v3847, %v3986
  %v3988 = vrot.slane %v3511, %v3987
  %v3989 = vlaneseq
  %v3990 = vshrl.u32 %v3989, 7
  %v3991 = vsub.s32 %v3852, %v3990
  %v3992 = vrot.slane %v3514, %v3991
  %v3993 = vsel %vm3857, %v3992, %v3988
  %v3994 = vsel %vm3792, %v3867, %v3858
  %v3995 = vsel %vm3794, %v3876, %v3994
  %v3996 = vsel %vm3796, %v3885, %v3995
  %v3997 = vsel %vm3798, %v3894, %v3996
  %v3998 = vsel %vm3800, %v3903, %v3997
  %v3999 = vsel %vm3802, %v3912, %v3998
  %v4000 = vsel %vm3804, %v3921, %v3999
  %v4001 = vsel %vm3792, %v3939, %v3930
  %v4002 = vsel %vm3794, %v3948, %v4001
  %v4003 = vsel %vm3796, %v3957, %v4002
  %v4004 = vsel %vm3798, %v3966, %v4003
  %v4005 = vsel %vm3800, %v3975, %v4004
  %v4006 = vsel %vm3802, %v3984, %v4005
  %v4007 = vsel %vm3804, %v3993, %v4006
  %v4042 = vadd.s32 %v3645, 4294967264
  %v4043 = vlaneseq
  %v4044 = vshrl.u32 %v4043, 7
  %v4045 = vsub.s32 %v4042, %v4044
  %v4046 = vrot.slane %v3518, %v4045
  %v4047 = vadd.s32 %v3645, 4294967256
  %v4048 = vlaneseq
  %v4049 = vshrl.u32 %v4048, 7
  %v4050 = vsub.s32 %v4047, %v4049
  %v4051 = vrot.slane %v3521, %v4050
  %vm4052 = vcmask 392512
  %v4053 = vsel %vm4052, %v4051, %v4046
  %v4054 = vlaneseq
  %v4055 = vshrl.u32 %v4054, 7
  %v4056 = vsub.s32 %v4042, %v4055
  %v4057 = vrot.slane %v3524, %v4056
  %v4058 = vlaneseq
  %v4059 = vshrl.u32 %v4058, 7
  %v4060 = vsub.s32 %v4047, %v4059
  %v4061 = vrot.slane %v3527, %v4060
  %v4062 = vsel %vm4052, %v4061, %v4057
  %v4063 = vlaneseq
  %v4064 = vshrl.u32 %v4063, 7
  %v4065 = vsub.s32 %v4042, %v4064
  %v4066 = vrot.slane %v3530, %v4065
  %v4067 = vlaneseq
  %v4068 = vshrl.u32 %v4067, 7
  %v4069 = vsub.s32 %v4047, %v4068
  %v4070 = vrot.slane %v3533, %v4069
  %v4071 = vsel %vm4052, %v4070, %v4066
  %v4072 = vlaneseq
  %v4073 = vshrl.u32 %v4072, 7
  %v4074 = vsub.s32 %v4042, %v4073
  %v4075 = vrot.slane %v3536, %v4074
  %v4076 = vlaneseq
  %v4077 = vshrl.u32 %v4076, 7
  %v4078 = vsub.s32 %v4047, %v4077
  %v4079 = vrot.slane %v3539, %v4078
  %v4080 = vsel %vm4052, %v4079, %v4075
  %v4081 = vlaneseq
  %v4082 = vshrl.u32 %v4081, 7
  %v4083 = vsub.s32 %v4042, %v4082
  %v4084 = vrot.slane %v3542, %v4083
  %v4085 = vlaneseq
  %v4086 = vshrl.u32 %v4085, 7
  %v4087 = vsub.s32 %v4047, %v4086
  %v4088 = vrot.slane %v3545, %v4087
  %v4089 = vsel %vm4052, %v4088, %v4084
  %v4090 = vlaneseq
  %v4091 = vshrl.u32 %v4090, 7
  %v4092 = vsub.s32 %v4042, %v4091
  %v4093 = vrot.slane %v3548, %v4092
  %v4094 = vlaneseq
  %v4095 = vshrl.u32 %v4094, 7
  %v4096 = vsub.s32 %v4047, %v4095
  %v4097 = vrot.slane %v3551, %v4096
  %v4098 = vsel %vm4052, %v4097, %v4093
  %v4099 = vlaneseq
  %v4100 = vshrl.u32 %v4099, 7
  %v4101 = vsub.s32 %v4042, %v4100
  %v4102 = vrot.slane %v3554, %v4101
  %v4103 = vlaneseq
  %v4104 = vshrl.u32 %v4103, 7
  %v4105 = vsub.s32 %v4047, %v4104
  %v4106 = vrot.slane %v3557, %v4105
  %v4107 = vsel %vm4052, %v4106, %v4102
  %v4108 = vlaneseq
  %v4109 = vshrl.u32 %v4108, 7
  %v4110 = vsub.s32 %v4042, %v4109
  %v4111 = vrot.slane %v3560, %v4110
  %v4112 = vlaneseq
  %v4113 = vshrl.u32 %v4112, 7
  %v4114 = vsub.s32 %v4047, %v4113
  %v4115 = vrot.slane %v3563, %v4114
  %v4116 = vsel %vm4052, %v4115, %v4111
  %v4117 = vlaneseq
  %v4118 = vshrl.u32 %v4117, 7
  %v4119 = vsub.s32 %v4042, %v4118
  %v4120 = vrot.slane %v3566, %v4119
  %v4121 = vlaneseq
  %v4122 = vshrl.u32 %v4121, 7
  %v4123 = vsub.s32 %v4047, %v4122
  %v4124 = vrot.slane %v3569, %v4123
  %v4125 = vsel %vm4052, %v4124, %v4120
  %v4126 = vlaneseq
  %v4127 = vshrl.u32 %v4126, 7
  %v4128 = vsub.s32 %v4042, %v4127
  %v4129 = vrot.slane %v3572, %v4128
  %v4130 = vlaneseq
  %v4131 = vshrl.u32 %v4130, 7
  %v4132 = vsub.s32 %v4047, %v4131
  %v4133 = vrot.slane %v3575, %v4132
  %v4134 = vsel %vm4052, %v4133, %v4129
  %v4135 = vlaneseq
  %v4136 = vshrl.u32 %v4135, 7
  %v4137 = vsub.s32 %v4042, %v4136
  %v4138 = vrot.slane %v3578, %v4137
  %v4139 = vlaneseq
  %v4140 = vshrl.u32 %v4139, 7
  %v4141 = vsub.s32 %v4047, %v4140
  %v4142 = vrot.slane %v3581, %v4141
  %v4143 = vsel %vm4052, %v4142, %v4138
  %v4144 = vlaneseq
  %v4145 = vshrl.u32 %v4144, 7
  %v4146 = vsub.s32 %v4042, %v4145
  %v4147 = vrot.slane %v3584, %v4146
  %v4148 = vlaneseq
  %v4149 = vshrl.u32 %v4148, 7
  %v4150 = vsub.s32 %v4047, %v4149
  %v4151 = vrot.slane %v3587, %v4150
  %v4152 = vsel %vm4052, %v4151, %v4147
  %v4153 = vlaneseq
  %v4154 = vshrl.u32 %v4153, 7
  %v4155 = vsub.s32 %v4042, %v4154
  %v4156 = vrot.slane %v3590, %v4155
  %v4157 = vlaneseq
  %v4158 = vshrl.u32 %v4157, 7
  %v4159 = vsub.s32 %v4047, %v4158
  %v4160 = vrot.slane %v3593, %v4159
  %v4161 = vsel %vm4052, %v4160, %v4156
  %v4162 = vlaneseq
  %v4163 = vshrl.u32 %v4162, 7
  %v4164 = vsub.s32 %v4042, %v4163
  %v4165 = vrot.slane %v3596, %v4164
  %v4166 = vlaneseq
  %v4167 = vshrl.u32 %v4166, 7
  %v4168 = vsub.s32 %v4047, %v4167
  %v4169 = vrot.slane %v3599, %v4168
  %v4170 = vsel %vm4052, %v4169, %v4165
  %v4171 = vlaneseq
  %v4172 = vshrl.u32 %v4171, 7
  %v4173 = vsub.s32 %v4042, %v4172
  %v4174 = vrot.slane %v3602, %v4173
  %v4175 = vlaneseq
  %v4176 = vshrl.u32 %v4175, 7
  %v4177 = vsub.s32 %v4047, %v4176
  %v4178 = vrot.slane %v3605, %v4177
  %v4179 = vsel %vm4052, %v4178, %v4174
  %v4180 = vlaneseq
  %v4181 = vshrl.u32 %v4180, 7
  %v4182 = vsub.s32 %v4042, %v4181
  %v4183 = vrot.slane %v3608, %v4182
  %v4184 = vlaneseq
  %v4185 = vshrl.u32 %v4184, 7
  %v4186 = vsub.s32 %v4047, %v4185
  %v4187 = vrot.slane %v3611, %v4186
  %v4188 = vsel %vm4052, %v4187, %v4183
  %v4189 = vsel %vm3792, %v4062, %v4053
  %v4190 = vsel %vm3794, %v4071, %v4189
  %v4191 = vsel %vm3796, %v4080, %v4190
  %v4192 = vsel %vm3798, %v4089, %v4191
  %v4193 = vsel %vm3800, %v4098, %v4192
  %v4194 = vsel %vm3802, %v4107, %v4193
  %v4195 = vsel %vm3804, %v4116, %v4194
  %v4196 = vsel %vm3792, %v4134, %v4125
  %v4197 = vsel %vm3794, %v4143, %v4196
  %v4198 = vsel %vm3796, %v4152, %v4197
  %v4199 = vsel %vm3798, %v4161, %v4198
  %v4200 = vsel %vm3800, %v4170, %v4199
  %v4201 = vsel %vm3802, %v4179, %v4200
  %v4202 = vsel %vm3804, %v4188, %v4201
  %v4205 = vsel %vm95, %v3805, %v4000
  %v4206 = vsel %vm95, %v3812, %v4007
  %vm4207 = vcmask 261120
  %v4208 = vsel %vm4207, %v4205, %v4195
  %v4209 = vsel %vm4207, %v4206, %v4202
  %v4210 = vld [vmem:[%s4] sm:$0xff]
  %v4211 = vld [vmem:[%s5] sm:$0xff]
  %4213 = vset.pattern.permute.xlu0 0
  %4214 = vperm.xlu0 %4213, %v4211
  %v4215 = vpop.permute.xlu0 %4214
  %v4218 = vsel %vm95, %v4210, 0
  %4220 = vmatprep.subr.mxu0 0.0
  %4221 = vmatpush1.msra.mxu0 %v4208
  %4222 = vmatprep.subr.mxu0 0.0
  %4223 = vmatpush1.msra.mxu0 %v4209
  %4224 = vmatprep.subr.mxu0 0.0
  %4225 = vmatpush1.msra.mxu0 0.0
  %4226 = vmatprep.subr.mxu0 0.0
  %4227 = vmatpush1.msra.mxu0 0.0
  %4228 = vmatprep.subr.mxu0 0.0
  %4229 = vmatpush1.msra.mxu0 0.0
  %4230 = vmatprep.subr.mxu0 0.0
  %4231 = vmatpush1.msra.mxu0 0.0
  %4232 = vmatprep.subr.mxu0 0.0
  %4233 = vmatpush1.msra.mxu0 0.0
  %4234 = vmatprep.subr.mxu0 0.0
  %4235 = vmatpush1.msra.mxu0 0.0
  %4236 = vmatprep.subr.mxu0 0.0
  %4237 = vmatpush1.msra.mxu0 0.0
  %4238 = vmatprep.subr.mxu0 0.0
  %4239 = vmatpush1.msra.mxu0 0.0
  %4240 = vmatprep.subr.mxu0 0.0
  %4241 = vmatpush1.msra.mxu0 0.0
  %4242 = vmatprep.subr.mxu0 0.0
  %4243 = vmatpush1.msra.mxu0 0.0
  %4244 = vmatprep.subr.mxu0 0.0
  %4245 = vmatpush1.msra.mxu0 0.0
  %4246 = vmatprep.subr.mxu0 0.0
  %4247 = vmatpush1.msra.mxu0 0.0
  %4248 = vmatprep.subr.mxu0 0.0
  %4249 = vmatpush1.msra.mxu0 0.0
  %4250 = vmatprep.subr.mxu0 0.0
  %4251 = vmatpush1.msra.mxu0 0.0
  %4252 = vmatprep.subr.mxu0 0.0
  %4253 = vmatpush1.msra.mxu0 0.0
  %4254 = vmatprep.subr.mxu0 0.0
  %4255 = vmatpush1.msra.mxu0 0.0
  %4256 = vmatprep.subr.mxu0 0.0
  %4257 = vmatpush1.msra.mxu0 0.0
  %4258 = vmatprep.subr.mxu0 0.0
  %4259 = vmatpush1.msra.mxu0 0.0
  %4260 = vmatprep.subr.mxu0 0.0
  %4261 = vmatpush1.msra.mxu0 0.0
  %4262 = vmatprep.subr.mxu0 0.0
  %4263 = vmatpush1.msra.mxu0 0.0
  %4264 = vmatprep.subr.mxu0 0.0
  %4265 = vmatpush1.msra.mxu0 0.0
  %4266 = vmatprep.subr.mxu0 0.0
  %4267 = vmatpush1.msra.mxu0 0.0
  %4268 = vmatprep.subr.mxu0 0.0
  %4269 = vmatpush1.msra.mxu0 0.0
  %4270 = vmatprep.subr.mxu0 0.0
  %4271 = vmatpush1.msra.mxu0 0.0
  %4272 = vmatprep.subr.mxu0 0.0
  %4273 = vmatpush1.msra.mxu0 0.0
  %4274 = vmatprep.subr.mxu0 0.0
  %4275 = vmatpush1.msra.mxu0 0.0
  %4276 = vmatprep.subr.mxu0 0.0
  %4277 = vmatpush1.msra.mxu0 0.0
  %4278 = vmatprep.subr.mxu0 0.0
  %4279 = vmatpush1.msra.mxu0 0.0
  %4280 = vmatprep.subr.mxu0 0.0
  %4281 = vmatpush1.msra.mxu0 0.0
  %4282 = vmatprep.subr.mxu0 0.0
  %4283 = vmatpush1.msra.mxu0 0.0
  %4284 = vmatprep.mubr.f32.mxu0 0.0
  %4285 = vmatmul.mubr.f32.gmra.mrb[0].mxu0 %v4218
  %v4286 = vpop.f32.mrb[0].mxu0
  %v4287 = vadd.f32 %v4215, %v4286
  %v4288 = vpop.f32.mrb[0].mxu0
  %4289 = vdwg.mxu0
  %v4290 = vld [vmem:[%s6] sm:$0x1]
  %v4291 = vld [vmem:[#allocation2] sm:$0x1]
  %4293 = vset.pattern.permute.xlu0 0
  %4294 = vperm.xlu0 %4293, %v4291
  %v4295 = vpop.permute.xlu0 %4294
  %v4297 = vlaneseq
  %v4298 = vshrl.u32 %v4297, 7
  %v4299 = vsub.s32 0, %v4298
  %v4300 = vrot.slane %v4295, %v4299
  %vm4301 = vcmask 64512
  %v4303 = vsel %vm4301, %v4290, 0
  %4305 = vmatprep.subr.mxu0 0.0
  %4306 = vmatpush1.msra.mxu0 %v4287
  %4307 = vmatprep.subr.mxu0 0.0
  %4308 = vmatpush1.msra.mxu0 0.0
  %4309 = vmatprep.subr.mxu0 0.0
  %4310 = vmatpush1.msra.mxu0 0.0
  %4311 = vmatprep.subr.mxu0 0.0
  %4312 = vmatpush1.msra.mxu0 0.0
  %4313 = vmatprep.subr.mxu0 0.0
  %4314 = vmatpush1.msra.mxu0 0.0
  %4315 = vmatprep.subr.mxu0 0.0
  %4316 = vmatpush1.msra.mxu0 0.0
  %4317 = vmatprep.subr.mxu0 0.0
  %4318 = vmatpush1.msra.mxu0 0.0
  %4319 = vmatprep.subr.mxu0 0.0
  %4320 = vmatpush1.msra.mxu0 0.0
  %4321 = vmatprep.subr.mxu0 0.0
  %4322 = vmatpush1.msra.mxu0 0.0
  %4323 = vmatprep.subr.mxu0 0.0
  %4324 = vmatpush1.msra.mxu0 0.0
  %4325 = vmatprep.subr.mxu0 0.0
  %4326 = vmatpush1.msra.mxu0 0.0
  %4327 = vmatprep.subr.mxu0 0.0
  %4328 = vmatpush1.msra.mxu0 0.0
  %4329 = vmatprep.subr.mxu0 0.0
  %4330 = vmatpush1.msra.mxu0 0.0
  %4331 = vmatprep.subr.mxu0 0.0
  %4332 = vmatpush1.msra.mxu0 0.0
  %4333 = vmatprep.subr.mxu0 0.0
  %4334 = vmatpush1.msra.mxu0 0.0
  %4335 = vmatprep.subr.mxu0 0.0
  %4336 = vmatpush1.msra.mxu0 0.0
  %4337 = vmatprep.subr.mxu0 0.0
  %4338 = vmatpush1.msra.mxu0 0.0
  %4339 = vmatprep.subr.mxu0 0.0
  %4340 = vmatpush1.msra.mxu0 0.0
  %4341 = vmatprep.subr.mxu0 0.0
  %4342 = vmatpush1.msra.mxu0 0.0
  %4343 = vmatprep.subr.mxu0 0.0
  %4344 = vmatpush1.msra.mxu0 0.0
  %4345 = vmatprep.subr.mxu0 0.0
  %4346 = vmatpush1.msra.mxu0 0.0
  %4347 = vmatprep.subr.mxu0 0.0
  %4348 = vmatpush1.msra.mxu0 0.0
  %4349 = vmatprep.subr.mxu0 0.0
  %4350 = vmatpush1.msra.mxu0 0.0
  %4351 = vmatprep.subr.mxu0 0.0
  %4352 = vmatpush1.msra.mxu0 0.0
  %4353 = vmatprep.subr.mxu0 0.0
  %4354 = vmatpush1.msra.mxu0 0.0
  %4355 = vmatprep.subr.mxu0 0.0
  %4356 = vmatpush1.msra.mxu0 0.0
  %4357 = vmatprep.subr.mxu0 0.0
  %4358 = vmatpush1.msra.mxu0 0.0
  %4359 = vmatprep.subr.mxu0 0.0
  %4360 = vmatpush1.msra.mxu0 0.0
  %4361 = vmatprep.subr.mxu0 0.0
  %4362 = vmatpush1.msra.mxu0 0.0
  %4363 = vmatprep.subr.mxu0 0.0
  %4364 = vmatpush1.msra.mxu0 0.0
  %4365 = vmatprep.subr.mxu0 0.0
  %4366 = vmatpush1.msra.mxu0 0.0
  %4367 = vmatprep.subr.mxu0 0.0
  %4368 = vmatpush1.msra.mxu0 0.0
  %4369 = vmatprep.mubr.f32.mxu0 0.0
  %4370 = vmatmul.mubr.f32.gmra.mrb[0].mxu0 %v4303
  %v4371 = vpop.f32.mrb[0].mxu0
  %v4372 = vadd.f32 %v4300, %v4371
  %v4373 = vpop.f32.mrb[0].mxu0
  %4374 = vdwg.mxu0
  %vm4375 = vcmask 385024
  %4376 = vst.msk [vmem:[%s8] sm:$0x1] %vm4375, %v4372
  // Predicated region
  $region34: #{mv_lstm_forward.3} parent=0 // pred_check
    _
  $region35: #{mv_lstm_forward.3} parent=0 // pred_check_branch
    %4378 = sbr.rel (0) target = $region37
  $region36: #{mv_lstm_forward.3} parent=0 // pred_region
    _
  $region37: #{mv_lstm_forward.3} parent=0 // pred_fallthru
    _
  // Predicated region
  $region38: #{mv_lstm_forward.3} parent=0 // pred_check
    _
  $region39: #{mv_lstm_forward.3} parent=0 // pred_check_branch
    %4380 = sbr.rel (0) target = $region41
  $region40: #{mv_lstm_forward.3} parent=0 // pred_region
    _
  $region41: #{mv_lstm_forward.3} parent=0 // pred_fallthru
    _

</llo_original>
